<compile_context>
chip_gen: v5e
topology: v5e:2x2
jax: 0.10.0
libtpu: 0.0.40
codegen_flags: <defaults>
</compile_context>

<pallas_src>
import jax
import jax.numpy as jnp
from jax.experimental import pallas as pl
from jax.experimental.pallas import tpu as pltpu

_LANE = 128
_NEG_INF = -1e30  # Python float: finite fill -> fully-masked rows give uniform probs


def _round_up(x, m):
    return ((x + m - 1) // m) * m


def _softdot_kernel(h_ref, ctx_ref, bias_ref, w_in_ref, w_out_c_ref, w_out_h_ref,
                    htilde_ref, attn_ref):
    h = h_ref[...]                                   # (TB, Dq_pad)        bf16
    ctx = ctx_ref[...]                               # (TB, S_pad, Dc_pad) bf16
    bias = bias_ref[...].astype(jnp.float32)         # (TB, S_pad) additive mask

    # target = linear_in(h)                                   (MXU, f32 accum)
    target = jnp.dot(h, w_in_ref[...], preferred_element_type=jnp.float32)

    # scores[b,s] = <context[b,s,:], target[b,:]>
    # VPU broadcast-multiply + lane-axis reduce (bf16*f32 promotes -> f32 accum)
    scores = jnp.sum(ctx * target[:, None, :], axis=-1)       # (TB, S_pad) f32

    # masked_fill_ + softmax over seq (f32 on VPU; exp / reciprocal on EUP)
    logits = scores + bias
    m = jnp.max(logits, axis=-1, keepdims=True)
    e = jnp.exp(logits - m)
    denom = jnp.sum(e, axis=-1, keepdims=True)
    probs = e * pl.reciprocal(denom, approx=True)
    attn_ref[...] = probs

    # weighted_context[b,d] = sum_s probs[b,s] * context[b,s,d]
    # VPU broadcast-multiply + sublane-axis reduce (f32 accumulation)
    weighted = jnp.sum(probs[:, :, None] * ctx, axis=1)        # (TB, Dc_pad) f32

    # h_tilde = tanh(linear_out(cat(weighted_context, h)))     (MXU, f32 accum)
    out = (jnp.dot(weighted.astype(jnp.bfloat16), w_out_c_ref[...],
                   preferred_element_type=jnp.float32)
           + jnp.dot(h, w_out_h_ref[...], preferred_element_type=jnp.float32))
    htilde_ref[...] = jnp.tanh(out)


def soft_dot_attention(h, context, mask, w_in, w_out_c, w_out_h):
    # TODO(synk): only the default forward path (output_tilde=True,
    # output_prob=True) is implemented; the other branches are trivial wrapper
    # variations (return logits / weighted_context instead).
    B, Dq = h.shape
    _, S, Dc = context.shape
    f32, bf16 = jnp.float32, jnp.bfloat16

    # Lane-dense layout: pad seq, query-feature and ctx-feature dims to 128.
    S_pad = _round_up(S, _LANE)
    Dq_pad = _round_up(Dq, _LANE)
    Dc_pad = _round_up(Dc, _LANE)

    # Batch tile: layout-padded VMEM bytes per batch row of the bf16 context
    # block; keep one buffer <= ~4 MiB (double-buffered -> ~8 MiB) so every
    # generation (v5e/v6e 128 MiB, v7x 64 MiB VMEM) fits comfortably.
    ctx_row_bytes = S_pad * Dc_pad * 2
    vmem_tb = (4 * 1024 * 1024) // max(ctx_row_bytes, 1)
    vmem_tb = max(16, (vmem_tb // 16) * 16)            # multiple of 16 (bf16 packing)
    B_pad16 = _round_up(B, 16)
    # Cap tb so the grid has >=~4 steps when the batch allows it: pipelining
    # overlap plus v7x's two-TensorCore "parallel" split.
    cap = max(16, _round_up(pl.cdiv(B_pad16, 4), 16))
    tb = min(vmem_tb, cap)
    n_steps = pl.cdiv(B_pad16, tb)
    tb = _round_up(pl.cdiv(B_pad16, n_steps), 16)      # near-divisor -> minimal overshoot
    B_pad = n_steps * tb
    grid = (n_steps,)

    # Wrapper-side padding + bf16 cast (halves HBM bytes of context/weights).
    h_p = jnp.zeros((B_pad, Dq_pad), bf16).at[:B, :Dq].set(h.astype(bf16))
    ctx_p = jnp.zeros((B_pad, S_pad, Dc_pad), bf16).at[:B, :S, :Dc].set(
        context.astype(bf16))
    # Additive mask bias: padded batch rows / seq positions are fully masked.
    bias_p = jnp.full((B_pad, S_pad), _NEG_INF, f32)
    bias_p = bias_p.at[:B, :S].set(mask.astype(f32) * _NEG_INF)
    bias_p = bias_p.astype(bf16)                      # -1e30 representable in bf16
    w_in_p = jnp.zeros((Dq_pad, Dc_pad), bf16).at[:Dq, :Dc].set(w_in.astype(bf16))
    w_out_c_p = jnp.zeros((Dc_pad, Dq_pad), bf16).at[:Dc, :Dq].set(w_out_c.astype(bf16))
    w_out_h_p = jnp.zeros((Dq_pad, Dq_pad), bf16).at[:Dq, :Dq].set(w_out_h.astype(bf16))

    h_tilde_p, attn_p = pl.pallas_call(
        _softdot_kernel,
        out_shape=(jax.ShapeDtypeStruct((B_pad, Dq_pad), f32),
                   jax.ShapeDtypeStruct((B_pad, S_pad), f32)),
        grid=grid,
        in_specs=[
            pl.BlockSpec((tb, Dq_pad), lambda i: (i, 0)),
            pl.BlockSpec((tb, S_pad, Dc_pad), lambda i: (i, 0, 0)),
            pl.BlockSpec((tb, S_pad), lambda i: (i, 0)),
            # weights: constant block index -> stay resident in VMEM
            pl.BlockSpec((Dq_pad, Dc_pad), lambda i: (0, 0)),
            pl.BlockSpec((Dc_pad, Dq_pad), lambda i: (0, 0)),
            pl.BlockSpec((Dq_pad, Dq_pad), lambda i: (0, 0)),
        ],
        out_specs=(
            pl.BlockSpec((tb, Dq_pad), lambda i: (i, 0)),
            pl.BlockSpec((tb, S_pad), lambda i: (i, 0)),
        ),
        compiler_params=pltpu.CompilerParams(
            dimension_semantics=("parallel",),   # v7x: shard batch across 2 TCs
            vmem_limit_bytes=48 * 1024 * 1024),
    )(h_p, ctx_p, bias_p, w_in_p, w_out_c_p, w_out_h_p)

    return h_tilde_p[:B, :Dq], attn_p[:B, :S]


def _reference(h, context, mask, w_in, w_out_c, w_out_h):
    # Mirrors the kernel's bf16 inputs / f32 accumulation so the comparison
    # isolates kernel correctness rather than precision choice.
    bf16 = jnp.bfloat16
    hb = h.astype(bf16)
    ctx = context.astype(bf16)
    target = jnp.dot(hb, w_in.astype(bf16), preferred_element_type=jnp.float32)
    scores = jnp.sum(ctx.astype(jnp.float32) * target[:, None, :], axis=-1)
    logits = jnp.where(mask > 0, _NEG_INF, scores)
    probs = jax.nn.softmax(logits, axis=-1)
    weighted = jnp.sum(probs[:, :, None] * ctx.astype(jnp.float32), axis=1)
    h_tilde = jnp.tanh(
        jnp.dot(weighted.astype(bf16), w_out_c.astype(bf16),
                preferred_element_type=jnp.float32)
        + jnp.dot(hb, w_out_h.astype(bf16), preferred_element_type=jnp.float32))
    return h_tilde, probs


if __name__ == "__main__":
    B, S, Dq, Dc = 4, 8, 32, 32

    key = jax.random.PRNGKey(0)
    k_h, k_ctx, k_mask, k_win, k_wout = jax.random.split(key, 5)

    h = jax.random.normal(k_h, (B, Dq), dtype=jnp.float32)
    context = jax.random.normal(k_ctx, (B, S, Dc), dtype=jnp.float32)

    # mask: 1 => masked; guarantee at least one unmasked position per row
    mask = (jax.random.uniform(k_mask, (B, S)) < 0.3).astype(jnp.float32)
    mask = mask.at[:, 0].set(0.0)

    # deterministic parameter init (PyTorch default: U(-1/sqrt(fan_in), 1/sqrt(fan_in)))
    bound_in = 1.0 / (Dq ** 0.5)
    w_in = jax.random.uniform(k_win, (Dq, Dc), jnp.float32, -bound_in, bound_in)
    bound_out = 1.0 / ((Dq + Dc) ** 0.5)
    w_out = jax.random.uniform(k_wout, (Dq + Dc, Dq), jnp.float32, -bound_out, bound_out)
    w_out_c, w_out_h = w_out[:Dc], w_out[Dc:]

    h_tilde, attn = soft_dot_attention(h, context, mask, w_in, w_out_c, w_out_h)
    jax.block_until_ready((h_tilde, attn))

    ref_ht, ref_attn = _reference(h, context, mask, w_in, w_out_c, w_out_h)
    # tolerance loosened for bf16 inputs + EUP approximate reciprocal
    assert jnp.allclose(h_tilde, ref_ht, atol=1e-2, rtol=1e-2), \
        float(jnp.max(jnp.abs(h_tilde - ref_ht)))
    assert jnp.allclose(attn, ref_attn, atol=1e-2, rtol=1e-2), \
        float(jnp.max(jnp.abs(attn - ref_attn)))

    print("KERNEL_OK")
</pallas_src>

<mosaic_0001>
module attributes {stable_mosaic.version = 11 : i64} {
  func.func @_softdot_kernel(%arg0: i32, %arg1: memref<16x128xbf16, #tpu.memory_space<vmem>>, %arg2: memref<16x128x128xbf16, #tpu.memory_space<vmem>>, %arg3: memref<16x128xbf16, #tpu.memory_space<vmem>>, %arg4: memref<128x128xbf16, #tpu.memory_space<vmem>>, %arg5: memref<128x128xbf16, #tpu.memory_space<vmem>>, %arg6: memref<128x128xbf16, #tpu.memory_space<vmem>>, %arg7: memref<16x128xf32, #tpu.memory_space<vmem>>, %arg8: memref<16x128xf32, #tpu.memory_space<vmem>>) attributes {dimension_semantics = [#tpu.dimension_semantics<parallel>], iteration_bounds = array<i64: 1>, scalar_prefetch = 0 : i64, scratch_operands = 0 : i64, tpu.core_type = #tpu.core_type<tc>, window_params = [{transform_indices = @transform_0, window_bounds = array<i64: 16, 128>}, {transform_indices = @transform_1, window_bounds = array<i64: 16, 128, 128>}, {transform_indices = @transform_2, window_bounds = array<i64: 16, 128>}, {pipeline_mode = #tpu.pipeline_mode<synchronous>, transform_indices = @transform_3, window_bounds = array<i64: 128, 128>}, {pipeline_mode = #tpu.pipeline_mode<synchronous>, transform_indices = @transform_4, window_bounds = array<i64: 128, 128>}, {pipeline_mode = #tpu.pipeline_mode<synchronous>, transform_indices = @transform_5, window_bounds = array<i64: 128, 128>}, {transform_indices = @transform_6, window_bounds = array<i64: 16, 128>}, {transform_indices = @transform_7, window_bounds = array<i64: 16, 128>}]} {
    %c0 = arith.constant 0 : index
    %c0_0 = arith.constant 0 : index
    %0 = vector.load %arg1[%c0, %c0_0] : memref<16x128xbf16, #tpu.memory_space<vmem>>, vector<16x128xbf16>
    %c0_1 = arith.constant 0 : index
    %c0_2 = arith.constant 0 : index
    %c0_3 = arith.constant 0 : index
    %1 = vector.load %arg2[%c0_1, %c0_2, %c0_3] : memref<16x128x128xbf16, #tpu.memory_space<vmem>>, vector<16x128x128xbf16>
    %c0_4 = arith.constant 0 : index
    %c0_5 = arith.constant 0 : index
    %2 = vector.load %arg3[%c0_4, %c0_5] : memref<16x128xbf16, #tpu.memory_space<vmem>>, vector<16x128xbf16>
    %3 = arith.extf %2 : vector<16x128xbf16> to vector<16x128xf32>
    %c0_6 = arith.constant 0 : index
    %c0_7 = arith.constant 0 : index
    %4 = vector.load %arg4[%c0_6, %c0_7] : memref<128x128xbf16, #tpu.memory_space<vmem>>, vector<128x128xbf16>
    %cst = arith.constant dense<0.000000e+00> : vector<16x128xf32>
    %5 = tpu.matmul %0, %4, %cst {dimension_numbers = #tpu.dot_dimension_numbers<[1], [0], [0], [1], [0, 0, 1, 1], [], []>} : vector<16x128xbf16>, vector<128x128xbf16>, vector<16x128xf32> -> vector<16x128xf32>
    %6 = vector.shape_cast %5 : vector<16x128xf32> to vector<16x1x128xf32>
    %7 = arith.extf %1 : vector<16x128x128xbf16> to vector<16x128x128xf32>
    %8 = vector.broadcast %6 : vector<16x1x128xf32> to vector<16x128x128xf32>
    %9 = arith.mulf %7, %8 : vector<16x128x128xf32>
    %cst_8 = arith.constant dense<0.000000e+00> : vector<16x128xf32>
    %10 = vector.multi_reduction <add>, %9, %cst_8 [2] : vector<16x128x128xf32> to vector<16x128xf32>
    %11 = arith.addf %10, %3 : vector<16x128xf32>
    %cst_9 = arith.constant dense<0xFF800000> : vector<16xf32>
    %12 = vector.multi_reduction <maximumf>, %11, %cst_9 [1] : vector<16x128xf32> to vector<16xf32>
    %13 = vector.shape_cast %12 : vector<16xf32> to vector<16x1xf32>
    %14 = vector.broadcast %13 : vector<16x1xf32> to vector<16x128xf32>
    %15 = arith.subf %11, %14 : vector<16x128xf32>
    %16 = math.exp %15 : vector<16x128xf32>
    %cst_10 = arith.constant dense<0.000000e+00> : vector<16xf32>
    %17 = vector.multi_reduction <add>, %16, %cst_10 [1] : vector<16x128xf32> to vector<16xf32>
    %18 = vector.shape_cast %17 : vector<16xf32> to vector<16x1xf32>
    %19 = tpu.reciprocal %18 {approx = true} : vector<16x1xf32> -> vector<16x1xf32>
    %20 = vector.broadcast %19 : vector<16x1xf32> to vector<16x128xf32>
    %21 = arith.mulf %16, %20 : vector<16x128xf32>
    %c0_11 = arith.constant 0 : index
    %c0_12 = arith.constant 0 : index
    %22 = vector.load %arg8[%c0_11, %c0_12] : memref<16x128xf32, #tpu.memory_space<vmem>>, vector<16x128xf32>
    tpu.vector_store %arg8[%c0_11, %c0_12], %21 {strides = array<i32>} : memref<16x128xf32, #tpu.memory_space<vmem>>, vector<16x128xf32>,
    %23 = vector.shape_cast %21 : vector<16x128xf32> to vector<16x128x1xf32>
    %24 = arith.extf %1 : vector<16x128x128xbf16> to vector<16x128x128xf32>
    %25 = vector.broadcast %23 : vector<16x128x1xf32> to vector<16x128x128xf32>
    %26 = arith.mulf %25, %24 : vector<16x128x128xf32>
    %cst_13 = arith.constant dense<0.000000e+00> : vector<16x128xf32>
    %27 = vector.multi_reduction <add>, %26, %cst_13 [1] : vector<16x128x128xf32> to vector<16x128xf32>
    %28 = arith.truncf %27 : vector<16x128xf32> to vector<16x128xbf16>
    %c0_14 = arith.constant 0 : index
    %c0_15 = arith.constant 0 : index
    %29 = vector.load %arg5[%c0_14, %c0_15] : memref<128x128xbf16, #tpu.memory_space<vmem>>, vector<128x128xbf16>
    %cst_16 = arith.constant dense<0.000000e+00> : vector<16x128xf32>
    %30 = tpu.matmul %28, %29, %cst_16 {dimension_numbers = #tpu.dot_dimension_numbers<[1], [0], [0], [1], [0, 0, 1, 1], [], []>} : vector<16x128xbf16>, vector<128x128xbf16>, vector<16x128xf32> -> vector<16x128xf32>
    %c0_17 = arith.constant 0 : index
    %c0_18 = arith.constant 0 : index
    %31 = vector.load %arg6[%c0_17, %c0_18] : memref<128x128xbf16, #tpu.memory_space<vmem>>, vector<128x128xbf16>
    %cst_19 = arith.constant dense<0.000000e+00> : vector<16x128xf32>
    %32 = tpu.matmul %0, %31, %cst_19 {dimension_numbers = #tpu.dot_dimension_numbers<[1], [0], [0], [1], [0, 0, 1, 1], [], []>} : vector<16x128xbf16>, vector<128x128xbf16>, vector<16x128xf32> -> vector<16x128xf32>
    %33 = arith.addf %30, %32 : vector<16x128xf32>
    %34 = math.tanh %33 : vector<16x128xf32>
    %c0_20 = arith.constant 0 : index
    %c0_21 = arith.constant 0 : index
    %35 = vector.load %arg7[%c0_20, %c0_21] : memref<16x128xf32, #tpu.memory_space<vmem>>, vector<16x128xf32>
    tpu.vector_store %arg7[%c0_20, %c0_21], %34 {strides = array<i32>} : memref<16x128xf32, #tpu.memory_space<vmem>>, vector<16x128xf32>,
    return
  }
  func.func @transform_0(%arg0: i32) -> (i32, i32) {
    %c0_i32 = arith.constant 0 : i32
    %c0_i32_0 = arith.constant 0 : i32
    return %arg0, %c0_i32 : i32, i32
  }
  func.func @transform_1(%arg0: i32) -> (i32, i32, i32) {
    %c0_i32 = arith.constant 0 : i32
    %c0_i32_0 = arith.constant 0 : i32
    %c0_i32_1 = arith.constant 0 : i32
    return %arg0, %c0_i32, %c0_i32_0 : i32, i32, i32
  }
  func.func @transform_2(%arg0: i32) -> (i32, i32) {
    %c0_i32 = arith.constant 0 : i32
    %c0_i32_0 = arith.constant 0 : i32
    return %arg0, %c0_i32 : i32, i32
  }
  func.func @transform_3(%arg0: i32) -> (i32, i32) {
    %c0_i32 = arith.constant 0 : i32
    %c0_i32_0 = arith.constant 0 : i32
    %c0_i32_1 = arith.constant 0 : i32
    return %c0_i32, %c0_i32_0 : i32, i32
  }
  func.func @transform_4(%arg0: i32) -> (i32, i32) {
    %c0_i32 = arith.constant 0 : i32
    %c0_i32_0 = arith.constant 0 : i32
    %c0_i32_1 = arith.constant 0 : i32
    return %c0_i32, %c0_i32_0 : i32, i32
  }
  func.func @transform_5(%arg0: i32) -> (i32, i32) {
    %c0_i32 = arith.constant 0 : i32
    %c0_i32_0 = arith.constant 0 : i32
    %c0_i32_1 = arith.constant 0 : i32
    return %c0_i32, %c0_i32_0 : i32, i32
  }
  func.func @transform_6(%arg0: i32) -> (i32, i32) {
    %c0_i32 = arith.constant 0 : i32
    %c0_i32_0 = arith.constant 0 : i32
    return %arg0, %c0_i32 : i32, i32
  }
  func.func @transform_7(%arg0: i32) -> (i32, i32) {
    %c0_i32 = arith.constant 0 : i32
    %c0_i32_0 = arith.constant 0 : i32
    return %arg0, %c0_i32 : i32, i32
  }
}

</mosaic_0001>

<llo_original>
// kernel: tpu_custom_call.1
$region0: #{tpu_custom_call.1}
  #allocation0 [shape = 'u32[]', space=smem, size = 0x4, offset = 0x4, fixed_abs, tag = 'smem constant byte address 0x4 - core index']
  #allocation1 [shape = 'u32[72,128]{1,0:T(1,128)}', space=vmem, size = 0x9000, scoped, tag = 'internal scratch']
  %s0 = inlined_call_operand.hbm [shape: bf16[16,128], index: 0, kind: input, shape index: {}]
  %s1 = inlined_call_operand.hbm [shape: bf16[16,128,128], index: 1, kind: input, shape index: {}]
  %s2 = inlined_call_operand.hbm [shape: bf16[16,128], index: 2, kind: input, shape index: {}]
  %s3 = inlined_call_operand.hbm [shape: bf16[128,128], index: 3, kind: input, shape index: {}]
  %s4 = inlined_call_operand.hbm [shape: bf16[128,128], index: 4, kind: input, shape index: {}]
  %s5 = inlined_call_operand.hbm [shape: bf16[128,128], index: 5, kind: input, shape index: {}]
  %s6 = inlined_call_operand.hbm [shape: f32[16,128], index: 6, kind: output, shape index: {0}]
  %s7 = inlined_call_operand.hbm [shape: f32[16,128], index: 7, kind: output, shape index: {1}]
  %8 = xla_tuple %s6, %s7
  %s9 = sld [smem:[#allocation0]]
  $region66: #{tpu_custom_call.1} parent=0
    _
  %s11 = ssub.s32 1, %s9
  %s12 = scalar_select 0, %s11, %s9
  $region1: #{tpu_custom_call.1} parent=0
    #allocation2 [shape = 'u8[4096]{0}', space=vmem, size = 0x1000, scoped, tag = 'input window, operand 0, single buffered']
    #allocation3 [shape = 's32[1]{0}', space=sflag, size = 0x4, scoped, tag = 'scoped memory for tpu_custom_call.1']
    #allocation4 [shape = 's32[1]{0}', space=sflag, size = 0x4, scoped, tag = 'scoped memory for tpu_custom_call.1']
    #allocation5 [shape = 'u8[524288]{0}', space=vmem, size = 0x80000, scoped, tag = 'input window, operand 1, single buffered']
    #allocation6 [shape = 's32[1]{0}', space=sflag, size = 0x4, scoped, tag = 'scoped memory for tpu_custom_call.1']
    #allocation7 [shape = 'u8[4096]{0}', space=vmem, size = 0x1000, scoped, tag = 'input window, operand 2, single buffered']
    #allocation8 [shape = 'u8[32768]{0}', space=vmem, size = 0x8000, scoped, tag = 'input window, operand 3, single buffered']
    #allocation9 [shape = 's32[1]{0}', space=sflag, size = 0x4, scoped, tag = 'scoped memory for tpu_custom_call.1']
    #allocation10 [shape = 'u8[32768]{0}', space=vmem, size = 0x8000, scoped, tag = 'input window, operand 4, single buffered']
    #allocation11 [shape = 'u8[32768]{0}', space=vmem, size = 0x8000, scoped, tag = 'input window, operand 5, single buffered']
    #allocation12 [shape = 's32[1]{0}', space=sflag, size = 0x4, scoped, tag = 'scoped memory for tpu_custom_call.1']
    #allocation13 [shape = 'u8[8192]{0}', space=vmem, size = 0x2000, scoped, tag = 'output window, operand 0, single buffered']
    #allocation14 [shape = 'u8[8192]{0}', space=vmem, size = 0x2000, scoped, tag = 'output window, operand 1, single buffered']
    #allocation15 [shape = 's32[1]{0}', space=sflag, size = 0x4, scoped, tag = 'scoped memory for tpu_custom_call.1']
    %13 = vsyncpa [#allocation3], 0
    %14 = vsyncpa [#allocation6], 0
    %15 = vsyncpa [#allocation9], 0
    %16 = vsyncpa [#allocation12], 0
    %17 = vsyncpa [#allocation4], 0
    %18 = vsyncpa [#allocation15], 0
    // Predicated region
    $region2: #{tpu_custom_call.1} parent=1 // pred_check
      _
    $region3: #{tpu_custom_call.1} parent=1 // pred_check_branch
      %20 = sbr.rel (0) target = $region5
    $region4: #{tpu_custom_call.1} parent=1 // pred_region
      %22 = vsyncadd [#allocation3], 0
      %s23 = sshll.u32 %s0, 4
      %s24 = int_to_ptr.hbm [resolvable:$true] %s23
      %s25 = sshll.u32 [#allocation2], 4
      %s26 = int_to_ptr.vmem [resolvable:$true] %s25
      %31 = dma.hbm_to_vmem [thread:$0]  %s24, 128, %s26, [#allocation3], 64, 64, 4
    $region5: #{tpu_custom_call.1} parent=1 // pred_fallthru
      _
    // Predicated region
    $region6: #{tpu_custom_call.1} parent=1 // pred_check
      _
    $region7: #{tpu_custom_call.1} parent=1 // pred_check_branch
      %33 = sbr.rel (0) target = $region9
    $region8: #{tpu_custom_call.1} parent=1 // pred_region
      %35 = vsyncadd [#allocation6], 0
      %s36 = sshll.u32 %s1, 4
      %s37 = int_to_ptr.hbm [resolvable:$true] %s36
      %s38 = sshll.u32 [#allocation5], 4
      %s39 = int_to_ptr.vmem [resolvable:$true] %s38
      %44 = dma.hbm_to_vmem [thread:$0]  %s37, 16384, %s39, [#allocation6], 64, 64, 4
    $region9: #{tpu_custom_call.1} parent=1 // pred_fallthru
      _
    // Predicated region
    $region10: #{tpu_custom_call.1} parent=1 // pred_check
      _
    $region11: #{tpu_custom_call.1} parent=1 // pred_check_branch
      %46 = sbr.rel (0) target = $region13
    $region12: #{tpu_custom_call.1} parent=1 // pred_region
      %48 = vsyncadd [#allocation6], 0
      %s49 = sshll.u32 %s2, 4
      %s50 = int_to_ptr.hbm [resolvable:$true] %s49
      %s51 = sshll.u32 [#allocation7], 4
      %s52 = int_to_ptr.vmem [resolvable:$true] %s51
      %57 = dma.hbm_to_vmem [thread:$0]  %s50, 128, %s52, [#allocation6], 64, 64, 4
    $region13: #{tpu_custom_call.1} parent=1 // pred_fallthru
      _
    // Predicated region
    $region14: #{tpu_custom_call.1} parent=1 // pred_check
      _
    $region15: #{tpu_custom_call.1} parent=1 // pred_check_branch
      %59 = sbr.rel (0) target = $region17
    $region16: #{tpu_custom_call.1} parent=1 // pred_region
      %61 = vsyncadd [#allocation9], 0
      %s62 = sshll.u32 %s3, 4
      %s63 = int_to_ptr.hbm [resolvable:$true] %s62
      %s64 = sshll.u32 [#allocation8], 4
      %s65 = int_to_ptr.vmem [resolvable:$true] %s64
      %70 = dma.hbm_to_vmem [thread:$0]  %s63, 1024, %s65, [#allocation9], 64, 64, 4
    $region17: #{tpu_custom_call.1} parent=1 // pred_fallthru
      _
    // Predicated region
    $region18: #{tpu_custom_call.1} parent=1 // pred_check
      _
    $region19: #{tpu_custom_call.1} parent=1 // pred_check_branch
      %72 = sbr.rel (0) target = $region21
    $region20: #{tpu_custom_call.1} parent=1 // pred_region
      %74 = vsyncadd [#allocation9], 0
      %s75 = sshll.u32 %s4, 4
      %s76 = int_to_ptr.hbm [resolvable:$true] %s75
      %s77 = sshll.u32 [#allocation10], 4
      %s78 = int_to_ptr.vmem [resolvable:$true] %s77
      %83 = dma.hbm_to_vmem [thread:$0]  %s76, 1024, %s78, [#allocation9], 64, 64, 4
    $region21: #{tpu_custom_call.1} parent=1 // pred_fallthru
      _
    // Predicated region
    $region22: #{tpu_custom_call.1} parent=1 // pred_check
      _
    $region23: #{tpu_custom_call.1} parent=1 // pred_check_branch
      %85 = sbr.rel (0) target = $region25
    $region24: #{tpu_custom_call.1} parent=1 // pred_region
      %87 = vsyncadd [#allocation12], 0
      %s88 = sshll.u32 %s5, 4
      %s89 = int_to_ptr.hbm [resolvable:$true] %s88
      %s90 = sshll.u32 [#allocation11], 4
      %s91 = int_to_ptr.vmem [resolvable:$true] %s90
      %96 = dma.hbm_to_vmem [thread:$0]  %s89, 1024, %s91, [#allocation12], 64, 64, 4
    $region25: #{tpu_custom_call.1} parent=1 // pred_fallthru
      _
    // Predicated region
    $region26: #{tpu_custom_call.1} parent=1 // pred_check
      _
    $region27: #{tpu_custom_call.1} parent=1 // pred_check_branch
      %98 = sbr.rel (0) target = $region29
    $region28: #{tpu_custom_call.1} parent=1 // pred_region
      %100 = dma.done [#allocation3], 128
    $region29: #{tpu_custom_call.1} parent=1 // pred_fallthru
      _
    // Predicated region
    $region30: #{tpu_custom_call.1} parent=1 // pred_check
      _
    $region31: #{tpu_custom_call.1} parent=1 // pred_check_branch
      %102 = sbr.rel (0) target = $region33
    $region32: #{tpu_custom_call.1} parent=1 // pred_region
      %104 = dma.done [#allocation6], 16384
    $region33: #{tpu_custom_call.1} parent=1 // pred_fallthru
      _
    // Predicated region
    $region34: #{tpu_custom_call.1} parent=1 // pred_check
      _
    $region35: #{tpu_custom_call.1} parent=1 // pred_check_branch
      %106 = sbr.rel (0) target = $region37
    $region36: #{tpu_custom_call.1} parent=1 // pred_region
      %108 = dma.done [#allocation6], 128
    $region37: #{tpu_custom_call.1} parent=1 // pred_fallthru
      _
    // Predicated region
    $region38: #{tpu_custom_call.1} parent=1 // pred_check
      _
    $region39: #{tpu_custom_call.1} parent=1 // pred_check_branch
      %110 = sbr.rel (0) target = $region41
    $region40: #{tpu_custom_call.1} parent=1 // pred_region
      %112 = dma.done [#allocation9], 1024
    $region41: #{tpu_custom_call.1} parent=1 // pred_fallthru
      _
    // Predicated region
    $region42: #{tpu_custom_call.1} parent=1 // pred_check
      _
    $region43: #{tpu_custom_call.1} parent=1 // pred_check_branch
      %114 = sbr.rel (0) target = $region45
    $region44: #{tpu_custom_call.1} parent=1 // pred_region
      %116 = dma.done [#allocation9], 1024
    $region45: #{tpu_custom_call.1} parent=1 // pred_fallthru
      _
    // Predicated region
    $region46: #{tpu_custom_call.1} parent=1 // pred_check
      _
    $region47: #{tpu_custom_call.1} parent=1 // pred_check_branch
      %118 = sbr.rel (0) target = $region49
    $region48: #{tpu_custom_call.1} parent=1 // pred_region
      %120 = dma.done [#allocation12], 1024
    $region49: #{tpu_custom_call.1} parent=1 // pred_fallthru
      _
    %v121 = vld [vmem:[#allocation2] sm:$0xf]
    %v122 = vld [vmem:[#allocation2 + $0x4] sm:$0xf]
    %v123 = vld [vmem:[#allocation5] sm:$0xf]
    %v124 = vld [vmem:[#allocation5 + $0x4] sm:$0xf]
    %v125 = vld [vmem:[#allocation5 + $0x8] sm:$0xf]
    %v126 = vld [vmem:[#allocation5 + $0xc] sm:$0xf]
    %v127 = vld [vmem:[#allocation5 + $0x10] sm:$0xf]
    %v128 = vld [vmem:[#allocation5 + $0x14] sm:$0xf]
    %v129 = vld [vmem:[#allocation5 + $0x18] sm:$0xf]
    %v130 = vld [vmem:[#allocation5 + $0x1c] sm:$0xf]
    %v131 = vld [vmem:[#allocation5 + $0x20] sm:$0xf]
    %v132 = vld [vmem:[#allocation5 + $0x24] sm:$0xf]
    %v133 = vld [vmem:[#allocation5 + $0x28] sm:$0xf]
    %v134 = vld [vmem:[#allocation5 + $0x2c] sm:$0xf]
    %v135 = vld [vmem:[#allocation5 + $0x30] sm:$0xf]
    %v136 = vld [vmem:[#allocation5 + $0x34] sm:$0xf]
    %v137 = vld [vmem:[#allocation5 + $0x38] sm:$0xf]
    %v138 = vld [vmem:[#allocation5 + $0x3c] sm:$0xf]
    %v139 = vld [vmem:[#allocation5 + $0x40] sm:$0xf]
    %v140 = vld [vmem:[#allocation5 + $0x44] sm:$0xf]
    %v141 = vld [vmem:[#allocation5 + $0x48] sm:$0xf]
    %v142 = vld [vmem:[#allocation5 + $0x4c] sm:$0xf]
    %v143 = vld [vmem:[#allocation5 + $0x50] sm:$0xf]
    %v144 = vld [vmem:[#allocation5 + $0x54] sm:$0xf]
    %v145 = vld [vmem:[#allocation5 + $0x58] sm:$0xf]
    %v146 = vld [vmem:[#allocation5 + $0x5c] sm:$0xf]
    %v147 = vld [vmem:[#allocation5 + $0x60] sm:$0xf]
    %v148 = vld [vmem:[#allocation5 + $0x64] sm:$0xf]
    %v149 = vld [vmem:[#allocation5 + $0x68] sm:$0xf]
    %v150 = vld [vmem:[#allocation5 + $0x6c] sm:$0xf]
    %v151 = vld [vmem:[#allocation5 + $0x70] sm:$0xf]
    %v152 = vld [vmem:[#allocation5 + $0x74] sm:$0xf]
    %v153 = vld [vmem:[#allocation5 + $0x78] sm:$0xf]
    %v154 = vld [vmem:[#allocation5 + $0x7c] sm:$0xf]
    %v155 = vld [vmem:[#allocation5 + $0x80] sm:$0xf]
    %v156 = vld [vmem:[#allocation5 + $0x84] sm:$0xf]
    %v157 = vld [vmem:[#allocation5 + $0x88] sm:$0xf]
    %v158 = vld [vmem:[#allocation5 + $0x8c] sm:$0xf]
    %v159 = vld [vmem:[#allocation5 + $0x90] sm:$0xf]
    %v160 = vld [vmem:[#allocation5 + $0x94] sm:$0xf]
    %v161 = vld [vmem:[#allocation5 + $0x98] sm:$0xf]
    %v162 = vld [vmem:[#allocation5 + $0x9c] sm:$0xf]
    %v163 = vld [vmem:[#allocation5 + $0xa0] sm:$0xf]
    %v164 = vld [vmem:[#allocation5 + $0xa4] sm:$0xf]
    %v165 = vld [vmem:[#allocation5 + $0xa8] sm:$0xf]
    %v166 = vld [vmem:[#allocation5 + $0xac] sm:$0xf]
    %v167 = vld [vmem:[#allocation5 + $0xb0] sm:$0xf]
    %v168 = vld [vmem:[#allocation5 + $0xb4] sm:$0xf]
    %v169 = vld [vmem:[#allocation5 + $0xb8] sm:$0xf]
    %v170 = vld [vmem:[#allocation5 + $0xbc] sm:$0xf]
    %v171 = vld [vmem:[#allocation5 + $0xc0] sm:$0xf]
    %v172 = vld [vmem:[#allocation5 + $0xc4] sm:$0xf]
    %v173 = vld [vmem:[#allocation5 + $0xc8] sm:$0xf]
    %v174 = vld [vmem:[#allocation5 + $0xcc] sm:$0xf]
    %v175 = vld [vmem:[#allocation5 + $0xd0] sm:$0xf]
    %v176 = vld [vmem:[#allocation5 + $0xd4] sm:$0xf]
    %v177 = vld [vmem:[#allocation5 + $0xd8] sm:$0xf]
    %v178 = vld [vmem:[#allocation5 + $0xdc] sm:$0xf]
    %v179 = vld [vmem:[#allocation5 + $0xe0] sm:$0xf]
    %v180 = vld [vmem:[#allocation5 + $0xe4] sm:$0xf]
    %v181 = vld [vmem:[#allocation5 + $0xe8] sm:$0xf]
    %v182 = vld [vmem:[#allocation5 + $0xec] sm:$0xf]
    %v183 = vld [vmem:[#allocation5 + $0xf0] sm:$0xf]
    %v184 = vld [vmem:[#allocation5 + $0xf4] sm:$0xf]
    %v185 = vld [vmem:[#allocation5 + $0xf8] sm:$0xf]
    %v186 = vld [vmem:[#allocation5 + $0xfc] sm:$0xf]
    %v187 = vld [vmem:[#allocation5 + $0x100] sm:$0xf]
    %v188 = vld [vmem:[#allocation5 + $0x104] sm:$0xf]
    %v189 = vld [vmem:[#allocation5 + $0x108] sm:$0xf]
    %v190 = vld [vmem:[#allocation5 + $0x10c] sm:$0xf]
    %v191 = vld [vmem:[#allocation5 + $0x110] sm:$0xf]
    %v192 = vld [vmem:[#allocation5 + $0x114] sm:$0xf]
    %v193 = vld [vmem:[#allocation5 + $0x118] sm:$0xf]
    %v194 = vld [vmem:[#allocation5 + $0x11c] sm:$0xf]
    %v195 = vld [vmem:[#allocation5 + $0x120] sm:$0xf]
    %v196 = vld [vmem:[#allocation5 + $0x124] sm:$0xf]
    %v197 = vld [vmem:[#allocation5 + $0x128] sm:$0xf]
    %v198 = vld [vmem:[#allocation5 + $0x12c] sm:$0xf]
    %v199 = vld [vmem:[#allocation5 + $0x130] sm:$0xf]
    %v200 = vld [vmem:[#allocation5 + $0x134] sm:$0xf]
    %v201 = vld [vmem:[#allocation5 + $0x138] sm:$0xf]
    %v202 = vld [vmem:[#allocation5 + $0x13c] sm:$0xf]
    %v203 = vld [vmem:[#allocation5 + $0x140] sm:$0xf]
    %v204 = vld [vmem:[#allocation5 + $0x144] sm:$0xf]
    %v205 = vld [vmem:[#allocation5 + $0x148] sm:$0xf]
    %v206 = vld [vmem:[#allocation5 + $0x14c] sm:$0xf]
    %v207 = vld [vmem:[#allocation5 + $0x150] sm:$0xf]
    %v208 = vld [vmem:[#allocation5 + $0x154] sm:$0xf]
    %v209 = vld [vmem:[#allocation5 + $0x158] sm:$0xf]
    %v210 = vld [vmem:[#allocation5 + $0x15c] sm:$0xf]
    %v211 = vld [vmem:[#allocation5 + $0x160] sm:$0xf]
    %v212 = vld [vmem:[#allocation5 + $0x164] sm:$0xf]
    %v213 = vld [vmem:[#allocation5 + $0x168] sm:$0xf]
    %v214 = vld [vmem:[#allocation5 + $0x16c] sm:$0xf]
    %v215 = vld [vmem:[#allocation5 + $0x170] sm:$0xf]
    %v216 = vld [vmem:[#allocation5 + $0x174] sm:$0xf]
    %v217 = vld [vmem:[#allocation5 + $0x178] sm:$0xf]
    %v218 = vld [vmem:[#allocation5 + $0x17c] sm:$0xf]
    %v219 = vld [vmem:[#allocation5 + $0x180] sm:$0xf]
    %v220 = vld [vmem:[#allocation5 + $0x184] sm:$0xf]
    %v221 = vld [vmem:[#allocation5 + $0x188] sm:$0xf]
    %v222 = vld [vmem:[#allocation5 + $0x18c] sm:$0xf]
    %v223 = vld [vmem:[#allocation5 + $0x190] sm:$0xf]
    %v224 = vld [vmem:[#allocation5 + $0x194] sm:$0xf]
    %v225 = vld [vmem:[#allocation5 + $0x198] sm:$0xf]
    %v226 = vld [vmem:[#allocation5 + $0x19c] sm:$0xf]
    %v227 = vld [vmem:[#allocation5 + $0x1a0] sm:$0xf]
    %v228 = vld [vmem:[#allocation5 + $0x1a4] sm:$0xf]
    %v229 = vld [vmem:[#allocation5 + $0x1a8] sm:$0xf]
    %v230 = vld [vmem:[#allocation5 + $0x1ac] sm:$0xf]
    %v231 = vld [vmem:[#allocation5 + $0x1b0] sm:$0xf]
    %v232 = vld [vmem:[#allocation5 + $0x1b4] sm:$0xf]
    %v233 = vld [vmem:[#allocation5 + $0x1b8] sm:$0xf]
    %v234 = vld [vmem:[#allocation5 + $0x1bc] sm:$0xf]
    %v235 = vld [vmem:[#allocation5 + $0x1c0] sm:$0xf]
    %v236 = vld [vmem:[#allocation5 + $0x1c4] sm:$0xf]
    %v237 = vld [vmem:[#allocation5 + $0x1c8] sm:$0xf]
    %v238 = vld [vmem:[#allocation5 + $0x1cc] sm:$0xf]
    %v239 = vld [vmem:[#allocation5 + $0x1d0] sm:$0xf]
    %v240 = vld [vmem:[#allocation5 + $0x1d4] sm:$0xf]
    %v241 = vld [vmem:[#allocation5 + $0x1d8] sm:$0xf]
    %v242 = vld [vmem:[#allocation5 + $0x1dc] sm:$0xf]
    %v243 = vld [vmem:[#allocation5 + $0x1e0] sm:$0xf]
    %v244 = vld [vmem:[#allocation5 + $0x1e4] sm:$0xf]
    %v245 = vld [vmem:[#allocation5 + $0x1e8] sm:$0xf]
    %v246 = vld [vmem:[#allocation5 + $0x1ec] sm:$0xf]
    %v247 = vld [vmem:[#allocation5 + $0x1f0] sm:$0xf]
    %v248 = vld [vmem:[#allocation5 + $0x1f4] sm:$0xf]
    %v249 = vld [vmem:[#allocation5 + $0x1f8] sm:$0xf]
    %v250 = vld [vmem:[#allocation5 + $0x1fc] sm:$0xf]
    %v251 = vld [vmem:[#allocation5 + $0x200] sm:$0xf]
    %v252 = vld [vmem:[#allocation5 + $0x204] sm:$0xf]
    %v253 = vld [vmem:[#allocation5 + $0x208] sm:$0xf]
    %v254 = vld [vmem:[#allocation5 + $0x20c] sm:$0xf]
    %v255 = vld [vmem:[#allocation5 + $0x210] sm:$0xf]
    %v256 = vld [vmem:[#allocation5 + $0x214] sm:$0xf]
    %v257 = vld [vmem:[#allocation5 + $0x218] sm:$0xf]
    %v258 = vld [vmem:[#allocation5 + $0x21c] sm:$0xf]
    %v259 = vld [vmem:[#allocation5 + $0x220] sm:$0xf]
    %v260 = vld [vmem:[#allocation5 + $0x224] sm:$0xf]
    %v261 = vld [vmem:[#allocation5 + $0x228] sm:$0xf]
    %v262 = vld [vmem:[#allocation5 + $0x22c] sm:$0xf]
    %v263 = vld [vmem:[#allocation5 + $0x230] sm:$0xf]
    %v264 = vld [vmem:[#allocation5 + $0x234] sm:$0xf]
    %v265 = vld [vmem:[#allocation5 + $0x238] sm:$0xf]
    %v266 = vld [vmem:[#allocation5 + $0x23c] sm:$0xf]
    %v267 = vld [vmem:[#allocation5 + $0x240] sm:$0xf]
    %v268 = vld [vmem:[#allocation5 + $0x244] sm:$0xf]
    %v269 = vld [vmem:[#allocation5 + $0x248] sm:$0xf]
    %v270 = vld [vmem:[#allocation5 + $0x24c] sm:$0xf]
    %v271 = vld [vmem:[#allocation5 + $0x250] sm:$0xf]
    %v272 = vld [vmem:[#allocation5 + $0x254] sm:$0xf]
    %v273 = vld [vmem:[#allocation5 + $0x258] sm:$0xf]
    %v274 = vld [vmem:[#allocation5 + $0x25c] sm:$0xf]
    %v275 = vld [vmem:[#allocation5 + $0x260] sm:$0xf]
    %v276 = vld [vmem:[#allocation5 + $0x264] sm:$0xf]
    %v277 = vld [vmem:[#allocation5 + $0x268] sm:$0xf]
    %v278 = vld [vmem:[#allocation5 + $0x26c] sm:$0xf]
    %v279 = vld [vmem:[#allocation5 + $0x270] sm:$0xf]
    %v280 = vld [vmem:[#allocation5 + $0x274] sm:$0xf]
    %v281 = vld [vmem:[#allocation5 + $0x278] sm:$0xf]
    %v282 = vld [vmem:[#allocation5 + $0x27c] sm:$0xf]
    %v283 = vld [vmem:[#allocation5 + $0x280] sm:$0xf]
    %v284 = vld [vmem:[#allocation5 + $0x284] sm:$0xf]
    %v285 = vld [vmem:[#allocation5 + $0x288] sm:$0xf]
    %v286 = vld [vmem:[#allocation5 + $0x28c] sm:$0xf]
    %v287 = vld [vmem:[#allocation5 + $0x290] sm:$0xf]
    %v288 = vld [vmem:[#allocation5 + $0x294] sm:$0xf]
    %v289 = vld [vmem:[#allocation5 + $0x298] sm:$0xf]
    %v290 = vld [vmem:[#allocation5 + $0x29c] sm:$0xf]
    %v291 = vld [vmem:[#allocation5 + $0x2a0] sm:$0xf]
    %v292 = vld [vmem:[#allocation5 + $0x2a4] sm:$0xf]
    %v293 = vld [vmem:[#allocation5 + $0x2a8] sm:$0xf]
    %v294 = vld [vmem:[#allocation5 + $0x2ac] sm:$0xf]
    %v295 = vld [vmem:[#allocation5 + $0x2b0] sm:$0xf]
    %v296 = vld [vmem:[#allocation5 + $0x2b4] sm:$0xf]
    %v297 = vld [vmem:[#allocation5 + $0x2b8] sm:$0xf]
    %v298 = vld [vmem:[#allocation5 + $0x2bc] sm:$0xf]
    %v299 = vld [vmem:[#allocation5 + $0x2c0] sm:$0xf]
    %v300 = vld [vmem:[#allocation5 + $0x2c4] sm:$0xf]
    %v301 = vld [vmem:[#allocation5 + $0x2c8] sm:$0xf]
    %v302 = vld [vmem:[#allocation5 + $0x2cc] sm:$0xf]
    %v303 = vld [vmem:[#allocation5 + $0x2d0] sm:$0xf]
    %v304 = vld [vmem:[#allocation5 + $0x2d4] sm:$0xf]
    %v305 = vld [vmem:[#allocation5 + $0x2d8] sm:$0xf]
    %v306 = vld [vmem:[#allocation5 + $0x2dc] sm:$0xf]
    %v307 = vld [vmem:[#allocation5 + $0x2e0] sm:$0xf]
    %v308 = vld [vmem:[#allocation5 + $0x2e4] sm:$0xf]
    %v309 = vld [vmem:[#allocation5 + $0x2e8] sm:$0xf]
    %v310 = vld [vmem:[#allocation5 + $0x2ec] sm:$0xf]
    %v311 = vld [vmem:[#allocation5 + $0x2f0] sm:$0xf]
    %v312 = vld [vmem:[#allocation5 + $0x2f4] sm:$0xf]
    %v313 = vld [vmem:[#allocation5 + $0x2f8] sm:$0xf]
    %v314 = vld [vmem:[#allocation5 + $0x2fc] sm:$0xf]
    %v315 = vld [vmem:[#allocation5 + $0x300] sm:$0xf]
    %v316 = vld [vmem:[#allocation5 + $0x304] sm:$0xf]
    %v317 = vld [vmem:[#allocation5 + $0x308] sm:$0xf]
    %v318 = vld [vmem:[#allocation5 + $0x30c] sm:$0xf]
    %v319 = vld [vmem:[#allocation5 + $0x310] sm:$0xf]
    %v320 = vld [vmem:[#allocation5 + $0x314] sm:$0xf]
    %v321 = vld [vmem:[#allocation5 + $0x318] sm:$0xf]
    %v322 = vld [vmem:[#allocation5 + $0x31c] sm:$0xf]
    %v323 = vld [vmem:[#allocation5 + $0x320] sm:$0xf]
    %v324 = vld [vmem:[#allocation5 + $0x324] sm:$0xf]
    %v325 = vld [vmem:[#allocation5 + $0x328] sm:$0xf]
    %v326 = vld [vmem:[#allocation5 + $0x32c] sm:$0xf]
    %v327 = vld [vmem:[#allocation5 + $0x330] sm:$0xf]
    %v328 = vld [vmem:[#allocation5 + $0x334] sm:$0xf]
    %v329 = vld [vmem:[#allocation5 + $0x338] sm:$0xf]
    %v330 = vld [vmem:[#allocation5 + $0x33c] sm:$0xf]
    %v331 = vld [vmem:[#allocation5 + $0x340] sm:$0xf]
    %v332 = vld [vmem:[#allocation5 + $0x344] sm:$0xf]
    %v333 = vld [vmem:[#allocation5 + $0x348] sm:$0xf]
    %v334 = vld [vmem:[#allocation5 + $0x34c] sm:$0xf]
    %v335 = vld [vmem:[#allocation5 + $0x350] sm:$0xf]
    %v336 = vld [vmem:[#allocation5 + $0x354] sm:$0xf]
    %v337 = vld [vmem:[#allocation5 + $0x358] sm:$0xf]
    %v338 = vld [vmem:[#allocation5 + $0x35c] sm:$0xf]
    %v339 = vld [vmem:[#allocation5 + $0x360] sm:$0xf]
    %v340 = vld [vmem:[#allocation5 + $0x364] sm:$0xf]
    %v341 = vld [vmem:[#allocation5 + $0x368] sm:$0xf]
    %v342 = vld [vmem:[#allocation5 + $0x36c] sm:$0xf]
    %v343 = vld [vmem:[#allocation5 + $0x370] sm:$0xf]
    %v344 = vld [vmem:[#allocation5 + $0x374] sm:$0xf]
    %v345 = vld [vmem:[#allocation5 + $0x378] sm:$0xf]
    %v346 = vld [vmem:[#allocation5 + $0x37c] sm:$0xf]
    %v347 = vld [vmem:[#allocation5 + $0x380] sm:$0xf]
    %v348 = vld [vmem:[#allocation5 + $0x384] sm:$0xf]
    %v349 = vld [vmem:[#allocation5 + $0x388] sm:$0xf]
    %v350 = vld [vmem:[#allocation5 + $0x38c] sm:$0xf]
    %v351 = vld [vmem:[#allocation5 + $0x390] sm:$0xf]
    %v352 = vld [vmem:[#allocation5 + $0x394] sm:$0xf]
    %v353 = vld [vmem:[#allocation5 + $0x398] sm:$0xf]
    %v354 = vld [vmem:[#allocation5 + $0x39c] sm:$0xf]
    %v355 = vld [vmem:[#allocation5 + $0x3a0] sm:$0xf]
    %v356 = vld [vmem:[#allocation5 + $0x3a4] sm:$0xf]
    %v357 = vld [vmem:[#allocation5 + $0x3a8] sm:$0xf]
    %v358 = vld [vmem:[#allocation5 + $0x3ac] sm:$0xf]
    %v359 = vld [vmem:[#allocation5 + $0x3b0] sm:$0xf]
    %v360 = vld [vmem:[#allocation5 + $0x3b4] sm:$0xf]
    %v361 = vld [vmem:[#allocation5 + $0x3b8] sm:$0xf]
    %v362 = vld [vmem:[#allocation5 + $0x3bc] sm:$0xf]
    %v363 = vld [vmem:[#allocation5 + $0x3c0] sm:$0xf]
    %v364 = vld [vmem:[#allocation5 + $0x3c4] sm:$0xf]
    %v365 = vld [vmem:[#allocation5 + $0x3c8] sm:$0xf]
    %v366 = vld [vmem:[#allocation5 + $0x3cc] sm:$0xf]
    %v367 = vld [vmem:[#allocation5 + $0x3d0] sm:$0xf]
    %v368 = vld [vmem:[#allocation5 + $0x3d4] sm:$0xf]
    %v369 = vld [vmem:[#allocation5 + $0x3d8] sm:$0xf]
    %v370 = vld [vmem:[#allocation5 + $0x3dc] sm:$0xf]
    %v371 = vld [vmem:[#allocation5 + $0x3e0] sm:$0xf]
    %v372 = vld [vmem:[#allocation5 + $0x3e4] sm:$0xf]
    %v373 = vld [vmem:[#allocation5 + $0x3e8] sm:$0xf]
    %v374 = vld [vmem:[#allocation5 + $0x3ec] sm:$0xf]
    %v375 = vld [vmem:[#allocation5 + $0x3f0] sm:$0xf]
    %v376 = vld [vmem:[#allocation5 + $0x3f4] sm:$0xf]
    %v377 = vld [vmem:[#allocation5 + $0x3f8] sm:$0xf]
    %v378 = vld [vmem:[#allocation5 + $0x3fc] sm:$0xf]
    %v379 = vld [vmem:[#allocation7] sm:$0xf]
    %v380 = vld [vmem:[#allocation7 + $0x4] sm:$0xf]
    %v381 = vunpack.c.l.bf16 %v379
    %v382 = vunpack.c.l.bf16 %v380
    %v383 = vld [vmem:[#allocation8] sm:$0xf]
    %v384 = vld [vmem:[#allocation8 + $0x4] sm:$0xf]
    %v385 = vld [vmem:[#allocation8 + $0x8] sm:$0xf]
    %v386 = vld [vmem:[#allocation8 + $0xc] sm:$0xf]
    %v387 = vld [vmem:[#allocation8 + $0x10] sm:$0xf]
    %v388 = vld [vmem:[#allocation8 + $0x14] sm:$0xf]
    %v389 = vld [vmem:[#allocation8 + $0x18] sm:$0xf]
    %v390 = vld [vmem:[#allocation8 + $0x1c] sm:$0xf]
    %v391 = vld [vmem:[#allocation8 + $0x20] sm:$0xf]
    %v392 = vld [vmem:[#allocation8 + $0x24] sm:$0xf]
    %v393 = vld [vmem:[#allocation8 + $0x28] sm:$0xf]
    %v394 = vld [vmem:[#allocation8 + $0x2c] sm:$0xf]
    %v395 = vld [vmem:[#allocation8 + $0x30] sm:$0xf]
    %v396 = vld [vmem:[#allocation8 + $0x34] sm:$0xf]
    %v397 = vld [vmem:[#allocation8 + $0x38] sm:$0xf]
    %v398 = vld [vmem:[#allocation8 + $0x3c] sm:$0xf]
    %v401 = vunpack.c.l.b16 %v121
    %v402 = vunpack.c.l.b16 %v122
    %v403 = vpack.c.b16 %v402, %v401
    %v421 = vunpack.c.l.b16 %v383
    %v422 = vunpack.c.l.b16 %v384
    %v423 = vunpack.c.l.b16 %v385
    %v424 = vunpack.c.l.b16 %v386
    %v425 = vunpack.c.l.b16 %v387
    %v426 = vunpack.c.l.b16 %v388
    %v427 = vunpack.c.l.b16 %v389
    %v428 = vunpack.c.l.b16 %v390
    %v429 = vunpack.c.l.b16 %v391
    %v430 = vunpack.c.l.b16 %v392
    %v431 = vunpack.c.l.b16 %v393
    %v432 = vunpack.c.l.b16 %v394
    %v433 = vunpack.c.l.b16 %v395
    %v434 = vunpack.c.l.b16 %v396
    %v435 = vunpack.c.l.b16 %v397
    %v436 = vunpack.c.l.b16 %v398
    %v437 = vpack.c.b16 %v422, %v421
    %v438 = vpack.c.b16 %v424, %v423
    %v439 = vpack.c.b16 %v426, %v425
    %v440 = vpack.c.b16 %v428, %v427
    %v441 = vpack.c.b16 %v430, %v429
    %v442 = vpack.c.b16 %v432, %v431
    %v443 = vpack.c.b16 %v434, %v433
    %v444 = vpack.c.b16 %v436, %v435
    %453 = vmatpush.bf16.msra.mxu0 %v444
    %454 = vmatpush.bf16.msra.mxu0 %v443
    %455 = vmatpush.bf16.msra.mxu0 %v442
    %456 = vmatpush.bf16.msra.mxu0 %v441
    %457 = vmatpush.bf16.msra.mxu0 %v440
    %458 = vmatpush.bf16.msra.mxu0 %v439
    %459 = vmatpush.bf16.msra.mxu0 %v438
    %460 = vmatpush.bf16.msra.mxu0 %v437
    %461 = vmatmul.bf16.gmra.mxu0 %v403
    %v462 = vpop.f32.mrf.mxu0
    %v463 = vadd.f32 0.0, %v462
    %v464 = vpop.f32.mrf.mxu0
    %v465 = vadd.f32 0.0, %v464
    %466 = vdwg.mxu0
    %v469 = vrot.slane %v463, 1
    %v470 = vrot.slane %v463, 2
    %v471 = vrot.slane %v463, 3
    %v472 = vrot.slane %v463, 4
    %v473 = vrot.slane %v463, 5
    %v474 = vrot.slane %v463, 6
    %v475 = vrot.slane %v463, 7
    %v476 = vrot.slane %v465, 1
    %v477 = vrot.slane %v465, 2
    %v478 = vrot.slane %v465, 3
    %v479 = vrot.slane %v465, 4
    %v480 = vrot.slane %v465, 5
    %v481 = vrot.slane %v465, 6
    %v482 = vrot.slane %v465, 7
    %v483 = vunpack.c.l.bf16 %v123
    %v484 = vunpack.c.l.bf16 %v124
    %v485 = vunpack.c.l.bf16 %v125
    %v486 = vunpack.c.l.bf16 %v126
    %v487 = vunpack.c.l.bf16 %v127
    %v488 = vunpack.c.l.bf16 %v128
    %v489 = vunpack.c.l.bf16 %v129
    %v490 = vunpack.c.l.bf16 %v130
    %v491 = vunpack.c.l.bf16 %v131
    %v492 = vunpack.c.l.bf16 %v132
    %v493 = vunpack.c.l.bf16 %v133
    %v494 = vunpack.c.l.bf16 %v134
    %v495 = vunpack.c.l.bf16 %v135
    %v496 = vunpack.c.l.bf16 %v136
    %v497 = vunpack.c.l.bf16 %v137
    %v498 = vunpack.c.l.bf16 %v138
    %v499 = vunpack.c.l.bf16 %v139
    %v500 = vunpack.c.l.bf16 %v140
    %v501 = vunpack.c.l.bf16 %v141
    %v502 = vunpack.c.l.bf16 %v142
    %v503 = vunpack.c.l.bf16 %v143
    %v504 = vunpack.c.l.bf16 %v144
    %v505 = vunpack.c.l.bf16 %v145
    %v506 = vunpack.c.l.bf16 %v146
    %v507 = vunpack.c.l.bf16 %v147
    %v508 = vunpack.c.l.bf16 %v148
    %v509 = vunpack.c.l.bf16 %v149
    %v510 = vunpack.c.l.bf16 %v150
    %v511 = vunpack.c.l.bf16 %v151
    %v512 = vunpack.c.l.bf16 %v152
    %v513 = vunpack.c.l.bf16 %v153
    %v514 = vunpack.c.l.bf16 %v154
    %v515 = vunpack.c.l.bf16 %v155
    %v516 = vunpack.c.l.bf16 %v156
    %v517 = vunpack.c.l.bf16 %v157
    %v518 = vunpack.c.l.bf16 %v158
    %v519 = vunpack.c.l.bf16 %v159
    %v520 = vunpack.c.l.bf16 %v160
    %v521 = vunpack.c.l.bf16 %v161
    %v522 = vunpack.c.l.bf16 %v162
    %v523 = vunpack.c.l.bf16 %v163
    %v524 = vunpack.c.l.bf16 %v164
    %v525 = vunpack.c.l.bf16 %v165
    %v526 = vunpack.c.l.bf16 %v166
    %v527 = vunpack.c.l.bf16 %v167
    %v528 = vunpack.c.l.bf16 %v168
    %v529 = vunpack.c.l.bf16 %v169
    %v530 = vunpack.c.l.bf16 %v170
    %v531 = vunpack.c.l.bf16 %v171
    %v532 = vunpack.c.l.bf16 %v172
    %v533 = vunpack.c.l.bf16 %v173
    %v534 = vunpack.c.l.bf16 %v174
    %v535 = vunpack.c.l.bf16 %v175
    %v536 = vunpack.c.l.bf16 %v176
    %v537 = vunpack.c.l.bf16 %v177
    %v538 = vunpack.c.l.bf16 %v178
    %v539 = vunpack.c.l.bf16 %v179
    %v540 = vunpack.c.l.bf16 %v180
    %v541 = vunpack.c.l.bf16 %v181
    %v542 = vunpack.c.l.bf16 %v182
    %v543 = vunpack.c.l.bf16 %v183
    %v544 = vunpack.c.l.bf16 %v184
    %v545 = vunpack.c.l.bf16 %v185
    %v546 = vunpack.c.l.bf16 %v186
    %v547 = vunpack.c.l.bf16 %v187
    %v548 = vunpack.c.l.bf16 %v188
    %v549 = vunpack.c.l.bf16 %v189
    %v550 = vunpack.c.l.bf16 %v190
    %v551 = vunpack.c.l.bf16 %v191
    %v552 = vunpack.c.l.bf16 %v192
    %v553 = vunpack.c.l.bf16 %v193
    %v554 = vunpack.c.l.bf16 %v194
    %v555 = vunpack.c.l.bf16 %v195
    %v556 = vunpack.c.l.bf16 %v196
    %v557 = vunpack.c.l.bf16 %v197
    %v558 = vunpack.c.l.bf16 %v198
    %v559 = vunpack.c.l.bf16 %v199
    %v560 = vunpack.c.l.bf16 %v200
    %v561 = vunpack.c.l.bf16 %v201
    %v562 = vunpack.c.l.bf16 %v202
    %v563 = vunpack.c.l.bf16 %v203
    %v564 = vunpack.c.l.bf16 %v204
    %v565 = vunpack.c.l.bf16 %v205
    %v566 = vunpack.c.l.bf16 %v206
    %v567 = vunpack.c.l.bf16 %v207
    %v568 = vunpack.c.l.bf16 %v208
    %v569 = vunpack.c.l.bf16 %v209
    %v570 = vunpack.c.l.bf16 %v210
    %v571 = vunpack.c.l.bf16 %v211
    %v572 = vunpack.c.l.bf16 %v212
    %v573 = vunpack.c.l.bf16 %v213
    %v574 = vunpack.c.l.bf16 %v214
    %v575 = vunpack.c.l.bf16 %v215
    %v576 = vunpack.c.l.bf16 %v216
    %v577 = vunpack.c.l.bf16 %v217
    %v578 = vunpack.c.l.bf16 %v218
    %v579 = vunpack.c.l.bf16 %v219
    %v580 = vunpack.c.l.bf16 %v220
    %v581 = vunpack.c.l.bf16 %v221
    %v582 = vunpack.c.l.bf16 %v222
    %v583 = vunpack.c.l.bf16 %v223
    %v584 = vunpack.c.l.bf16 %v224
    %v585 = vunpack.c.l.bf16 %v225
    %v586 = vunpack.c.l.bf16 %v226
    %v587 = vunpack.c.l.bf16 %v227
    %v588 = vunpack.c.l.bf16 %v228
    %v589 = vunpack.c.l.bf16 %v229
    %v590 = vunpack.c.l.bf16 %v230
    %v591 = vunpack.c.l.bf16 %v231
    %v592 = vunpack.c.l.bf16 %v232
    %v593 = vunpack.c.l.bf16 %v233
    %v594 = vunpack.c.l.bf16 %v234
    %v595 = vunpack.c.l.bf16 %v235
    %v596 = vunpack.c.l.bf16 %v236
    %v597 = vunpack.c.l.bf16 %v237
    %v598 = vunpack.c.l.bf16 %v238
    %v599 = vunpack.c.l.bf16 %v239
    %v600 = vunpack.c.l.bf16 %v240
    %v601 = vunpack.c.l.bf16 %v241
    %v602 = vunpack.c.l.bf16 %v242
    %v603 = vunpack.c.l.bf16 %v243
    %v604 = vunpack.c.l.bf16 %v244
    %v605 = vunpack.c.l.bf16 %v245
    %v606 = vunpack.c.l.bf16 %v246
    %v607 = vunpack.c.l.bf16 %v247
    %v608 = vunpack.c.l.bf16 %v248
    %v609 = vunpack.c.l.bf16 %v249
    %v610 = vunpack.c.l.bf16 %v250
    %v611 = vunpack.c.l.bf16 %v251
    %v612 = vunpack.c.l.bf16 %v252
    %v613 = vunpack.c.l.bf16 %v253
    %v614 = vunpack.c.l.bf16 %v254
    %v615 = vunpack.c.l.bf16 %v255
    %v616 = vunpack.c.l.bf16 %v256
    %v617 = vunpack.c.l.bf16 %v257
    %v618 = vunpack.c.l.bf16 %v258
    %v619 = vunpack.c.l.bf16 %v259
    %v620 = vunpack.c.l.bf16 %v260
    %v621 = vunpack.c.l.bf16 %v261
    %v622 = vunpack.c.l.bf16 %v262
    %v623 = vunpack.c.l.bf16 %v263
    %v624 = vunpack.c.l.bf16 %v264
    %v625 = vunpack.c.l.bf16 %v265
    %v626 = vunpack.c.l.bf16 %v266
    %v627 = vunpack.c.l.bf16 %v267
    %v628 = vunpack.c.l.bf16 %v268
    %v629 = vunpack.c.l.bf16 %v269
    %v630 = vunpack.c.l.bf16 %v270
    %v631 = vunpack.c.l.bf16 %v271
    %v632 = vunpack.c.l.bf16 %v272
    %v633 = vunpack.c.l.bf16 %v273
    %v634 = vunpack.c.l.bf16 %v274
    %v635 = vunpack.c.l.bf16 %v275
    %v636 = vunpack.c.l.bf16 %v276
    %v637 = vunpack.c.l.bf16 %v277
    %v638 = vunpack.c.l.bf16 %v278
    %v639 = vunpack.c.l.bf16 %v279
    %v640 = vunpack.c.l.bf16 %v280
    %v641 = vunpack.c.l.bf16 %v281
    %v642 = vunpack.c.l.bf16 %v282
    %v643 = vunpack.c.l.bf16 %v283
    %v644 = vunpack.c.l.bf16 %v284
    %v645 = vunpack.c.l.bf16 %v285
    %v646 = vunpack.c.l.bf16 %v286
    %v647 = vunpack.c.l.bf16 %v287
    %v648 = vunpack.c.l.bf16 %v288
    %v649 = vunpack.c.l.bf16 %v289
    %v650 = vunpack.c.l.bf16 %v290
    %v651 = vunpack.c.l.bf16 %v291
    %v652 = vunpack.c.l.bf16 %v292
    %v653 = vunpack.c.l.bf16 %v293
    %v654 = vunpack.c.l.bf16 %v294
    %v655 = vunpack.c.l.bf16 %v295
    %v656 = vunpack.c.l.bf16 %v296
    %v657 = vunpack.c.l.bf16 %v297
    %v658 = vunpack.c.l.bf16 %v298
    %v659 = vunpack.c.l.bf16 %v299
    %v660 = vunpack.c.l.bf16 %v300
    %v661 = vunpack.c.l.bf16 %v301
    %v662 = vunpack.c.l.bf16 %v302
    %v663 = vunpack.c.l.bf16 %v303
    %v664 = vunpack.c.l.bf16 %v304
    %v665 = vunpack.c.l.bf16 %v305
    %v666 = vunpack.c.l.bf16 %v306
    %v667 = vunpack.c.l.bf16 %v307
    %v668 = vunpack.c.l.bf16 %v308
    %v669 = vunpack.c.l.bf16 %v309
    %v670 = vunpack.c.l.bf16 %v310
    %v671 = vunpack.c.l.bf16 %v311
    %v672 = vunpack.c.l.bf16 %v312
    %v673 = vunpack.c.l.bf16 %v313
    %v674 = vunpack.c.l.bf16 %v314
    %v675 = vunpack.c.l.bf16 %v315
    %v676 = vunpack.c.l.bf16 %v316
    %v677 = vunpack.c.l.bf16 %v317
    %v678 = vunpack.c.l.bf16 %v318
    %v679 = vunpack.c.l.bf16 %v319
    %v680 = vunpack.c.l.bf16 %v320
    %v681 = vunpack.c.l.bf16 %v321
    %v682 = vunpack.c.l.bf16 %v322
    %v683 = vunpack.c.l.bf16 %v323
    %v684 = vunpack.c.l.bf16 %v324
    %v685 = vunpack.c.l.bf16 %v325
    %v686 = vunpack.c.l.bf16 %v326
    %v687 = vunpack.c.l.bf16 %v327
    %v688 = vunpack.c.l.bf16 %v328
    %v689 = vunpack.c.l.bf16 %v329
    %v690 = vunpack.c.l.bf16 %v330
    %v691 = vunpack.c.l.bf16 %v331
    %v692 = vunpack.c.l.bf16 %v332
    %v693 = vunpack.c.l.bf16 %v333
    %v694 = vunpack.c.l.bf16 %v334
    %v695 = vunpack.c.l.bf16 %v335
    %v696 = vunpack.c.l.bf16 %v336
    %v697 = vunpack.c.l.bf16 %v337
    %v698 = vunpack.c.l.bf16 %v338
    %v699 = vunpack.c.l.bf16 %v339
    %v700 = vunpack.c.l.bf16 %v340
    %v701 = vunpack.c.l.bf16 %v341
    %v702 = vunpack.c.l.bf16 %v342
    %v703 = vunpack.c.l.bf16 %v343
    %v704 = vunpack.c.l.bf16 %v344
    %v705 = vunpack.c.l.bf16 %v345
    %v706 = vunpack.c.l.bf16 %v346
    %v707 = vunpack.c.l.bf16 %v347
    %v708 = vunpack.c.l.bf16 %v348
    %v709 = vunpack.c.l.bf16 %v349
    %v710 = vunpack.c.l.bf16 %v350
    %v711 = vunpack.c.l.bf16 %v351
    %v712 = vunpack.c.l.bf16 %v352
    %v713 = vunpack.c.l.bf16 %v353
    %v714 = vunpack.c.l.bf16 %v354
    %v715 = vunpack.c.l.bf16 %v355
    %v716 = vunpack.c.l.bf16 %v356
    %v717 = vunpack.c.l.bf16 %v357
    %v718 = vunpack.c.l.bf16 %v358
    %v719 = vunpack.c.l.bf16 %v359
    %v720 = vunpack.c.l.bf16 %v360
    %v721 = vunpack.c.l.bf16 %v361
    %v722 = vunpack.c.l.bf16 %v362
    %v723 = vunpack.c.l.bf16 %v363
    %v724 = vunpack.c.l.bf16 %v364
    %v725 = vunpack.c.l.bf16 %v365
    %v726 = vunpack.c.l.bf16 %v366
    %v727 = vunpack.c.l.bf16 %v367
    %v728 = vunpack.c.l.bf16 %v368
    %v729 = vunpack.c.l.bf16 %v369
    %v730 = vunpack.c.l.bf16 %v370
    %v731 = vunpack.c.l.bf16 %v371
    %v732 = vunpack.c.l.bf16 %v372
    %v733 = vunpack.c.l.bf16 %v373
    %v734 = vunpack.c.l.bf16 %v374
    %v735 = vunpack.c.l.bf16 %v375
    %v736 = vunpack.c.l.bf16 %v376
    %v737 = vunpack.c.l.bf16 %v377
    %v738 = vunpack.c.l.bf16 %v378
    %v739 = vperm.slane %v463, 0
    %v740 = vperm.slane %v469, 0
    %v741 = vperm.slane %v470, 0
    %v742 = vperm.slane %v471, 0
    %v743 = vperm.slane %v472, 0
    %v744 = vperm.slane %v473, 0
    %v745 = vperm.slane %v474, 0
    %v746 = vperm.slane %v475, 0
    %v747 = vperm.slane %v465, 0
    %v748 = vperm.slane %v476, 0
    %v749 = vperm.slane %v477, 0
    %v750 = vperm.slane %v478, 0
    %v751 = vperm.slane %v479, 0
    %v752 = vperm.slane %v480, 0
    %v753 = vperm.slane %v481, 0
    %v754 = vperm.slane %v482, 0
    %v771 = vmul.f32 %v483, %v739
    %v772 = vmul.f32 %v484, %v739
    %v773 = vmul.f32 %v485, %v739
    %v774 = vmul.f32 %v486, %v739
    %v775 = vmul.f32 %v487, %v739
    %v776 = vmul.f32 %v488, %v739
    %v777 = vmul.f32 %v489, %v739
    %v778 = vmul.f32 %v490, %v739
    %v779 = vmul.f32 %v491, %v739
    %v780 = vmul.f32 %v492, %v739
    %v781 = vmul.f32 %v493, %v739
    %v782 = vmul.f32 %v494, %v739
    %v783 = vmul.f32 %v495, %v739
    %v784 = vmul.f32 %v496, %v739
    %v785 = vmul.f32 %v497, %v739
    %v786 = vmul.f32 %v498, %v739
    %v787 = vmul.f32 %v499, %v740
    %v788 = vmul.f32 %v500, %v740
    %v789 = vmul.f32 %v501, %v740
    %v790 = vmul.f32 %v502, %v740
    %v791 = vmul.f32 %v503, %v740
    %v792 = vmul.f32 %v504, %v740
    %v793 = vmul.f32 %v505, %v740
    %v794 = vmul.f32 %v506, %v740
    %v795 = vmul.f32 %v507, %v740
    %v796 = vmul.f32 %v508, %v740
    %v797 = vmul.f32 %v509, %v740
    %v798 = vmul.f32 %v510, %v740
    %v799 = vmul.f32 %v511, %v740
    %v800 = vmul.f32 %v512, %v740
    %v801 = vmul.f32 %v513, %v740
    %v802 = vmul.f32 %v514, %v740
    %v803 = vmul.f32 %v515, %v741
    %v804 = vmul.f32 %v516, %v741
    %v805 = vmul.f32 %v517, %v741
    %v806 = vmul.f32 %v518, %v741
    %v807 = vmul.f32 %v519, %v741
    %v808 = vmul.f32 %v520, %v741
    %v809 = vmul.f32 %v521, %v741
    %v810 = vmul.f32 %v522, %v741
    %v811 = vmul.f32 %v523, %v741
    %v812 = vmul.f32 %v524, %v741
    %v813 = vmul.f32 %v525, %v741
    %v814 = vmul.f32 %v526, %v741
    %v815 = vmul.f32 %v527, %v741
    %v816 = vmul.f32 %v528, %v741
    %v817 = vmul.f32 %v529, %v741
    %v818 = vmul.f32 %v530, %v741
    %v819 = vmul.f32 %v531, %v742
    %v820 = vmul.f32 %v532, %v742
    %v821 = vmul.f32 %v533, %v742
    %v822 = vmul.f32 %v534, %v742
    %v823 = vmul.f32 %v535, %v742
    %v824 = vmul.f32 %v536, %v742
    %v825 = vmul.f32 %v537, %v742
    %v826 = vmul.f32 %v538, %v742
    %v827 = vmul.f32 %v539, %v742
    %v828 = vmul.f32 %v540, %v742
    %v829 = vmul.f32 %v541, %v742
    %v830 = vmul.f32 %v542, %v742
    %v831 = vmul.f32 %v543, %v742
    %v832 = vmul.f32 %v544, %v742
    %v833 = vmul.f32 %v545, %v742
    %v834 = vmul.f32 %v546, %v742
    %v835 = vmul.f32 %v547, %v743
    %v836 = vmul.f32 %v548, %v743
    %v837 = vmul.f32 %v549, %v743
    %v838 = vmul.f32 %v550, %v743
    %v839 = vmul.f32 %v551, %v743
    %v840 = vmul.f32 %v552, %v743
    %v841 = vmul.f32 %v553, %v743
    %v842 = vmul.f32 %v554, %v743
    %v843 = vmul.f32 %v555, %v743
    %v844 = vmul.f32 %v556, %v743
    %v845 = vmul.f32 %v557, %v743
    %v846 = vmul.f32 %v558, %v743
    %v847 = vmul.f32 %v559, %v743
    %v848 = vmul.f32 %v560, %v743
    %v849 = vmul.f32 %v561, %v743
    %v850 = vmul.f32 %v562, %v743
    %v851 = vmul.f32 %v563, %v744
    %v852 = vmul.f32 %v564, %v744
    %v853 = vmul.f32 %v565, %v744
    %v854 = vmul.f32 %v566, %v744
    %v855 = vmul.f32 %v567, %v744
    %v856 = vmul.f32 %v568, %v744
    %v857 = vmul.f32 %v569, %v744
    %v858 = vmul.f32 %v570, %v744
    %v859 = vmul.f32 %v571, %v744
    %v860 = vmul.f32 %v572, %v744
    %v861 = vmul.f32 %v573, %v744
    %v862 = vmul.f32 %v574, %v744
    %v863 = vmul.f32 %v575, %v744
    %v864 = vmul.f32 %v576, %v744
    %v865 = vmul.f32 %v577, %v744
    %v866 = vmul.f32 %v578, %v744
    %v867 = vmul.f32 %v579, %v745
    %v868 = vmul.f32 %v580, %v745
    %v869 = vmul.f32 %v581, %v745
    %v870 = vmul.f32 %v582, %v745
    %v871 = vmul.f32 %v583, %v745
    %v872 = vmul.f32 %v584, %v745
    %v873 = vmul.f32 %v585, %v745
    %v874 = vmul.f32 %v586, %v745
    %v875 = vmul.f32 %v587, %v745
    %v876 = vmul.f32 %v588, %v745
    %v877 = vmul.f32 %v589, %v745
    %v878 = vmul.f32 %v590, %v745
    %v879 = vmul.f32 %v591, %v745
    %v880 = vmul.f32 %v592, %v745
    %v881 = vmul.f32 %v593, %v745
    %v882 = vmul.f32 %v594, %v745
    %v883 = vmul.f32 %v595, %v746
    %v884 = vmul.f32 %v596, %v746
    %v885 = vmul.f32 %v597, %v746
    %v886 = vmul.f32 %v598, %v746
    %v887 = vmul.f32 %v599, %v746
    %v888 = vmul.f32 %v600, %v746
    %v889 = vmul.f32 %v601, %v746
    %v890 = vmul.f32 %v602, %v746
    %v891 = vmul.f32 %v603, %v746
    %v892 = vmul.f32 %v604, %v746
    %v893 = vmul.f32 %v605, %v746
    %v894 = vmul.f32 %v606, %v746
    %v895 = vmul.f32 %v607, %v746
    %v896 = vmul.f32 %v608, %v746
    %v897 = vmul.f32 %v609, %v746
    %v898 = vmul.f32 %v610, %v746
    %v899 = vmul.f32 %v611, %v747
    %v900 = vmul.f32 %v612, %v747
    %v901 = vmul.f32 %v613, %v747
    %v902 = vmul.f32 %v614, %v747
    %v903 = vmul.f32 %v615, %v747
    %v904 = vmul.f32 %v616, %v747
    %v905 = vmul.f32 %v617, %v747
    %v906 = vmul.f32 %v618, %v747
    %v907 = vmul.f32 %v619, %v747
    %v908 = vmul.f32 %v620, %v747
    %v909 = vmul.f32 %v621, %v747
    %v910 = vmul.f32 %v622, %v747
    %v911 = vmul.f32 %v623, %v747
    %v912 = vmul.f32 %v624, %v747
    %v913 = vmul.f32 %v625, %v747
    %v914 = vmul.f32 %v626, %v747
    %v915 = vmul.f32 %v627, %v748
    %v916 = vmul.f32 %v628, %v748
    %v917 = vmul.f32 %v629, %v748
    %v918 = vmul.f32 %v630, %v748
    %v919 = vmul.f32 %v631, %v748
    %v920 = vmul.f32 %v632, %v748
    %v921 = vmul.f32 %v633, %v748
    %v922 = vmul.f32 %v634, %v748
    %v923 = vmul.f32 %v635, %v748
    %v924 = vmul.f32 %v636, %v748
    %v925 = vmul.f32 %v637, %v748
    %v926 = vmul.f32 %v638, %v748
    %v927 = vmul.f32 %v639, %v748
    %v928 = vmul.f32 %v640, %v748
    %v929 = vmul.f32 %v641, %v748
    %v930 = vmul.f32 %v642, %v748
    %v931 = vmul.f32 %v643, %v749
    %v932 = vmul.f32 %v644, %v749
    %v933 = vmul.f32 %v645, %v749
    %v934 = vmul.f32 %v646, %v749
    %v935 = vmul.f32 %v647, %v749
    %v936 = vmul.f32 %v648, %v749
    %v937 = vmul.f32 %v649, %v749
    %v938 = vmul.f32 %v650, %v749
    %v939 = vmul.f32 %v651, %v749
    %v940 = vmul.f32 %v652, %v749
    %v941 = vmul.f32 %v653, %v749
    %v942 = vmul.f32 %v654, %v749
    %v943 = vmul.f32 %v655, %v749
    %v944 = vmul.f32 %v656, %v749
    %v945 = vmul.f32 %v657, %v749
    %v946 = vmul.f32 %v658, %v749
    %v947 = vmul.f32 %v659, %v750
    %v948 = vmul.f32 %v660, %v750
    %v949 = vmul.f32 %v661, %v750
    %v950 = vmul.f32 %v662, %v750
    %v951 = vmul.f32 %v663, %v750
    %v952 = vmul.f32 %v664, %v750
    %v953 = vmul.f32 %v665, %v750
    %v954 = vmul.f32 %v666, %v750
    %v955 = vmul.f32 %v667, %v750
    %v956 = vmul.f32 %v668, %v750
    %v957 = vmul.f32 %v669, %v750
    %v958 = vmul.f32 %v670, %v750
    %v959 = vmul.f32 %v671, %v750
    %v960 = vmul.f32 %v672, %v750
    %v961 = vmul.f32 %v673, %v750
    %v962 = vmul.f32 %v674, %v750
    %v963 = vmul.f32 %v675, %v751
    %v964 = vmul.f32 %v676, %v751
    %v965 = vmul.f32 %v677, %v751
    %v966 = vmul.f32 %v678, %v751
    %v967 = vmul.f32 %v679, %v751
    %v968 = vmul.f32 %v680, %v751
    %v969 = vmul.f32 %v681, %v751
    %v970 = vmul.f32 %v682, %v751
    %v971 = vmul.f32 %v683, %v751
    %v972 = vmul.f32 %v684, %v751
    %v973 = vmul.f32 %v685, %v751
    %v974 = vmul.f32 %v686, %v751
    %v975 = vmul.f32 %v687, %v751
    %v976 = vmul.f32 %v688, %v751
    %v977 = vmul.f32 %v689, %v751
    %v978 = vmul.f32 %v690, %v751
    %v979 = vmul.f32 %v691, %v752
    %v980 = vmul.f32 %v692, %v752
    %v981 = vmul.f32 %v693, %v752
    %v982 = vmul.f32 %v694, %v752
    %v983 = vmul.f32 %v695, %v752
    %v984 = vmul.f32 %v696, %v752
    %v985 = vmul.f32 %v697, %v752
    %v986 = vmul.f32 %v698, %v752
    %v987 = vmul.f32 %v699, %v752
    %v988 = vmul.f32 %v700, %v752
    %v989 = vmul.f32 %v701, %v752
    %v990 = vmul.f32 %v702, %v752
    %v991 = vmul.f32 %v703, %v752
    %v992 = vmul.f32 %v704, %v752
    %v993 = vmul.f32 %v705, %v752
    %v994 = vmul.f32 %v706, %v752
    %v995 = vmul.f32 %v707, %v753
    %v996 = vmul.f32 %v708, %v753
    %v997 = vmul.f32 %v709, %v753
    %v998 = vmul.f32 %v710, %v753
    %v999 = vmul.f32 %v711, %v753
    %v1000 = vmul.f32 %v712, %v753
    %v1001 = vmul.f32 %v713, %v753
    %v1002 = vmul.f32 %v714, %v753
    %v1003 = vmul.f32 %v715, %v753
    %v1004 = vmul.f32 %v716, %v753
    %v1005 = vmul.f32 %v717, %v753
    %v1006 = vmul.f32 %v718, %v753
    %v1007 = vmul.f32 %v719, %v753
    %v1008 = vmul.f32 %v720, %v753
    %v1009 = vmul.f32 %v721, %v753
    %v1010 = vmul.f32 %v722, %v753
    %v1011 = vmul.f32 %v723, %v754
    %v1012 = vmul.f32 %v724, %v754
    %v1013 = vmul.f32 %v725, %v754
    %v1014 = vmul.f32 %v726, %v754
    %v1015 = vmul.f32 %v727, %v754
    %v1016 = vmul.f32 %v728, %v754
    %v1017 = vmul.f32 %v729, %v754
    %v1018 = vmul.f32 %v730, %v754
    %v1019 = vmul.f32 %v731, %v754
    %v1020 = vmul.f32 %v732, %v754
    %v1021 = vmul.f32 %v733, %v754
    %v1022 = vmul.f32 %v734, %v754
    %v1023 = vmul.f32 %v735, %v754
    %v1024 = vmul.f32 %v736, %v754
    %v1025 = vmul.f32 %v737, %v754
    %v1026 = vmul.f32 %v738, %v754
    %1027 = vadd.xlane.f32.xlu0 %v771
    %v1028 = vpop.xlane.xlu0 %1027
    %1029 = vadd.xlane.f32.xlu0 %v772
    %v1030 = vpop.xlane.xlu0 %1029
    %1031 = vadd.xlane.f32.xlu0 %v773
    %v1032 = vpop.xlane.xlu0 %1031
    %1033 = vadd.xlane.f32.xlu0 %v774
    %v1034 = vpop.xlane.xlu0 %1033
    %1035 = vadd.xlane.f32.xlu0 %v775
    %v1036 = vpop.xlane.xlu0 %1035
    %1037 = vadd.xlane.f32.xlu0 %v776
    %v1038 = vpop.xlane.xlu0 %1037
    %1039 = vadd.xlane.f32.xlu0 %v777
    %v1040 = vpop.xlane.xlu0 %1039
    %1041 = vadd.xlane.f32.xlu0 %v778
    %v1042 = vpop.xlane.xlu0 %1041
    %1043 = vadd.xlane.f32.xlu0 %v779
    %v1044 = vpop.xlane.xlu0 %1043
    %1045 = vadd.xlane.f32.xlu0 %v780
    %v1046 = vpop.xlane.xlu0 %1045
    %1047 = vadd.xlane.f32.xlu0 %v781
    %v1048 = vpop.xlane.xlu0 %1047
    %1049 = vadd.xlane.f32.xlu0 %v782
    %v1050 = vpop.xlane.xlu0 %1049
    %1051 = vadd.xlane.f32.xlu0 %v783
    %v1052 = vpop.xlane.xlu0 %1051
    %1053 = vadd.xlane.f32.xlu0 %v784
    %v1054 = vpop.xlane.xlu0 %1053
    %1055 = vadd.xlane.f32.xlu0 %v785
    %v1056 = vpop.xlane.xlu0 %1055
    %1057 = vadd.xlane.f32.xlu0 %v786
    %v1058 = vpop.xlane.xlu0 %1057
    %1059 = vadd.xlane.f32.xlu0 %v787
    %v1060 = vpop.xlane.xlu0 %1059
    %1061 = vadd.xlane.f32.xlu0 %v788
    %v1062 = vpop.xlane.xlu0 %1061
    %1063 = vadd.xlane.f32.xlu0 %v789
    %v1064 = vpop.xlane.xlu0 %1063
    %1065 = vadd.xlane.f32.xlu0 %v790
    %v1066 = vpop.xlane.xlu0 %1065
    %1067 = vadd.xlane.f32.xlu0 %v791
    %v1068 = vpop.xlane.xlu0 %1067
    %1069 = vadd.xlane.f32.xlu0 %v792
    %v1070 = vpop.xlane.xlu0 %1069
    %1071 = vadd.xlane.f32.xlu0 %v793
    %v1072 = vpop.xlane.xlu0 %1071
    %1073 = vadd.xlane.f32.xlu0 %v794
    %v1074 = vpop.xlane.xlu0 %1073
    %1075 = vadd.xlane.f32.xlu0 %v795
    %v1076 = vpop.xlane.xlu0 %1075
    %1077 = vadd.xlane.f32.xlu0 %v796
    %v1078 = vpop.xlane.xlu0 %1077
    %1079 = vadd.xlane.f32.xlu0 %v797
    %v1080 = vpop.xlane.xlu0 %1079
    %1081 = vadd.xlane.f32.xlu0 %v798
    %v1082 = vpop.xlane.xlu0 %1081
    %1083 = vadd.xlane.f32.xlu0 %v799
    %v1084 = vpop.xlane.xlu0 %1083
    %1085 = vadd.xlane.f32.xlu0 %v800
    %v1086 = vpop.xlane.xlu0 %1085
    %1087 = vadd.xlane.f32.xlu0 %v801
    %v1088 = vpop.xlane.xlu0 %1087
    %1089 = vadd.xlane.f32.xlu0 %v802
    %v1090 = vpop.xlane.xlu0 %1089
    %1091 = vadd.xlane.f32.xlu0 %v803
    %v1092 = vpop.xlane.xlu0 %1091
    %1093 = vadd.xlane.f32.xlu0 %v804
    %v1094 = vpop.xlane.xlu0 %1093
    %1095 = vadd.xlane.f32.xlu0 %v805
    %v1096 = vpop.xlane.xlu0 %1095
    %1097 = vadd.xlane.f32.xlu0 %v806
    %v1098 = vpop.xlane.xlu0 %1097
    %1099 = vadd.xlane.f32.xlu0 %v807
    %v1100 = vpop.xlane.xlu0 %1099
    %1101 = vadd.xlane.f32.xlu0 %v808
    %v1102 = vpop.xlane.xlu0 %1101
    %1103 = vadd.xlane.f32.xlu0 %v809
    %v1104 = vpop.xlane.xlu0 %1103
    %1105 = vadd.xlane.f32.xlu0 %v810
    %v1106 = vpop.xlane.xlu0 %1105
    %1107 = vadd.xlane.f32.xlu0 %v811
    %v1108 = vpop.xlane.xlu0 %1107
    %1109 = vadd.xlane.f32.xlu0 %v812
    %v1110 = vpop.xlane.xlu0 %1109
    %1111 = vadd.xlane.f32.xlu0 %v813
    %v1112 = vpop.xlane.xlu0 %1111
    %1113 = vadd.xlane.f32.xlu0 %v814
    %v1114 = vpop.xlane.xlu0 %1113
    %1115 = vadd.xlane.f32.xlu0 %v815
    %v1116 = vpop.xlane.xlu0 %1115
    %1117 = vadd.xlane.f32.xlu0 %v816
    %v1118 = vpop.xlane.xlu0 %1117
    %1119 = vadd.xlane.f32.xlu0 %v817
    %v1120 = vpop.xlane.xlu0 %1119
    %1121 = vadd.xlane.f32.xlu0 %v818
    %v1122 = vpop.xlane.xlu0 %1121
    %1123 = vadd.xlane.f32.xlu0 %v819
    %v1124 = vpop.xlane.xlu0 %1123
    %1125 = vadd.xlane.f32.xlu0 %v820
    %v1126 = vpop.xlane.xlu0 %1125
    %1127 = vadd.xlane.f32.xlu0 %v821
    %v1128 = vpop.xlane.xlu0 %1127
    %1129 = vadd.xlane.f32.xlu0 %v822
    %v1130 = vpop.xlane.xlu0 %1129
    %1131 = vadd.xlane.f32.xlu0 %v823
    %v1132 = vpop.xlane.xlu0 %1131
    %1133 = vadd.xlane.f32.xlu0 %v824
    %v1134 = vpop.xlane.xlu0 %1133
    %1135 = vadd.xlane.f32.xlu0 %v825
    %v1136 = vpop.xlane.xlu0 %1135
    %1137 = vadd.xlane.f32.xlu0 %v826
    %v1138 = vpop.xlane.xlu0 %1137
    %1139 = vadd.xlane.f32.xlu0 %v827
    %v1140 = vpop.xlane.xlu0 %1139
    %1141 = vadd.xlane.f32.xlu0 %v828
    %v1142 = vpop.xlane.xlu0 %1141
    %1143 = vadd.xlane.f32.xlu0 %v829
    %v1144 = vpop.xlane.xlu0 %1143
    %1145 = vadd.xlane.f32.xlu0 %v830
    %v1146 = vpop.xlane.xlu0 %1145
    %1147 = vadd.xlane.f32.xlu0 %v831
    %v1148 = vpop.xlane.xlu0 %1147
    %1149 = vadd.xlane.f32.xlu0 %v832
    %v1150 = vpop.xlane.xlu0 %1149
    %1151 = vadd.xlane.f32.xlu0 %v833
    %v1152 = vpop.xlane.xlu0 %1151
    %1153 = vadd.xlane.f32.xlu0 %v834
    %v1154 = vpop.xlane.xlu0 %1153
    %1155 = vadd.xlane.f32.xlu0 %v835
    %v1156 = vpop.xlane.xlu0 %1155
    %1157 = vadd.xlane.f32.xlu0 %v836
    %v1158 = vpop.xlane.xlu0 %1157
    %1159 = vadd.xlane.f32.xlu0 %v837
    %v1160 = vpop.xlane.xlu0 %1159
    %1161 = vadd.xlane.f32.xlu0 %v838
    %v1162 = vpop.xlane.xlu0 %1161
    %1163 = vadd.xlane.f32.xlu0 %v839
    %v1164 = vpop.xlane.xlu0 %1163
    %1165 = vadd.xlane.f32.xlu0 %v840
    %v1166 = vpop.xlane.xlu0 %1165
    %1167 = vadd.xlane.f32.xlu0 %v841
    %v1168 = vpop.xlane.xlu0 %1167
    %1169 = vadd.xlane.f32.xlu0 %v842
    %v1170 = vpop.xlane.xlu0 %1169
    %1171 = vadd.xlane.f32.xlu0 %v843
    %v1172 = vpop.xlane.xlu0 %1171
    %1173 = vadd.xlane.f32.xlu0 %v844
    %v1174 = vpop.xlane.xlu0 %1173
    %1175 = vadd.xlane.f32.xlu0 %v845
    %v1176 = vpop.xlane.xlu0 %1175
    %1177 = vadd.xlane.f32.xlu0 %v846
    %v1178 = vpop.xlane.xlu0 %1177
    %1179 = vadd.xlane.f32.xlu0 %v847
    %v1180 = vpop.xlane.xlu0 %1179
    %1181 = vadd.xlane.f32.xlu0 %v848
    %v1182 = vpop.xlane.xlu0 %1181
    %1183 = vadd.xlane.f32.xlu0 %v849
    %v1184 = vpop.xlane.xlu0 %1183
    %1185 = vadd.xlane.f32.xlu0 %v850
    %v1186 = vpop.xlane.xlu0 %1185
    %1187 = vadd.xlane.f32.xlu0 %v851
    %v1188 = vpop.xlane.xlu0 %1187
    %1189 = vadd.xlane.f32.xlu0 %v852
    %v1190 = vpop.xlane.xlu0 %1189
    %1191 = vadd.xlane.f32.xlu0 %v853
    %v1192 = vpop.xlane.xlu0 %1191
    %1193 = vadd.xlane.f32.xlu0 %v854
    %v1194 = vpop.xlane.xlu0 %1193
    %1195 = vadd.xlane.f32.xlu0 %v855
    %v1196 = vpop.xlane.xlu0 %1195
    %1197 = vadd.xlane.f32.xlu0 %v856
    %v1198 = vpop.xlane.xlu0 %1197
    %1199 = vadd.xlane.f32.xlu0 %v857
    %v1200 = vpop.xlane.xlu0 %1199
    %1201 = vadd.xlane.f32.xlu0 %v858
    %v1202 = vpop.xlane.xlu0 %1201
    %1203 = vadd.xlane.f32.xlu0 %v859
    %v1204 = vpop.xlane.xlu0 %1203
    %1205 = vadd.xlane.f32.xlu0 %v860
    %v1206 = vpop.xlane.xlu0 %1205
    %1207 = vadd.xlane.f32.xlu0 %v861
    %v1208 = vpop.xlane.xlu0 %1207
    %1209 = vadd.xlane.f32.xlu0 %v862
    %v1210 = vpop.xlane.xlu0 %1209
    %1211 = vadd.xlane.f32.xlu0 %v863
    %v1212 = vpop.xlane.xlu0 %1211
    %1213 = vadd.xlane.f32.xlu0 %v864
    %v1214 = vpop.xlane.xlu0 %1213
    %1215 = vadd.xlane.f32.xlu0 %v865
    %v1216 = vpop.xlane.xlu0 %1215
    %1217 = vadd.xlane.f32.xlu0 %v866
    %v1218 = vpop.xlane.xlu0 %1217
    %1219 = vadd.xlane.f32.xlu0 %v867
    %v1220 = vpop.xlane.xlu0 %1219
    %1221 = vadd.xlane.f32.xlu0 %v868
    %v1222 = vpop.xlane.xlu0 %1221
    %1223 = vadd.xlane.f32.xlu0 %v869
    %v1224 = vpop.xlane.xlu0 %1223
    %1225 = vadd.xlane.f32.xlu0 %v870
    %v1226 = vpop.xlane.xlu0 %1225
    %1227 = vadd.xlane.f32.xlu0 %v871
    %v1228 = vpop.xlane.xlu0 %1227
    %1229 = vadd.xlane.f32.xlu0 %v872
    %v1230 = vpop.xlane.xlu0 %1229
    %1231 = vadd.xlane.f32.xlu0 %v873
    %v1232 = vpop.xlane.xlu0 %1231
    %1233 = vadd.xlane.f32.xlu0 %v874
    %v1234 = vpop.xlane.xlu0 %1233
    %1235 = vadd.xlane.f32.xlu0 %v875
    %v1236 = vpop.xlane.xlu0 %1235
    %1237 = vadd.xlane.f32.xlu0 %v876
    %v1238 = vpop.xlane.xlu0 %1237
    %1239 = vadd.xlane.f32.xlu0 %v877
    %v1240 = vpop.xlane.xlu0 %1239
    %1241 = vadd.xlane.f32.xlu0 %v878
    %v1242 = vpop.xlane.xlu0 %1241
    %1243 = vadd.xlane.f32.xlu0 %v879
    %v1244 = vpop.xlane.xlu0 %1243
    %1245 = vadd.xlane.f32.xlu0 %v880
    %v1246 = vpop.xlane.xlu0 %1245
    %1247 = vadd.xlane.f32.xlu0 %v881
    %v1248 = vpop.xlane.xlu0 %1247
    %1249 = vadd.xlane.f32.xlu0 %v882
    %v1250 = vpop.xlane.xlu0 %1249
    %1251 = vadd.xlane.f32.xlu0 %v883
    %v1252 = vpop.xlane.xlu0 %1251
    %1253 = vadd.xlane.f32.xlu0 %v884
    %v1254 = vpop.xlane.xlu0 %1253
    %1255 = vadd.xlane.f32.xlu0 %v885
    %v1256 = vpop.xlane.xlu0 %1255
    %1257 = vadd.xlane.f32.xlu0 %v886
    %v1258 = vpop.xlane.xlu0 %1257
    %1259 = vadd.xlane.f32.xlu0 %v887
    %v1260 = vpop.xlane.xlu0 %1259
    %1261 = vadd.xlane.f32.xlu0 %v888
    %v1262 = vpop.xlane.xlu0 %1261
    %1263 = vadd.xlane.f32.xlu0 %v889
    %v1264 = vpop.xlane.xlu0 %1263
    %1265 = vadd.xlane.f32.xlu0 %v890
    %v1266 = vpop.xlane.xlu0 %1265
    %1267 = vadd.xlane.f32.xlu0 %v891
    %v1268 = vpop.xlane.xlu0 %1267
    %1269 = vadd.xlane.f32.xlu0 %v892
    %v1270 = vpop.xlane.xlu0 %1269
    %1271 = vadd.xlane.f32.xlu0 %v893
    %v1272 = vpop.xlane.xlu0 %1271
    %1273 = vadd.xlane.f32.xlu0 %v894
    %v1274 = vpop.xlane.xlu0 %1273
    %1275 = vadd.xlane.f32.xlu0 %v895
    %v1276 = vpop.xlane.xlu0 %1275
    %1277 = vadd.xlane.f32.xlu0 %v896
    %v1278 = vpop.xlane.xlu0 %1277
    %1279 = vadd.xlane.f32.xlu0 %v897
    %v1280 = vpop.xlane.xlu0 %1279
    %1281 = vadd.xlane.f32.xlu0 %v898
    %v1282 = vpop.xlane.xlu0 %1281
    %1283 = vadd.xlane.f32.xlu0 %v899
    %v1284 = vpop.xlane.xlu0 %1283
    %1285 = vadd.xlane.f32.xlu0 %v900
    %v1286 = vpop.xlane.xlu0 %1285
    %1287 = vadd.xlane.f32.xlu0 %v901
    %v1288 = vpop.xlane.xlu0 %1287
    %1289 = vadd.xlane.f32.xlu0 %v902
    %v1290 = vpop.xlane.xlu0 %1289
    %1291 = vadd.xlane.f32.xlu0 %v903
    %v1292 = vpop.xlane.xlu0 %1291
    %1293 = vadd.xlane.f32.xlu0 %v904
    %v1294 = vpop.xlane.xlu0 %1293
    %1295 = vadd.xlane.f32.xlu0 %v905
    %v1296 = vpop.xlane.xlu0 %1295
    %1297 = vadd.xlane.f32.xlu0 %v906
    %v1298 = vpop.xlane.xlu0 %1297
    %1299 = vadd.xlane.f32.xlu0 %v907
    %v1300 = vpop.xlane.xlu0 %1299
    %1301 = vadd.xlane.f32.xlu0 %v908
    %v1302 = vpop.xlane.xlu0 %1301
    %1303 = vadd.xlane.f32.xlu0 %v909
    %v1304 = vpop.xlane.xlu0 %1303
    %1305 = vadd.xlane.f32.xlu0 %v910
    %v1306 = vpop.xlane.xlu0 %1305
    %1307 = vadd.xlane.f32.xlu0 %v911
    %v1308 = vpop.xlane.xlu0 %1307
    %1309 = vadd.xlane.f32.xlu0 %v912
    %v1310 = vpop.xlane.xlu0 %1309
    %1311 = vadd.xlane.f32.xlu0 %v913
    %v1312 = vpop.xlane.xlu0 %1311
    %1313 = vadd.xlane.f32.xlu0 %v914
    %v1314 = vpop.xlane.xlu0 %1313
    %1315 = vadd.xlane.f32.xlu0 %v915
    %v1316 = vpop.xlane.xlu0 %1315
    %1317 = vadd.xlane.f32.xlu0 %v916
    %v1318 = vpop.xlane.xlu0 %1317
    %1319 = vadd.xlane.f32.xlu0 %v917
    %v1320 = vpop.xlane.xlu0 %1319
    %1321 = vadd.xlane.f32.xlu0 %v918
    %v1322 = vpop.xlane.xlu0 %1321
    %1323 = vadd.xlane.f32.xlu0 %v919
    %v1324 = vpop.xlane.xlu0 %1323
    %1325 = vadd.xlane.f32.xlu0 %v920
    %v1326 = vpop.xlane.xlu0 %1325
    %1327 = vadd.xlane.f32.xlu0 %v921
    %v1328 = vpop.xlane.xlu0 %1327
    %1329 = vadd.xlane.f32.xlu0 %v922
    %v1330 = vpop.xlane.xlu0 %1329
    %1331 = vadd.xlane.f32.xlu0 %v923
    %v1332 = vpop.xlane.xlu0 %1331
    %1333 = vadd.xlane.f32.xlu0 %v924
    %v1334 = vpop.xlane.xlu0 %1333
    %1335 = vadd.xlane.f32.xlu0 %v925
    %v1336 = vpop.xlane.xlu0 %1335
    %1337 = vadd.xlane.f32.xlu0 %v926
    %v1338 = vpop.xlane.xlu0 %1337
    %1339 = vadd.xlane.f32.xlu0 %v927
    %v1340 = vpop.xlane.xlu0 %1339
    %1341 = vadd.xlane.f32.xlu0 %v928
    %v1342 = vpop.xlane.xlu0 %1341
    %1343 = vadd.xlane.f32.xlu0 %v929
    %v1344 = vpop.xlane.xlu0 %1343
    %1345 = vadd.xlane.f32.xlu0 %v930
    %v1346 = vpop.xlane.xlu0 %1345
    %1347 = vadd.xlane.f32.xlu0 %v931
    %v1348 = vpop.xlane.xlu0 %1347
    %1349 = vadd.xlane.f32.xlu0 %v932
    %v1350 = vpop.xlane.xlu0 %1349
    %1351 = vadd.xlane.f32.xlu0 %v933
    %v1352 = vpop.xlane.xlu0 %1351
    %1353 = vadd.xlane.f32.xlu0 %v934
    %v1354 = vpop.xlane.xlu0 %1353
    %1355 = vadd.xlane.f32.xlu0 %v935
    %v1356 = vpop.xlane.xlu0 %1355
    %1357 = vadd.xlane.f32.xlu0 %v936
    %v1358 = vpop.xlane.xlu0 %1357
    %1359 = vadd.xlane.f32.xlu0 %v937
    %v1360 = vpop.xlane.xlu0 %1359
    %1361 = vadd.xlane.f32.xlu0 %v938
    %v1362 = vpop.xlane.xlu0 %1361
    %1363 = vadd.xlane.f32.xlu0 %v939
    %v1364 = vpop.xlane.xlu0 %1363
    %1365 = vadd.xlane.f32.xlu0 %v940
    %v1366 = vpop.xlane.xlu0 %1365
    %1367 = vadd.xlane.f32.xlu0 %v941
    %v1368 = vpop.xlane.xlu0 %1367
    %1369 = vadd.xlane.f32.xlu0 %v942
    %v1370 = vpop.xlane.xlu0 %1369
    %1371 = vadd.xlane.f32.xlu0 %v943
    %v1372 = vpop.xlane.xlu0 %1371
    %1373 = vadd.xlane.f32.xlu0 %v944
    %v1374 = vpop.xlane.xlu0 %1373
    %1375 = vadd.xlane.f32.xlu0 %v945
    %v1376 = vpop.xlane.xlu0 %1375
    %1377 = vadd.xlane.f32.xlu0 %v946
    %v1378 = vpop.xlane.xlu0 %1377
    %1379 = vadd.xlane.f32.xlu0 %v947
    %v1380 = vpop.xlane.xlu0 %1379
    %1381 = vadd.xlane.f32.xlu0 %v948
    %v1382 = vpop.xlane.xlu0 %1381
    %1383 = vadd.xlane.f32.xlu0 %v949
    %v1384 = vpop.xlane.xlu0 %1383
    %1385 = vadd.xlane.f32.xlu0 %v950
    %v1386 = vpop.xlane.xlu0 %1385
    %1387 = vadd.xlane.f32.xlu0 %v951
    %v1388 = vpop.xlane.xlu0 %1387
    %1389 = vadd.xlane.f32.xlu0 %v952
    %v1390 = vpop.xlane.xlu0 %1389
    %1391 = vadd.xlane.f32.xlu0 %v953
    %v1392 = vpop.xlane.xlu0 %1391
    %1393 = vadd.xlane.f32.xlu0 %v954
    %v1394 = vpop.xlane.xlu0 %1393
    %1395 = vadd.xlane.f32.xlu0 %v955
    %v1396 = vpop.xlane.xlu0 %1395
    %1397 = vadd.xlane.f32.xlu0 %v956
    %v1398 = vpop.xlane.xlu0 %1397
    %1399 = vadd.xlane.f32.xlu0 %v957
    %v1400 = vpop.xlane.xlu0 %1399
    %1401 = vadd.xlane.f32.xlu0 %v958
    %v1402 = vpop.xlane.xlu0 %1401
    %1403 = vadd.xlane.f32.xlu0 %v959
    %v1404 = vpop.xlane.xlu0 %1403
    %1405 = vadd.xlane.f32.xlu0 %v960
    %v1406 = vpop.xlane.xlu0 %1405
    %1407 = vadd.xlane.f32.xlu0 %v961
    %v1408 = vpop.xlane.xlu0 %1407
    %1409 = vadd.xlane.f32.xlu0 %v962
    %v1410 = vpop.xlane.xlu0 %1409
    %1411 = vadd.xlane.f32.xlu0 %v963
    %v1412 = vpop.xlane.xlu0 %1411
    %1413 = vadd.xlane.f32.xlu0 %v964
    %v1414 = vpop.xlane.xlu0 %1413
    %1415 = vadd.xlane.f32.xlu0 %v965
    %v1416 = vpop.xlane.xlu0 %1415
    %1417 = vadd.xlane.f32.xlu0 %v966
    %v1418 = vpop.xlane.xlu0 %1417
    %1419 = vadd.xlane.f32.xlu0 %v967
    %v1420 = vpop.xlane.xlu0 %1419
    %1421 = vadd.xlane.f32.xlu0 %v968
    %v1422 = vpop.xlane.xlu0 %1421
    %1423 = vadd.xlane.f32.xlu0 %v969
    %v1424 = vpop.xlane.xlu0 %1423
    %1425 = vadd.xlane.f32.xlu0 %v970
    %v1426 = vpop.xlane.xlu0 %1425
    %1427 = vadd.xlane.f32.xlu0 %v971
    %v1428 = vpop.xlane.xlu0 %1427
    %1429 = vadd.xlane.f32.xlu0 %v972
    %v1430 = vpop.xlane.xlu0 %1429
    %1431 = vadd.xlane.f32.xlu0 %v973
    %v1432 = vpop.xlane.xlu0 %1431
    %1433 = vadd.xlane.f32.xlu0 %v974
    %v1434 = vpop.xlane.xlu0 %1433
    %1435 = vadd.xlane.f32.xlu0 %v975
    %v1436 = vpop.xlane.xlu0 %1435
    %1437 = vadd.xlane.f32.xlu0 %v976
    %v1438 = vpop.xlane.xlu0 %1437
    %1439 = vadd.xlane.f32.xlu0 %v977
    %v1440 = vpop.xlane.xlu0 %1439
    %1441 = vadd.xlane.f32.xlu0 %v978
    %v1442 = vpop.xlane.xlu0 %1441
    %1443 = vadd.xlane.f32.xlu0 %v979
    %v1444 = vpop.xlane.xlu0 %1443
    %1445 = vadd.xlane.f32.xlu0 %v980
    %v1446 = vpop.xlane.xlu0 %1445
    %1447 = vadd.xlane.f32.xlu0 %v981
    %v1448 = vpop.xlane.xlu0 %1447
    %1449 = vadd.xlane.f32.xlu0 %v982
    %v1450 = vpop.xlane.xlu0 %1449
    %1451 = vadd.xlane.f32.xlu0 %v983
    %v1452 = vpop.xlane.xlu0 %1451
    %1453 = vadd.xlane.f32.xlu0 %v984
    %v1454 = vpop.xlane.xlu0 %1453
    %1455 = vadd.xlane.f32.xlu0 %v985
    %v1456 = vpop.xlane.xlu0 %1455
    %1457 = vadd.xlane.f32.xlu0 %v986
    %v1458 = vpop.xlane.xlu0 %1457
    %1459 = vadd.xlane.f32.xlu0 %v987
    %v1460 = vpop.xlane.xlu0 %1459
    %1461 = vadd.xlane.f32.xlu0 %v988
    %v1462 = vpop.xlane.xlu0 %1461
    %1463 = vadd.xlane.f32.xlu0 %v989
    %v1464 = vpop.xlane.xlu0 %1463
    %1465 = vadd.xlane.f32.xlu0 %v990
    %v1466 = vpop.xlane.xlu0 %1465
    %1467 = vadd.xlane.f32.xlu0 %v991
    %v1468 = vpop.xlane.xlu0 %1467
    %1469 = vadd.xlane.f32.xlu0 %v992
    %v1470 = vpop.xlane.xlu0 %1469
    %1471 = vadd.xlane.f32.xlu0 %v993
    %v1472 = vpop.xlane.xlu0 %1471
    %1473 = vadd.xlane.f32.xlu0 %v994
    %v1474 = vpop.xlane.xlu0 %1473
    %1475 = vadd.xlane.f32.xlu0 %v995
    %v1476 = vpop.xlane.xlu0 %1475
    %1477 = vadd.xlane.f32.xlu0 %v996
    %v1478 = vpop.xlane.xlu0 %1477
    %1479 = vadd.xlane.f32.xlu0 %v997
    %v1480 = vpop.xlane.xlu0 %1479
    %1481 = vadd.xlane.f32.xlu0 %v998
    %v1482 = vpop.xlane.xlu0 %1481
    %1483 = vadd.xlane.f32.xlu0 %v999
    %v1484 = vpop.xlane.xlu0 %1483
    %1485 = vadd.xlane.f32.xlu0 %v1000
    %v1486 = vpop.xlane.xlu0 %1485
    %1487 = vadd.xlane.f32.xlu0 %v1001
    %v1488 = vpop.xlane.xlu0 %1487
    %1489 = vadd.xlane.f32.xlu0 %v1002
    %v1490 = vpop.xlane.xlu0 %1489
    %1491 = vadd.xlane.f32.xlu0 %v1003
    %v1492 = vpop.xlane.xlu0 %1491
    %1493 = vadd.xlane.f32.xlu0 %v1004
    %v1494 = vpop.xlane.xlu0 %1493
    %1495 = vadd.xlane.f32.xlu0 %v1005
    %v1496 = vpop.xlane.xlu0 %1495
    %1497 = vadd.xlane.f32.xlu0 %v1006
    %v1498 = vpop.xlane.xlu0 %1497
    %1499 = vadd.xlane.f32.xlu0 %v1007
    %v1500 = vpop.xlane.xlu0 %1499
    %1501 = vadd.xlane.f32.xlu0 %v1008
    %v1502 = vpop.xlane.xlu0 %1501
    %1503 = vadd.xlane.f32.xlu0 %v1009
    %v1504 = vpop.xlane.xlu0 %1503
    %1505 = vadd.xlane.f32.xlu0 %v1010
    %v1506 = vpop.xlane.xlu0 %1505
    %1507 = vadd.xlane.f32.xlu0 %v1011
    %v1508 = vpop.xlane.xlu0 %1507
    %1509 = vadd.xlane.f32.xlu0 %v1012
    %v1510 = vpop.xlane.xlu0 %1509
    %1511 = vadd.xlane.f32.xlu0 %v1013
    %v1512 = vpop.xlane.xlu0 %1511
    %1513 = vadd.xlane.f32.xlu0 %v1014
    %v1514 = vpop.xlane.xlu0 %1513
    %1515 = vadd.xlane.f32.xlu0 %v1015
    %v1516 = vpop.xlane.xlu0 %1515
    %1517 = vadd.xlane.f32.xlu0 %v1016
    %v1518 = vpop.xlane.xlu0 %1517
    %1519 = vadd.xlane.f32.xlu0 %v1017
    %v1520 = vpop.xlane.xlu0 %1519
    %1521 = vadd.xlane.f32.xlu0 %v1018
    %v1522 = vpop.xlane.xlu0 %1521
    %1523 = vadd.xlane.f32.xlu0 %v1019
    %v1524 = vpop.xlane.xlu0 %1523
    %1525 = vadd.xlane.f32.xlu0 %v1020
    %v1526 = vpop.xlane.xlu0 %1525
    %1527 = vadd.xlane.f32.xlu0 %v1021
    %v1528 = vpop.xlane.xlu0 %1527
    %1529 = vadd.xlane.f32.xlu0 %v1022
    %v1530 = vpop.xlane.xlu0 %1529
    %1531 = vadd.xlane.f32.xlu0 %v1023
    %v1532 = vpop.xlane.xlu0 %1531
    %1533 = vadd.xlane.f32.xlu0 %v1024
    %v1534 = vpop.xlane.xlu0 %1533
    %1535 = vadd.xlane.f32.xlu0 %v1025
    %v1536 = vpop.xlane.xlu0 %1535
    %1537 = vadd.xlane.f32.xlu0 %v1026
    %v1538 = vpop.xlane.xlu0 %1537
    %v1541 = vperm.slane %v381, 0
    %v1542 = vlaneseq
    %v1543 = vshrl.u32 %v1542, 7
    %1545 = vset.pattern.permute.xlu0 %v1543
    %1546 = vperm.xlu0 %1545, %v1541
    %v1547 = vpop.permute.xlu0 %1546
    %v1548 = vlaneseq
    %v1549 = vshrl.u32 %v1548, 7
    %v1550 = vadd.s32 %v1549, 8
    %1551 = vset.pattern.permute.xlu0 %v1550
    %1552 = vperm.xlu0 %1551, %v1541
    %v1553 = vpop.permute.xlu0 %1552
    %v1554 = vlaneseq
    %v1555 = vshrl.u32 %v1554, 7
    %v1556 = vadd.s32 %v1555, 16
    %1557 = vset.pattern.permute.xlu0 %v1556
    %1558 = vperm.xlu0 %1557, %v1541
    %v1559 = vpop.permute.xlu0 %1558
    %v1560 = vlaneseq
    %v1561 = vshrl.u32 %v1560, 7
    %v1562 = vadd.s32 %v1561, 24
    %1563 = vset.pattern.permute.xlu0 %v1562
    %1564 = vperm.xlu0 %1563, %v1541
    %v1565 = vpop.permute.xlu0 %1564
    %v1566 = vlaneseq
    %v1567 = vshrl.u32 %v1566, 7
    %v1568 = vadd.s32 %v1567, 32
    %1569 = vset.pattern.permute.xlu0 %v1568
    %1570 = vperm.xlu0 %1569, %v1541
    %v1571 = vpop.permute.xlu0 %1570
    %v1572 = vlaneseq
    %v1573 = vshrl.u32 %v1572, 7
    %v1574 = vadd.s32 %v1573, 40
    %1575 = vset.pattern.permute.xlu0 %v1574
    %1576 = vperm.xlu0 %1575, %v1541
    %v1577 = vpop.permute.xlu0 %1576
    %v1578 = vlaneseq
    %v1579 = vshrl.u32 %v1578, 7
    %v1580 = vadd.s32 %v1579, 48
    %1581 = vset.pattern.permute.xlu0 %v1580
    %1582 = vperm.xlu0 %1581, %v1541
    %v1583 = vpop.permute.xlu0 %1582
    %v1584 = vlaneseq
    %v1585 = vshrl.u32 %v1584, 7
    %v1586 = vadd.s32 %v1585, 56
    %1587 = vset.pattern.permute.xlu0 %v1586
    %1588 = vperm.xlu0 %1587, %v1541
    %v1589 = vpop.permute.xlu0 %1588
    %v1590 = vlaneseq
    %v1591 = vshrl.u32 %v1590, 7
    %v1592 = vadd.s32 %v1591, 64
    %1593 = vset.pattern.permute.xlu0 %v1592
    %1594 = vperm.xlu0 %1593, %v1541
    %v1595 = vpop.permute.xlu0 %1594
    %v1596 = vlaneseq
    %v1597 = vshrl.u32 %v1596, 7
    %v1598 = vadd.s32 %v1597, 72
    %1599 = vset.pattern.permute.xlu0 %v1598
    %1600 = vperm.xlu0 %1599, %v1541
    %v1601 = vpop.permute.xlu0 %1600
    %v1602 = vlaneseq
    %v1603 = vshrl.u32 %v1602, 7
    %v1604 = vadd.s32 %v1603, 80
    %1605 = vset.pattern.permute.xlu0 %v1604
    %1606 = vperm.xlu0 %1605, %v1541
    %v1607 = vpop.permute.xlu0 %1606
    %v1608 = vlaneseq
    %v1609 = vshrl.u32 %v1608, 7
    %v1610 = vadd.s32 %v1609, 88
    %1611 = vset.pattern.permute.xlu0 %v1610
    %1612 = vperm.xlu0 %1611, %v1541
    %v1613 = vpop.permute.xlu0 %1612
    %v1614 = vlaneseq
    %v1615 = vshrl.u32 %v1614, 7
    %v1616 = vadd.s32 %v1615, 96
    %1617 = vset.pattern.permute.xlu0 %v1616
    %1618 = vperm.xlu0 %1617, %v1541
    %v1619 = vpop.permute.xlu0 %1618
    %v1620 = vlaneseq
    %v1621 = vshrl.u32 %v1620, 7
    %v1622 = vadd.s32 %v1621, 104
    %1623 = vset.pattern.permute.xlu0 %v1622
    %1624 = vperm.xlu0 %1623, %v1541
    %v1625 = vpop.permute.xlu0 %1624
    %v1626 = vlaneseq
    %v1627 = vshrl.u32 %v1626, 7
    %v1628 = vadd.s32 %v1627, 112
    %1629 = vset.pattern.permute.xlu0 %v1628
    %1630 = vperm.xlu0 %1629, %v1541
    %v1631 = vpop.permute.xlu0 %1630
    %v1632 = vlaneseq
    %v1633 = vshrl.u32 %v1632, 7
    %v1634 = vadd.s32 %v1633, 120
    %1635 = vset.pattern.permute.xlu0 %v1634
    %1636 = vperm.xlu0 %1635, %v1541
    %v1637 = vpop.permute.xlu0 %1636
    %v1638 = vperm.slane %v381, 1
    %v1639 = vlaneseq
    %v1640 = vshrl.u32 %v1639, 7
    %1642 = vset.pattern.permute.xlu0 %v1640
    %1643 = vperm.xlu0 %1642, %v1638
    %v1644 = vpop.permute.xlu0 %1643
    %v1645 = vlaneseq
    %v1646 = vshrl.u32 %v1645, 7
    %v1647 = vadd.s32 %v1646, 8
    %1648 = vset.pattern.permute.xlu0 %v1647
    %1649 = vperm.xlu0 %1648, %v1638
    %v1650 = vpop.permute.xlu0 %1649
    %v1651 = vlaneseq
    %v1652 = vshrl.u32 %v1651, 7
    %v1653 = vadd.s32 %v1652, 16
    %1654 = vset.pattern.permute.xlu0 %v1653
    %1655 = vperm.xlu0 %1654, %v1638
    %v1656 = vpop.permute.xlu0 %1655
    %v1657 = vlaneseq
    %v1658 = vshrl.u32 %v1657, 7
    %v1659 = vadd.s32 %v1658, 24
    %1660 = vset.pattern.permute.xlu0 %v1659
    %1661 = vperm.xlu0 %1660, %v1638
    %v1662 = vpop.permute.xlu0 %1661
    %v1663 = vlaneseq
    %v1664 = vshrl.u32 %v1663, 7
    %v1665 = vadd.s32 %v1664, 32
    %1666 = vset.pattern.permute.xlu0 %v1665
    %1667 = vperm.xlu0 %1666, %v1638
    %v1668 = vpop.permute.xlu0 %1667
    %v1669 = vlaneseq
    %v1670 = vshrl.u32 %v1669, 7
    %v1671 = vadd.s32 %v1670, 40
    %1672 = vset.pattern.permute.xlu0 %v1671
    %1673 = vperm.xlu0 %1672, %v1638
    %v1674 = vpop.permute.xlu0 %1673
    %v1675 = vlaneseq
    %v1676 = vshrl.u32 %v1675, 7
    %v1677 = vadd.s32 %v1676, 48
    %1678 = vset.pattern.permute.xlu0 %v1677
    %1679 = vperm.xlu0 %1678, %v1638
    %v1680 = vpop.permute.xlu0 %1679
    %v1681 = vlaneseq
    %v1682 = vshrl.u32 %v1681, 7
    %v1683 = vadd.s32 %v1682, 56
    %1684 = vset.pattern.permute.xlu0 %v1683
    %1685 = vperm.xlu0 %1684, %v1638
    %v1686 = vpop.permute.xlu0 %1685
    %v1687 = vlaneseq
    %v1688 = vshrl.u32 %v1687, 7
    %v1689 = vadd.s32 %v1688, 64
    %1690 = vset.pattern.permute.xlu0 %v1689
    %1691 = vperm.xlu0 %1690, %v1638
    %v1692 = vpop.permute.xlu0 %1691
    %v1693 = vlaneseq
    %v1694 = vshrl.u32 %v1693, 7
    %v1695 = vadd.s32 %v1694, 72
    %1696 = vset.pattern.permute.xlu0 %v1695
    %1697 = vperm.xlu0 %1696, %v1638
    %v1698 = vpop.permute.xlu0 %1697
    %v1699 = vlaneseq
    %v1700 = vshrl.u32 %v1699, 7
    %v1701 = vadd.s32 %v1700, 80
    %1702 = vset.pattern.permute.xlu0 %v1701
    %1703 = vperm.xlu0 %1702, %v1638
    %v1704 = vpop.permute.xlu0 %1703
    %v1705 = vlaneseq
    %v1706 = vshrl.u32 %v1705, 7
    %v1707 = vadd.s32 %v1706, 88
    %1708 = vset.pattern.permute.xlu0 %v1707
    %1709 = vperm.xlu0 %1708, %v1638
    %v1710 = vpop.permute.xlu0 %1709
    %v1711 = vlaneseq
    %v1712 = vshrl.u32 %v1711, 7
    %v1713 = vadd.s32 %v1712, 96
    %1714 = vset.pattern.permute.xlu0 %v1713
    %1715 = vperm.xlu0 %1714, %v1638
    %v1716 = vpop.permute.xlu0 %1715
    %v1717 = vlaneseq
    %v1718 = vshrl.u32 %v1717, 7
    %v1719 = vadd.s32 %v1718, 104
    %1720 = vset.pattern.permute.xlu0 %v1719
    %1721 = vperm.xlu0 %1720, %v1638
    %v1722 = vpop.permute.xlu0 %1721
    %v1723 = vlaneseq
    %v1724 = vshrl.u32 %v1723, 7
    %v1725 = vadd.s32 %v1724, 112
    %1726 = vset.pattern.permute.xlu0 %v1725
    %1727 = vperm.xlu0 %1726, %v1638
    %v1728 = vpop.permute.xlu0 %1727
    %v1729 = vlaneseq
    %v1730 = vshrl.u32 %v1729, 7
    %v1731 = vadd.s32 %v1730, 120
    %1732 = vset.pattern.permute.xlu0 %v1731
    %1733 = vperm.xlu0 %1732, %v1638
    %v1734 = vpop.permute.xlu0 %1733
    %v1735 = vperm.slane %v381, 2
    %v1736 = vlaneseq
    %v1737 = vshrl.u32 %v1736, 7
    %1739 = vset.pattern.permute.xlu0 %v1737
    %1740 = vperm.xlu0 %1739, %v1735
    %v1741 = vpop.permute.xlu0 %1740
    %v1742 = vlaneseq
    %v1743 = vshrl.u32 %v1742, 7
    %v1744 = vadd.s32 %v1743, 8
    %1745 = vset.pattern.permute.xlu0 %v1744
    %1746 = vperm.xlu0 %1745, %v1735
    %v1747 = vpop.permute.xlu0 %1746
    %v1748 = vlaneseq
    %v1749 = vshrl.u32 %v1748, 7
    %v1750 = vadd.s32 %v1749, 16
    %1751 = vset.pattern.permute.xlu0 %v1750
    %1752 = vperm.xlu0 %1751, %v1735
    %v1753 = vpop.permute.xlu0 %1752
    %v1754 = vlaneseq
    %v1755 = vshrl.u32 %v1754, 7
    %v1756 = vadd.s32 %v1755, 24
    %1757 = vset.pattern.permute.xlu0 %v1756
    %1758 = vperm.xlu0 %1757, %v1735
    %v1759 = vpop.permute.xlu0 %1758
    %v1760 = vlaneseq
    %v1761 = vshrl.u32 %v1760, 7
    %v1762 = vadd.s32 %v1761, 32
    %1763 = vset.pattern.permute.xlu0 %v1762
    %1764 = vperm.xlu0 %1763, %v1735
    %v1765 = vpop.permute.xlu0 %1764
    %v1766 = vlaneseq
    %v1767 = vshrl.u32 %v1766, 7
    %v1768 = vadd.s32 %v1767, 40
    %1769 = vset.pattern.permute.xlu0 %v1768
    %1770 = vperm.xlu0 %1769, %v1735
    %v1771 = vpop.permute.xlu0 %1770
    %v1772 = vlaneseq
    %v1773 = vshrl.u32 %v1772, 7
    %v1774 = vadd.s32 %v1773, 48
    %1775 = vset.pattern.permute.xlu0 %v1774
    %1776 = vperm.xlu0 %1775, %v1735
    %v1777 = vpop.permute.xlu0 %1776
    %v1778 = vlaneseq
    %v1779 = vshrl.u32 %v1778, 7
    %v1780 = vadd.s32 %v1779, 56
    %1781 = vset.pattern.permute.xlu0 %v1780
    %1782 = vperm.xlu0 %1781, %v1735
    %v1783 = vpop.permute.xlu0 %1782
    %v1784 = vlaneseq
    %v1785 = vshrl.u32 %v1784, 7
    %v1786 = vadd.s32 %v1785, 64
    %1787 = vset.pattern.permute.xlu0 %v1786
    %1788 = vperm.xlu0 %1787, %v1735
    %v1789 = vpop.permute.xlu0 %1788
    %v1790 = vlaneseq
    %v1791 = vshrl.u32 %v1790, 7
    %v1792 = vadd.s32 %v1791, 72
    %1793 = vset.pattern.permute.xlu0 %v1792
    %1794 = vperm.xlu0 %1793, %v1735
    %v1795 = vpop.permute.xlu0 %1794
    %v1796 = vlaneseq
    %v1797 = vshrl.u32 %v1796, 7
    %v1798 = vadd.s32 %v1797, 80
    %1799 = vset.pattern.permute.xlu0 %v1798
    %1800 = vperm.xlu0 %1799, %v1735
    %v1801 = vpop.permute.xlu0 %1800
    %v1802 = vlaneseq
    %v1803 = vshrl.u32 %v1802, 7
    %v1804 = vadd.s32 %v1803, 88
    %1805 = vset.pattern.permute.xlu0 %v1804
    %1806 = vperm.xlu0 %1805, %v1735
    %v1807 = vpop.permute.xlu0 %1806
    %v1808 = vlaneseq
    %v1809 = vshrl.u32 %v1808, 7
    %v1810 = vadd.s32 %v1809, 96
    %1811 = vset.pattern.permute.xlu0 %v1810
    %1812 = vperm.xlu0 %1811, %v1735
    %v1813 = vpop.permute.xlu0 %1812
    %v1814 = vlaneseq
    %v1815 = vshrl.u32 %v1814, 7
    %v1816 = vadd.s32 %v1815, 104
    %1817 = vset.pattern.permute.xlu0 %v1816
    %1818 = vperm.xlu0 %1817, %v1735
    %v1819 = vpop.permute.xlu0 %1818
    %v1820 = vlaneseq
    %v1821 = vshrl.u32 %v1820, 7
    %v1822 = vadd.s32 %v1821, 112
    %1823 = vset.pattern.permute.xlu0 %v1822
    %1824 = vperm.xlu0 %1823, %v1735
    %v1825 = vpop.permute.xlu0 %1824
    %v1826 = vlaneseq
    %v1827 = vshrl.u32 %v1826, 7
    %v1828 = vadd.s32 %v1827, 120
    %1829 = vset.pattern.permute.xlu0 %v1828
    %1830 = vperm.xlu0 %1829, %v1735
    %v1831 = vpop.permute.xlu0 %1830
    %v1832 = vperm.slane %v381, 3
    %v1833 = vlaneseq
    %v1834 = vshrl.u32 %v1833, 7
    %1836 = vset.pattern.permute.xlu0 %v1834
    %1837 = vperm.xlu0 %1836, %v1832
    %v1838 = vpop.permute.xlu0 %1837
    %v1839 = vlaneseq
    %v1840 = vshrl.u32 %v1839, 7
    %v1841 = vadd.s32 %v1840, 8
    %1842 = vset.pattern.permute.xlu0 %v1841
    %1843 = vperm.xlu0 %1842, %v1832
    %v1844 = vpop.permute.xlu0 %1843
    %v1845 = vlaneseq
    %v1846 = vshrl.u32 %v1845, 7
    %v1847 = vadd.s32 %v1846, 16
    %1848 = vset.pattern.permute.xlu0 %v1847
    %1849 = vperm.xlu0 %1848, %v1832
    %v1850 = vpop.permute.xlu0 %1849
    %v1851 = vlaneseq
    %v1852 = vshrl.u32 %v1851, 7
    %v1853 = vadd.s32 %v1852, 24
    %1854 = vset.pattern.permute.xlu0 %v1853
    %1855 = vperm.xlu0 %1854, %v1832
    %v1856 = vpop.permute.xlu0 %1855
    %v1857 = vlaneseq
    %v1858 = vshrl.u32 %v1857, 7
    %v1859 = vadd.s32 %v1858, 32
    %1860 = vset.pattern.permute.xlu0 %v1859
    %1861 = vperm.xlu0 %1860, %v1832
    %v1862 = vpop.permute.xlu0 %1861
    %v1863 = vlaneseq
    %v1864 = vshrl.u32 %v1863, 7
    %v1865 = vadd.s32 %v1864, 40
    %1866 = vset.pattern.permute.xlu0 %v1865
    %1867 = vperm.xlu0 %1866, %v1832
    %v1868 = vpop.permute.xlu0 %1867
    %v1869 = vlaneseq
    %v1870 = vshrl.u32 %v1869, 7
    %v1871 = vadd.s32 %v1870, 48
    %1872 = vset.pattern.permute.xlu0 %v1871
    %1873 = vperm.xlu0 %1872, %v1832
    %v1874 = vpop.permute.xlu0 %1873
    %v1875 = vlaneseq
    %v1876 = vshrl.u32 %v1875, 7
    %v1877 = vadd.s32 %v1876, 56
    %1878 = vset.pattern.permute.xlu0 %v1877
    %1879 = vperm.xlu0 %1878, %v1832
    %v1880 = vpop.permute.xlu0 %1879
    %v1881 = vlaneseq
    %v1882 = vshrl.u32 %v1881, 7
    %v1883 = vadd.s32 %v1882, 64
    %1884 = vset.pattern.permute.xlu0 %v1883
    %1885 = vperm.xlu0 %1884, %v1832
    %v1886 = vpop.permute.xlu0 %1885
    %v1887 = vlaneseq
    %v1888 = vshrl.u32 %v1887, 7
    %v1889 = vadd.s32 %v1888, 72
    %1890 = vset.pattern.permute.xlu0 %v1889
    %1891 = vperm.xlu0 %1890, %v1832
    %v1892 = vpop.permute.xlu0 %1891
    %v1893 = vlaneseq
    %v1894 = vshrl.u32 %v1893, 7
    %v1895 = vadd.s32 %v1894, 80
    %1896 = vset.pattern.permute.xlu0 %v1895
    %1897 = vperm.xlu0 %1896, %v1832
    %v1898 = vpop.permute.xlu0 %1897
    %v1899 = vlaneseq
    %v1900 = vshrl.u32 %v1899, 7
    %v1901 = vadd.s32 %v1900, 88
    %1902 = vset.pattern.permute.xlu0 %v1901
    %1903 = vperm.xlu0 %1902, %v1832
    %v1904 = vpop.permute.xlu0 %1903
    %v1905 = vlaneseq
    %v1906 = vshrl.u32 %v1905, 7
    %v1907 = vadd.s32 %v1906, 96
    %1908 = vset.pattern.permute.xlu0 %v1907
    %1909 = vperm.xlu0 %1908, %v1832
    %v1910 = vpop.permute.xlu0 %1909
    %v1911 = vlaneseq
    %v1912 = vshrl.u32 %v1911, 7
    %v1913 = vadd.s32 %v1912, 104
    %1914 = vset.pattern.permute.xlu0 %v1913
    %1915 = vperm.xlu0 %1914, %v1832
    %v1916 = vpop.permute.xlu0 %1915
    %v1917 = vlaneseq
    %v1918 = vshrl.u32 %v1917, 7
    %v1919 = vadd.s32 %v1918, 112
    %1920 = vset.pattern.permute.xlu0 %v1919
    %1921 = vperm.xlu0 %1920, %v1832
    %v1922 = vpop.permute.xlu0 %1921
    %v1923 = vlaneseq
    %v1924 = vshrl.u32 %v1923, 7
    %v1925 = vadd.s32 %v1924, 120
    %1926 = vset.pattern.permute.xlu0 %v1925
    %1927 = vperm.xlu0 %1926, %v1832
    %v1928 = vpop.permute.xlu0 %1927
    %v1929 = vperm.slane %v381, 4
    %v1930 = vlaneseq
    %v1931 = vshrl.u32 %v1930, 7
    %1933 = vset.pattern.permute.xlu0 %v1931
    %1934 = vperm.xlu0 %1933, %v1929
    %v1935 = vpop.permute.xlu0 %1934
    %v1936 = vlaneseq
    %v1937 = vshrl.u32 %v1936, 7
    %v1938 = vadd.s32 %v1937, 8
    %1939 = vset.pattern.permute.xlu0 %v1938
    %1940 = vperm.xlu0 %1939, %v1929
    %v1941 = vpop.permute.xlu0 %1940
    %v1942 = vlaneseq
    %v1943 = vshrl.u32 %v1942, 7
    %v1944 = vadd.s32 %v1943, 16
    %1945 = vset.pattern.permute.xlu0 %v1944
    %1946 = vperm.xlu0 %1945, %v1929
    %v1947 = vpop.permute.xlu0 %1946
    %v1948 = vlaneseq
    %v1949 = vshrl.u32 %v1948, 7
    %v1950 = vadd.s32 %v1949, 24
    %1951 = vset.pattern.permute.xlu0 %v1950
    %1952 = vperm.xlu0 %1951, %v1929
    %v1953 = vpop.permute.xlu0 %1952
    %v1954 = vlaneseq
    %v1955 = vshrl.u32 %v1954, 7
    %v1956 = vadd.s32 %v1955, 32
    %1957 = vset.pattern.permute.xlu0 %v1956
    %1958 = vperm.xlu0 %1957, %v1929
    %v1959 = vpop.permute.xlu0 %1958
    %v1960 = vlaneseq
    %v1961 = vshrl.u32 %v1960, 7
    %v1962 = vadd.s32 %v1961, 40
    %1963 = vset.pattern.permute.xlu0 %v1962
    %1964 = vperm.xlu0 %1963, %v1929
    %v1965 = vpop.permute.xlu0 %1964
    %v1966 = vlaneseq
    %v1967 = vshrl.u32 %v1966, 7
    %v1968 = vadd.s32 %v1967, 48
    %1969 = vset.pattern.permute.xlu0 %v1968
    %1970 = vperm.xlu0 %1969, %v1929
    %v1971 = vpop.permute.xlu0 %1970
    %v1972 = vlaneseq
    %v1973 = vshrl.u32 %v1972, 7
    %v1974 = vadd.s32 %v1973, 56
    %1975 = vset.pattern.permute.xlu0 %v1974
    %1976 = vperm.xlu0 %1975, %v1929
    %v1977 = vpop.permute.xlu0 %1976
    %v1978 = vlaneseq
    %v1979 = vshrl.u32 %v1978, 7
    %v1980 = vadd.s32 %v1979, 64
    %1981 = vset.pattern.permute.xlu0 %v1980
    %1982 = vperm.xlu0 %1981, %v1929
    %v1983 = vpop.permute.xlu0 %1982
    %v1984 = vlaneseq
    %v1985 = vshrl.u32 %v1984, 7
    %v1986 = vadd.s32 %v1985, 72
    %1987 = vset.pattern.permute.xlu0 %v1986
    %1988 = vperm.xlu0 %1987, %v1929
    %v1989 = vpop.permute.xlu0 %1988
    %v1990 = vlaneseq
    %v1991 = vshrl.u32 %v1990, 7
    %v1992 = vadd.s32 %v1991, 80
    %1993 = vset.pattern.permute.xlu0 %v1992
    %1994 = vperm.xlu0 %1993, %v1929
    %v1995 = vpop.permute.xlu0 %1994
    %v1996 = vlaneseq
    %v1997 = vshrl.u32 %v1996, 7
    %v1998 = vadd.s32 %v1997, 88
    %1999 = vset.pattern.permute.xlu0 %v1998
    %2000 = vperm.xlu0 %1999, %v1929
    %v2001 = vpop.permute.xlu0 %2000
    %v2002 = vlaneseq
    %v2003 = vshrl.u32 %v2002, 7
    %v2004 = vadd.s32 %v2003, 96
    %2005 = vset.pattern.permute.xlu0 %v2004
    %2006 = vperm.xlu0 %2005, %v1929
    %v2007 = vpop.permute.xlu0 %2006
    %v2008 = vlaneseq
    %v2009 = vshrl.u32 %v2008, 7
    %v2010 = vadd.s32 %v2009, 104
    %2011 = vset.pattern.permute.xlu0 %v2010
    %2012 = vperm.xlu0 %2011, %v1929
    %v2013 = vpop.permute.xlu0 %2012
    %v2014 = vlaneseq
    %v2015 = vshrl.u32 %v2014, 7
    %v2016 = vadd.s32 %v2015, 112
    %2017 = vset.pattern.permute.xlu0 %v2016
    %2018 = vperm.xlu0 %2017, %v1929
    %v2019 = vpop.permute.xlu0 %2018
    %v2020 = vlaneseq
    %v2021 = vshrl.u32 %v2020, 7
    %v2022 = vadd.s32 %v2021, 120
    %2023 = vset.pattern.permute.xlu0 %v2022
    %2024 = vperm.xlu0 %2023, %v1929
    %v2025 = vpop.permute.xlu0 %2024
    %v2026 = vperm.slane %v381, 5
    %v2027 = vlaneseq
    %v2028 = vshrl.u32 %v2027, 7
    %2030 = vset.pattern.permute.xlu0 %v2028
    %2031 = vperm.xlu0 %2030, %v2026
    %v2032 = vpop.permute.xlu0 %2031
    %v2033 = vlaneseq
    %v2034 = vshrl.u32 %v2033, 7
    %v2035 = vadd.s32 %v2034, 8
    %2036 = vset.pattern.permute.xlu0 %v2035
    %2037 = vperm.xlu0 %2036, %v2026
    %v2038 = vpop.permute.xlu0 %2037
    %v2039 = vlaneseq
    %v2040 = vshrl.u32 %v2039, 7
    %v2041 = vadd.s32 %v2040, 16
    %2042 = vset.pattern.permute.xlu0 %v2041
    %2043 = vperm.xlu0 %2042, %v2026
    %v2044 = vpop.permute.xlu0 %2043
    %v2045 = vlaneseq
    %v2046 = vshrl.u32 %v2045, 7
    %v2047 = vadd.s32 %v2046, 24
    %2048 = vset.pattern.permute.xlu0 %v2047
    %2049 = vperm.xlu0 %2048, %v2026
    %v2050 = vpop.permute.xlu0 %2049
    %v2051 = vlaneseq
    %v2052 = vshrl.u32 %v2051, 7
    %v2053 = vadd.s32 %v2052, 32
    %2054 = vset.pattern.permute.xlu0 %v2053
    %2055 = vperm.xlu0 %2054, %v2026
    %v2056 = vpop.permute.xlu0 %2055
    %v2057 = vlaneseq
    %v2058 = vshrl.u32 %v2057, 7
    %v2059 = vadd.s32 %v2058, 40
    %2060 = vset.pattern.permute.xlu0 %v2059
    %2061 = vperm.xlu0 %2060, %v2026
    %v2062 = vpop.permute.xlu0 %2061
    %v2063 = vlaneseq
    %v2064 = vshrl.u32 %v2063, 7
    %v2065 = vadd.s32 %v2064, 48
    %2066 = vset.pattern.permute.xlu0 %v2065
    %2067 = vperm.xlu0 %2066, %v2026
    %v2068 = vpop.permute.xlu0 %2067
    %v2069 = vlaneseq
    %v2070 = vshrl.u32 %v2069, 7
    %v2071 = vadd.s32 %v2070, 56
    %2072 = vset.pattern.permute.xlu0 %v2071
    %2073 = vperm.xlu0 %2072, %v2026
    %v2074 = vpop.permute.xlu0 %2073
    %v2075 = vlaneseq
    %v2076 = vshrl.u32 %v2075, 7
    %v2077 = vadd.s32 %v2076, 64
    %2078 = vset.pattern.permute.xlu0 %v2077
    %2079 = vperm.xlu0 %2078, %v2026
    %v2080 = vpop.permute.xlu0 %2079
    %v2081 = vlaneseq
    %v2082 = vshrl.u32 %v2081, 7
    %v2083 = vadd.s32 %v2082, 72
    %2084 = vset.pattern.permute.xlu0 %v2083
    %2085 = vperm.xlu0 %2084, %v2026
    %v2086 = vpop.permute.xlu0 %2085
    %v2087 = vlaneseq
    %v2088 = vshrl.u32 %v2087, 7
    %v2089 = vadd.s32 %v2088, 80
    %2090 = vset.pattern.permute.xlu0 %v2089
    %2091 = vperm.xlu0 %2090, %v2026
    %v2092 = vpop.permute.xlu0 %2091
    %v2093 = vlaneseq
    %v2094 = vshrl.u32 %v2093, 7
    %v2095 = vadd.s32 %v2094, 88
    %2096 = vset.pattern.permute.xlu0 %v2095
    %2097 = vperm.xlu0 %2096, %v2026
    %v2098 = vpop.permute.xlu0 %2097
    %v2099 = vlaneseq
    %v2100 = vshrl.u32 %v2099, 7
    %v2101 = vadd.s32 %v2100, 96
    %2102 = vset.pattern.permute.xlu0 %v2101
    %2103 = vperm.xlu0 %2102, %v2026
    %v2104 = vpop.permute.xlu0 %2103
    %v2105 = vlaneseq
    %v2106 = vshrl.u32 %v2105, 7
    %v2107 = vadd.s32 %v2106, 104
    %2108 = vset.pattern.permute.xlu0 %v2107
    %2109 = vperm.xlu0 %2108, %v2026
    %v2110 = vpop.permute.xlu0 %2109
    %v2111 = vlaneseq
    %v2112 = vshrl.u32 %v2111, 7
    %v2113 = vadd.s32 %v2112, 112
    %2114 = vset.pattern.permute.xlu0 %v2113
    %2115 = vperm.xlu0 %2114, %v2026
    %v2116 = vpop.permute.xlu0 %2115
    %v2117 = vlaneseq
    %v2118 = vshrl.u32 %v2117, 7
    %v2119 = vadd.s32 %v2118, 120
    %2120 = vset.pattern.permute.xlu0 %v2119
    %2121 = vperm.xlu0 %2120, %v2026
    %v2122 = vpop.permute.xlu0 %2121
    %v2123 = vperm.slane %v381, 6
    %v2124 = vlaneseq
    %v2125 = vshrl.u32 %v2124, 7
    %2127 = vset.pattern.permute.xlu0 %v2125
    %2128 = vperm.xlu0 %2127, %v2123
    %v2129 = vpop.permute.xlu0 %2128
    %v2130 = vlaneseq
    %v2131 = vshrl.u32 %v2130, 7
    %v2132 = vadd.s32 %v2131, 8
    %2133 = vset.pattern.permute.xlu0 %v2132
    %2134 = vperm.xlu0 %2133, %v2123
    %v2135 = vpop.permute.xlu0 %2134
    %v2136 = vlaneseq
    %v2137 = vshrl.u32 %v2136, 7
    %v2138 = vadd.s32 %v2137, 16
    %2139 = vset.pattern.permute.xlu0 %v2138
    %2140 = vperm.xlu0 %2139, %v2123
    %v2141 = vpop.permute.xlu0 %2140
    %v2142 = vlaneseq
    %v2143 = vshrl.u32 %v2142, 7
    %v2144 = vadd.s32 %v2143, 24
    %2145 = vset.pattern.permute.xlu0 %v2144
    %2146 = vperm.xlu0 %2145, %v2123
    %v2147 = vpop.permute.xlu0 %2146
    %v2148 = vlaneseq
    %v2149 = vshrl.u32 %v2148, 7
    %v2150 = vadd.s32 %v2149, 32
    %2151 = vset.pattern.permute.xlu0 %v2150
    %2152 = vperm.xlu0 %2151, %v2123
    %v2153 = vpop.permute.xlu0 %2152
    %v2154 = vlaneseq
    %v2155 = vshrl.u32 %v2154, 7
    %v2156 = vadd.s32 %v2155, 40
    %2157 = vset.pattern.permute.xlu0 %v2156
    %2158 = vperm.xlu0 %2157, %v2123
    %v2159 = vpop.permute.xlu0 %2158
    %v2160 = vlaneseq
    %v2161 = vshrl.u32 %v2160, 7
    %v2162 = vadd.s32 %v2161, 48
    %2163 = vset.pattern.permute.xlu0 %v2162
    %2164 = vperm.xlu0 %2163, %v2123
    %v2165 = vpop.permute.xlu0 %2164
    %v2166 = vlaneseq
    %v2167 = vshrl.u32 %v2166, 7
    %v2168 = vadd.s32 %v2167, 56
    %2169 = vset.pattern.permute.xlu0 %v2168
    %2170 = vperm.xlu0 %2169, %v2123
    %v2171 = vpop.permute.xlu0 %2170
    %v2172 = vlaneseq
    %v2173 = vshrl.u32 %v2172, 7
    %v2174 = vadd.s32 %v2173, 64
    %2175 = vset.pattern.permute.xlu0 %v2174
    %2176 = vperm.xlu0 %2175, %v2123
    %v2177 = vpop.permute.xlu0 %2176
    %v2178 = vlaneseq
    %v2179 = vshrl.u32 %v2178, 7
    %v2180 = vadd.s32 %v2179, 72
    %2181 = vset.pattern.permute.xlu0 %v2180
    %2182 = vperm.xlu0 %2181, %v2123
    %v2183 = vpop.permute.xlu0 %2182
    %v2184 = vlaneseq
    %v2185 = vshrl.u32 %v2184, 7
    %v2186 = vadd.s32 %v2185, 80
    %2187 = vset.pattern.permute.xlu0 %v2186
    %2188 = vperm.xlu0 %2187, %v2123
    %v2189 = vpop.permute.xlu0 %2188
    %v2190 = vlaneseq
    %v2191 = vshrl.u32 %v2190, 7
    %v2192 = vadd.s32 %v2191, 88
    %2193 = vset.pattern.permute.xlu0 %v2192
    %2194 = vperm.xlu0 %2193, %v2123
    %v2195 = vpop.permute.xlu0 %2194
    %v2196 = vlaneseq
    %v2197 = vshrl.u32 %v2196, 7
    %v2198 = vadd.s32 %v2197, 96
    %2199 = vset.pattern.permute.xlu0 %v2198
    %2200 = vperm.xlu0 %2199, %v2123
    %v2201 = vpop.permute.xlu0 %2200
    %v2202 = vlaneseq
    %v2203 = vshrl.u32 %v2202, 7
    %v2204 = vadd.s32 %v2203, 104
    %2205 = vset.pattern.permute.xlu0 %v2204
    %2206 = vperm.xlu0 %2205, %v2123
    %v2207 = vpop.permute.xlu0 %2206
    %v2208 = vlaneseq
    %v2209 = vshrl.u32 %v2208, 7
    %v2210 = vadd.s32 %v2209, 112
    %2211 = vset.pattern.permute.xlu0 %v2210
    %2212 = vperm.xlu0 %2211, %v2123
    %v2213 = vpop.permute.xlu0 %2212
    %v2214 = vlaneseq
    %v2215 = vshrl.u32 %v2214, 7
    %v2216 = vadd.s32 %v2215, 120
    %2217 = vset.pattern.permute.xlu0 %v2216
    %2218 = vperm.xlu0 %2217, %v2123
    %v2219 = vpop.permute.xlu0 %2218
    %v2220 = vperm.slane %v381, 7
    %v2221 = vlaneseq
    %v2222 = vshrl.u32 %v2221, 7
    %2224 = vset.pattern.permute.xlu0 %v2222
    %2225 = vperm.xlu0 %2224, %v2220
    %v2226 = vpop.permute.xlu0 %2225
    %v2227 = vlaneseq
    %v2228 = vshrl.u32 %v2227, 7
    %v2229 = vadd.s32 %v2228, 8
    %2230 = vset.pattern.permute.xlu0 %v2229
    %2231 = vperm.xlu0 %2230, %v2220
    %v2232 = vpop.permute.xlu0 %2231
    %v2233 = vlaneseq
    %v2234 = vshrl.u32 %v2233, 7
    %v2235 = vadd.s32 %v2234, 16
    %2236 = vset.pattern.permute.xlu0 %v2235
    %2237 = vperm.xlu0 %2236, %v2220
    %v2238 = vpop.permute.xlu0 %2237
    %v2239 = vlaneseq
    %v2240 = vshrl.u32 %v2239, 7
    %v2241 = vadd.s32 %v2240, 24
    %2242 = vset.pattern.permute.xlu0 %v2241
    %2243 = vperm.xlu0 %2242, %v2220
    %v2244 = vpop.permute.xlu0 %2243
    %v2245 = vlaneseq
    %v2246 = vshrl.u32 %v2245, 7
    %v2247 = vadd.s32 %v2246, 32
    %2248 = vset.pattern.permute.xlu0 %v2247
    %2249 = vperm.xlu0 %2248, %v2220
    %v2250 = vpop.permute.xlu0 %2249
    %v2251 = vlaneseq
    %v2252 = vshrl.u32 %v2251, 7
    %v2253 = vadd.s32 %v2252, 40
    %2254 = vset.pattern.permute.xlu0 %v2253
    %2255 = vperm.xlu0 %2254, %v2220
    %v2256 = vpop.permute.xlu0 %2255
    %v2257 = vlaneseq
    %v2258 = vshrl.u32 %v2257, 7
    %v2259 = vadd.s32 %v2258, 48
    %2260 = vset.pattern.permute.xlu0 %v2259
    %2261 = vperm.xlu0 %2260, %v2220
    %v2262 = vpop.permute.xlu0 %2261
    %v2263 = vlaneseq
    %v2264 = vshrl.u32 %v2263, 7
    %v2265 = vadd.s32 %v2264, 56
    %2266 = vset.pattern.permute.xlu0 %v2265
    %2267 = vperm.xlu0 %2266, %v2220
    %v2268 = vpop.permute.xlu0 %2267
    %v2269 = vlaneseq
    %v2270 = vshrl.u32 %v2269, 7
    %v2271 = vadd.s32 %v2270, 64
    %2272 = vset.pattern.permute.xlu0 %v2271
    %2273 = vperm.xlu0 %2272, %v2220
    %v2274 = vpop.permute.xlu0 %2273
    %v2275 = vlaneseq
    %v2276 = vshrl.u32 %v2275, 7
    %v2277 = vadd.s32 %v2276, 72
    %2278 = vset.pattern.permute.xlu0 %v2277
    %2279 = vperm.xlu0 %2278, %v2220
    %v2280 = vpop.permute.xlu0 %2279
    %v2281 = vlaneseq
    %v2282 = vshrl.u32 %v2281, 7
    %v2283 = vadd.s32 %v2282, 80
    %2284 = vset.pattern.permute.xlu0 %v2283
    %2285 = vperm.xlu0 %2284, %v2220
    %v2286 = vpop.permute.xlu0 %2285
    %v2287 = vlaneseq
    %v2288 = vshrl.u32 %v2287, 7
    %v2289 = vadd.s32 %v2288, 88
    %2290 = vset.pattern.permute.xlu0 %v2289
    %2291 = vperm.xlu0 %2290, %v2220
    %v2292 = vpop.permute.xlu0 %2291
    %v2293 = vlaneseq
    %v2294 = vshrl.u32 %v2293, 7
    %v2295 = vadd.s32 %v2294, 96
    %2296 = vset.pattern.permute.xlu0 %v2295
    %2297 = vperm.xlu0 %2296, %v2220
    %v2298 = vpop.permute.xlu0 %2297
    %v2299 = vlaneseq
    %v2300 = vshrl.u32 %v2299, 7
    %v2301 = vadd.s32 %v2300, 104
    %2302 = vset.pattern.permute.xlu0 %v2301
    %2303 = vperm.xlu0 %2302, %v2220
    %v2304 = vpop.permute.xlu0 %2303
    %v2305 = vlaneseq
    %v2306 = vshrl.u32 %v2305, 7
    %v2307 = vadd.s32 %v2306, 112
    %2308 = vset.pattern.permute.xlu0 %v2307
    %2309 = vperm.xlu0 %2308, %v2220
    %v2310 = vpop.permute.xlu0 %2309
    %v2311 = vlaneseq
    %v2312 = vshrl.u32 %v2311, 7
    %v2313 = vadd.s32 %v2312, 120
    %2314 = vset.pattern.permute.xlu0 %v2313
    %2315 = vperm.xlu0 %2314, %v2220
    %v2316 = vpop.permute.xlu0 %2315
    %v2317 = vperm.slane %v382, 0
    %v2318 = vlaneseq
    %v2319 = vshrl.u32 %v2318, 7
    %2321 = vset.pattern.permute.xlu0 %v2319
    %2322 = vperm.xlu0 %2321, %v2317
    %v2323 = vpop.permute.xlu0 %2322
    %v2324 = vlaneseq
    %v2325 = vshrl.u32 %v2324, 7
    %v2326 = vadd.s32 %v2325, 8
    %2327 = vset.pattern.permute.xlu0 %v2326
    %2328 = vperm.xlu0 %2327, %v2317
    %v2329 = vpop.permute.xlu0 %2328
    %v2330 = vlaneseq
    %v2331 = vshrl.u32 %v2330, 7
    %v2332 = vadd.s32 %v2331, 16
    %2333 = vset.pattern.permute.xlu0 %v2332
    %2334 = vperm.xlu0 %2333, %v2317
    %v2335 = vpop.permute.xlu0 %2334
    %v2336 = vlaneseq
    %v2337 = vshrl.u32 %v2336, 7
    %v2338 = vadd.s32 %v2337, 24
    %2339 = vset.pattern.permute.xlu0 %v2338
    %2340 = vperm.xlu0 %2339, %v2317
    %v2341 = vpop.permute.xlu0 %2340
    %v2342 = vlaneseq
    %v2343 = vshrl.u32 %v2342, 7
    %v2344 = vadd.s32 %v2343, 32
    %2345 = vset.pattern.permute.xlu0 %v2344
    %2346 = vperm.xlu0 %2345, %v2317
    %v2347 = vpop.permute.xlu0 %2346
    %v2348 = vlaneseq
    %v2349 = vshrl.u32 %v2348, 7
    %v2350 = vadd.s32 %v2349, 40
    %2351 = vset.pattern.permute.xlu0 %v2350
    %2352 = vperm.xlu0 %2351, %v2317
    %v2353 = vpop.permute.xlu0 %2352
    %v2354 = vlaneseq
    %v2355 = vshrl.u32 %v2354, 7
    %v2356 = vadd.s32 %v2355, 48
    %2357 = vset.pattern.permute.xlu0 %v2356
    %2358 = vperm.xlu0 %2357, %v2317
    %v2359 = vpop.permute.xlu0 %2358
    %v2360 = vlaneseq
    %v2361 = vshrl.u32 %v2360, 7
    %v2362 = vadd.s32 %v2361, 56
    %2363 = vset.pattern.permute.xlu0 %v2362
    %2364 = vperm.xlu0 %2363, %v2317
    %v2365 = vpop.permute.xlu0 %2364
    %v2366 = vlaneseq
    %v2367 = vshrl.u32 %v2366, 7
    %v2368 = vadd.s32 %v2367, 64
    %2369 = vset.pattern.permute.xlu0 %v2368
    %2370 = vperm.xlu0 %2369, %v2317
    %v2371 = vpop.permute.xlu0 %2370
    %v2372 = vlaneseq
    %v2373 = vshrl.u32 %v2372, 7
    %v2374 = vadd.s32 %v2373, 72
    %2375 = vset.pattern.permute.xlu0 %v2374
    %2376 = vperm.xlu0 %2375, %v2317
    %v2377 = vpop.permute.xlu0 %2376
    %v2378 = vlaneseq
    %v2379 = vshrl.u32 %v2378, 7
    %v2380 = vadd.s32 %v2379, 80
    %2381 = vset.pattern.permute.xlu0 %v2380
    %2382 = vperm.xlu0 %2381, %v2317
    %v2383 = vpop.permute.xlu0 %2382
    %v2384 = vlaneseq
    %v2385 = vshrl.u32 %v2384, 7
    %v2386 = vadd.s32 %v2385, 88
    %2387 = vset.pattern.permute.xlu0 %v2386
    %2388 = vperm.xlu0 %2387, %v2317
    %v2389 = vpop.permute.xlu0 %2388
    %v2390 = vlaneseq
    %v2391 = vshrl.u32 %v2390, 7
    %v2392 = vadd.s32 %v2391, 96
    %2393 = vset.pattern.permute.xlu0 %v2392
    %2394 = vperm.xlu0 %2393, %v2317
    %v2395 = vpop.permute.xlu0 %2394
    %v2396 = vlaneseq
    %v2397 = vshrl.u32 %v2396, 7
    %v2398 = vadd.s32 %v2397, 104
    %2399 = vset.pattern.permute.xlu0 %v2398
    %2400 = vperm.xlu0 %2399, %v2317
    %v2401 = vpop.permute.xlu0 %2400
    %v2402 = vlaneseq
    %v2403 = vshrl.u32 %v2402, 7
    %v2404 = vadd.s32 %v2403, 112
    %2405 = vset.pattern.permute.xlu0 %v2404
    %2406 = vperm.xlu0 %2405, %v2317
    %v2407 = vpop.permute.xlu0 %2406
    %v2408 = vlaneseq
    %v2409 = vshrl.u32 %v2408, 7
    %v2410 = vadd.s32 %v2409, 120
    %2411 = vset.pattern.permute.xlu0 %v2410
    %2412 = vperm.xlu0 %2411, %v2317
    %v2413 = vpop.permute.xlu0 %2412
    %v2414 = vperm.slane %v382, 1
    %v2415 = vlaneseq
    %v2416 = vshrl.u32 %v2415, 7
    %2418 = vset.pattern.permute.xlu0 %v2416
    %2419 = vperm.xlu0 %2418, %v2414
    %v2420 = vpop.permute.xlu0 %2419
    %v2421 = vlaneseq
    %v2422 = vshrl.u32 %v2421, 7
    %v2423 = vadd.s32 %v2422, 8
    %2424 = vset.pattern.permute.xlu0 %v2423
    %2425 = vperm.xlu0 %2424, %v2414
    %v2426 = vpop.permute.xlu0 %2425
    %v2427 = vlaneseq
    %v2428 = vshrl.u32 %v2427, 7
    %v2429 = vadd.s32 %v2428, 16
    %2430 = vset.pattern.permute.xlu0 %v2429
    %2431 = vperm.xlu0 %2430, %v2414
    %v2432 = vpop.permute.xlu0 %2431
    %v2433 = vlaneseq
    %v2434 = vshrl.u32 %v2433, 7
    %v2435 = vadd.s32 %v2434, 24
    %2436 = vset.pattern.permute.xlu0 %v2435
    %2437 = vperm.xlu0 %2436, %v2414
    %v2438 = vpop.permute.xlu0 %2437
    %v2439 = vlaneseq
    %v2440 = vshrl.u32 %v2439, 7
    %v2441 = vadd.s32 %v2440, 32
    %2442 = vset.pattern.permute.xlu0 %v2441
    %2443 = vperm.xlu0 %2442, %v2414
    %v2444 = vpop.permute.xlu0 %2443
    %v2445 = vlaneseq
    %v2446 = vshrl.u32 %v2445, 7
    %v2447 = vadd.s32 %v2446, 40
    %2448 = vset.pattern.permute.xlu0 %v2447
    %2449 = vperm.xlu0 %2448, %v2414
    %v2450 = vpop.permute.xlu0 %2449
    %v2451 = vlaneseq
    %v2452 = vshrl.u32 %v2451, 7
    %v2453 = vadd.s32 %v2452, 48
    %2454 = vset.pattern.permute.xlu0 %v2453
    %2455 = vperm.xlu0 %2454, %v2414
    %v2456 = vpop.permute.xlu0 %2455
    %v2457 = vlaneseq
    %v2458 = vshrl.u32 %v2457, 7
    %v2459 = vadd.s32 %v2458, 56
    %2460 = vset.pattern.permute.xlu0 %v2459
    %2461 = vperm.xlu0 %2460, %v2414
    %v2462 = vpop.permute.xlu0 %2461
    %v2463 = vlaneseq
    %v2464 = vshrl.u32 %v2463, 7
    %v2465 = vadd.s32 %v2464, 64
    %2466 = vset.pattern.permute.xlu0 %v2465
    %2467 = vperm.xlu0 %2466, %v2414
    %v2468 = vpop.permute.xlu0 %2467
    %v2469 = vlaneseq
    %v2470 = vshrl.u32 %v2469, 7
    %v2471 = vadd.s32 %v2470, 72
    %2472 = vset.pattern.permute.xlu0 %v2471
    %2473 = vperm.xlu0 %2472, %v2414
    %v2474 = vpop.permute.xlu0 %2473
    %v2475 = vlaneseq
    %v2476 = vshrl.u32 %v2475, 7
    %v2477 = vadd.s32 %v2476, 80
    %2478 = vset.pattern.permute.xlu0 %v2477
    %2479 = vperm.xlu0 %2478, %v2414
    %v2480 = vpop.permute.xlu0 %2479
    %v2481 = vlaneseq
    %v2482 = vshrl.u32 %v2481, 7
    %v2483 = vadd.s32 %v2482, 88
    %2484 = vset.pattern.permute.xlu0 %v2483
    %2485 = vperm.xlu0 %2484, %v2414
    %v2486 = vpop.permute.xlu0 %2485
    %v2487 = vlaneseq
    %v2488 = vshrl.u32 %v2487, 7
    %v2489 = vadd.s32 %v2488, 96
    %2490 = vset.pattern.permute.xlu0 %v2489
    %2491 = vperm.xlu0 %2490, %v2414
    %v2492 = vpop.permute.xlu0 %2491
    %v2493 = vlaneseq
    %v2494 = vshrl.u32 %v2493, 7
    %v2495 = vadd.s32 %v2494, 104
    %2496 = vset.pattern.permute.xlu0 %v2495
    %2497 = vperm.xlu0 %2496, %v2414
    %v2498 = vpop.permute.xlu0 %2497
    %v2499 = vlaneseq
    %v2500 = vshrl.u32 %v2499, 7
    %v2501 = vadd.s32 %v2500, 112
    %2502 = vset.pattern.permute.xlu0 %v2501
    %2503 = vperm.xlu0 %2502, %v2414
    %v2504 = vpop.permute.xlu0 %2503
    %v2505 = vlaneseq
    %v2506 = vshrl.u32 %v2505, 7
    %v2507 = vadd.s32 %v2506, 120
    %2508 = vset.pattern.permute.xlu0 %v2507
    %2509 = vperm.xlu0 %2508, %v2414
    %v2510 = vpop.permute.xlu0 %2509
    %v2511 = vperm.slane %v382, 2
    %v2512 = vlaneseq
    %v2513 = vshrl.u32 %v2512, 7
    %2515 = vset.pattern.permute.xlu0 %v2513
    %2516 = vperm.xlu0 %2515, %v2511
    %v2517 = vpop.permute.xlu0 %2516
    %v2518 = vlaneseq
    %v2519 = vshrl.u32 %v2518, 7
    %v2520 = vadd.s32 %v2519, 8
    %2521 = vset.pattern.permute.xlu0 %v2520
    %2522 = vperm.xlu0 %2521, %v2511
    %v2523 = vpop.permute.xlu0 %2522
    %v2524 = vlaneseq
    %v2525 = vshrl.u32 %v2524, 7
    %v2526 = vadd.s32 %v2525, 16
    %2527 = vset.pattern.permute.xlu0 %v2526
    %2528 = vperm.xlu0 %2527, %v2511
    %v2529 = vpop.permute.xlu0 %2528
    %v2530 = vlaneseq
    %v2531 = vshrl.u32 %v2530, 7
    %v2532 = vadd.s32 %v2531, 24
    %2533 = vset.pattern.permute.xlu0 %v2532
    %2534 = vperm.xlu0 %2533, %v2511
    %v2535 = vpop.permute.xlu0 %2534
    %v2536 = vlaneseq
    %v2537 = vshrl.u32 %v2536, 7
    %v2538 = vadd.s32 %v2537, 32
    %2539 = vset.pattern.permute.xlu0 %v2538
    %2540 = vperm.xlu0 %2539, %v2511
    %v2541 = vpop.permute.xlu0 %2540
    %v2542 = vlaneseq
    %v2543 = vshrl.u32 %v2542, 7
    %v2544 = vadd.s32 %v2543, 40
    %2545 = vset.pattern.permute.xlu0 %v2544
    %2546 = vperm.xlu0 %2545, %v2511
    %v2547 = vpop.permute.xlu0 %2546
    %v2548 = vlaneseq
    %v2549 = vshrl.u32 %v2548, 7
    %v2550 = vadd.s32 %v2549, 48
    %2551 = vset.pattern.permute.xlu0 %v2550
    %2552 = vperm.xlu0 %2551, %v2511
    %v2553 = vpop.permute.xlu0 %2552
    %v2554 = vlaneseq
    %v2555 = vshrl.u32 %v2554, 7
    %v2556 = vadd.s32 %v2555, 56
    %2557 = vset.pattern.permute.xlu0 %v2556
    %2558 = vperm.xlu0 %2557, %v2511
    %v2559 = vpop.permute.xlu0 %2558
    %v2560 = vlaneseq
    %v2561 = vshrl.u32 %v2560, 7
    %v2562 = vadd.s32 %v2561, 64
    %2563 = vset.pattern.permute.xlu0 %v2562
    %2564 = vperm.xlu0 %2563, %v2511
    %v2565 = vpop.permute.xlu0 %2564
    %v2566 = vlaneseq
    %v2567 = vshrl.u32 %v2566, 7
    %v2568 = vadd.s32 %v2567, 72
    %2569 = vset.pattern.permute.xlu0 %v2568
    %2570 = vperm.xlu0 %2569, %v2511
    %v2571 = vpop.permute.xlu0 %2570
    %v2572 = vlaneseq
    %v2573 = vshrl.u32 %v2572, 7
    %v2574 = vadd.s32 %v2573, 80
    %2575 = vset.pattern.permute.xlu0 %v2574
    %2576 = vperm.xlu0 %2575, %v2511
    %v2577 = vpop.permute.xlu0 %2576
    %v2578 = vlaneseq
    %v2579 = vshrl.u32 %v2578, 7
    %v2580 = vadd.s32 %v2579, 88
    %2581 = vset.pattern.permute.xlu0 %v2580
    %2582 = vperm.xlu0 %2581, %v2511
    %v2583 = vpop.permute.xlu0 %2582
    %v2584 = vlaneseq
    %v2585 = vshrl.u32 %v2584, 7
    %v2586 = vadd.s32 %v2585, 96
    %2587 = vset.pattern.permute.xlu0 %v2586
    %2588 = vperm.xlu0 %2587, %v2511
    %v2589 = vpop.permute.xlu0 %2588
    %v2590 = vlaneseq
    %v2591 = vshrl.u32 %v2590, 7
    %v2592 = vadd.s32 %v2591, 104
    %2593 = vset.pattern.permute.xlu0 %v2592
    %2594 = vperm.xlu0 %2593, %v2511
    %v2595 = vpop.permute.xlu0 %2594
    %v2596 = vlaneseq
    %v2597 = vshrl.u32 %v2596, 7
    %v2598 = vadd.s32 %v2597, 112
    %2599 = vset.pattern.permute.xlu0 %v2598
    %2600 = vperm.xlu0 %2599, %v2511
    %v2601 = vpop.permute.xlu0 %2600
    %v2602 = vlaneseq
    %v2603 = vshrl.u32 %v2602, 7
    %v2604 = vadd.s32 %v2603, 120
    %2605 = vset.pattern.permute.xlu0 %v2604
    %2606 = vperm.xlu0 %2605, %v2511
    %v2607 = vpop.permute.xlu0 %2606
    %v2608 = vperm.slane %v382, 3
    %v2609 = vlaneseq
    %v2610 = vshrl.u32 %v2609, 7
    %2612 = vset.pattern.permute.xlu0 %v2610
    %2613 = vperm.xlu0 %2612, %v2608
    %v2614 = vpop.permute.xlu0 %2613
    %v2615 = vlaneseq
    %v2616 = vshrl.u32 %v2615, 7
    %v2617 = vadd.s32 %v2616, 8
    %2618 = vset.pattern.permute.xlu0 %v2617
    %2619 = vperm.xlu0 %2618, %v2608
    %v2620 = vpop.permute.xlu0 %2619
    %v2621 = vlaneseq
    %v2622 = vshrl.u32 %v2621, 7
    %v2623 = vadd.s32 %v2622, 16
    %2624 = vset.pattern.permute.xlu0 %v2623
    %2625 = vperm.xlu0 %2624, %v2608
    %v2626 = vpop.permute.xlu0 %2625
    %v2627 = vlaneseq
    %v2628 = vshrl.u32 %v2627, 7
    %v2629 = vadd.s32 %v2628, 24
    %2630 = vset.pattern.permute.xlu0 %v2629
    %2631 = vperm.xlu0 %2630, %v2608
    %v2632 = vpop.permute.xlu0 %2631
    %v2633 = vlaneseq
    %v2634 = vshrl.u32 %v2633, 7
    %v2635 = vadd.s32 %v2634, 32
    %2636 = vset.pattern.permute.xlu0 %v2635
    %2637 = vperm.xlu0 %2636, %v2608
    %v2638 = vpop.permute.xlu0 %2637
    %v2639 = vlaneseq
    %v2640 = vshrl.u32 %v2639, 7
    %v2641 = vadd.s32 %v2640, 40
    %2642 = vset.pattern.permute.xlu0 %v2641
    %2643 = vperm.xlu0 %2642, %v2608
    %v2644 = vpop.permute.xlu0 %2643
    %v2645 = vlaneseq
    %v2646 = vshrl.u32 %v2645, 7
    %v2647 = vadd.s32 %v2646, 48
    %2648 = vset.pattern.permute.xlu0 %v2647
    %2649 = vperm.xlu0 %2648, %v2608
    %v2650 = vpop.permute.xlu0 %2649
    %v2651 = vlaneseq
    %v2652 = vshrl.u32 %v2651, 7
    %v2653 = vadd.s32 %v2652, 56
    %2654 = vset.pattern.permute.xlu0 %v2653
    %2655 = vperm.xlu0 %2654, %v2608
    %v2656 = vpop.permute.xlu0 %2655
    %v2657 = vlaneseq
    %v2658 = vshrl.u32 %v2657, 7
    %v2659 = vadd.s32 %v2658, 64
    %2660 = vset.pattern.permute.xlu0 %v2659
    %2661 = vperm.xlu0 %2660, %v2608
    %v2662 = vpop.permute.xlu0 %2661
    %v2663 = vlaneseq
    %v2664 = vshrl.u32 %v2663, 7
    %v2665 = vadd.s32 %v2664, 72
    %2666 = vset.pattern.permute.xlu0 %v2665
    %2667 = vperm.xlu0 %2666, %v2608
    %v2668 = vpop.permute.xlu0 %2667
    %v2669 = vlaneseq
    %v2670 = vshrl.u32 %v2669, 7
    %v2671 = vadd.s32 %v2670, 80
    %2672 = vset.pattern.permute.xlu0 %v2671
    %2673 = vperm.xlu0 %2672, %v2608
    %v2674 = vpop.permute.xlu0 %2673
    %v2675 = vlaneseq
    %v2676 = vshrl.u32 %v2675, 7
    %v2677 = vadd.s32 %v2676, 88
    %2678 = vset.pattern.permute.xlu0 %v2677
    %2679 = vperm.xlu0 %2678, %v2608
    %v2680 = vpop.permute.xlu0 %2679
    %v2681 = vlaneseq
    %v2682 = vshrl.u32 %v2681, 7
    %v2683 = vadd.s32 %v2682, 96
    %2684 = vset.pattern.permute.xlu0 %v2683
    %2685 = vperm.xlu0 %2684, %v2608
    %v2686 = vpop.permute.xlu0 %2685
    %v2687 = vlaneseq
    %v2688 = vshrl.u32 %v2687, 7
    %v2689 = vadd.s32 %v2688, 104
    %2690 = vset.pattern.permute.xlu0 %v2689
    %2691 = vperm.xlu0 %2690, %v2608
    %v2692 = vpop.permute.xlu0 %2691
    %v2693 = vlaneseq
    %v2694 = vshrl.u32 %v2693, 7
    %v2695 = vadd.s32 %v2694, 112
    %2696 = vset.pattern.permute.xlu0 %v2695
    %2697 = vperm.xlu0 %2696, %v2608
    %v2698 = vpop.permute.xlu0 %2697
    %v2699 = vlaneseq
    %v2700 = vshrl.u32 %v2699, 7
    %v2701 = vadd.s32 %v2700, 120
    %2702 = vset.pattern.permute.xlu0 %v2701
    %2703 = vperm.xlu0 %2702, %v2608
    %v2704 = vpop.permute.xlu0 %2703
    %v2705 = vperm.slane %v382, 4
    %v2706 = vlaneseq
    %v2707 = vshrl.u32 %v2706, 7
    %2709 = vset.pattern.permute.xlu0 %v2707
    %2710 = vperm.xlu0 %2709, %v2705
    %v2711 = vpop.permute.xlu0 %2710
    %v2712 = vlaneseq
    %v2713 = vshrl.u32 %v2712, 7
    %v2714 = vadd.s32 %v2713, 8
    %2715 = vset.pattern.permute.xlu0 %v2714
    %2716 = vperm.xlu0 %2715, %v2705
    %v2717 = vpop.permute.xlu0 %2716
    %v2718 = vlaneseq
    %v2719 = vshrl.u32 %v2718, 7
    %v2720 = vadd.s32 %v2719, 16
    %2721 = vset.pattern.permute.xlu0 %v2720
    %2722 = vperm.xlu0 %2721, %v2705
    %v2723 = vpop.permute.xlu0 %2722
    %v2724 = vlaneseq
    %v2725 = vshrl.u32 %v2724, 7
    %v2726 = vadd.s32 %v2725, 24
    %2727 = vset.pattern.permute.xlu0 %v2726
    %2728 = vperm.xlu0 %2727, %v2705
    %v2729 = vpop.permute.xlu0 %2728
    %v2730 = vlaneseq
    %v2731 = vshrl.u32 %v2730, 7
    %v2732 = vadd.s32 %v2731, 32
    %2733 = vset.pattern.permute.xlu0 %v2732
    %2734 = vperm.xlu0 %2733, %v2705
    %v2735 = vpop.permute.xlu0 %2734
    %v2736 = vlaneseq
    %v2737 = vshrl.u32 %v2736, 7
    %v2738 = vadd.s32 %v2737, 40
    %2739 = vset.pattern.permute.xlu0 %v2738
    %2740 = vperm.xlu0 %2739, %v2705
    %v2741 = vpop.permute.xlu0 %2740
    %v2742 = vlaneseq
    %v2743 = vshrl.u32 %v2742, 7
    %v2744 = vadd.s32 %v2743, 48
    %2745 = vset.pattern.permute.xlu0 %v2744
    %2746 = vperm.xlu0 %2745, %v2705
    %v2747 = vpop.permute.xlu0 %2746
    %v2748 = vlaneseq
    %v2749 = vshrl.u32 %v2748, 7
    %v2750 = vadd.s32 %v2749, 56
    %2751 = vset.pattern.permute.xlu0 %v2750
    %2752 = vperm.xlu0 %2751, %v2705
    %v2753 = vpop.permute.xlu0 %2752
    %v2754 = vlaneseq
    %v2755 = vshrl.u32 %v2754, 7
    %v2756 = vadd.s32 %v2755, 64
    %2757 = vset.pattern.permute.xlu0 %v2756
    %2758 = vperm.xlu0 %2757, %v2705
    %v2759 = vpop.permute.xlu0 %2758
    %v2760 = vlaneseq
    %v2761 = vshrl.u32 %v2760, 7
    %v2762 = vadd.s32 %v2761, 72
    %2763 = vset.pattern.permute.xlu0 %v2762
    %2764 = vperm.xlu0 %2763, %v2705
    %v2765 = vpop.permute.xlu0 %2764
    %v2766 = vlaneseq
    %v2767 = vshrl.u32 %v2766, 7
    %v2768 = vadd.s32 %v2767, 80
    %2769 = vset.pattern.permute.xlu0 %v2768
    %2770 = vperm.xlu0 %2769, %v2705
    %v2771 = vpop.permute.xlu0 %2770
    %v2772 = vlaneseq
    %v2773 = vshrl.u32 %v2772, 7
    %v2774 = vadd.s32 %v2773, 88
    %2775 = vset.pattern.permute.xlu0 %v2774
    %2776 = vperm.xlu0 %2775, %v2705
    %v2777 = vpop.permute.xlu0 %2776
    %v2778 = vlaneseq
    %v2779 = vshrl.u32 %v2778, 7
    %v2780 = vadd.s32 %v2779, 96
    %2781 = vset.pattern.permute.xlu0 %v2780
    %2782 = vperm.xlu0 %2781, %v2705
    %v2783 = vpop.permute.xlu0 %2782
    %v2784 = vlaneseq
    %v2785 = vshrl.u32 %v2784, 7
    %v2786 = vadd.s32 %v2785, 104
    %2787 = vset.pattern.permute.xlu0 %v2786
    %2788 = vperm.xlu0 %2787, %v2705
    %v2789 = vpop.permute.xlu0 %2788
    %v2790 = vlaneseq
    %v2791 = vshrl.u32 %v2790, 7
    %v2792 = vadd.s32 %v2791, 112
    %2793 = vset.pattern.permute.xlu0 %v2792
    %2794 = vperm.xlu0 %2793, %v2705
    %v2795 = vpop.permute.xlu0 %2794
    %v2796 = vlaneseq
    %v2797 = vshrl.u32 %v2796, 7
    %v2798 = vadd.s32 %v2797, 120
    %2799 = vset.pattern.permute.xlu0 %v2798
    %2800 = vperm.xlu0 %2799, %v2705
    %v2801 = vpop.permute.xlu0 %2800
    %v2802 = vperm.slane %v382, 5
    %v2803 = vlaneseq
    %v2804 = vshrl.u32 %v2803, 7
    %2806 = vset.pattern.permute.xlu0 %v2804
    %2807 = vperm.xlu0 %2806, %v2802
    %v2808 = vpop.permute.xlu0 %2807
    %v2809 = vlaneseq
    %v2810 = vshrl.u32 %v2809, 7
    %v2811 = vadd.s32 %v2810, 8
    %2812 = vset.pattern.permute.xlu0 %v2811
    %2813 = vperm.xlu0 %2812, %v2802
    %v2814 = vpop.permute.xlu0 %2813
    %v2815 = vlaneseq
    %v2816 = vshrl.u32 %v2815, 7
    %v2817 = vadd.s32 %v2816, 16
    %2818 = vset.pattern.permute.xlu0 %v2817
    %2819 = vperm.xlu0 %2818, %v2802
    %v2820 = vpop.permute.xlu0 %2819
    %v2821 = vlaneseq
    %v2822 = vshrl.u32 %v2821, 7
    %v2823 = vadd.s32 %v2822, 24
    %2824 = vset.pattern.permute.xlu0 %v2823
    %2825 = vperm.xlu0 %2824, %v2802
    %v2826 = vpop.permute.xlu0 %2825
    %v2827 = vlaneseq
    %v2828 = vshrl.u32 %v2827, 7
    %v2829 = vadd.s32 %v2828, 32
    %2830 = vset.pattern.permute.xlu0 %v2829
    %2831 = vperm.xlu0 %2830, %v2802
    %v2832 = vpop.permute.xlu0 %2831
    %v2833 = vlaneseq
    %v2834 = vshrl.u32 %v2833, 7
    %v2835 = vadd.s32 %v2834, 40
    %2836 = vset.pattern.permute.xlu0 %v2835
    %2837 = vperm.xlu0 %2836, %v2802
    %v2838 = vpop.permute.xlu0 %2837
    %v2839 = vlaneseq
    %v2840 = vshrl.u32 %v2839, 7
    %v2841 = vadd.s32 %v2840, 48
    %2842 = vset.pattern.permute.xlu0 %v2841
    %2843 = vperm.xlu0 %2842, %v2802
    %v2844 = vpop.permute.xlu0 %2843
    %v2845 = vlaneseq
    %v2846 = vshrl.u32 %v2845, 7
    %v2847 = vadd.s32 %v2846, 56
    %2848 = vset.pattern.permute.xlu0 %v2847
    %2849 = vperm.xlu0 %2848, %v2802
    %v2850 = vpop.permute.xlu0 %2849
    %v2851 = vlaneseq
    %v2852 = vshrl.u32 %v2851, 7
    %v2853 = vadd.s32 %v2852, 64
    %2854 = vset.pattern.permute.xlu0 %v2853
    %2855 = vperm.xlu0 %2854, %v2802
    %v2856 = vpop.permute.xlu0 %2855
    %v2857 = vlaneseq
    %v2858 = vshrl.u32 %v2857, 7
    %v2859 = vadd.s32 %v2858, 72
    %2860 = vset.pattern.permute.xlu0 %v2859
    %2861 = vperm.xlu0 %2860, %v2802
    %v2862 = vpop.permute.xlu0 %2861
    %v2863 = vlaneseq
    %v2864 = vshrl.u32 %v2863, 7
    %v2865 = vadd.s32 %v2864, 80
    %2866 = vset.pattern.permute.xlu0 %v2865
    %2867 = vperm.xlu0 %2866, %v2802
    %v2868 = vpop.permute.xlu0 %2867
    %v2869 = vlaneseq
    %v2870 = vshrl.u32 %v2869, 7
    %v2871 = vadd.s32 %v2870, 88
    %2872 = vset.pattern.permute.xlu0 %v2871
    %2873 = vperm.xlu0 %2872, %v2802
    %v2874 = vpop.permute.xlu0 %2873
    %v2875 = vlaneseq
    %v2876 = vshrl.u32 %v2875, 7
    %v2877 = vadd.s32 %v2876, 96
    %2878 = vset.pattern.permute.xlu0 %v2877
    %2879 = vperm.xlu0 %2878, %v2802
    %v2880 = vpop.permute.xlu0 %2879
    %v2881 = vlaneseq
    %v2882 = vshrl.u32 %v2881, 7
    %v2883 = vadd.s32 %v2882, 104
    %2884 = vset.pattern.permute.xlu0 %v2883
    %2885 = vperm.xlu0 %2884, %v2802
    %v2886 = vpop.permute.xlu0 %2885
    %v2887 = vlaneseq
    %v2888 = vshrl.u32 %v2887, 7
    %v2889 = vadd.s32 %v2888, 112
    %2890 = vset.pattern.permute.xlu0 %v2889
    %2891 = vperm.xlu0 %2890, %v2802
    %v2892 = vpop.permute.xlu0 %2891
    %v2893 = vlaneseq
    %v2894 = vshrl.u32 %v2893, 7
    %v2895 = vadd.s32 %v2894, 120
    %2896 = vset.pattern.permute.xlu0 %v2895
    %2897 = vperm.xlu0 %2896, %v2802
    %v2898 = vpop.permute.xlu0 %2897
    %v2899 = vperm.slane %v382, 6
    %v2900 = vlaneseq
    %v2901 = vshrl.u32 %v2900, 7
    %2903 = vset.pattern.permute.xlu0 %v2901
    %2904 = vperm.xlu0 %2903, %v2899
    %v2905 = vpop.permute.xlu0 %2904
    %v2906 = vlaneseq
    %v2907 = vshrl.u32 %v2906, 7
    %v2908 = vadd.s32 %v2907, 8
    %2909 = vset.pattern.permute.xlu0 %v2908
    %2910 = vperm.xlu0 %2909, %v2899
    %v2911 = vpop.permute.xlu0 %2910
    %v2912 = vlaneseq
    %v2913 = vshrl.u32 %v2912, 7
    %v2914 = vadd.s32 %v2913, 16
    %2915 = vset.pattern.permute.xlu0 %v2914
    %2916 = vperm.xlu0 %2915, %v2899
    %v2917 = vpop.permute.xlu0 %2916
    %v2918 = vlaneseq
    %v2919 = vshrl.u32 %v2918, 7
    %v2920 = vadd.s32 %v2919, 24
    %2921 = vset.pattern.permute.xlu0 %v2920
    %2922 = vperm.xlu0 %2921, %v2899
    %v2923 = vpop.permute.xlu0 %2922
    %v2924 = vlaneseq
    %v2925 = vshrl.u32 %v2924, 7
    %v2926 = vadd.s32 %v2925, 32
    %2927 = vset.pattern.permute.xlu0 %v2926
    %2928 = vperm.xlu0 %2927, %v2899
    %v2929 = vpop.permute.xlu0 %2928
    %v2930 = vlaneseq
    %v2931 = vshrl.u32 %v2930, 7
    %v2932 = vadd.s32 %v2931, 40
    %2933 = vset.pattern.permute.xlu0 %v2932
    %2934 = vperm.xlu0 %2933, %v2899
    %v2935 = vpop.permute.xlu0 %2934
    %v2936 = vlaneseq
    %v2937 = vshrl.u32 %v2936, 7
    %v2938 = vadd.s32 %v2937, 48
    %2939 = vset.pattern.permute.xlu0 %v2938
    %2940 = vperm.xlu0 %2939, %v2899
    %v2941 = vpop.permute.xlu0 %2940
    %v2942 = vlaneseq
    %v2943 = vshrl.u32 %v2942, 7
    %v2944 = vadd.s32 %v2943, 56
    %2945 = vset.pattern.permute.xlu0 %v2944
    %2946 = vperm.xlu0 %2945, %v2899
    %v2947 = vpop.permute.xlu0 %2946
    %v2948 = vlaneseq
    %v2949 = vshrl.u32 %v2948, 7
    %v2950 = vadd.s32 %v2949, 64
    %2951 = vset.pattern.permute.xlu0 %v2950
    %2952 = vperm.xlu0 %2951, %v2899
    %v2953 = vpop.permute.xlu0 %2952
    %v2954 = vlaneseq
    %v2955 = vshrl.u32 %v2954, 7
    %v2956 = vadd.s32 %v2955, 72
    %2957 = vset.pattern.permute.xlu0 %v2956
    %2958 = vperm.xlu0 %2957, %v2899
    %v2959 = vpop.permute.xlu0 %2958
    %v2960 = vlaneseq
    %v2961 = vshrl.u32 %v2960, 7
    %v2962 = vadd.s32 %v2961, 80
    %2963 = vset.pattern.permute.xlu0 %v2962
    %2964 = vperm.xlu0 %2963, %v2899
    %v2965 = vpop.permute.xlu0 %2964
    %v2966 = vlaneseq
    %v2967 = vshrl.u32 %v2966, 7
    %v2968 = vadd.s32 %v2967, 88
    %2969 = vset.pattern.permute.xlu0 %v2968
    %2970 = vperm.xlu0 %2969, %v2899
    %v2971 = vpop.permute.xlu0 %2970
    %v2972 = vlaneseq
    %v2973 = vshrl.u32 %v2972, 7
    %v2974 = vadd.s32 %v2973, 96
    %2975 = vset.pattern.permute.xlu0 %v2974
    %2976 = vperm.xlu0 %2975, %v2899
    %v2977 = vpop.permute.xlu0 %2976
    %v2978 = vlaneseq
    %v2979 = vshrl.u32 %v2978, 7
    %v2980 = vadd.s32 %v2979, 104
    %2981 = vset.pattern.permute.xlu0 %v2980
    %2982 = vperm.xlu0 %2981, %v2899
    %v2983 = vpop.permute.xlu0 %2982
    %v2984 = vlaneseq
    %v2985 = vshrl.u32 %v2984, 7
    %v2986 = vadd.s32 %v2985, 112
    %2987 = vset.pattern.permute.xlu0 %v2986
    %2988 = vperm.xlu0 %2987, %v2899
    %v2989 = vpop.permute.xlu0 %2988
    %v2990 = vlaneseq
    %v2991 = vshrl.u32 %v2990, 7
    %v2992 = vadd.s32 %v2991, 120
    %2993 = vset.pattern.permute.xlu0 %v2992
    %2994 = vperm.xlu0 %2993, %v2899
    %v2995 = vpop.permute.xlu0 %2994
    %v2996 = vperm.slane %v382, 7
    %v2997 = vlaneseq
    %v2998 = vshrl.u32 %v2997, 7
    %3000 = vset.pattern.permute.xlu0 %v2998
    %3001 = vperm.xlu0 %3000, %v2996
    %v3002 = vpop.permute.xlu0 %3001
    %v3003 = vlaneseq
    %v3004 = vshrl.u32 %v3003, 7
    %v3005 = vadd.s32 %v3004, 8
    %3006 = vset.pattern.permute.xlu0 %v3005
    %3007 = vperm.xlu0 %3006, %v2996
    %v3008 = vpop.permute.xlu0 %3007
    %v3009 = vlaneseq
    %v3010 = vshrl.u32 %v3009, 7
    %v3011 = vadd.s32 %v3010, 16
    %3012 = vset.pattern.permute.xlu0 %v3011
    %3013 = vperm.xlu0 %3012, %v2996
    %v3014 = vpop.permute.xlu0 %3013
    %v3015 = vlaneseq
    %v3016 = vshrl.u32 %v3015, 7
    %v3017 = vadd.s32 %v3016, 24
    %3018 = vset.pattern.permute.xlu0 %v3017
    %3019 = vperm.xlu0 %3018, %v2996
    %v3020 = vpop.permute.xlu0 %3019
    %v3021 = vlaneseq
    %v3022 = vshrl.u32 %v3021, 7
    %v3023 = vadd.s32 %v3022, 32
    %3024 = vset.pattern.permute.xlu0 %v3023
    %3025 = vperm.xlu0 %3024, %v2996
    %v3026 = vpop.permute.xlu0 %3025
    %v3027 = vlaneseq
    %v3028 = vshrl.u32 %v3027, 7
    %v3029 = vadd.s32 %v3028, 40
    %3030 = vset.pattern.permute.xlu0 %v3029
    %3031 = vperm.xlu0 %3030, %v2996
    %v3032 = vpop.permute.xlu0 %3031
    %v3033 = vlaneseq
    %v3034 = vshrl.u32 %v3033, 7
    %v3035 = vadd.s32 %v3034, 48
    %3036 = vset.pattern.permute.xlu0 %v3035
    %3037 = vperm.xlu0 %3036, %v2996
    %v3038 = vpop.permute.xlu0 %3037
    %v3039 = vlaneseq
    %v3040 = vshrl.u32 %v3039, 7
    %v3041 = vadd.s32 %v3040, 56
    %3042 = vset.pattern.permute.xlu0 %v3041
    %3043 = vperm.xlu0 %3042, %v2996
    %v3044 = vpop.permute.xlu0 %3043
    %v3045 = vlaneseq
    %v3046 = vshrl.u32 %v3045, 7
    %v3047 = vadd.s32 %v3046, 64
    %3048 = vset.pattern.permute.xlu0 %v3047
    %3049 = vperm.xlu0 %3048, %v2996
    %v3050 = vpop.permute.xlu0 %3049
    %v3051 = vlaneseq
    %v3052 = vshrl.u32 %v3051, 7
    %v3053 = vadd.s32 %v3052, 72
    %3054 = vset.pattern.permute.xlu0 %v3053
    %3055 = vperm.xlu0 %3054, %v2996
    %v3056 = vpop.permute.xlu0 %3055
    %v3057 = vlaneseq
    %v3058 = vshrl.u32 %v3057, 7
    %v3059 = vadd.s32 %v3058, 80
    %3060 = vset.pattern.permute.xlu0 %v3059
    %3061 = vperm.xlu0 %3060, %v2996
    %v3062 = vpop.permute.xlu0 %3061
    %v3063 = vlaneseq
    %v3064 = vshrl.u32 %v3063, 7
    %v3065 = vadd.s32 %v3064, 88
    %3066 = vset.pattern.permute.xlu0 %v3065
    %3067 = vperm.xlu0 %3066, %v2996
    %v3068 = vpop.permute.xlu0 %3067
    %v3069 = vlaneseq
    %v3070 = vshrl.u32 %v3069, 7
    %v3071 = vadd.s32 %v3070, 96
    %3072 = vset.pattern.permute.xlu0 %v3071
    %3073 = vperm.xlu0 %3072, %v2996
    %v3074 = vpop.permute.xlu0 %3073
    %v3075 = vlaneseq
    %v3076 = vshrl.u32 %v3075, 7
    %v3077 = vadd.s32 %v3076, 104
    %3078 = vset.pattern.permute.xlu0 %v3077
    %3079 = vperm.xlu0 %3078, %v2996
    %v3080 = vpop.permute.xlu0 %3079
    %v3081 = vlaneseq
    %v3082 = vshrl.u32 %v3081, 7
    %v3083 = vadd.s32 %v3082, 112
    %3084 = vset.pattern.permute.xlu0 %v3083
    %3085 = vperm.xlu0 %3084, %v2996
    %v3086 = vpop.permute.xlu0 %3085
    %v3087 = vlaneseq
    %v3088 = vshrl.u32 %v3087, 7
    %v3089 = vadd.s32 %v3088, 120
    %3090 = vset.pattern.permute.xlu0 %v3089
    %3091 = vperm.xlu0 %3090, %v2996
    %v3092 = vpop.permute.xlu0 %3091
    %v3349 = vadd.f32 %v1028, %v1547
    %v3350 = vadd.f32 %v1030, %v1553
    %v3351 = vadd.f32 %v1032, %v1559
    %v3352 = vadd.f32 %v1034, %v1565
    %v3353 = vadd.f32 %v1036, %v1571
    %v3354 = vadd.f32 %v1038, %v1577
    %v3355 = vadd.f32 %v1040, %v1583
    %v3356 = vadd.f32 %v1042, %v1589
    %v3357 = vadd.f32 %v1044, %v1595
    %v3358 = vadd.f32 %v1046, %v1601
    %v3359 = vadd.f32 %v1048, %v1607
    %v3360 = vadd.f32 %v1050, %v1613
    %v3361 = vadd.f32 %v1052, %v1619
    %v3362 = vadd.f32 %v1054, %v1625
    %v3363 = vadd.f32 %v1056, %v1631
    %v3364 = vadd.f32 %v1058, %v1637
    %v3365 = vadd.f32 %v1060, %v1644
    %v3366 = vadd.f32 %v1062, %v1650
    %v3367 = vadd.f32 %v1064, %v1656
    %v3368 = vadd.f32 %v1066, %v1662
    %v3369 = vadd.f32 %v1068, %v1668
    %v3370 = vadd.f32 %v1070, %v1674
    %v3371 = vadd.f32 %v1072, %v1680
    %v3372 = vadd.f32 %v1074, %v1686
    %v3373 = vadd.f32 %v1076, %v1692
    %v3374 = vadd.f32 %v1078, %v1698
    %v3375 = vadd.f32 %v1080, %v1704
    %v3376 = vadd.f32 %v1082, %v1710
    %v3377 = vadd.f32 %v1084, %v1716
    %v3378 = vadd.f32 %v1086, %v1722
    %v3379 = vadd.f32 %v1088, %v1728
    %v3380 = vadd.f32 %v1090, %v1734
    %v3381 = vadd.f32 %v1092, %v1741
    %v3382 = vadd.f32 %v1094, %v1747
    %v3383 = vadd.f32 %v1096, %v1753
    %v3384 = vadd.f32 %v1098, %v1759
    %v3385 = vadd.f32 %v1100, %v1765
    %v3386 = vadd.f32 %v1102, %v1771
    %v3387 = vadd.f32 %v1104, %v1777
    %v3388 = vadd.f32 %v1106, %v1783
    %v3389 = vadd.f32 %v1108, %v1789
    %v3390 = vadd.f32 %v1110, %v1795
    %v3391 = vadd.f32 %v1112, %v1801
    %v3392 = vadd.f32 %v1114, %v1807
    %v3393 = vadd.f32 %v1116, %v1813
    %v3394 = vadd.f32 %v1118, %v1819
    %v3395 = vadd.f32 %v1120, %v1825
    %v3396 = vadd.f32 %v1122, %v1831
    %v3397 = vadd.f32 %v1124, %v1838
    %v3398 = vadd.f32 %v1126, %v1844
    %v3399 = vadd.f32 %v1128, %v1850
    %v3400 = vadd.f32 %v1130, %v1856
    %v3401 = vadd.f32 %v1132, %v1862
    %v3402 = vadd.f32 %v1134, %v1868
    %v3403 = vadd.f32 %v1136, %v1874
    %v3404 = vadd.f32 %v1138, %v1880
    %v3405 = vadd.f32 %v1140, %v1886
    %v3406 = vadd.f32 %v1142, %v1892
    %v3407 = vadd.f32 %v1144, %v1898
    %v3408 = vadd.f32 %v1146, %v1904
    %v3409 = vadd.f32 %v1148, %v1910
    %v3410 = vadd.f32 %v1150, %v1916
    %v3411 = vadd.f32 %v1152, %v1922
    %v3412 = vadd.f32 %v1154, %v1928
    %v3413 = vadd.f32 %v1156, %v1935
    %v3414 = vadd.f32 %v1158, %v1941
    %v3415 = vadd.f32 %v1160, %v1947
    %v3416 = vadd.f32 %v1162, %v1953
    %v3417 = vadd.f32 %v1164, %v1959
    %v3418 = vadd.f32 %v1166, %v1965
    %v3419 = vadd.f32 %v1168, %v1971
    %v3420 = vadd.f32 %v1170, %v1977
    %v3421 = vadd.f32 %v1172, %v1983
    %v3422 = vadd.f32 %v1174, %v1989
    %v3423 = vadd.f32 %v1176, %v1995
    %v3424 = vadd.f32 %v1178, %v2001
    %v3425 = vadd.f32 %v1180, %v2007
    %v3426 = vadd.f32 %v1182, %v2013
    %v3427 = vadd.f32 %v1184, %v2019
    %v3428 = vadd.f32 %v1186, %v2025
    %v3429 = vadd.f32 %v1188, %v2032
    %v3430 = vadd.f32 %v1190, %v2038
    %v3431 = vadd.f32 %v1192, %v2044
    %v3432 = vadd.f32 %v1194, %v2050
    %v3433 = vadd.f32 %v1196, %v2056
    %v3434 = vadd.f32 %v1198, %v2062
    %v3435 = vadd.f32 %v1200, %v2068
    %v3436 = vadd.f32 %v1202, %v2074
    %v3437 = vadd.f32 %v1204, %v2080
    %v3438 = vadd.f32 %v1206, %v2086
    %v3439 = vadd.f32 %v1208, %v2092
    %v3440 = vadd.f32 %v1210, %v2098
    %v3441 = vadd.f32 %v1212, %v2104
    %v3442 = vadd.f32 %v1214, %v2110
    %v3443 = vadd.f32 %v1216, %v2116
    %v3444 = vadd.f32 %v1218, %v2122
    %v3445 = vadd.f32 %v1220, %v2129
    %v3446 = vadd.f32 %v1222, %v2135
    %v3447 = vadd.f32 %v1224, %v2141
    %v3448 = vadd.f32 %v1226, %v2147
    %v3449 = vadd.f32 %v1228, %v2153
    %v3450 = vadd.f32 %v1230, %v2159
    %v3451 = vadd.f32 %v1232, %v2165
    %v3452 = vadd.f32 %v1234, %v2171
    %v3453 = vadd.f32 %v1236, %v2177
    %v3454 = vadd.f32 %v1238, %v2183
    %v3455 = vadd.f32 %v1240, %v2189
    %v3456 = vadd.f32 %v1242, %v2195
    %v3457 = vadd.f32 %v1244, %v2201
    %v3458 = vadd.f32 %v1246, %v2207
    %v3459 = vadd.f32 %v1248, %v2213
    %v3460 = vadd.f32 %v1250, %v2219
    %v3461 = vadd.f32 %v1252, %v2226
    %v3462 = vadd.f32 %v1254, %v2232
    %v3463 = vadd.f32 %v1256, %v2238
    %v3464 = vadd.f32 %v1258, %v2244
    %v3465 = vadd.f32 %v1260, %v2250
    %v3466 = vadd.f32 %v1262, %v2256
    %v3467 = vadd.f32 %v1264, %v2262
    %v3468 = vadd.f32 %v1266, %v2268
    %v3469 = vadd.f32 %v1268, %v2274
    %v3470 = vadd.f32 %v1270, %v2280
    %v3471 = vadd.f32 %v1272, %v2286
    %v3472 = vadd.f32 %v1274, %v2292
    %v3473 = vadd.f32 %v1276, %v2298
    %v3474 = vadd.f32 %v1278, %v2304
    %v3475 = vadd.f32 %v1280, %v2310
    %v3476 = vadd.f32 %v1282, %v2316
    %v3477 = vadd.f32 %v1284, %v2323
    %v3478 = vadd.f32 %v1286, %v2329
    %v3479 = vadd.f32 %v1288, %v2335
    %v3480 = vadd.f32 %v1290, %v2341
    %v3481 = vadd.f32 %v1292, %v2347
    %v3482 = vadd.f32 %v1294, %v2353
    %v3483 = vadd.f32 %v1296, %v2359
    %v3484 = vadd.f32 %v1298, %v2365
    %v3485 = vadd.f32 %v1300, %v2371
    %v3486 = vadd.f32 %v1302, %v2377
    %v3487 = vadd.f32 %v1304, %v2383
    %v3488 = vadd.f32 %v1306, %v2389
    %v3489 = vadd.f32 %v1308, %v2395
    %v3490 = vadd.f32 %v1310, %v2401
    %v3491 = vadd.f32 %v1312, %v2407
    %v3492 = vadd.f32 %v1314, %v2413
    %v3493 = vadd.f32 %v1316, %v2420
    %v3494 = vadd.f32 %v1318, %v2426
    %v3495 = vadd.f32 %v1320, %v2432
    %v3496 = vadd.f32 %v1322, %v2438
    %v3497 = vadd.f32 %v1324, %v2444
    %v3498 = vadd.f32 %v1326, %v2450
    %v3499 = vadd.f32 %v1328, %v2456
    %v3500 = vadd.f32 %v1330, %v2462
    %v3501 = vadd.f32 %v1332, %v2468
    %v3502 = vadd.f32 %v1334, %v2474
    %v3503 = vadd.f32 %v1336, %v2480
    %v3504 = vadd.f32 %v1338, %v2486
    %v3505 = vadd.f32 %v1340, %v2492
    %v3506 = vadd.f32 %v1342, %v2498
    %v3507 = vadd.f32 %v1344, %v2504
    %v3508 = vadd.f32 %v1346, %v2510
    %v3509 = vadd.f32 %v1348, %v2517
    %v3510 = vadd.f32 %v1350, %v2523
    %v3511 = vadd.f32 %v1352, %v2529
    %v3512 = vadd.f32 %v1354, %v2535
    %v3513 = vadd.f32 %v1356, %v2541
    %v3514 = vadd.f32 %v1358, %v2547
    %v3515 = vadd.f32 %v1360, %v2553
    %v3516 = vadd.f32 %v1362, %v2559
    %v3517 = vadd.f32 %v1364, %v2565
    %v3518 = vadd.f32 %v1366, %v2571
    %v3519 = vadd.f32 %v1368, %v2577
    %v3520 = vadd.f32 %v1370, %v2583
    %v3521 = vadd.f32 %v1372, %v2589
    %v3522 = vadd.f32 %v1374, %v2595
    %v3523 = vadd.f32 %v1376, %v2601
    %v3524 = vadd.f32 %v1378, %v2607
    %v3525 = vadd.f32 %v1380, %v2614
    %v3526 = vadd.f32 %v1382, %v2620
    %v3527 = vadd.f32 %v1384, %v2626
    %v3528 = vadd.f32 %v1386, %v2632
    %v3529 = vadd.f32 %v1388, %v2638
    %v3530 = vadd.f32 %v1390, %v2644
    %v3531 = vadd.f32 %v1392, %v2650
    %v3532 = vadd.f32 %v1394, %v2656
    %v3533 = vadd.f32 %v1396, %v2662
    %v3534 = vadd.f32 %v1398, %v2668
    %v3535 = vadd.f32 %v1400, %v2674
    %v3536 = vadd.f32 %v1402, %v2680
    %v3537 = vadd.f32 %v1404, %v2686
    %v3538 = vadd.f32 %v1406, %v2692
    %v3539 = vadd.f32 %v1408, %v2698
    %v3540 = vadd.f32 %v1410, %v2704
    %v3541 = vadd.f32 %v1412, %v2711
    %v3542 = vadd.f32 %v1414, %v2717
    %v3543 = vadd.f32 %v1416, %v2723
    %v3544 = vadd.f32 %v1418, %v2729
    %v3545 = vadd.f32 %v1420, %v2735
    %v3546 = vadd.f32 %v1422, %v2741
    %v3547 = vadd.f32 %v1424, %v2747
    %v3548 = vadd.f32 %v1426, %v2753
    %v3549 = vadd.f32 %v1428, %v2759
    %v3550 = vadd.f32 %v1430, %v2765
    %v3551 = vadd.f32 %v1432, %v2771
    %v3552 = vadd.f32 %v1434, %v2777
    %v3553 = vadd.f32 %v1436, %v2783
    %v3554 = vadd.f32 %v1438, %v2789
    %v3555 = vadd.f32 %v1440, %v2795
    %v3556 = vadd.f32 %v1442, %v2801
    %v3557 = vadd.f32 %v1444, %v2808
    %v3558 = vadd.f32 %v1446, %v2814
    %v3559 = vadd.f32 %v1448, %v2820
    %v3560 = vadd.f32 %v1450, %v2826
    %v3561 = vadd.f32 %v1452, %v2832
    %v3562 = vadd.f32 %v1454, %v2838
    %v3563 = vadd.f32 %v1456, %v2844
    %v3564 = vadd.f32 %v1458, %v2850
    %v3565 = vadd.f32 %v1460, %v2856
    %v3566 = vadd.f32 %v1462, %v2862
    %v3567 = vadd.f32 %v1464, %v2868
    %v3568 = vadd.f32 %v1466, %v2874
    %v3569 = vadd.f32 %v1468, %v2880
    %v3570 = vadd.f32 %v1470, %v2886
    %v3571 = vadd.f32 %v1472, %v2892
    %v3572 = vadd.f32 %v1474, %v2898
    %v3573 = vadd.f32 %v1476, %v2905
    %v3574 = vadd.f32 %v1478, %v2911
    %v3575 = vadd.f32 %v1480, %v2917
    %v3576 = vadd.f32 %v1482, %v2923
    %v3577 = vadd.f32 %v1484, %v2929
    %v3578 = vadd.f32 %v1486, %v2935
    %v3579 = vadd.f32 %v1488, %v2941
    %v3580 = vadd.f32 %v1490, %v2947
    %v3581 = vadd.f32 %v1492, %v2953
    %v3582 = vadd.f32 %v1494, %v2959
    %v3583 = vadd.f32 %v1496, %v2965
    %v3584 = vadd.f32 %v1498, %v2971
    %v3585 = vadd.f32 %v1500, %v2977
    %v3586 = vadd.f32 %v1502, %v2983
    %v3587 = vadd.f32 %v1504, %v2989
    %v3588 = vadd.f32 %v1506, %v2995
    %v3589 = vadd.f32 %v1508, %v3002
    %v3590 = vadd.f32 %v1510, %v3008
    %v3591 = vadd.f32 %v1512, %v3014
    %v3592 = vadd.f32 %v1514, %v3020
    %v3593 = vadd.f32 %v1516, %v3026
    %v3594 = vadd.f32 %v1518, %v3032
    %v3595 = vadd.f32 %v1520, %v3038
    %v3596 = vadd.f32 %v1522, %v3044
    %v3597 = vadd.f32 %v1524, %v3050
    %v3598 = vadd.f32 %v1526, %v3056
    %v3599 = vadd.f32 %v1528, %v3062
    %v3600 = vadd.f32 %v1530, %v3068
    %v3601 = vadd.f32 %v1532, %v3074
    %v3602 = vadd.f32 %v1534, %v3080
    %v3603 = vadd.f32 %v1536, %v3086
    %v3604 = vadd.f32 %v1538, %v3092
    %3861 = vset.pattern.permute.xlu0 0
    %3862 = vperm.xlu0 %3861, %v3349
    %v3863 = vpop.permute.xlu0 %3862
    %3864 = vset.pattern.permute.xlu0 0
    %3865 = vperm.xlu0 %3864, %v3350
    %v3866 = vpop.permute.xlu0 %3865
    %3867 = vset.pattern.permute.xlu0 0
    %3868 = vperm.xlu0 %3867, %v3351
    %v3869 = vpop.permute.xlu0 %3868
    %3870 = vset.pattern.permute.xlu0 0
    %3871 = vperm.xlu0 %3870, %v3352
    %v3872 = vpop.permute.xlu0 %3871
    %3873 = vset.pattern.permute.xlu0 0
    %3874 = vperm.xlu0 %3873, %v3353
    %v3875 = vpop.permute.xlu0 %3874
    %3876 = vset.pattern.permute.xlu0 0
    %3877 = vperm.xlu0 %3876, %v3354
    %v3878 = vpop.permute.xlu0 %3877
    %3879 = vset.pattern.permute.xlu0 0
    %3880 = vperm.xlu0 %3879, %v3355
    %v3881 = vpop.permute.xlu0 %3880
    %3882 = vset.pattern.permute.xlu0 0
    %3883 = vperm.xlu0 %3882, %v3356
    %v3884 = vpop.permute.xlu0 %3883
    %3885 = vset.pattern.permute.xlu0 0
    %3886 = vperm.xlu0 %3885, %v3357
    %v3887 = vpop.permute.xlu0 %3886
    %3888 = vset.pattern.permute.xlu0 0
    %3889 = vperm.xlu0 %3888, %v3358
    %v3890 = vpop.permute.xlu0 %3889
    %3891 = vset.pattern.permute.xlu0 0
    %3892 = vperm.xlu0 %3891, %v3359
    %v3893 = vpop.permute.xlu0 %3892
    %3894 = vset.pattern.permute.xlu0 0
    %3895 = vperm.xlu0 %3894, %v3360
    %v3896 = vpop.permute.xlu0 %3895
    %3897 = vset.pattern.permute.xlu0 0
    %3898 = vperm.xlu0 %3897, %v3361
    %v3899 = vpop.permute.xlu0 %3898
    %3900 = vset.pattern.permute.xlu0 0
    %3901 = vperm.xlu0 %3900, %v3362
    %v3902 = vpop.permute.xlu0 %3901
    %3903 = vset.pattern.permute.xlu0 0
    %3904 = vperm.xlu0 %3903, %v3363
    %v3905 = vpop.permute.xlu0 %3904
    %3906 = vset.pattern.permute.xlu0 0
    %3907 = vperm.xlu0 %3906, %v3364
    %v3908 = vpop.permute.xlu0 %3907
    %3909 = vset.pattern.permute.xlu0 0
    %3910 = vperm.xlu0 %3909, %v3365
    %v3911 = vpop.permute.xlu0 %3910
    %3912 = vset.pattern.permute.xlu0 0
    %3913 = vperm.xlu0 %3912, %v3366
    %v3914 = vpop.permute.xlu0 %3913
    %3915 = vset.pattern.permute.xlu0 0
    %3916 = vperm.xlu0 %3915, %v3367
    %v3917 = vpop.permute.xlu0 %3916
    %3918 = vset.pattern.permute.xlu0 0
    %3919 = vperm.xlu0 %3918, %v3368
    %v3920 = vpop.permute.xlu0 %3919
    %3921 = vset.pattern.permute.xlu0 0
    %3922 = vperm.xlu0 %3921, %v3369
    %v3923 = vpop.permute.xlu0 %3922
    %3924 = vset.pattern.permute.xlu0 0
    %3925 = vperm.xlu0 %3924, %v3370
    %v3926 = vpop.permute.xlu0 %3925
    %3927 = vset.pattern.permute.xlu0 0
    %3928 = vperm.xlu0 %3927, %v3371
    %v3929 = vpop.permute.xlu0 %3928
    %3930 = vset.pattern.permute.xlu0 0
    %3931 = vperm.xlu0 %3930, %v3372
    %v3932 = vpop.permute.xlu0 %3931
    %3933 = vset.pattern.permute.xlu0 0
    %3934 = vperm.xlu0 %3933, %v3373
    %v3935 = vpop.permute.xlu0 %3934
    %3936 = vset.pattern.permute.xlu0 0
    %3937 = vperm.xlu0 %3936, %v3374
    %v3938 = vpop.permute.xlu0 %3937
    %3939 = vset.pattern.permute.xlu0 0
    %3940 = vperm.xlu0 %3939, %v3375
    %v3941 = vpop.permute.xlu0 %3940
    %3942 = vset.pattern.permute.xlu0 0
    %3943 = vperm.xlu0 %3942, %v3376
    %v3944 = vpop.permute.xlu0 %3943
    %3945 = vset.pattern.permute.xlu0 0
    %3946 = vperm.xlu0 %3945, %v3377
    %v3947 = vpop.permute.xlu0 %3946
    %3948 = vset.pattern.permute.xlu0 0
    %3949 = vperm.xlu0 %3948, %v3378
    %v3950 = vpop.permute.xlu0 %3949
    %3951 = vset.pattern.permute.xlu0 0
    %3952 = vperm.xlu0 %3951, %v3379
    %v3953 = vpop.permute.xlu0 %3952
    %3954 = vset.pattern.permute.xlu0 0
    %3955 = vperm.xlu0 %3954, %v3380
    %v3956 = vpop.permute.xlu0 %3955
    %3957 = vset.pattern.permute.xlu0 0
    %3958 = vperm.xlu0 %3957, %v3381
    %v3959 = vpop.permute.xlu0 %3958
    %3960 = vset.pattern.permute.xlu0 0
    %3961 = vperm.xlu0 %3960, %v3382
    %v3962 = vpop.permute.xlu0 %3961
    %3963 = vset.pattern.permute.xlu0 0
    %3964 = vperm.xlu0 %3963, %v3383
    %v3965 = vpop.permute.xlu0 %3964
    %3966 = vset.pattern.permute.xlu0 0
    %3967 = vperm.xlu0 %3966, %v3384
    %v3968 = vpop.permute.xlu0 %3967
    %3969 = vset.pattern.permute.xlu0 0
    %3970 = vperm.xlu0 %3969, %v3385
    %v3971 = vpop.permute.xlu0 %3970
    %3972 = vset.pattern.permute.xlu0 0
    %3973 = vperm.xlu0 %3972, %v3386
    %v3974 = vpop.permute.xlu0 %3973
    %3975 = vset.pattern.permute.xlu0 0
    %3976 = vperm.xlu0 %3975, %v3387
    %v3977 = vpop.permute.xlu0 %3976
    %3978 = vset.pattern.permute.xlu0 0
    %3979 = vperm.xlu0 %3978, %v3388
    %v3980 = vpop.permute.xlu0 %3979
    %3981 = vset.pattern.permute.xlu0 0
    %3982 = vperm.xlu0 %3981, %v3389
    %v3983 = vpop.permute.xlu0 %3982
    %3984 = vset.pattern.permute.xlu0 0
    %3985 = vperm.xlu0 %3984, %v3390
    %v3986 = vpop.permute.xlu0 %3985
    %3987 = vset.pattern.permute.xlu0 0
    %3988 = vperm.xlu0 %3987, %v3391
    %v3989 = vpop.permute.xlu0 %3988
    %3990 = vset.pattern.permute.xlu0 0
    %3991 = vperm.xlu0 %3990, %v3392
    %v3992 = vpop.permute.xlu0 %3991
    %3993 = vset.pattern.permute.xlu0 0
    %3994 = vperm.xlu0 %3993, %v3393
    %v3995 = vpop.permute.xlu0 %3994
    %3996 = vset.pattern.permute.xlu0 0
    %3997 = vperm.xlu0 %3996, %v3394
    %v3998 = vpop.permute.xlu0 %3997
    %3999 = vset.pattern.permute.xlu0 0
    %4000 = vperm.xlu0 %3999, %v3395
    %v4001 = vpop.permute.xlu0 %4000
    %4002 = vset.pattern.permute.xlu0 0
    %4003 = vperm.xlu0 %4002, %v3396
    %v4004 = vpop.permute.xlu0 %4003
    %4005 = vset.pattern.permute.xlu0 0
    %4006 = vperm.xlu0 %4005, %v3397
    %v4007 = vpop.permute.xlu0 %4006
    %4008 = vset.pattern.permute.xlu0 0
    %4009 = vperm.xlu0 %4008, %v3398
    %v4010 = vpop.permute.xlu0 %4009
    %4011 = vset.pattern.permute.xlu0 0
    %4012 = vperm.xlu0 %4011, %v3399
    %v4013 = vpop.permute.xlu0 %4012
    %4014 = vset.pattern.permute.xlu0 0
    %4015 = vperm.xlu0 %4014, %v3400
    %v4016 = vpop.permute.xlu0 %4015
    %4017 = vset.pattern.permute.xlu0 0
    %4018 = vperm.xlu0 %4017, %v3401
    %v4019 = vpop.permute.xlu0 %4018
    %4020 = vset.pattern.permute.xlu0 0
    %4021 = vperm.xlu0 %4020, %v3402
    %v4022 = vpop.permute.xlu0 %4021
    %4023 = vset.pattern.permute.xlu0 0
    %4024 = vperm.xlu0 %4023, %v3403
    %v4025 = vpop.permute.xlu0 %4024
    %4026 = vset.pattern.permute.xlu0 0
    %4027 = vperm.xlu0 %4026, %v3404
    %v4028 = vpop.permute.xlu0 %4027
    %4029 = vset.pattern.permute.xlu0 0
    %4030 = vperm.xlu0 %4029, %v3405
    %v4031 = vpop.permute.xlu0 %4030
    %4032 = vset.pattern.permute.xlu0 0
    %4033 = vperm.xlu0 %4032, %v3406
    %v4034 = vpop.permute.xlu0 %4033
    %4035 = vset.pattern.permute.xlu0 0
    %4036 = vperm.xlu0 %4035, %v3407
    %v4037 = vpop.permute.xlu0 %4036
    %4038 = vset.pattern.permute.xlu0 0
    %4039 = vperm.xlu0 %4038, %v3408
    %v4040 = vpop.permute.xlu0 %4039
    %4041 = vset.pattern.permute.xlu0 0
    %4042 = vperm.xlu0 %4041, %v3409
    %v4043 = vpop.permute.xlu0 %4042
    %4044 = vset.pattern.permute.xlu0 0
    %4045 = vperm.xlu0 %4044, %v3410
    %v4046 = vpop.permute.xlu0 %4045
    %4047 = vset.pattern.permute.xlu0 0
    %4048 = vperm.xlu0 %4047, %v3411
    %v4049 = vpop.permute.xlu0 %4048
    %4050 = vset.pattern.permute.xlu0 0
    %4051 = vperm.xlu0 %4050, %v3412
    %v4052 = vpop.permute.xlu0 %4051
    %4053 = vset.pattern.permute.xlu0 0
    %4054 = vperm.xlu0 %4053, %v3413
    %v4055 = vpop.permute.xlu0 %4054
    %4056 = vset.pattern.permute.xlu0 0
    %4057 = vperm.xlu0 %4056, %v3414
    %v4058 = vpop.permute.xlu0 %4057
    %4059 = vset.pattern.permute.xlu0 0
    %4060 = vperm.xlu0 %4059, %v3415
    %v4061 = vpop.permute.xlu0 %4060
    %4062 = vset.pattern.permute.xlu0 0
    %4063 = vperm.xlu0 %4062, %v3416
    %v4064 = vpop.permute.xlu0 %4063
    %4065 = vset.pattern.permute.xlu0 0
    %4066 = vperm.xlu0 %4065, %v3417
    %v4067 = vpop.permute.xlu0 %4066
    %4068 = vset.pattern.permute.xlu0 0
    %4069 = vperm.xlu0 %4068, %v3418
    %v4070 = vpop.permute.xlu0 %4069
    %4071 = vset.pattern.permute.xlu0 0
    %4072 = vperm.xlu0 %4071, %v3419
    %v4073 = vpop.permute.xlu0 %4072
    %4074 = vset.pattern.permute.xlu0 0
    %4075 = vperm.xlu0 %4074, %v3420
    %v4076 = vpop.permute.xlu0 %4075
    %4077 = vset.pattern.permute.xlu0 0
    %4078 = vperm.xlu0 %4077, %v3421
    %v4079 = vpop.permute.xlu0 %4078
    %4080 = vset.pattern.permute.xlu0 0
    %4081 = vperm.xlu0 %4080, %v3422
    %v4082 = vpop.permute.xlu0 %4081
    %4083 = vset.pattern.permute.xlu0 0
    %4084 = vperm.xlu0 %4083, %v3423
    %v4085 = vpop.permute.xlu0 %4084
    %4086 = vset.pattern.permute.xlu0 0
    %4087 = vperm.xlu0 %4086, %v3424
    %v4088 = vpop.permute.xlu0 %4087
    %4089 = vset.pattern.permute.xlu0 0
    %4090 = vperm.xlu0 %4089, %v3425
    %v4091 = vpop.permute.xlu0 %4090
    %4092 = vset.pattern.permute.xlu0 0
    %4093 = vperm.xlu0 %4092, %v3426
    %v4094 = vpop.permute.xlu0 %4093
    %4095 = vset.pattern.permute.xlu0 0
    %4096 = vperm.xlu0 %4095, %v3427
    %v4097 = vpop.permute.xlu0 %4096
    %4098 = vset.pattern.permute.xlu0 0
    %4099 = vperm.xlu0 %4098, %v3428
    %v4100 = vpop.permute.xlu0 %4099
    %4101 = vset.pattern.permute.xlu0 0
    %4102 = vperm.xlu0 %4101, %v3429
    %v4103 = vpop.permute.xlu0 %4102
    %4104 = vset.pattern.permute.xlu0 0
    %4105 = vperm.xlu0 %4104, %v3430
    %v4106 = vpop.permute.xlu0 %4105
    %4107 = vset.pattern.permute.xlu0 0
    %4108 = vperm.xlu0 %4107, %v3431
    %v4109 = vpop.permute.xlu0 %4108
    %4110 = vset.pattern.permute.xlu0 0
    %4111 = vperm.xlu0 %4110, %v3432
    %v4112 = vpop.permute.xlu0 %4111
    %4113 = vset.pattern.permute.xlu0 0
    %4114 = vperm.xlu0 %4113, %v3433
    %v4115 = vpop.permute.xlu0 %4114
    %4116 = vset.pattern.permute.xlu0 0
    %4117 = vperm.xlu0 %4116, %v3434
    %v4118 = vpop.permute.xlu0 %4117
    %4119 = vset.pattern.permute.xlu0 0
    %4120 = vperm.xlu0 %4119, %v3435
    %v4121 = vpop.permute.xlu0 %4120
    %4122 = vset.pattern.permute.xlu0 0
    %4123 = vperm.xlu0 %4122, %v3436
    %v4124 = vpop.permute.xlu0 %4123
    %4125 = vset.pattern.permute.xlu0 0
    %4126 = vperm.xlu0 %4125, %v3437
    %v4127 = vpop.permute.xlu0 %4126
    %4128 = vset.pattern.permute.xlu0 0
    %4129 = vperm.xlu0 %4128, %v3438
    %v4130 = vpop.permute.xlu0 %4129
    %4131 = vset.pattern.permute.xlu0 0
    %4132 = vperm.xlu0 %4131, %v3439
    %v4133 = vpop.permute.xlu0 %4132
    %4134 = vset.pattern.permute.xlu0 0
    %4135 = vperm.xlu0 %4134, %v3440
    %v4136 = vpop.permute.xlu0 %4135
    %4137 = vset.pattern.permute.xlu0 0
    %4138 = vperm.xlu0 %4137, %v3441
    %v4139 = vpop.permute.xlu0 %4138
    %4140 = vset.pattern.permute.xlu0 0
    %4141 = vperm.xlu0 %4140, %v3442
    %v4142 = vpop.permute.xlu0 %4141
    %4143 = vset.pattern.permute.xlu0 0
    %4144 = vperm.xlu0 %4143, %v3443
    %v4145 = vpop.permute.xlu0 %4144
    %4146 = vset.pattern.permute.xlu0 0
    %4147 = vperm.xlu0 %4146, %v3444
    %v4148 = vpop.permute.xlu0 %4147
    %4149 = vset.pattern.permute.xlu0 0
    %4150 = vperm.xlu0 %4149, %v3445
    %v4151 = vpop.permute.xlu0 %4150
    %4152 = vset.pattern.permute.xlu0 0
    %4153 = vperm.xlu0 %4152, %v3446
    %v4154 = vpop.permute.xlu0 %4153
    %4155 = vset.pattern.permute.xlu0 0
    %4156 = vperm.xlu0 %4155, %v3447
    %v4157 = vpop.permute.xlu0 %4156
    %4158 = vset.pattern.permute.xlu0 0
    %4159 = vperm.xlu0 %4158, %v3448
    %v4160 = vpop.permute.xlu0 %4159
    %4161 = vset.pattern.permute.xlu0 0
    %4162 = vperm.xlu0 %4161, %v3449
    %v4163 = vpop.permute.xlu0 %4162
    %4164 = vset.pattern.permute.xlu0 0
    %4165 = vperm.xlu0 %4164, %v3450
    %v4166 = vpop.permute.xlu0 %4165
    %4167 = vset.pattern.permute.xlu0 0
    %4168 = vperm.xlu0 %4167, %v3451
    %v4169 = vpop.permute.xlu0 %4168
    %4170 = vset.pattern.permute.xlu0 0
    %4171 = vperm.xlu0 %4170, %v3452
    %v4172 = vpop.permute.xlu0 %4171
    %4173 = vset.pattern.permute.xlu0 0
    %4174 = vperm.xlu0 %4173, %v3453
    %v4175 = vpop.permute.xlu0 %4174
    %4176 = vset.pattern.permute.xlu0 0
    %4177 = vperm.xlu0 %4176, %v3454
    %v4178 = vpop.permute.xlu0 %4177
    %4179 = vset.pattern.permute.xlu0 0
    %4180 = vperm.xlu0 %4179, %v3455
    %v4181 = vpop.permute.xlu0 %4180
    %4182 = vset.pattern.permute.xlu0 0
    %4183 = vperm.xlu0 %4182, %v3456
    %v4184 = vpop.permute.xlu0 %4183
    %4185 = vset.pattern.permute.xlu0 0
    %4186 = vperm.xlu0 %4185, %v3457
    %v4187 = vpop.permute.xlu0 %4186
    %4188 = vset.pattern.permute.xlu0 0
    %4189 = vperm.xlu0 %4188, %v3458
    %v4190 = vpop.permute.xlu0 %4189
    %4191 = vset.pattern.permute.xlu0 0
    %4192 = vperm.xlu0 %4191, %v3459
    %v4193 = vpop.permute.xlu0 %4192
    %4194 = vset.pattern.permute.xlu0 0
    %4195 = vperm.xlu0 %4194, %v3460
    %v4196 = vpop.permute.xlu0 %4195
    %4197 = vset.pattern.permute.xlu0 0
    %4198 = vperm.xlu0 %4197, %v3461
    %v4199 = vpop.permute.xlu0 %4198
    %4200 = vset.pattern.permute.xlu0 0
    %4201 = vperm.xlu0 %4200, %v3462
    %v4202 = vpop.permute.xlu0 %4201
    %4203 = vset.pattern.permute.xlu0 0
    %4204 = vperm.xlu0 %4203, %v3463
    %v4205 = vpop.permute.xlu0 %4204
    %4206 = vset.pattern.permute.xlu0 0
    %4207 = vperm.xlu0 %4206, %v3464
    %v4208 = vpop.permute.xlu0 %4207
    %4209 = vset.pattern.permute.xlu0 0
    %4210 = vperm.xlu0 %4209, %v3465
    %v4211 = vpop.permute.xlu0 %4210
    %4212 = vset.pattern.permute.xlu0 0
    %4213 = vperm.xlu0 %4212, %v3466
    %v4214 = vpop.permute.xlu0 %4213
    %4215 = vset.pattern.permute.xlu0 0
    %4216 = vperm.xlu0 %4215, %v3467
    %v4217 = vpop.permute.xlu0 %4216
    %4218 = vset.pattern.permute.xlu0 0
    %4219 = vperm.xlu0 %4218, %v3468
    %v4220 = vpop.permute.xlu0 %4219
    %4221 = vset.pattern.permute.xlu0 0
    %4222 = vperm.xlu0 %4221, %v3469
    %v4223 = vpop.permute.xlu0 %4222
    %4224 = vset.pattern.permute.xlu0 0
    %4225 = vperm.xlu0 %4224, %v3470
    %v4226 = vpop.permute.xlu0 %4225
    %4227 = vset.pattern.permute.xlu0 0
    %4228 = vperm.xlu0 %4227, %v3471
    %v4229 = vpop.permute.xlu0 %4228
    %4230 = vset.pattern.permute.xlu0 0
    %4231 = vperm.xlu0 %4230, %v3472
    %v4232 = vpop.permute.xlu0 %4231
    %4233 = vset.pattern.permute.xlu0 0
    %4234 = vperm.xlu0 %4233, %v3473
    %v4235 = vpop.permute.xlu0 %4234
    %4236 = vset.pattern.permute.xlu0 0
    %4237 = vperm.xlu0 %4236, %v3474
    %v4238 = vpop.permute.xlu0 %4237
    %4239 = vset.pattern.permute.xlu0 0
    %4240 = vperm.xlu0 %4239, %v3475
    %v4241 = vpop.permute.xlu0 %4240
    %4242 = vset.pattern.permute.xlu0 0
    %4243 = vperm.xlu0 %4242, %v3476
    %v4244 = vpop.permute.xlu0 %4243
    %4245 = vset.pattern.permute.xlu0 0
    %4246 = vperm.xlu0 %4245, %v3477
    %v4247 = vpop.permute.xlu0 %4246
    %4248 = vset.pattern.permute.xlu0 0
    %4249 = vperm.xlu0 %4248, %v3478
    %v4250 = vpop.permute.xlu0 %4249
    %4251 = vset.pattern.permute.xlu0 0
    %4252 = vperm.xlu0 %4251, %v3479
    %v4253 = vpop.permute.xlu0 %4252
    %4254 = vset.pattern.permute.xlu0 0
    %4255 = vperm.xlu0 %4254, %v3480
    %v4256 = vpop.permute.xlu0 %4255
    %4257 = vset.pattern.permute.xlu0 0
    %4258 = vperm.xlu0 %4257, %v3481
    %v4259 = vpop.permute.xlu0 %4258
    %4260 = vset.pattern.permute.xlu0 0
    %4261 = vperm.xlu0 %4260, %v3482
    %v4262 = vpop.permute.xlu0 %4261
    %4263 = vset.pattern.permute.xlu0 0
    %4264 = vperm.xlu0 %4263, %v3483
    %v4265 = vpop.permute.xlu0 %4264
    %4266 = vset.pattern.permute.xlu0 0
    %4267 = vperm.xlu0 %4266, %v3484
    %v4268 = vpop.permute.xlu0 %4267
    %4269 = vset.pattern.permute.xlu0 0
    %4270 = vperm.xlu0 %4269, %v3485
    %v4271 = vpop.permute.xlu0 %4270
    %4272 = vset.pattern.permute.xlu0 0
    %4273 = vperm.xlu0 %4272, %v3486
    %v4274 = vpop.permute.xlu0 %4273
    %4275 = vset.pattern.permute.xlu0 0
    %4276 = vperm.xlu0 %4275, %v3487
    %v4277 = vpop.permute.xlu0 %4276
    %4278 = vset.pattern.permute.xlu0 0
    %4279 = vperm.xlu0 %4278, %v3488
    %v4280 = vpop.permute.xlu0 %4279
    %4281 = vset.pattern.permute.xlu0 0
    %4282 = vperm.xlu0 %4281, %v3489
    %v4283 = vpop.permute.xlu0 %4282
    %4284 = vset.pattern.permute.xlu0 0
    %4285 = vperm.xlu0 %4284, %v3490
    %v4286 = vpop.permute.xlu0 %4285
    %4287 = vset.pattern.permute.xlu0 0
    %4288 = vperm.xlu0 %4287, %v3491
    %v4289 = vpop.permute.xlu0 %4288
    %4290 = vset.pattern.permute.xlu0 0
    %4291 = vperm.xlu0 %4290, %v3492
    %v4292 = vpop.permute.xlu0 %4291
    %4293 = vset.pattern.permute.xlu0 0
    %4294 = vperm.xlu0 %4293, %v3493
    %v4295 = vpop.permute.xlu0 %4294
    %4296 = vset.pattern.permute.xlu0 0
    %4297 = vperm.xlu0 %4296, %v3494
    %v4298 = vpop.permute.xlu0 %4297
    %4299 = vset.pattern.permute.xlu0 0
    %4300 = vperm.xlu0 %4299, %v3495
    %v4301 = vpop.permute.xlu0 %4300
    %4302 = vset.pattern.permute.xlu0 0
    %4303 = vperm.xlu0 %4302, %v3496
    %v4304 = vpop.permute.xlu0 %4303
    %4305 = vset.pattern.permute.xlu0 0
    %4306 = vperm.xlu0 %4305, %v3497
    %v4307 = vpop.permute.xlu0 %4306
    %4308 = vset.pattern.permute.xlu0 0
    %4309 = vperm.xlu0 %4308, %v3498
    %v4310 = vpop.permute.xlu0 %4309
    %4311 = vset.pattern.permute.xlu0 0
    %4312 = vperm.xlu0 %4311, %v3499
    %v4313 = vpop.permute.xlu0 %4312
    %4314 = vset.pattern.permute.xlu0 0
    %4315 = vperm.xlu0 %4314, %v3500
    %v4316 = vpop.permute.xlu0 %4315
    %4317 = vset.pattern.permute.xlu0 0
    %4318 = vperm.xlu0 %4317, %v3501
    %v4319 = vpop.permute.xlu0 %4318
    %4320 = vset.pattern.permute.xlu0 0
    %4321 = vperm.xlu0 %4320, %v3502
    %v4322 = vpop.permute.xlu0 %4321
    %4323 = vset.pattern.permute.xlu0 0
    %4324 = vperm.xlu0 %4323, %v3503
    %v4325 = vpop.permute.xlu0 %4324
    %4326 = vset.pattern.permute.xlu0 0
    %4327 = vperm.xlu0 %4326, %v3504
    %v4328 = vpop.permute.xlu0 %4327
    %4329 = vset.pattern.permute.xlu0 0
    %4330 = vperm.xlu0 %4329, %v3505
    %v4331 = vpop.permute.xlu0 %4330
    %4332 = vset.pattern.permute.xlu0 0
    %4333 = vperm.xlu0 %4332, %v3506
    %v4334 = vpop.permute.xlu0 %4333
    %4335 = vset.pattern.permute.xlu0 0
    %4336 = vperm.xlu0 %4335, %v3507
    %v4337 = vpop.permute.xlu0 %4336
    %4338 = vset.pattern.permute.xlu0 0
    %4339 = vperm.xlu0 %4338, %v3508
    %v4340 = vpop.permute.xlu0 %4339
    %4341 = vset.pattern.permute.xlu0 0
    %4342 = vperm.xlu0 %4341, %v3509
    %v4343 = vpop.permute.xlu0 %4342
    %4344 = vset.pattern.permute.xlu0 0
    %4345 = vperm.xlu0 %4344, %v3510
    %v4346 = vpop.permute.xlu0 %4345
    %4347 = vset.pattern.permute.xlu0 0
    %4348 = vperm.xlu0 %4347, %v3511
    %v4349 = vpop.permute.xlu0 %4348
    %4350 = vset.pattern.permute.xlu0 0
    %4351 = vperm.xlu0 %4350, %v3512
    %v4352 = vpop.permute.xlu0 %4351
    %4353 = vset.pattern.permute.xlu0 0
    %4354 = vperm.xlu0 %4353, %v3513
    %v4355 = vpop.permute.xlu0 %4354
    %4356 = vset.pattern.permute.xlu0 0
    %4357 = vperm.xlu0 %4356, %v3514
    %v4358 = vpop.permute.xlu0 %4357
    %4359 = vset.pattern.permute.xlu0 0
    %4360 = vperm.xlu0 %4359, %v3515
    %v4361 = vpop.permute.xlu0 %4360
    %4362 = vset.pattern.permute.xlu0 0
    %4363 = vperm.xlu0 %4362, %v3516
    %v4364 = vpop.permute.xlu0 %4363
    %4365 = vset.pattern.permute.xlu0 0
    %4366 = vperm.xlu0 %4365, %v3517
    %v4367 = vpop.permute.xlu0 %4366
    %4368 = vset.pattern.permute.xlu0 0
    %4369 = vperm.xlu0 %4368, %v3518
    %v4370 = vpop.permute.xlu0 %4369
    %4371 = vset.pattern.permute.xlu0 0
    %4372 = vperm.xlu0 %4371, %v3519
    %v4373 = vpop.permute.xlu0 %4372
    %4374 = vset.pattern.permute.xlu0 0
    %4375 = vperm.xlu0 %4374, %v3520
    %v4376 = vpop.permute.xlu0 %4375
    %4377 = vset.pattern.permute.xlu0 0
    %4378 = vperm.xlu0 %4377, %v3521
    %v4379 = vpop.permute.xlu0 %4378
    %4380 = vset.pattern.permute.xlu0 0
    %4381 = vperm.xlu0 %4380, %v3522
    %v4382 = vpop.permute.xlu0 %4381
    %4383 = vset.pattern.permute.xlu0 0
    %4384 = vperm.xlu0 %4383, %v3523
    %v4385 = vpop.permute.xlu0 %4384
    %4386 = vset.pattern.permute.xlu0 0
    %4387 = vperm.xlu0 %4386, %v3524
    %v4388 = vpop.permute.xlu0 %4387
    %4389 = vset.pattern.permute.xlu0 0
    %4390 = vperm.xlu0 %4389, %v3525
    %v4391 = vpop.permute.xlu0 %4390
    %4392 = vset.pattern.permute.xlu0 0
    %4393 = vperm.xlu0 %4392, %v3526
    %v4394 = vpop.permute.xlu0 %4393
    %4395 = vset.pattern.permute.xlu0 0
    %4396 = vperm.xlu0 %4395, %v3527
    %v4397 = vpop.permute.xlu0 %4396
    %4398 = vset.pattern.permute.xlu0 0
    %4399 = vperm.xlu0 %4398, %v3528
    %v4400 = vpop.permute.xlu0 %4399
    %4401 = vset.pattern.permute.xlu0 0
    %4402 = vperm.xlu0 %4401, %v3529
    %v4403 = vpop.permute.xlu0 %4402
    %4404 = vset.pattern.permute.xlu0 0
    %4405 = vperm.xlu0 %4404, %v3530
    %v4406 = vpop.permute.xlu0 %4405
    %4407 = vset.pattern.permute.xlu0 0
    %4408 = vperm.xlu0 %4407, %v3531
    %v4409 = vpop.permute.xlu0 %4408
    %4410 = vset.pattern.permute.xlu0 0
    %4411 = vperm.xlu0 %4410, %v3532
    %v4412 = vpop.permute.xlu0 %4411
    %4413 = vset.pattern.permute.xlu0 0
    %4414 = vperm.xlu0 %4413, %v3533
    %v4415 = vpop.permute.xlu0 %4414
    %4416 = vset.pattern.permute.xlu0 0
    %4417 = vperm.xlu0 %4416, %v3534
    %v4418 = vpop.permute.xlu0 %4417
    %4419 = vset.pattern.permute.xlu0 0
    %4420 = vperm.xlu0 %4419, %v3535
    %v4421 = vpop.permute.xlu0 %4420
    %4422 = vset.pattern.permute.xlu0 0
    %4423 = vperm.xlu0 %4422, %v3536
    %v4424 = vpop.permute.xlu0 %4423
    %4425 = vset.pattern.permute.xlu0 0
    %4426 = vperm.xlu0 %4425, %v3537
    %v4427 = vpop.permute.xlu0 %4426
    %4428 = vset.pattern.permute.xlu0 0
    %4429 = vperm.xlu0 %4428, %v3538
    %v4430 = vpop.permute.xlu0 %4429
    %4431 = vset.pattern.permute.xlu0 0
    %4432 = vperm.xlu0 %4431, %v3539
    %v4433 = vpop.permute.xlu0 %4432
    %4434 = vset.pattern.permute.xlu0 0
    %4435 = vperm.xlu0 %4434, %v3540
    %v4436 = vpop.permute.xlu0 %4435
    %4437 = vset.pattern.permute.xlu0 0
    %4438 = vperm.xlu0 %4437, %v3541
    %v4439 = vpop.permute.xlu0 %4438
    %4440 = vset.pattern.permute.xlu0 0
    %4441 = vperm.xlu0 %4440, %v3542
    %v4442 = vpop.permute.xlu0 %4441
    %4443 = vset.pattern.permute.xlu0 0
    %4444 = vperm.xlu0 %4443, %v3543
    %v4445 = vpop.permute.xlu0 %4444
    %4446 = vset.pattern.permute.xlu0 0
    %4447 = vperm.xlu0 %4446, %v3544
    %v4448 = vpop.permute.xlu0 %4447
    %4449 = vset.pattern.permute.xlu0 0
    %4450 = vperm.xlu0 %4449, %v3545
    %v4451 = vpop.permute.xlu0 %4450
    %4452 = vset.pattern.permute.xlu0 0
    %4453 = vperm.xlu0 %4452, %v3546
    %v4454 = vpop.permute.xlu0 %4453
    %4455 = vset.pattern.permute.xlu0 0
    %4456 = vperm.xlu0 %4455, %v3547
    %v4457 = vpop.permute.xlu0 %4456
    %4458 = vset.pattern.permute.xlu0 0
    %4459 = vperm.xlu0 %4458, %v3548
    %v4460 = vpop.permute.xlu0 %4459
    %4461 = vset.pattern.permute.xlu0 0
    %4462 = vperm.xlu0 %4461, %v3549
    %v4463 = vpop.permute.xlu0 %4462
    %4464 = vset.pattern.permute.xlu0 0
    %4465 = vperm.xlu0 %4464, %v3550
    %v4466 = vpop.permute.xlu0 %4465
    %4467 = vset.pattern.permute.xlu0 0
    %4468 = vperm.xlu0 %4467, %v3551
    %v4469 = vpop.permute.xlu0 %4468
    %4470 = vset.pattern.permute.xlu0 0
    %4471 = vperm.xlu0 %4470, %v3552
    %v4472 = vpop.permute.xlu0 %4471
    %4473 = vset.pattern.permute.xlu0 0
    %4474 = vperm.xlu0 %4473, %v3553
    %v4475 = vpop.permute.xlu0 %4474
    %4476 = vset.pattern.permute.xlu0 0
    %4477 = vperm.xlu0 %4476, %v3554
    %v4478 = vpop.permute.xlu0 %4477
    %4479 = vset.pattern.permute.xlu0 0
    %4480 = vperm.xlu0 %4479, %v3555
    %v4481 = vpop.permute.xlu0 %4480
    %4482 = vset.pattern.permute.xlu0 0
    %4483 = vperm.xlu0 %4482, %v3556
    %v4484 = vpop.permute.xlu0 %4483
    %4485 = vset.pattern.permute.xlu0 0
    %4486 = vperm.xlu0 %4485, %v3557
    %v4487 = vpop.permute.xlu0 %4486
    %4488 = vset.pattern.permute.xlu0 0
    %4489 = vperm.xlu0 %4488, %v3558
    %v4490 = vpop.permute.xlu0 %4489
    %4491 = vset.pattern.permute.xlu0 0
    %4492 = vperm.xlu0 %4491, %v3559
    %v4493 = vpop.permute.xlu0 %4492
    %4494 = vset.pattern.permute.xlu0 0
    %4495 = vperm.xlu0 %4494, %v3560
    %v4496 = vpop.permute.xlu0 %4495
    %4497 = vset.pattern.permute.xlu0 0
    %4498 = vperm.xlu0 %4497, %v3561
    %v4499 = vpop.permute.xlu0 %4498
    %4500 = vset.pattern.permute.xlu0 0
    %4501 = vperm.xlu0 %4500, %v3562
    %v4502 = vpop.permute.xlu0 %4501
    %4503 = vset.pattern.permute.xlu0 0
    %4504 = vperm.xlu0 %4503, %v3563
    %v4505 = vpop.permute.xlu0 %4504
    %4506 = vset.pattern.permute.xlu0 0
    %4507 = vperm.xlu0 %4506, %v3564
    %v4508 = vpop.permute.xlu0 %4507
    %4509 = vset.pattern.permute.xlu0 0
    %4510 = vperm.xlu0 %4509, %v3565
    %v4511 = vpop.permute.xlu0 %4510
    %4512 = vset.pattern.permute.xlu0 0
    %4513 = vperm.xlu0 %4512, %v3566
    %v4514 = vpop.permute.xlu0 %4513
    %4515 = vset.pattern.permute.xlu0 0
    %4516 = vperm.xlu0 %4515, %v3567
    %v4517 = vpop.permute.xlu0 %4516
    %4518 = vset.pattern.permute.xlu0 0
    %4519 = vperm.xlu0 %4518, %v3568
    %v4520 = vpop.permute.xlu0 %4519
    %4521 = vset.pattern.permute.xlu0 0
    %4522 = vperm.xlu0 %4521, %v3569
    %v4523 = vpop.permute.xlu0 %4522
    %4524 = vset.pattern.permute.xlu0 0
    %4525 = vperm.xlu0 %4524, %v3570
    %v4526 = vpop.permute.xlu0 %4525
    %4527 = vset.pattern.permute.xlu0 0
    %4528 = vperm.xlu0 %4527, %v3571
    %v4529 = vpop.permute.xlu0 %4528
    %4530 = vset.pattern.permute.xlu0 0
    %4531 = vperm.xlu0 %4530, %v3572
    %v4532 = vpop.permute.xlu0 %4531
    %4533 = vset.pattern.permute.xlu0 0
    %4534 = vperm.xlu0 %4533, %v3573
    %v4535 = vpop.permute.xlu0 %4534
    %4536 = vset.pattern.permute.xlu0 0
    %4537 = vperm.xlu0 %4536, %v3574
    %v4538 = vpop.permute.xlu0 %4537
    %4539 = vset.pattern.permute.xlu0 0
    %4540 = vperm.xlu0 %4539, %v3575
    %v4541 = vpop.permute.xlu0 %4540
    %4542 = vset.pattern.permute.xlu0 0
    %4543 = vperm.xlu0 %4542, %v3576
    %v4544 = vpop.permute.xlu0 %4543
    %4545 = vset.pattern.permute.xlu0 0
    %4546 = vperm.xlu0 %4545, %v3577
    %v4547 = vpop.permute.xlu0 %4546
    %4548 = vset.pattern.permute.xlu0 0
    %4549 = vperm.xlu0 %4548, %v3578
    %v4550 = vpop.permute.xlu0 %4549
    %4551 = vset.pattern.permute.xlu0 0
    %4552 = vperm.xlu0 %4551, %v3579
    %v4553 = vpop.permute.xlu0 %4552
    %4554 = vset.pattern.permute.xlu0 0
    %4555 = vperm.xlu0 %4554, %v3580
    %v4556 = vpop.permute.xlu0 %4555
    %4557 = vset.pattern.permute.xlu0 0
    %4558 = vperm.xlu0 %4557, %v3581
    %v4559 = vpop.permute.xlu0 %4558
    %4560 = vset.pattern.permute.xlu0 0
    %4561 = vperm.xlu0 %4560, %v3582
    %v4562 = vpop.permute.xlu0 %4561
    %4563 = vset.pattern.permute.xlu0 0
    %4564 = vperm.xlu0 %4563, %v3583
    %v4565 = vpop.permute.xlu0 %4564
    %4566 = vset.pattern.permute.xlu0 0
    %4567 = vperm.xlu0 %4566, %v3584
    %v4568 = vpop.permute.xlu0 %4567
    %4569 = vset.pattern.permute.xlu0 0
    %4570 = vperm.xlu0 %4569, %v3585
    %v4571 = vpop.permute.xlu0 %4570
    %4572 = vset.pattern.permute.xlu0 0
    %4573 = vperm.xlu0 %4572, %v3586
    %v4574 = vpop.permute.xlu0 %4573
    %4575 = vset.pattern.permute.xlu0 0
    %4576 = vperm.xlu0 %4575, %v3587
    %v4577 = vpop.permute.xlu0 %4576
    %4578 = vset.pattern.permute.xlu0 0
    %4579 = vperm.xlu0 %4578, %v3588
    %v4580 = vpop.permute.xlu0 %4579
    %4581 = vset.pattern.permute.xlu0 0
    %4582 = vperm.xlu0 %4581, %v3589
    %v4583 = vpop.permute.xlu0 %4582
    %4584 = vset.pattern.permute.xlu0 0
    %4585 = vperm.xlu0 %4584, %v3590
    %v4586 = vpop.permute.xlu0 %4585
    %4587 = vset.pattern.permute.xlu0 0
    %4588 = vperm.xlu0 %4587, %v3591
    %v4589 = vpop.permute.xlu0 %4588
    %4590 = vset.pattern.permute.xlu0 0
    %4591 = vperm.xlu0 %4590, %v3592
    %v4592 = vpop.permute.xlu0 %4591
    %4593 = vset.pattern.permute.xlu0 0
    %4594 = vperm.xlu0 %4593, %v3593
    %v4595 = vpop.permute.xlu0 %4594
    %4596 = vset.pattern.permute.xlu0 0
    %4597 = vperm.xlu0 %4596, %v3594
    %v4598 = vpop.permute.xlu0 %4597
    %4599 = vset.pattern.permute.xlu0 0
    %4600 = vperm.xlu0 %4599, %v3595
    %v4601 = vpop.permute.xlu0 %4600
    %4602 = vset.pattern.permute.xlu0 0
    %4603 = vperm.xlu0 %4602, %v3596
    %v4604 = vpop.permute.xlu0 %4603
    %4605 = vset.pattern.permute.xlu0 0
    %4606 = vperm.xlu0 %4605, %v3597
    %v4607 = vpop.permute.xlu0 %4606
    %4608 = vset.pattern.permute.xlu0 0
    %4609 = vperm.xlu0 %4608, %v3598
    %v4610 = vpop.permute.xlu0 %4609
    %4611 = vset.pattern.permute.xlu0 0
    %4612 = vperm.xlu0 %4611, %v3599
    %v4613 = vpop.permute.xlu0 %4612
    %4614 = vset.pattern.permute.xlu0 0
    %4615 = vperm.xlu0 %4614, %v3600
    %v4616 = vpop.permute.xlu0 %4615
    %4617 = vset.pattern.permute.xlu0 0
    %4618 = vperm.xlu0 %4617, %v3601
    %v4619 = vpop.permute.xlu0 %4618
    %4620 = vset.pattern.permute.xlu0 0
    %4621 = vperm.xlu0 %4620, %v3602
    %v4622 = vpop.permute.xlu0 %4621
    %4623 = vset.pattern.permute.xlu0 0
    %4624 = vperm.xlu0 %4623, %v3603
    %v4625 = vpop.permute.xlu0 %4624
    %4626 = vset.pattern.permute.xlu0 0
    %4627 = vperm.xlu0 %4626, %v3604
    %v4628 = vpop.permute.xlu0 %4627
    %v4629 = vlaneseq
    %v4630 = vand.u32 %v4629, 127
    %v4631 = vperm.slane %v3863, %v4630
    %v4632 = vadd.s32 %v4630, 4294967288
    %v4633 = vperm.slane %v3866, %v4632
    %vm4634 = vcmask 130112
    %v4635 = vsel %vm4634, %v4633, %v4631
    %v4636 = vadd.s32 %v4630, 4294967280
    %v4637 = vperm.slane %v3869, %v4636
    %vm4638 = vcmask 195712
    %v4639 = vsel %vm4638, %v4637, %v4635
    %v4640 = vadd.s32 %v4630, 4294967272
    %v4641 = vperm.slane %v3872, %v4640
    %vm4642 = vcmask 261312
    %v4643 = vsel %vm4642, %v4641, %v4639
    %v4644 = vadd.s32 %v4630, 4294967264
    %v4645 = vperm.slane %v3875, %v4644
    %vm4646 = vcmask 326912
    %v4647 = vsel %vm4646, %v4645, %v4643
    %v4648 = vadd.s32 %v4630, 4294967256
    %v4649 = vperm.slane %v3878, %v4648
    %vm4650 = vcmask 392512
    %v4651 = vsel %vm4650, %v4649, %v4647
    %v4652 = vadd.s32 %v4630, 4294967248
    %v4653 = vperm.slane %v3881, %v4652
    %vm4654 = vcmask 458112
    %v4655 = vsel %vm4654, %v4653, %v4651
    %v4656 = vadd.s32 %v4630, 4294967240
    %v4657 = vperm.slane %v3884, %v4656
    %vm4658 = vcmask 523712
    %v4659 = vsel %vm4658, %v4657, %v4655
    %v4660 = vadd.s32 %v4630, 4294967232
    %v4661 = vperm.slane %v3887, %v4660
    %vm4662 = vcmask 589312
    %v4663 = vsel %vm4662, %v4661, %v4659
    %v4664 = vadd.s32 %v4630, 4294967224
    %v4665 = vperm.slane %v3890, %v4664
    %vm4666 = vcmask 654912
    %v4667 = vsel %vm4666, %v4665, %v4663
    %v4668 = vadd.s32 %v4630, 4294967216
    %v4669 = vperm.slane %v3893, %v4668
    %vm4670 = vcmask 720512
    %v4671 = vsel %vm4670, %v4669, %v4667
    %v4672 = vadd.s32 %v4630, 4294967208
    %v4673 = vperm.slane %v3896, %v4672
    %vm4674 = vcmask 786112
    %v4675 = vsel %vm4674, %v4673, %v4671
    %v4676 = vadd.s32 %v4630, 4294967200
    %v4677 = vperm.slane %v3899, %v4676
    %vm4678 = vcmask 851712
    %v4679 = vsel %vm4678, %v4677, %v4675
    %v4680 = vadd.s32 %v4630, 4294967192
    %v4681 = vperm.slane %v3902, %v4680
    %vm4682 = vcmask 917312
    %v4683 = vsel %vm4682, %v4681, %v4679
    %v4684 = vadd.s32 %v4630, 4294967184
    %v4685 = vperm.slane %v3905, %v4684
    %vm4686 = vcmask 982912
    %v4687 = vsel %vm4686, %v4685, %v4683
    %v4688 = vadd.s32 %v4630, 4294967176
    %v4689 = vperm.slane %v3908, %v4688
    %vm4690 = vcmask 1048512
    %v4691 = vsel %vm4690, %v4689, %v4687
    %v4692 = vperm.slane %v3911, %v4630
    %v4693 = vperm.slane %v3914, %v4632
    %v4694 = vsel %vm4634, %v4693, %v4692
    %v4695 = vperm.slane %v3917, %v4636
    %v4696 = vsel %vm4638, %v4695, %v4694
    %v4697 = vperm.slane %v3920, %v4640
    %v4698 = vsel %vm4642, %v4697, %v4696
    %v4699 = vperm.slane %v3923, %v4644
    %v4700 = vsel %vm4646, %v4699, %v4698
    %v4701 = vperm.slane %v3926, %v4648
    %v4702 = vsel %vm4650, %v4701, %v4700
    %v4703 = vperm.slane %v3929, %v4652
    %v4704 = vsel %vm4654, %v4703, %v4702
    %v4705 = vperm.slane %v3932, %v4656
    %v4706 = vsel %vm4658, %v4705, %v4704
    %v4707 = vperm.slane %v3935, %v4660
    %v4708 = vsel %vm4662, %v4707, %v4706
    %v4709 = vperm.slane %v3938, %v4664
    %v4710 = vsel %vm4666, %v4709, %v4708
    %v4711 = vperm.slane %v3941, %v4668
    %v4712 = vsel %vm4670, %v4711, %v4710
    %v4713 = vperm.slane %v3944, %v4672
    %v4714 = vsel %vm4674, %v4713, %v4712
    %v4715 = vperm.slane %v3947, %v4676
    %v4716 = vsel %vm4678, %v4715, %v4714
    %v4717 = vperm.slane %v3950, %v4680
    %v4718 = vsel %vm4682, %v4717, %v4716
    %v4719 = vperm.slane %v3953, %v4684
    %v4720 = vsel %vm4686, %v4719, %v4718
    %v4721 = vperm.slane %v3956, %v4688
    %v4722 = vsel %vm4690, %v4721, %v4720
    %v4723 = vperm.slane %v3959, %v4630
    %v4724 = vperm.slane %v3962, %v4632
    %v4725 = vsel %vm4634, %v4724, %v4723
    %v4726 = vperm.slane %v3965, %v4636
    %v4727 = vsel %vm4638, %v4726, %v4725
    %v4728 = vperm.slane %v3968, %v4640
    %v4729 = vsel %vm4642, %v4728, %v4727
    %v4730 = vperm.slane %v3971, %v4644
    %v4731 = vsel %vm4646, %v4730, %v4729
    %v4732 = vperm.slane %v3974, %v4648
    %v4733 = vsel %vm4650, %v4732, %v4731
    %v4734 = vperm.slane %v3977, %v4652
    %v4735 = vsel %vm4654, %v4734, %v4733
    %v4736 = vperm.slane %v3980, %v4656
    %v4737 = vsel %vm4658, %v4736, %v4735
    %v4738 = vperm.slane %v3983, %v4660
    %v4739 = vsel %vm4662, %v4738, %v4737
    %v4740 = vperm.slane %v3986, %v4664
    %v4741 = vsel %vm4666, %v4740, %v4739
    %v4742 = vperm.slane %v3989, %v4668
    %v4743 = vsel %vm4670, %v4742, %v4741
    %v4744 = vperm.slane %v3992, %v4672
    %v4745 = vsel %vm4674, %v4744, %v4743
    %v4746 = vperm.slane %v3995, %v4676
    %v4747 = vsel %vm4678, %v4746, %v4745
    %v4748 = vperm.slane %v3998, %v4680
    %v4749 = vsel %vm4682, %v4748, %v4747
    %v4750 = vperm.slane %v4001, %v4684
    %v4751 = vsel %vm4686, %v4750, %v4749
    %v4752 = vperm.slane %v4004, %v4688
    %v4753 = vsel %vm4690, %v4752, %v4751
    %v4754 = vperm.slane %v4007, %v4630
    %v4755 = vperm.slane %v4010, %v4632
    %v4756 = vsel %vm4634, %v4755, %v4754
    %v4757 = vperm.slane %v4013, %v4636
    %v4758 = vsel %vm4638, %v4757, %v4756
    %v4759 = vperm.slane %v4016, %v4640
    %v4760 = vsel %vm4642, %v4759, %v4758
    %v4761 = vperm.slane %v4019, %v4644
    %v4762 = vsel %vm4646, %v4761, %v4760
    %v4763 = vperm.slane %v4022, %v4648
    %v4764 = vsel %vm4650, %v4763, %v4762
    %v4765 = vperm.slane %v4025, %v4652
    %v4766 = vsel %vm4654, %v4765, %v4764
    %v4767 = vperm.slane %v4028, %v4656
    %v4768 = vsel %vm4658, %v4767, %v4766
    %v4769 = vperm.slane %v4031, %v4660
    %v4770 = vsel %vm4662, %v4769, %v4768
    %v4771 = vperm.slane %v4034, %v4664
    %v4772 = vsel %vm4666, %v4771, %v4770
    %v4773 = vperm.slane %v4037, %v4668
    %v4774 = vsel %vm4670, %v4773, %v4772
    %v4775 = vperm.slane %v4040, %v4672
    %v4776 = vsel %vm4674, %v4775, %v4774
    %v4777 = vperm.slane %v4043, %v4676
    %v4778 = vsel %vm4678, %v4777, %v4776
    %v4779 = vperm.slane %v4046, %v4680
    %v4780 = vsel %vm4682, %v4779, %v4778
    %v4781 = vperm.slane %v4049, %v4684
    %v4782 = vsel %vm4686, %v4781, %v4780
    %v4783 = vperm.slane %v4052, %v4688
    %v4784 = vsel %vm4690, %v4783, %v4782
    %v4785 = vperm.slane %v4055, %v4630
    %v4786 = vperm.slane %v4058, %v4632
    %v4787 = vsel %vm4634, %v4786, %v4785
    %v4788 = vperm.slane %v4061, %v4636
    %v4789 = vsel %vm4638, %v4788, %v4787
    %v4790 = vperm.slane %v4064, %v4640
    %v4791 = vsel %vm4642, %v4790, %v4789
    %v4792 = vperm.slane %v4067, %v4644
    %v4793 = vsel %vm4646, %v4792, %v4791
    %v4794 = vperm.slane %v4070, %v4648
    %v4795 = vsel %vm4650, %v4794, %v4793
    %v4796 = vperm.slane %v4073, %v4652
    %v4797 = vsel %vm4654, %v4796, %v4795
    %v4798 = vperm.slane %v4076, %v4656
    %v4799 = vsel %vm4658, %v4798, %v4797
    %v4800 = vperm.slane %v4079, %v4660
    %v4801 = vsel %vm4662, %v4800, %v4799
    %v4802 = vperm.slane %v4082, %v4664
    %v4803 = vsel %vm4666, %v4802, %v4801
    %v4804 = vperm.slane %v4085, %v4668
    %v4805 = vsel %vm4670, %v4804, %v4803
    %v4806 = vperm.slane %v4088, %v4672
    %v4807 = vsel %vm4674, %v4806, %v4805
    %v4808 = vperm.slane %v4091, %v4676
    %v4809 = vsel %vm4678, %v4808, %v4807
    %v4810 = vperm.slane %v4094, %v4680
    %v4811 = vsel %vm4682, %v4810, %v4809
    %v4812 = vperm.slane %v4097, %v4684
    %v4813 = vsel %vm4686, %v4812, %v4811
    %v4814 = vperm.slane %v4100, %v4688
    %v4815 = vsel %vm4690, %v4814, %v4813
    %v4816 = vperm.slane %v4103, %v4630
    %v4817 = vperm.slane %v4106, %v4632
    %v4818 = vsel %vm4634, %v4817, %v4816
    %v4819 = vperm.slane %v4109, %v4636
    %v4820 = vsel %vm4638, %v4819, %v4818
    %v4821 = vperm.slane %v4112, %v4640
    %v4822 = vsel %vm4642, %v4821, %v4820
    %v4823 = vperm.slane %v4115, %v4644
    %v4824 = vsel %vm4646, %v4823, %v4822
    %v4825 = vperm.slane %v4118, %v4648
    %v4826 = vsel %vm4650, %v4825, %v4824
    %v4827 = vperm.slane %v4121, %v4652
    %v4828 = vsel %vm4654, %v4827, %v4826
    %v4829 = vperm.slane %v4124, %v4656
    %v4830 = vsel %vm4658, %v4829, %v4828
    %v4831 = vperm.slane %v4127, %v4660
    %v4832 = vsel %vm4662, %v4831, %v4830
    %v4833 = vperm.slane %v4130, %v4664
    %v4834 = vsel %vm4666, %v4833, %v4832
    %v4835 = vperm.slane %v4133, %v4668
    %v4836 = vsel %vm4670, %v4835, %v4834
    %v4837 = vperm.slane %v4136, %v4672
    %v4838 = vsel %vm4674, %v4837, %v4836
    %v4839 = vperm.slane %v4139, %v4676
    %v4840 = vsel %vm4678, %v4839, %v4838
    %v4841 = vperm.slane %v4142, %v4680
    %v4842 = vsel %vm4682, %v4841, %v4840
    %v4843 = vperm.slane %v4145, %v4684
    %v4844 = vsel %vm4686, %v4843, %v4842
    %v4845 = vperm.slane %v4148, %v4688
    %v4846 = vsel %vm4690, %v4845, %v4844
    %v4847 = vperm.slane %v4151, %v4630
    %v4848 = vperm.slane %v4154, %v4632
    %v4849 = vsel %vm4634, %v4848, %v4847
    %v4850 = vperm.slane %v4157, %v4636
    %v4851 = vsel %vm4638, %v4850, %v4849
    %v4852 = vperm.slane %v4160, %v4640
    %v4853 = vsel %vm4642, %v4852, %v4851
    %v4854 = vperm.slane %v4163, %v4644
    %v4855 = vsel %vm4646, %v4854, %v4853
    %v4856 = vperm.slane %v4166, %v4648
    %v4857 = vsel %vm4650, %v4856, %v4855
    %v4858 = vperm.slane %v4169, %v4652
    %v4859 = vsel %vm4654, %v4858, %v4857
    %v4860 = vperm.slane %v4172, %v4656
    %v4861 = vsel %vm4658, %v4860, %v4859
    %v4862 = vperm.slane %v4175, %v4660
    %v4863 = vsel %vm4662, %v4862, %v4861
    %v4864 = vperm.slane %v4178, %v4664
    %v4865 = vsel %vm4666, %v4864, %v4863
    %v4866 = vperm.slane %v4181, %v4668
    %v4867 = vsel %vm4670, %v4866, %v4865
    %v4868 = vperm.slane %v4184, %v4672
    %v4869 = vsel %vm4674, %v4868, %v4867
    %v4870 = vperm.slane %v4187, %v4676
    %v4871 = vsel %vm4678, %v4870, %v4869
    %v4872 = vperm.slane %v4190, %v4680
    %v4873 = vsel %vm4682, %v4872, %v4871
    %v4874 = vperm.slane %v4193, %v4684
    %v4875 = vsel %vm4686, %v4874, %v4873
    %v4876 = vperm.slane %v4196, %v4688
    %v4877 = vsel %vm4690, %v4876, %v4875
    %v4878 = vperm.slane %v4199, %v4630
    %v4879 = vperm.slane %v4202, %v4632
    %v4880 = vsel %vm4634, %v4879, %v4878
    %v4881 = vperm.slane %v4205, %v4636
    %v4882 = vsel %vm4638, %v4881, %v4880
    %v4883 = vperm.slane %v4208, %v4640
    %v4884 = vsel %vm4642, %v4883, %v4882
    %v4885 = vperm.slane %v4211, %v4644
    %v4886 = vsel %vm4646, %v4885, %v4884
    %v4887 = vperm.slane %v4214, %v4648
    %v4888 = vsel %vm4650, %v4887, %v4886
    %v4889 = vperm.slane %v4217, %v4652
    %v4890 = vsel %vm4654, %v4889, %v4888
    %v4891 = vperm.slane %v4220, %v4656
    %v4892 = vsel %vm4658, %v4891, %v4890
    %v4893 = vperm.slane %v4223, %v4660
    %v4894 = vsel %vm4662, %v4893, %v4892
    %v4895 = vperm.slane %v4226, %v4664
    %v4896 = vsel %vm4666, %v4895, %v4894
    %v4897 = vperm.slane %v4229, %v4668
    %v4898 = vsel %vm4670, %v4897, %v4896
    %v4899 = vperm.slane %v4232, %v4672
    %v4900 = vsel %vm4674, %v4899, %v4898
    %v4901 = vperm.slane %v4235, %v4676
    %v4902 = vsel %vm4678, %v4901, %v4900
    %v4903 = vperm.slane %v4238, %v4680
    %v4904 = vsel %vm4682, %v4903, %v4902
    %v4905 = vperm.slane %v4241, %v4684
    %v4906 = vsel %vm4686, %v4905, %v4904
    %v4907 = vperm.slane %v4244, %v4688
    %v4908 = vsel %vm4690, %v4907, %v4906
    %v4909 = vperm.slane %v4247, %v4630
    %v4910 = vperm.slane %v4250, %v4632
    %v4911 = vsel %vm4634, %v4910, %v4909
    %v4912 = vperm.slane %v4253, %v4636
    %v4913 = vsel %vm4638, %v4912, %v4911
    %v4914 = vperm.slane %v4256, %v4640
    %v4915 = vsel %vm4642, %v4914, %v4913
    %v4916 = vperm.slane %v4259, %v4644
    %v4917 = vsel %vm4646, %v4916, %v4915
    %v4918 = vperm.slane %v4262, %v4648
    %v4919 = vsel %vm4650, %v4918, %v4917
    %v4920 = vperm.slane %v4265, %v4652
    %v4921 = vsel %vm4654, %v4920, %v4919
    %v4922 = vperm.slane %v4268, %v4656
    %v4923 = vsel %vm4658, %v4922, %v4921
    %v4924 = vperm.slane %v4271, %v4660
    %v4925 = vsel %vm4662, %v4924, %v4923
    %v4926 = vperm.slane %v4274, %v4664
    %v4927 = vsel %vm4666, %v4926, %v4925
    %v4928 = vperm.slane %v4277, %v4668
    %v4929 = vsel %vm4670, %v4928, %v4927
    %v4930 = vperm.slane %v4280, %v4672
    %v4931 = vsel %vm4674, %v4930, %v4929
    %v4932 = vperm.slane %v4283, %v4676
    %v4933 = vsel %vm4678, %v4932, %v4931
    %v4934 = vperm.slane %v4286, %v4680
    %v4935 = vsel %vm4682, %v4934, %v4933
    %v4936 = vperm.slane %v4289, %v4684
    %v4937 = vsel %vm4686, %v4936, %v4935
    %v4938 = vperm.slane %v4292, %v4688
    %v4939 = vsel %vm4690, %v4938, %v4937
    %v4940 = vperm.slane %v4295, %v4630
    %v4941 = vperm.slane %v4298, %v4632
    %v4942 = vsel %vm4634, %v4941, %v4940
    %v4943 = vperm.slane %v4301, %v4636
    %v4944 = vsel %vm4638, %v4943, %v4942
    %v4945 = vperm.slane %v4304, %v4640
    %v4946 = vsel %vm4642, %v4945, %v4944
    %v4947 = vperm.slane %v4307, %v4644
    %v4948 = vsel %vm4646, %v4947, %v4946
    %v4949 = vperm.slane %v4310, %v4648
    %v4950 = vsel %vm4650, %v4949, %v4948
    %v4951 = vperm.slane %v4313, %v4652
    %v4952 = vsel %vm4654, %v4951, %v4950
    %v4953 = vperm.slane %v4316, %v4656
    %v4954 = vsel %vm4658, %v4953, %v4952
    %v4955 = vperm.slane %v4319, %v4660
    %v4956 = vsel %vm4662, %v4955, %v4954
    %v4957 = vperm.slane %v4322, %v4664
    %v4958 = vsel %vm4666, %v4957, %v4956
    %v4959 = vperm.slane %v4325, %v4668
    %v4960 = vsel %vm4670, %v4959, %v4958
    %v4961 = vperm.slane %v4328, %v4672
    %v4962 = vsel %vm4674, %v4961, %v4960
    %v4963 = vperm.slane %v4331, %v4676
    %v4964 = vsel %vm4678, %v4963, %v4962
    %v4965 = vperm.slane %v4334, %v4680
    %v4966 = vsel %vm4682, %v4965, %v4964
    %v4967 = vperm.slane %v4337, %v4684
    %v4968 = vsel %vm4686, %v4967, %v4966
    %v4969 = vperm.slane %v4340, %v4688
    %v4970 = vsel %vm4690, %v4969, %v4968
    %v4971 = vperm.slane %v4343, %v4630
    %v4972 = vperm.slane %v4346, %v4632
    %v4973 = vsel %vm4634, %v4972, %v4971
    %v4974 = vperm.slane %v4349, %v4636
    %v4975 = vsel %vm4638, %v4974, %v4973
    %v4976 = vperm.slane %v4352, %v4640
    %v4977 = vsel %vm4642, %v4976, %v4975
    %v4978 = vperm.slane %v4355, %v4644
    %v4979 = vsel %vm4646, %v4978, %v4977
    %v4980 = vperm.slane %v4358, %v4648
    %v4981 = vsel %vm4650, %v4980, %v4979
    %v4982 = vperm.slane %v4361, %v4652
    %v4983 = vsel %vm4654, %v4982, %v4981
    %v4984 = vperm.slane %v4364, %v4656
    %v4985 = vsel %vm4658, %v4984, %v4983
    %v4986 = vperm.slane %v4367, %v4660
    %v4987 = vsel %vm4662, %v4986, %v4985
    %v4988 = vperm.slane %v4370, %v4664
    %v4989 = vsel %vm4666, %v4988, %v4987
    %v4990 = vperm.slane %v4373, %v4668
    %v4991 = vsel %vm4670, %v4990, %v4989
    %v4992 = vperm.slane %v4376, %v4672
    %v4993 = vsel %vm4674, %v4992, %v4991
    %v4994 = vperm.slane %v4379, %v4676
    %v4995 = vsel %vm4678, %v4994, %v4993
    %v4996 = vperm.slane %v4382, %v4680
    %v4997 = vsel %vm4682, %v4996, %v4995
    %v4998 = vperm.slane %v4385, %v4684
    %v4999 = vsel %vm4686, %v4998, %v4997
    %v5000 = vperm.slane %v4388, %v4688
    %v5001 = vsel %vm4690, %v5000, %v4999
    %v5002 = vperm.slane %v4391, %v4630
    %v5003 = vperm.slane %v4394, %v4632
    %v5004 = vsel %vm4634, %v5003, %v5002
    %v5005 = vperm.slane %v4397, %v4636
    %v5006 = vsel %vm4638, %v5005, %v5004
    %v5007 = vperm.slane %v4400, %v4640
    %v5008 = vsel %vm4642, %v5007, %v5006
    %v5009 = vperm.slane %v4403, %v4644
    %v5010 = vsel %vm4646, %v5009, %v5008
    %v5011 = vperm.slane %v4406, %v4648
    %v5012 = vsel %vm4650, %v5011, %v5010
    %v5013 = vperm.slane %v4409, %v4652
    %v5014 = vsel %vm4654, %v5013, %v5012
    %v5015 = vperm.slane %v4412, %v4656
    %v5016 = vsel %vm4658, %v5015, %v5014
    %v5017 = vperm.slane %v4415, %v4660
    %v5018 = vsel %vm4662, %v5017, %v5016
    %v5019 = vperm.slane %v4418, %v4664
    %v5020 = vsel %vm4666, %v5019, %v5018
    %v5021 = vperm.slane %v4421, %v4668
    %v5022 = vsel %vm4670, %v5021, %v5020
    %v5023 = vperm.slane %v4424, %v4672
    %v5024 = vsel %vm4674, %v5023, %v5022
    %v5025 = vperm.slane %v4427, %v4676
    %v5026 = vsel %vm4678, %v5025, %v5024
    %v5027 = vperm.slane %v4430, %v4680
    %v5028 = vsel %vm4682, %v5027, %v5026
    %v5029 = vperm.slane %v4433, %v4684
    %v5030 = vsel %vm4686, %v5029, %v5028
    %v5031 = vperm.slane %v4436, %v4688
    %v5032 = vsel %vm4690, %v5031, %v5030
    %v5033 = vperm.slane %v4439, %v4630
    %v5034 = vperm.slane %v4442, %v4632
    %v5035 = vsel %vm4634, %v5034, %v5033
    %v5036 = vperm.slane %v4445, %v4636
    %v5037 = vsel %vm4638, %v5036, %v5035
    %v5038 = vperm.slane %v4448, %v4640
    %v5039 = vsel %vm4642, %v5038, %v5037
    %v5040 = vperm.slane %v4451, %v4644
    %v5041 = vsel %vm4646, %v5040, %v5039
    %v5042 = vperm.slane %v4454, %v4648
    %v5043 = vsel %vm4650, %v5042, %v5041
    %v5044 = vperm.slane %v4457, %v4652
    %v5045 = vsel %vm4654, %v5044, %v5043
    %v5046 = vperm.slane %v4460, %v4656
    %v5047 = vsel %vm4658, %v5046, %v5045
    %v5048 = vperm.slane %v4463, %v4660
    %v5049 = vsel %vm4662, %v5048, %v5047
    %v5050 = vperm.slane %v4466, %v4664
    %v5051 = vsel %vm4666, %v5050, %v5049
    %v5052 = vperm.slane %v4469, %v4668
    %v5053 = vsel %vm4670, %v5052, %v5051
    %v5054 = vperm.slane %v4472, %v4672
    %v5055 = vsel %vm4674, %v5054, %v5053
    %v5056 = vperm.slane %v4475, %v4676
    %v5057 = vsel %vm4678, %v5056, %v5055
    %v5058 = vperm.slane %v4478, %v4680
    %v5059 = vsel %vm4682, %v5058, %v5057
    %v5060 = vperm.slane %v4481, %v4684
    %v5061 = vsel %vm4686, %v5060, %v5059
    %v5062 = vperm.slane %v4484, %v4688
    %v5063 = vsel %vm4690, %v5062, %v5061
    %v5064 = vperm.slane %v4487, %v4630
    %v5065 = vperm.slane %v4490, %v4632
    %v5066 = vsel %vm4634, %v5065, %v5064
    %v5067 = vperm.slane %v4493, %v4636
    %v5068 = vsel %vm4638, %v5067, %v5066
    %v5069 = vperm.slane %v4496, %v4640
    %v5070 = vsel %vm4642, %v5069, %v5068
    %v5071 = vperm.slane %v4499, %v4644
    %v5072 = vsel %vm4646, %v5071, %v5070
    %v5073 = vperm.slane %v4502, %v4648
    %v5074 = vsel %vm4650, %v5073, %v5072
    %v5075 = vperm.slane %v4505, %v4652
    %v5076 = vsel %vm4654, %v5075, %v5074
    %v5077 = vperm.slane %v4508, %v4656
    %v5078 = vsel %vm4658, %v5077, %v5076
    %v5079 = vperm.slane %v4511, %v4660
    %v5080 = vsel %vm4662, %v5079, %v5078
    %v5081 = vperm.slane %v4514, %v4664
    %v5082 = vsel %vm4666, %v5081, %v5080
    %v5083 = vperm.slane %v4517, %v4668
    %v5084 = vsel %vm4670, %v5083, %v5082
    %v5085 = vperm.slane %v4520, %v4672
    %v5086 = vsel %vm4674, %v5085, %v5084
    %v5087 = vperm.slane %v4523, %v4676
    %v5088 = vsel %vm4678, %v5087, %v5086
    %v5089 = vperm.slane %v4526, %v4680
    %v5090 = vsel %vm4682, %v5089, %v5088
    %v5091 = vperm.slane %v4529, %v4684
    %v5092 = vsel %vm4686, %v5091, %v5090
    %v5093 = vperm.slane %v4532, %v4688
    %v5094 = vsel %vm4690, %v5093, %v5092
    %v5095 = vperm.slane %v4535, %v4630
    %v5096 = vperm.slane %v4538, %v4632
    %v5097 = vsel %vm4634, %v5096, %v5095
    %v5098 = vperm.slane %v4541, %v4636
    %v5099 = vsel %vm4638, %v5098, %v5097
    %v5100 = vperm.slane %v4544, %v4640
    %v5101 = vsel %vm4642, %v5100, %v5099
    %v5102 = vperm.slane %v4547, %v4644
    %v5103 = vsel %vm4646, %v5102, %v5101
    %v5104 = vperm.slane %v4550, %v4648
    %v5105 = vsel %vm4650, %v5104, %v5103
    %v5106 = vperm.slane %v4553, %v4652
    %v5107 = vsel %vm4654, %v5106, %v5105
    %v5108 = vperm.slane %v4556, %v4656
    %v5109 = vsel %vm4658, %v5108, %v5107
    %v5110 = vperm.slane %v4559, %v4660
    %v5111 = vsel %vm4662, %v5110, %v5109
    %v5112 = vperm.slane %v4562, %v4664
    %v5113 = vsel %vm4666, %v5112, %v5111
    %v5114 = vperm.slane %v4565, %v4668
    %v5115 = vsel %vm4670, %v5114, %v5113
    %v5116 = vperm.slane %v4568, %v4672
    %v5117 = vsel %vm4674, %v5116, %v5115
    %v5118 = vperm.slane %v4571, %v4676
    %v5119 = vsel %vm4678, %v5118, %v5117
    %v5120 = vperm.slane %v4574, %v4680
    %v5121 = vsel %vm4682, %v5120, %v5119
    %v5122 = vperm.slane %v4577, %v4684
    %v5123 = vsel %vm4686, %v5122, %v5121
    %v5124 = vperm.slane %v4580, %v4688
    %v5125 = vsel %vm4690, %v5124, %v5123
    %v5126 = vperm.slane %v4583, %v4630
    %v5127 = vperm.slane %v4586, %v4632
    %v5128 = vsel %vm4634, %v5127, %v5126
    %v5129 = vperm.slane %v4589, %v4636
    %v5130 = vsel %vm4638, %v5129, %v5128
    %v5131 = vperm.slane %v4592, %v4640
    %v5132 = vsel %vm4642, %v5131, %v5130
    %v5133 = vperm.slane %v4595, %v4644
    %v5134 = vsel %vm4646, %v5133, %v5132
    %v5135 = vperm.slane %v4598, %v4648
    %v5136 = vsel %vm4650, %v5135, %v5134
    %v5137 = vperm.slane %v4601, %v4652
    %v5138 = vsel %vm4654, %v5137, %v5136
    %v5139 = vperm.slane %v4604, %v4656
    %v5140 = vsel %vm4658, %v5139, %v5138
    %v5141 = vperm.slane %v4607, %v4660
    %v5142 = vsel %vm4662, %v5141, %v5140
    %v5143 = vperm.slane %v4610, %v4664
    %v5144 = vsel %vm4666, %v5143, %v5142
    %v5145 = vperm.slane %v4613, %v4668
    %v5146 = vsel %vm4670, %v5145, %v5144
    %v5147 = vperm.slane %v4616, %v4672
    %v5148 = vsel %vm4674, %v5147, %v5146
    %v5149 = vperm.slane %v4619, %v4676
    %v5150 = vsel %vm4678, %v5149, %v5148
    %v5151 = vperm.slane %v4622, %v4680
    %v5152 = vsel %vm4682, %v5151, %v5150
    %v5153 = vperm.slane %v4625, %v4684
    %v5154 = vsel %vm4686, %v5153, %v5152
    %v5155 = vperm.slane %v4628, %v4688
    %v5156 = vsel %vm4690, %v5155, %v5154
    %vm5157 = vcmask 1041409
    %v5158 = vsel %vm5157, %v4722, %v4691
    %vm5159 = vcmask 1042434
    %v5160 = vsel %vm5159, %v4753, %v5158
    %vm5161 = vcmask 1043459
    %v5162 = vsel %vm5161, %v4784, %v5160
    %vm5163 = vcmask 1044484
    %v5164 = vsel %vm5163, %v4815, %v5162
    %vm5165 = vcmask 1045509
    %v5166 = vsel %vm5165, %v4846, %v5164
    %vm5167 = vcmask 1046534
    %v5168 = vsel %vm5167, %v4877, %v5166
    %vm5169 = vcmask 1047559
    %v5170 = vsel %vm5169, %v4908, %v5168
    %v5171 = vsel %vm5157, %v4970, %v4939
    %v5172 = vsel %vm5159, %v5001, %v5171
    %v5173 = vsel %vm5161, %v5032, %v5172
    %v5174 = vsel %vm5163, %v5063, %v5173
    %v5175 = vsel %vm5165, %v5094, %v5174
    %v5176 = vsel %vm5167, %v5125, %v5175
    %v5177 = vsel %vm5169, %v5156, %v5176
    %5180 = vmax.xlane.f32.xlu0 %v5170
    %v5181 = vpop.xlane.xlu0 %5180
    %5182 = vmax.xlane.f32.xlu0 %v5177
    %v5183 = vpop.xlane.xlu0 %5182
    %v5186 = vperm.slane %v5181, 0
    %v5187 = vperm.slane %v5181, 1
    %v5188 = vperm.slane %v5181, 2
    %v5189 = vperm.slane %v5181, 3
    %v5190 = vperm.slane %v5181, 4
    %v5191 = vperm.slane %v5181, 5
    %v5192 = vperm.slane %v5181, 6
    %v5193 = vperm.slane %v5181, 7
    %v5194 = vperm.slane %v5183, 0
    %v5195 = vperm.slane %v5183, 1
    %v5196 = vperm.slane %v5183, 2
    %v5197 = vperm.slane %v5183, 3
    %v5198 = vperm.slane %v5183, 4
    %v5199 = vperm.slane %v5183, 5
    %v5200 = vperm.slane %v5183, 6
    %v5201 = vperm.slane %v5183, 7
    %v5218 = vsub.f32 %v3349, %v5186
    %v5219 = vsub.f32 %v3350, %v5186
    %v5220 = vsub.f32 %v3351, %v5186
    %v5221 = vsub.f32 %v3352, %v5186
    %v5222 = vsub.f32 %v3353, %v5186
    %v5223 = vsub.f32 %v3354, %v5186
    %v5224 = vsub.f32 %v3355, %v5186
    %v5225 = vsub.f32 %v3356, %v5186
    %v5226 = vsub.f32 %v3357, %v5186
    %v5227 = vsub.f32 %v3358, %v5186
    %v5228 = vsub.f32 %v3359, %v5186
    %v5229 = vsub.f32 %v3360, %v5186
    %v5230 = vsub.f32 %v3361, %v5186
    %v5231 = vsub.f32 %v3362, %v5186
    %v5232 = vsub.f32 %v3363, %v5186
    %v5233 = vsub.f32 %v3364, %v5186
    %v5234 = vsub.f32 %v3365, %v5187
    %v5235 = vsub.f32 %v3366, %v5187
    %v5236 = vsub.f32 %v3367, %v5187
    %v5237 = vsub.f32 %v3368, %v5187
    %v5238 = vsub.f32 %v3369, %v5187
    %v5239 = vsub.f32 %v3370, %v5187
    %v5240 = vsub.f32 %v3371, %v5187
    %v5241 = vsub.f32 %v3372, %v5187
    %v5242 = vsub.f32 %v3373, %v5187
    %v5243 = vsub.f32 %v3374, %v5187
    %v5244 = vsub.f32 %v3375, %v5187
    %v5245 = vsub.f32 %v3376, %v5187
    %v5246 = vsub.f32 %v3377, %v5187
    %v5247 = vsub.f32 %v3378, %v5187
    %v5248 = vsub.f32 %v3379, %v5187
    %v5249 = vsub.f32 %v3380, %v5187
    %v5250 = vsub.f32 %v3381, %v5188
    %v5251 = vsub.f32 %v3382, %v5188
    %v5252 = vsub.f32 %v3383, %v5188
    %v5253 = vsub.f32 %v3384, %v5188
    %v5254 = vsub.f32 %v3385, %v5188
    %v5255 = vsub.f32 %v3386, %v5188
    %v5256 = vsub.f32 %v3387, %v5188
    %v5257 = vsub.f32 %v3388, %v5188
    %v5258 = vsub.f32 %v3389, %v5188
    %v5259 = vsub.f32 %v3390, %v5188
    %v5260 = vsub.f32 %v3391, %v5188
    %v5261 = vsub.f32 %v3392, %v5188
    %v5262 = vsub.f32 %v3393, %v5188
    %v5263 = vsub.f32 %v3394, %v5188
    %v5264 = vsub.f32 %v3395, %v5188
    %v5265 = vsub.f32 %v3396, %v5188
    %v5266 = vsub.f32 %v3397, %v5189
    %v5267 = vsub.f32 %v3398, %v5189
    %v5268 = vsub.f32 %v3399, %v5189
    %v5269 = vsub.f32 %v3400, %v5189
    %v5270 = vsub.f32 %v3401, %v5189
    %v5271 = vsub.f32 %v3402, %v5189
    %v5272 = vsub.f32 %v3403, %v5189
    %v5273 = vsub.f32 %v3404, %v5189
    %v5274 = vsub.f32 %v3405, %v5189
    %v5275 = vsub.f32 %v3406, %v5189
    %v5276 = vsub.f32 %v3407, %v5189
    %v5277 = vsub.f32 %v3408, %v5189
    %v5278 = vsub.f32 %v3409, %v5189
    %v5279 = vsub.f32 %v3410, %v5189
    %v5280 = vsub.f32 %v3411, %v5189
    %v5281 = vsub.f32 %v3412, %v5189
    %v5282 = vsub.f32 %v3413, %v5190
    %v5283 = vsub.f32 %v3414, %v5190
    %v5284 = vsub.f32 %v3415, %v5190
    %v5285 = vsub.f32 %v3416, %v5190
    %v5286 = vsub.f32 %v3417, %v5190
    %v5287 = vsub.f32 %v3418, %v5190
    %v5288 = vsub.f32 %v3419, %v5190
    %v5289 = vsub.f32 %v3420, %v5190
    %v5290 = vsub.f32 %v3421, %v5190
    %v5291 = vsub.f32 %v3422, %v5190
    %v5292 = vsub.f32 %v3423, %v5190
    %v5293 = vsub.f32 %v3424, %v5190
    %v5294 = vsub.f32 %v3425, %v5190
    %v5295 = vsub.f32 %v3426, %v5190
    %v5296 = vsub.f32 %v3427, %v5190
    %v5297 = vsub.f32 %v3428, %v5190
    %v5298 = vsub.f32 %v3429, %v5191
    %v5299 = vsub.f32 %v3430, %v5191
    %v5300 = vsub.f32 %v3431, %v5191
    %v5301 = vsub.f32 %v3432, %v5191
    %v5302 = vsub.f32 %v3433, %v5191
    %v5303 = vsub.f32 %v3434, %v5191
    %v5304 = vsub.f32 %v3435, %v5191
    %v5305 = vsub.f32 %v3436, %v5191
    %v5306 = vsub.f32 %v3437, %v5191
    %v5307 = vsub.f32 %v3438, %v5191
    %v5308 = vsub.f32 %v3439, %v5191
    %v5309 = vsub.f32 %v3440, %v5191
    %v5310 = vsub.f32 %v3441, %v5191
    %v5311 = vsub.f32 %v3442, %v5191
    %v5312 = vsub.f32 %v3443, %v5191
    %v5313 = vsub.f32 %v3444, %v5191
    %v5314 = vsub.f32 %v3445, %v5192
    %v5315 = vsub.f32 %v3446, %v5192
    %v5316 = vsub.f32 %v3447, %v5192
    %v5317 = vsub.f32 %v3448, %v5192
    %v5318 = vsub.f32 %v3449, %v5192
    %v5319 = vsub.f32 %v3450, %v5192
    %v5320 = vsub.f32 %v3451, %v5192
    %v5321 = vsub.f32 %v3452, %v5192
    %v5322 = vsub.f32 %v3453, %v5192
    %v5323 = vsub.f32 %v3454, %v5192
    %v5324 = vsub.f32 %v3455, %v5192
    %v5325 = vsub.f32 %v3456, %v5192
    %v5326 = vsub.f32 %v3457, %v5192
    %v5327 = vsub.f32 %v3458, %v5192
    %v5328 = vsub.f32 %v3459, %v5192
    %v5329 = vsub.f32 %v3460, %v5192
    %v5330 = vsub.f32 %v3461, %v5193
    %v5331 = vsub.f32 %v3462, %v5193
    %v5332 = vsub.f32 %v3463, %v5193
    %v5333 = vsub.f32 %v3464, %v5193
    %v5334 = vsub.f32 %v3465, %v5193
    %v5335 = vsub.f32 %v3466, %v5193
    %v5336 = vsub.f32 %v3467, %v5193
    %v5337 = vsub.f32 %v3468, %v5193
    %v5338 = vsub.f32 %v3469, %v5193
    %v5339 = vsub.f32 %v3470, %v5193
    %v5340 = vsub.f32 %v3471, %v5193
    %v5341 = vsub.f32 %v3472, %v5193
    %v5342 = vsub.f32 %v3473, %v5193
    %v5343 = vsub.f32 %v3474, %v5193
    %v5344 = vsub.f32 %v3475, %v5193
    %v5345 = vsub.f32 %v3476, %v5193
    %v5346 = vsub.f32 %v3477, %v5194
    %v5347 = vsub.f32 %v3478, %v5194
    %v5348 = vsub.f32 %v3479, %v5194
    %v5349 = vsub.f32 %v3480, %v5194
    %v5350 = vsub.f32 %v3481, %v5194
    %v5351 = vsub.f32 %v3482, %v5194
    %v5352 = vsub.f32 %v3483, %v5194
    %v5353 = vsub.f32 %v3484, %v5194
    %v5354 = vsub.f32 %v3485, %v5194
    %v5355 = vsub.f32 %v3486, %v5194
    %v5356 = vsub.f32 %v3487, %v5194
    %v5357 = vsub.f32 %v3488, %v5194
    %v5358 = vsub.f32 %v3489, %v5194
    %v5359 = vsub.f32 %v3490, %v5194
    %v5360 = vsub.f32 %v3491, %v5194
    %v5361 = vsub.f32 %v3492, %v5194
    %v5362 = vsub.f32 %v3493, %v5195
    %v5363 = vsub.f32 %v3494, %v5195
    %v5364 = vsub.f32 %v3495, %v5195
    %v5365 = vsub.f32 %v3496, %v5195
    %v5366 = vsub.f32 %v3497, %v5195
    %v5367 = vsub.f32 %v3498, %v5195
    %v5368 = vsub.f32 %v3499, %v5195
    %v5369 = vsub.f32 %v3500, %v5195
    %v5370 = vsub.f32 %v3501, %v5195
    %v5371 = vsub.f32 %v3502, %v5195
    %v5372 = vsub.f32 %v3503, %v5195
    %v5373 = vsub.f32 %v3504, %v5195
    %v5374 = vsub.f32 %v3505, %v5195
    %v5375 = vsub.f32 %v3506, %v5195
    %v5376 = vsub.f32 %v3507, %v5195
    %v5377 = vsub.f32 %v3508, %v5195
    %v5378 = vsub.f32 %v3509, %v5196
    %v5379 = vsub.f32 %v3510, %v5196
    %v5380 = vsub.f32 %v3511, %v5196
    %v5381 = vsub.f32 %v3512, %v5196
    %v5382 = vsub.f32 %v3513, %v5196
    %v5383 = vsub.f32 %v3514, %v5196
    %v5384 = vsub.f32 %v3515, %v5196
    %v5385 = vsub.f32 %v3516, %v5196
    %v5386 = vsub.f32 %v3517, %v5196
    %v5387 = vsub.f32 %v3518, %v5196
    %v5388 = vsub.f32 %v3519, %v5196
    %v5389 = vsub.f32 %v3520, %v5196
    %v5390 = vsub.f32 %v3521, %v5196
    %v5391 = vsub.f32 %v3522, %v5196
    %v5392 = vsub.f32 %v3523, %v5196
    %v5393 = vsub.f32 %v3524, %v5196
    %v5394 = vsub.f32 %v3525, %v5197
    %v5395 = vsub.f32 %v3526, %v5197
    %v5396 = vsub.f32 %v3527, %v5197
    %v5397 = vsub.f32 %v3528, %v5197
    %v5398 = vsub.f32 %v3529, %v5197
    %v5399 = vsub.f32 %v3530, %v5197
    %v5400 = vsub.f32 %v3531, %v5197
    %v5401 = vsub.f32 %v3532, %v5197
    %v5402 = vsub.f32 %v3533, %v5197
    %v5403 = vsub.f32 %v3534, %v5197
    %v5404 = vsub.f32 %v3535, %v5197
    %v5405 = vsub.f32 %v3536, %v5197
    %v5406 = vsub.f32 %v3537, %v5197
    %v5407 = vsub.f32 %v3538, %v5197
    %v5408 = vsub.f32 %v3539, %v5197
    %v5409 = vsub.f32 %v3540, %v5197
    %v5410 = vsub.f32 %v3541, %v5198
    %v5411 = vsub.f32 %v3542, %v5198
    %v5412 = vsub.f32 %v3543, %v5198
    %v5413 = vsub.f32 %v3544, %v5198
    %v5414 = vsub.f32 %v3545, %v5198
    %v5415 = vsub.f32 %v3546, %v5198
    %v5416 = vsub.f32 %v3547, %v5198
    %v5417 = vsub.f32 %v3548, %v5198
    %v5418 = vsub.f32 %v3549, %v5198
    %v5419 = vsub.f32 %v3550, %v5198
    %v5420 = vsub.f32 %v3551, %v5198
    %v5421 = vsub.f32 %v3552, %v5198
    %v5422 = vsub.f32 %v3553, %v5198
    %v5423 = vsub.f32 %v3554, %v5198
    %v5424 = vsub.f32 %v3555, %v5198
    %v5425 = vsub.f32 %v3556, %v5198
    %v5426 = vsub.f32 %v3557, %v5199
    %v5427 = vsub.f32 %v3558, %v5199
    %v5428 = vsub.f32 %v3559, %v5199
    %v5429 = vsub.f32 %v3560, %v5199
    %v5430 = vsub.f32 %v3561, %v5199
    %v5431 = vsub.f32 %v3562, %v5199
    %v5432 = vsub.f32 %v3563, %v5199
    %v5433 = vsub.f32 %v3564, %v5199
    %v5434 = vsub.f32 %v3565, %v5199
    %v5435 = vsub.f32 %v3566, %v5199
    %v5436 = vsub.f32 %v3567, %v5199
    %v5437 = vsub.f32 %v3568, %v5199
    %v5438 = vsub.f32 %v3569, %v5199
    %v5439 = vsub.f32 %v3570, %v5199
    %v5440 = vsub.f32 %v3571, %v5199
    %v5441 = vsub.f32 %v3572, %v5199
    %v5442 = vsub.f32 %v3573, %v5200
    %v5443 = vsub.f32 %v3574, %v5200
    %v5444 = vsub.f32 %v3575, %v5200
    %v5445 = vsub.f32 %v3576, %v5200
    %v5446 = vsub.f32 %v3577, %v5200
    %v5447 = vsub.f32 %v3578, %v5200
    %v5448 = vsub.f32 %v3579, %v5200
    %v5449 = vsub.f32 %v3580, %v5200
    %v5450 = vsub.f32 %v3581, %v5200
    %v5451 = vsub.f32 %v3582, %v5200
    %v5452 = vsub.f32 %v3583, %v5200
    %v5453 = vsub.f32 %v3584, %v5200
    %v5454 = vsub.f32 %v3585, %v5200
    %v5455 = vsub.f32 %v3586, %v5200
    %v5456 = vsub.f32 %v3587, %v5200
    %v5457 = vsub.f32 %v3588, %v5200
    %v5458 = vsub.f32 %v3589, %v5201
    %v5459 = vsub.f32 %v3590, %v5201
    %v5460 = vsub.f32 %v3591, %v5201
    %v5461 = vsub.f32 %v3592, %v5201
    %v5462 = vsub.f32 %v3593, %v5201
    %v5463 = vsub.f32 %v3594, %v5201
    %v5464 = vsub.f32 %v3595, %v5201
    %v5465 = vsub.f32 %v3596, %v5201
    %v5466 = vsub.f32 %v3597, %v5201
    %v5467 = vsub.f32 %v3598, %v5201
    %v5468 = vsub.f32 %v3599, %v5201
    %v5469 = vsub.f32 %v3600, %v5201
    %v5470 = vsub.f32 %v3601, %v5201
    %v5471 = vsub.f32 %v3602, %v5201
    %v5472 = vsub.f32 %v3603, %v5201
    %v5473 = vsub.f32 %v3604, %v5201
    %v5474 = vmul.f32 %v5218, 1.442695
    %v5475 = vpow.pop %v5474
    %v5476 = vmul.f32 %v5219, 1.442695
    %v5477 = vpow.pop %v5476
    %v5478 = vmul.f32 %v5220, 1.442695
    %v5479 = vpow.pop %v5478
    %v5480 = vmul.f32 %v5221, 1.442695
    %v5481 = vpow.pop %v5480
    %v5482 = vmul.f32 %v5222, 1.442695
    %v5483 = vpow.pop %v5482
    %v5484 = vmul.f32 %v5223, 1.442695
    %v5485 = vpow.pop %v5484
    %v5486 = vmul.f32 %v5224, 1.442695
    %v5487 = vpow.pop %v5486
    %v5488 = vmul.f32 %v5225, 1.442695
    %v5489 = vpow.pop %v5488
    %v5490 = vmul.f32 %v5226, 1.442695
    %v5491 = vpow.pop %v5490
    %v5492 = vmul.f32 %v5227, 1.442695
    %v5493 = vpow.pop %v5492
    %v5494 = vmul.f32 %v5228, 1.442695
    %v5495 = vpow.pop %v5494
    %v5496 = vmul.f32 %v5229, 1.442695
    %v5497 = vpow.pop %v5496
    %v5498 = vmul.f32 %v5230, 1.442695
    %v5499 = vpow.pop %v5498
    %v5500 = vmul.f32 %v5231, 1.442695
    %v5501 = vpow.pop %v5500
    %v5502 = vmul.f32 %v5232, 1.442695
    %v5503 = vpow.pop %v5502
    %v5504 = vmul.f32 %v5233, 1.442695
    %v5505 = vpow.pop %v5504
    %v5506 = vmul.f32 %v5234, 1.442695
    %v5507 = vpow.pop %v5506
    %v5508 = vmul.f32 %v5235, 1.442695
    %v5509 = vpow.pop %v5508
    %v5510 = vmul.f32 %v5236, 1.442695
    %v5511 = vpow.pop %v5510
    %v5512 = vmul.f32 %v5237, 1.442695
    %v5513 = vpow.pop %v5512
    %v5514 = vmul.f32 %v5238, 1.442695
    %v5515 = vpow.pop %v5514
    %v5516 = vmul.f32 %v5239, 1.442695
    %v5517 = vpow.pop %v5516
    %v5518 = vmul.f32 %v5240, 1.442695
    %v5519 = vpow.pop %v5518
    %v5520 = vmul.f32 %v5241, 1.442695
    %v5521 = vpow.pop %v5520
    %v5522 = vmul.f32 %v5242, 1.442695
    %v5523 = vpow.pop %v5522
    %v5524 = vmul.f32 %v5243, 1.442695
    %v5525 = vpow.pop %v5524
    %v5526 = vmul.f32 %v5244, 1.442695
    %v5527 = vpow.pop %v5526
    %v5528 = vmul.f32 %v5245, 1.442695
    %v5529 = vpow.pop %v5528
    %v5530 = vmul.f32 %v5246, 1.442695
    %v5531 = vpow.pop %v5530
    %v5532 = vmul.f32 %v5247, 1.442695
    %v5533 = vpow.pop %v5532
    %v5534 = vmul.f32 %v5248, 1.442695
    %v5535 = vpow.pop %v5534
    %v5536 = vmul.f32 %v5249, 1.442695
    %v5537 = vpow.pop %v5536
    %v5538 = vmul.f32 %v5250, 1.442695
    %v5539 = vpow.pop %v5538
    %v5540 = vmul.f32 %v5251, 1.442695
    %v5541 = vpow.pop %v5540
    %v5542 = vmul.f32 %v5252, 1.442695
    %v5543 = vpow.pop %v5542
    %v5544 = vmul.f32 %v5253, 1.442695
    %v5545 = vpow.pop %v5544
    %v5546 = vmul.f32 %v5254, 1.442695
    %v5547 = vpow.pop %v5546
    %v5548 = vmul.f32 %v5255, 1.442695
    %v5549 = vpow.pop %v5548
    %v5550 = vmul.f32 %v5256, 1.442695
    %v5551 = vpow.pop %v5550
    %v5552 = vmul.f32 %v5257, 1.442695
    %v5553 = vpow.pop %v5552
    %v5554 = vmul.f32 %v5258, 1.442695
    %v5555 = vpow.pop %v5554
    %v5556 = vmul.f32 %v5259, 1.442695
    %v5557 = vpow.pop %v5556
    %v5558 = vmul.f32 %v5260, 1.442695
    %v5559 = vpow.pop %v5558
    %v5560 = vmul.f32 %v5261, 1.442695
    %v5561 = vpow.pop %v5560
    %v5562 = vmul.f32 %v5262, 1.442695
    %v5563 = vpow.pop %v5562
    %v5564 = vmul.f32 %v5263, 1.442695
    %v5565 = vpow.pop %v5564
    %v5566 = vmul.f32 %v5264, 1.442695
    %v5567 = vpow.pop %v5566
    %v5568 = vmul.f32 %v5265, 1.442695
    %v5569 = vpow.pop %v5568
    %v5570 = vmul.f32 %v5266, 1.442695
    %v5571 = vpow.pop %v5570
    %v5572 = vmul.f32 %v5267, 1.442695
    %v5573 = vpow.pop %v5572
    %v5574 = vmul.f32 %v5268, 1.442695
    %v5575 = vpow.pop %v5574
    %v5576 = vmul.f32 %v5269, 1.442695
    %v5577 = vpow.pop %v5576
    %v5578 = vmul.f32 %v5270, 1.442695
    %v5579 = vpow.pop %v5578
    %v5580 = vmul.f32 %v5271, 1.442695
    %v5581 = vpow.pop %v5580
    %v5582 = vmul.f32 %v5272, 1.442695
    %v5583 = vpow.pop %v5582
    %v5584 = vmul.f32 %v5273, 1.442695
    %v5585 = vpow.pop %v5584
    %v5586 = vmul.f32 %v5274, 1.442695
    %v5587 = vpow.pop %v5586
    %v5588 = vmul.f32 %v5275, 1.442695
    %v5589 = vpow.pop %v5588
    %v5590 = vmul.f32 %v5276, 1.442695
    %v5591 = vpow.pop %v5590
    %v5592 = vmul.f32 %v5277, 1.442695
    %v5593 = vpow.pop %v5592
    %v5594 = vmul.f32 %v5278, 1.442695
    %v5595 = vpow.pop %v5594
    %v5596 = vmul.f32 %v5279, 1.442695
    %v5597 = vpow.pop %v5596
    %v5598 = vmul.f32 %v5280, 1.442695
    %v5599 = vpow.pop %v5598
    %v5600 = vmul.f32 %v5281, 1.442695
    %v5601 = vpow.pop %v5600
    %v5602 = vmul.f32 %v5282, 1.442695
    %v5603 = vpow.pop %v5602
    %v5604 = vmul.f32 %v5283, 1.442695
    %v5605 = vpow.pop %v5604
    %v5606 = vmul.f32 %v5284, 1.442695
    %v5607 = vpow.pop %v5606
    %v5608 = vmul.f32 %v5285, 1.442695
    %v5609 = vpow.pop %v5608
    %v5610 = vmul.f32 %v5286, 1.442695
    %v5611 = vpow.pop %v5610
    %v5612 = vmul.f32 %v5287, 1.442695
    %v5613 = vpow.pop %v5612
    %v5614 = vmul.f32 %v5288, 1.442695
    %v5615 = vpow.pop %v5614
    %v5616 = vmul.f32 %v5289, 1.442695
    %v5617 = vpow.pop %v5616
    %v5618 = vmul.f32 %v5290, 1.442695
    %v5619 = vpow.pop %v5618
    %v5620 = vmul.f32 %v5291, 1.442695
    %v5621 = vpow.pop %v5620
    %v5622 = vmul.f32 %v5292, 1.442695
    %v5623 = vpow.pop %v5622
    %v5624 = vmul.f32 %v5293, 1.442695
    %v5625 = vpow.pop %v5624
    %v5626 = vmul.f32 %v5294, 1.442695
    %v5627 = vpow.pop %v5626
    %v5628 = vmul.f32 %v5295, 1.442695
    %v5629 = vpow.pop %v5628
    %v5630 = vmul.f32 %v5296, 1.442695
    %v5631 = vpow.pop %v5630
    %v5632 = vmul.f32 %v5297, 1.442695
    %v5633 = vpow.pop %v5632
    %v5634 = vmul.f32 %v5298, 1.442695
    %v5635 = vpow.pop %v5634
    %v5636 = vmul.f32 %v5299, 1.442695
    %v5637 = vpow.pop %v5636
    %v5638 = vmul.f32 %v5300, 1.442695
    %v5639 = vpow.pop %v5638
    %v5640 = vmul.f32 %v5301, 1.442695
    %v5641 = vpow.pop %v5640
    %v5642 = vmul.f32 %v5302, 1.442695
    %v5643 = vpow.pop %v5642
    %v5644 = vmul.f32 %v5303, 1.442695
    %v5645 = vpow.pop %v5644
    %v5646 = vmul.f32 %v5304, 1.442695
    %v5647 = vpow.pop %v5646
    %v5648 = vmul.f32 %v5305, 1.442695
    %v5649 = vpow.pop %v5648
    %v5650 = vmul.f32 %v5306, 1.442695
    %v5651 = vpow.pop %v5650
    %v5652 = vmul.f32 %v5307, 1.442695
    %v5653 = vpow.pop %v5652
    %v5654 = vmul.f32 %v5308, 1.442695
    %v5655 = vpow.pop %v5654
    %v5656 = vmul.f32 %v5309, 1.442695
    %v5657 = vpow.pop %v5656
    %v5658 = vmul.f32 %v5310, 1.442695
    %v5659 = vpow.pop %v5658
    %v5660 = vmul.f32 %v5311, 1.442695
    %v5661 = vpow.pop %v5660
    %v5662 = vmul.f32 %v5312, 1.442695
    %v5663 = vpow.pop %v5662
    %v5664 = vmul.f32 %v5313, 1.442695
    %v5665 = vpow.pop %v5664
    %v5666 = vmul.f32 %v5314, 1.442695
    %v5667 = vpow.pop %v5666
    %v5668 = vmul.f32 %v5315, 1.442695
    %v5669 = vpow.pop %v5668
    %v5670 = vmul.f32 %v5316, 1.442695
    %v5671 = vpow.pop %v5670
    %v5672 = vmul.f32 %v5317, 1.442695
    %v5673 = vpow.pop %v5672
    %v5674 = vmul.f32 %v5318, 1.442695
    %v5675 = vpow.pop %v5674
    %v5676 = vmul.f32 %v5319, 1.442695
    %v5677 = vpow.pop %v5676
    %v5678 = vmul.f32 %v5320, 1.442695
    %v5679 = vpow.pop %v5678
    %v5680 = vmul.f32 %v5321, 1.442695
    %v5681 = vpow.pop %v5680
    %v5682 = vmul.f32 %v5322, 1.442695
    %v5683 = vpow.pop %v5682
    %v5684 = vmul.f32 %v5323, 1.442695
    %v5685 = vpow.pop %v5684
    %v5686 = vmul.f32 %v5324, 1.442695
    %v5687 = vpow.pop %v5686
    %v5688 = vmul.f32 %v5325, 1.442695
    %v5689 = vpow.pop %v5688
    %v5690 = vmul.f32 %v5326, 1.442695
    %v5691 = vpow.pop %v5690
    %v5692 = vmul.f32 %v5327, 1.442695
    %v5693 = vpow.pop %v5692
    %v5694 = vmul.f32 %v5328, 1.442695
    %v5695 = vpow.pop %v5694
    %v5696 = vmul.f32 %v5329, 1.442695
    %v5697 = vpow.pop %v5696
    %v5698 = vmul.f32 %v5330, 1.442695
    %v5699 = vpow.pop %v5698
    %v5700 = vmul.f32 %v5331, 1.442695
    %v5701 = vpow.pop %v5700
    %v5702 = vmul.f32 %v5332, 1.442695
    %v5703 = vpow.pop %v5702
    %v5704 = vmul.f32 %v5333, 1.442695
    %v5705 = vpow.pop %v5704
    %v5706 = vmul.f32 %v5334, 1.442695
    %v5707 = vpow.pop %v5706
    %v5708 = vmul.f32 %v5335, 1.442695
    %v5709 = vpow.pop %v5708
    %v5710 = vmul.f32 %v5336, 1.442695
    %v5711 = vpow.pop %v5710
    %v5712 = vmul.f32 %v5337, 1.442695
    %v5713 = vpow.pop %v5712
    %v5714 = vmul.f32 %v5338, 1.442695
    %v5715 = vpow.pop %v5714
    %v5716 = vmul.f32 %v5339, 1.442695
    %v5717 = vpow.pop %v5716
    %v5718 = vmul.f32 %v5340, 1.442695
    %v5719 = vpow.pop %v5718
    %v5720 = vmul.f32 %v5341, 1.442695
    %v5721 = vpow.pop %v5720
    %v5722 = vmul.f32 %v5342, 1.442695
    %v5723 = vpow.pop %v5722
    %v5724 = vmul.f32 %v5343, 1.442695
    %v5725 = vpow.pop %v5724
    %v5726 = vmul.f32 %v5344, 1.442695
    %v5727 = vpow.pop %v5726
    %v5728 = vmul.f32 %v5345, 1.442695
    %v5729 = vpow.pop %v5728
    %v5730 = vmul.f32 %v5346, 1.442695
    %v5731 = vpow.pop %v5730
    %v5732 = vmul.f32 %v5347, 1.442695
    %v5733 = vpow.pop %v5732
    %v5734 = vmul.f32 %v5348, 1.442695
    %v5735 = vpow.pop %v5734
    %v5736 = vmul.f32 %v5349, 1.442695
    %v5737 = vpow.pop %v5736
    %v5738 = vmul.f32 %v5350, 1.442695
    %v5739 = vpow.pop %v5738
    %v5740 = vmul.f32 %v5351, 1.442695
    %v5741 = vpow.pop %v5740
    %v5742 = vmul.f32 %v5352, 1.442695
    %v5743 = vpow.pop %v5742
    %v5744 = vmul.f32 %v5353, 1.442695
    %v5745 = vpow.pop %v5744
    %v5746 = vmul.f32 %v5354, 1.442695
    %v5747 = vpow.pop %v5746
    %v5748 = vmul.f32 %v5355, 1.442695
    %v5749 = vpow.pop %v5748
    %v5750 = vmul.f32 %v5356, 1.442695
    %v5751 = vpow.pop %v5750
    %v5752 = vmul.f32 %v5357, 1.442695
    %v5753 = vpow.pop %v5752
    %v5754 = vmul.f32 %v5358, 1.442695
    %v5755 = vpow.pop %v5754
    %v5756 = vmul.f32 %v5359, 1.442695
    %v5757 = vpow.pop %v5756
    %v5758 = vmul.f32 %v5360, 1.442695
    %v5759 = vpow.pop %v5758
    %v5760 = vmul.f32 %v5361, 1.442695
    %v5761 = vpow.pop %v5760
    %v5762 = vmul.f32 %v5362, 1.442695
    %v5763 = vpow.pop %v5762
    %v5764 = vmul.f32 %v5363, 1.442695
    %v5765 = vpow.pop %v5764
    %v5766 = vmul.f32 %v5364, 1.442695
    %v5767 = vpow.pop %v5766
    %v5768 = vmul.f32 %v5365, 1.442695
    %v5769 = vpow.pop %v5768
    %v5770 = vmul.f32 %v5366, 1.442695
    %v5771 = vpow.pop %v5770
    %v5772 = vmul.f32 %v5367, 1.442695
    %v5773 = vpow.pop %v5772
    %v5774 = vmul.f32 %v5368, 1.442695
    %v5775 = vpow.pop %v5774
    %v5776 = vmul.f32 %v5369, 1.442695
    %v5777 = vpow.pop %v5776
    %v5778 = vmul.f32 %v5370, 1.442695
    %v5779 = vpow.pop %v5778
    %v5780 = vmul.f32 %v5371, 1.442695
    %v5781 = vpow.pop %v5780
    %v5782 = vmul.f32 %v5372, 1.442695
    %v5783 = vpow.pop %v5782
    %v5784 = vmul.f32 %v5373, 1.442695
    %v5785 = vpow.pop %v5784
    %v5786 = vmul.f32 %v5374, 1.442695
    %v5787 = vpow.pop %v5786
    %v5788 = vmul.f32 %v5375, 1.442695
    %v5789 = vpow.pop %v5788
    %v5790 = vmul.f32 %v5376, 1.442695
    %v5791 = vpow.pop %v5790
    %v5792 = vmul.f32 %v5377, 1.442695
    %v5793 = vpow.pop %v5792
    %v5794 = vmul.f32 %v5378, 1.442695
    %v5795 = vpow.pop %v5794
    %v5796 = vmul.f32 %v5379, 1.442695
    %v5797 = vpow.pop %v5796
    %v5798 = vmul.f32 %v5380, 1.442695
    %v5799 = vpow.pop %v5798
    %v5800 = vmul.f32 %v5381, 1.442695
    %v5801 = vpow.pop %v5800
    %v5802 = vmul.f32 %v5382, 1.442695
    %v5803 = vpow.pop %v5802
    %v5804 = vmul.f32 %v5383, 1.442695
    %v5805 = vpow.pop %v5804
    %v5806 = vmul.f32 %v5384, 1.442695
    %v5807 = vpow.pop %v5806
    %v5808 = vmul.f32 %v5385, 1.442695
    %v5809 = vpow.pop %v5808
    %v5810 = vmul.f32 %v5386, 1.442695
    %v5811 = vpow.pop %v5810
    %v5812 = vmul.f32 %v5387, 1.442695
    %v5813 = vpow.pop %v5812
    %v5814 = vmul.f32 %v5388, 1.442695
    %v5815 = vpow.pop %v5814
    %v5816 = vmul.f32 %v5389, 1.442695
    %v5817 = vpow.pop %v5816
    %v5818 = vmul.f32 %v5390, 1.442695
    %v5819 = vpow.pop %v5818
    %v5820 = vmul.f32 %v5391, 1.442695
    %v5821 = vpow.pop %v5820
    %v5822 = vmul.f32 %v5392, 1.442695
    %v5823 = vpow.pop %v5822
    %v5824 = vmul.f32 %v5393, 1.442695
    %v5825 = vpow.pop %v5824
    %v5826 = vmul.f32 %v5394, 1.442695
    %v5827 = vpow.pop %v5826
    %v5828 = vmul.f32 %v5395, 1.442695
    %v5829 = vpow.pop %v5828
    %v5830 = vmul.f32 %v5396, 1.442695
    %v5831 = vpow.pop %v5830
    %v5832 = vmul.f32 %v5397, 1.442695
    %v5833 = vpow.pop %v5832
    %v5834 = vmul.f32 %v5398, 1.442695
    %v5835 = vpow.pop %v5834
    %v5836 = vmul.f32 %v5399, 1.442695
    %v5837 = vpow.pop %v5836
    %v5838 = vmul.f32 %v5400, 1.442695
    %v5839 = vpow.pop %v5838
    %v5840 = vmul.f32 %v5401, 1.442695
    %v5841 = vpow.pop %v5840
    %v5842 = vmul.f32 %v5402, 1.442695
    %v5843 = vpow.pop %v5842
    %v5844 = vmul.f32 %v5403, 1.442695
    %v5845 = vpow.pop %v5844
    %v5846 = vmul.f32 %v5404, 1.442695
    %v5847 = vpow.pop %v5846
    %v5848 = vmul.f32 %v5405, 1.442695
    %v5849 = vpow.pop %v5848
    %v5850 = vmul.f32 %v5406, 1.442695
    %v5851 = vpow.pop %v5850
    %v5852 = vmul.f32 %v5407, 1.442695
    %v5853 = vpow.pop %v5852
    %v5854 = vmul.f32 %v5408, 1.442695
    %v5855 = vpow.pop %v5854
    %v5856 = vmul.f32 %v5409, 1.442695
    %v5857 = vpow.pop %v5856
    %v5858 = vmul.f32 %v5410, 1.442695
    %v5859 = vpow.pop %v5858
    %v5860 = vmul.f32 %v5411, 1.442695
    %v5861 = vpow.pop %v5860
    %v5862 = vmul.f32 %v5412, 1.442695
    %v5863 = vpow.pop %v5862
    %v5864 = vmul.f32 %v5413, 1.442695
    %v5865 = vpow.pop %v5864
    %v5866 = vmul.f32 %v5414, 1.442695
    %v5867 = vpow.pop %v5866
    %v5868 = vmul.f32 %v5415, 1.442695
    %v5869 = vpow.pop %v5868
    %v5870 = vmul.f32 %v5416, 1.442695
    %v5871 = vpow.pop %v5870
    %v5872 = vmul.f32 %v5417, 1.442695
    %v5873 = vpow.pop %v5872
    %v5874 = vmul.f32 %v5418, 1.442695
    %v5875 = vpow.pop %v5874
    %v5876 = vmul.f32 %v5419, 1.442695
    %v5877 = vpow.pop %v5876
    %v5878 = vmul.f32 %v5420, 1.442695
    %v5879 = vpow.pop %v5878
    %v5880 = vmul.f32 %v5421, 1.442695
    %v5881 = vpow.pop %v5880
    %v5882 = vmul.f32 %v5422, 1.442695
    %v5883 = vpow.pop %v5882
    %v5884 = vmul.f32 %v5423, 1.442695
    %v5885 = vpow.pop %v5884
    %v5886 = vmul.f32 %v5424, 1.442695
    %v5887 = vpow.pop %v5886
    %v5888 = vmul.f32 %v5425, 1.442695
    %v5889 = vpow.pop %v5888
    %v5890 = vmul.f32 %v5426, 1.442695
    %v5891 = vpow.pop %v5890
    %v5892 = vmul.f32 %v5427, 1.442695
    %v5893 = vpow.pop %v5892
    %v5894 = vmul.f32 %v5428, 1.442695
    %v5895 = vpow.pop %v5894
    %v5896 = vmul.f32 %v5429, 1.442695
    %v5897 = vpow.pop %v5896
    %v5898 = vmul.f32 %v5430, 1.442695
    %v5899 = vpow.pop %v5898
    %v5900 = vmul.f32 %v5431, 1.442695
    %v5901 = vpow.pop %v5900
    %v5902 = vmul.f32 %v5432, 1.442695
    %v5903 = vpow.pop %v5902
    %v5904 = vmul.f32 %v5433, 1.442695
    %v5905 = vpow.pop %v5904
    %v5906 = vmul.f32 %v5434, 1.442695
    %v5907 = vpow.pop %v5906
    %v5908 = vmul.f32 %v5435, 1.442695
    %v5909 = vpow.pop %v5908
    %v5910 = vmul.f32 %v5436, 1.442695
    %v5911 = vpow.pop %v5910
    %v5912 = vmul.f32 %v5437, 1.442695
    %v5913 = vpow.pop %v5912
    %v5914 = vmul.f32 %v5438, 1.442695
    %v5915 = vpow.pop %v5914
    %v5916 = vmul.f32 %v5439, 1.442695
    %v5917 = vpow.pop %v5916
    %v5918 = vmul.f32 %v5440, 1.442695
    %v5919 = vpow.pop %v5918
    %v5920 = vmul.f32 %v5441, 1.442695
    %v5921 = vpow.pop %v5920
    %v5922 = vmul.f32 %v5442, 1.442695
    %v5923 = vpow.pop %v5922
    %v5924 = vmul.f32 %v5443, 1.442695
    %v5925 = vpow.pop %v5924
    %v5926 = vmul.f32 %v5444, 1.442695
    %v5927 = vpow.pop %v5926
    %v5928 = vmul.f32 %v5445, 1.442695
    %v5929 = vpow.pop %v5928
    %v5930 = vmul.f32 %v5446, 1.442695
    %v5931 = vpow.pop %v5930
    %v5932 = vmul.f32 %v5447, 1.442695
    %v5933 = vpow.pop %v5932
    %v5934 = vmul.f32 %v5448, 1.442695
    %v5935 = vpow.pop %v5934
    %v5936 = vmul.f32 %v5449, 1.442695
    %v5937 = vpow.pop %v5936
    %v5938 = vmul.f32 %v5450, 1.442695
    %v5939 = vpow.pop %v5938
    %v5940 = vmul.f32 %v5451, 1.442695
    %v5941 = vpow.pop %v5940
    %v5942 = vmul.f32 %v5452, 1.442695
    %v5943 = vpow.pop %v5942
    %v5944 = vmul.f32 %v5453, 1.442695
    %v5945 = vpow.pop %v5944
    %v5946 = vmul.f32 %v5454, 1.442695
    %v5947 = vpow.pop %v5946
    %v5948 = vmul.f32 %v5455, 1.442695
    %v5949 = vpow.pop %v5948
    %v5950 = vmul.f32 %v5456, 1.442695
    %v5951 = vpow.pop %v5950
    %v5952 = vmul.f32 %v5457, 1.442695
    %v5953 = vpow.pop %v5952
    %v5954 = vmul.f32 %v5458, 1.442695
    %v5955 = vpow.pop %v5954
    %v5956 = vmul.f32 %v5459, 1.442695
    %v5957 = vpow.pop %v5956
    %v5958 = vmul.f32 %v5460, 1.442695
    %v5959 = vpow.pop %v5958
    %v5960 = vmul.f32 %v5461, 1.442695
    %v5961 = vpow.pop %v5960
    %v5962 = vmul.f32 %v5462, 1.442695
    %v5963 = vpow.pop %v5962
    %v5964 = vmul.f32 %v5463, 1.442695
    %v5965 = vpow.pop %v5964
    %v5966 = vmul.f32 %v5464, 1.442695
    %v5967 = vpow.pop %v5966
    %v5968 = vmul.f32 %v5465, 1.442695
    %v5969 = vpow.pop %v5968
    %v5970 = vmul.f32 %v5466, 1.442695
    %v5971 = vpow.pop %v5970
    %v5972 = vmul.f32 %v5467, 1.442695
    %v5973 = vpow.pop %v5972
    %v5974 = vmul.f32 %v5468, 1.442695
    %v5975 = vpow.pop %v5974
    %v5976 = vmul.f32 %v5469, 1.442695
    %v5977 = vpow.pop %v5976
    %v5978 = vmul.f32 %v5470, 1.442695
    %v5979 = vpow.pop %v5978
    %v5980 = vmul.f32 %v5471, 1.442695
    %v5981 = vpow.pop %v5980
    %v5982 = vmul.f32 %v5472, 1.442695
    %v5983 = vpow.pop %v5982
    %v5984 = vmul.f32 %v5473, 1.442695
    %v5985 = vpow.pop %v5984
    %6242 = vset.pattern.permute.xlu0 0
    %6243 = vperm.xlu0 %6242, %v5475
    %v6244 = vpop.permute.xlu0 %6243
    %6245 = vset.pattern.permute.xlu0 0
    %6246 = vperm.xlu0 %6245, %v5477
    %v6247 = vpop.permute.xlu0 %6246
    %6248 = vset.pattern.permute.xlu0 0
    %6249 = vperm.xlu0 %6248, %v5479
    %v6250 = vpop.permute.xlu0 %6249
    %6251 = vset.pattern.permute.xlu0 0
    %6252 = vperm.xlu0 %6251, %v5481
    %v6253 = vpop.permute.xlu0 %6252
    %6254 = vset.pattern.permute.xlu0 0
    %6255 = vperm.xlu0 %6254, %v5483
    %v6256 = vpop.permute.xlu0 %6255
    %6257 = vset.pattern.permute.xlu0 0
    %6258 = vperm.xlu0 %6257, %v5485
    %v6259 = vpop.permute.xlu0 %6258
    %6260 = vset.pattern.permute.xlu0 0
    %6261 = vperm.xlu0 %6260, %v5487
    %v6262 = vpop.permute.xlu0 %6261
    %6263 = vset.pattern.permute.xlu0 0
    %6264 = vperm.xlu0 %6263, %v5489
    %v6265 = vpop.permute.xlu0 %6264
    %6266 = vset.pattern.permute.xlu0 0
    %6267 = vperm.xlu0 %6266, %v5491
    %v6268 = vpop.permute.xlu0 %6267
    %6269 = vset.pattern.permute.xlu0 0
    %6270 = vperm.xlu0 %6269, %v5493
    %v6271 = vpop.permute.xlu0 %6270
    %6272 = vset.pattern.permute.xlu0 0
    %6273 = vperm.xlu0 %6272, %v5495
    %v6274 = vpop.permute.xlu0 %6273
    %6275 = vset.pattern.permute.xlu0 0
    %6276 = vperm.xlu0 %6275, %v5497
    %v6277 = vpop.permute.xlu0 %6276
    %6278 = vset.pattern.permute.xlu0 0
    %6279 = vperm.xlu0 %6278, %v5499
    %v6280 = vpop.permute.xlu0 %6279
    %6281 = vset.pattern.permute.xlu0 0
    %6282 = vperm.xlu0 %6281, %v5501
    %v6283 = vpop.permute.xlu0 %6282
    %6284 = vset.pattern.permute.xlu0 0
    %6285 = vperm.xlu0 %6284, %v5503
    %v6286 = vpop.permute.xlu0 %6285
    %6287 = vset.pattern.permute.xlu0 0
    %6288 = vperm.xlu0 %6287, %v5505
    %v6289 = vpop.permute.xlu0 %6288
    %6290 = vset.pattern.permute.xlu0 0
    %6291 = vperm.xlu0 %6290, %v5507
    %v6292 = vpop.permute.xlu0 %6291
    %6293 = vset.pattern.permute.xlu0 0
    %6294 = vperm.xlu0 %6293, %v5509
    %v6295 = vpop.permute.xlu0 %6294
    %6296 = vset.pattern.permute.xlu0 0
    %6297 = vperm.xlu0 %6296, %v5511
    %v6298 = vpop.permute.xlu0 %6297
    %6299 = vset.pattern.permute.xlu0 0
    %6300 = vperm.xlu0 %6299, %v5513
    %v6301 = vpop.permute.xlu0 %6300
    %6302 = vset.pattern.permute.xlu0 0
    %6303 = vperm.xlu0 %6302, %v5515
    %v6304 = vpop.permute.xlu0 %6303
    %6305 = vset.pattern.permute.xlu0 0
    %6306 = vperm.xlu0 %6305, %v5517
    %v6307 = vpop.permute.xlu0 %6306
    %6308 = vset.pattern.permute.xlu0 0
    %6309 = vperm.xlu0 %6308, %v5519
    %v6310 = vpop.permute.xlu0 %6309
    %6311 = vset.pattern.permute.xlu0 0
    %6312 = vperm.xlu0 %6311, %v5521
    %v6313 = vpop.permute.xlu0 %6312
    %6314 = vset.pattern.permute.xlu0 0
    %6315 = vperm.xlu0 %6314, %v5523
    %v6316 = vpop.permute.xlu0 %6315
    %6317 = vset.pattern.permute.xlu0 0
    %6318 = vperm.xlu0 %6317, %v5525
    %v6319 = vpop.permute.xlu0 %6318
    %6320 = vset.pattern.permute.xlu0 0
    %6321 = vperm.xlu0 %6320, %v5527
    %v6322 = vpop.permute.xlu0 %6321
    %6323 = vset.pattern.permute.xlu0 0
    %6324 = vperm.xlu0 %6323, %v5529
    %v6325 = vpop.permute.xlu0 %6324
    %6326 = vset.pattern.permute.xlu0 0
    %6327 = vperm.xlu0 %6326, %v5531
    %v6328 = vpop.permute.xlu0 %6327
    %6329 = vset.pattern.permute.xlu0 0
    %6330 = vperm.xlu0 %6329, %v5533
    %v6331 = vpop.permute.xlu0 %6330
    %6332 = vset.pattern.permute.xlu0 0
    %6333 = vperm.xlu0 %6332, %v5535
    %v6334 = vpop.permute.xlu0 %6333
    %6335 = vset.pattern.permute.xlu0 0
    %6336 = vperm.xlu0 %6335, %v5537
    %v6337 = vpop.permute.xlu0 %6336
    %6338 = vset.pattern.permute.xlu0 0
    %6339 = vperm.xlu0 %6338, %v5539
    %v6340 = vpop.permute.xlu0 %6339
    %6341 = vset.pattern.permute.xlu0 0
    %6342 = vperm.xlu0 %6341, %v5541
    %v6343 = vpop.permute.xlu0 %6342
    %6344 = vset.pattern.permute.xlu0 0
    %6345 = vperm.xlu0 %6344, %v5543
    %v6346 = vpop.permute.xlu0 %6345
    %6347 = vset.pattern.permute.xlu0 0
    %6348 = vperm.xlu0 %6347, %v5545
    %v6349 = vpop.permute.xlu0 %6348
    %6350 = vset.pattern.permute.xlu0 0
    %6351 = vperm.xlu0 %6350, %v5547
    %v6352 = vpop.permute.xlu0 %6351
    %6353 = vset.pattern.permute.xlu0 0
    %6354 = vperm.xlu0 %6353, %v5549
    %v6355 = vpop.permute.xlu0 %6354
    %6356 = vset.pattern.permute.xlu0 0
    %6357 = vperm.xlu0 %6356, %v5551
    %v6358 = vpop.permute.xlu0 %6357
    %6359 = vset.pattern.permute.xlu0 0
    %6360 = vperm.xlu0 %6359, %v5553
    %v6361 = vpop.permute.xlu0 %6360
    %6362 = vset.pattern.permute.xlu0 0
    %6363 = vperm.xlu0 %6362, %v5555
    %v6364 = vpop.permute.xlu0 %6363
    %6365 = vset.pattern.permute.xlu0 0
    %6366 = vperm.xlu0 %6365, %v5557
    %v6367 = vpop.permute.xlu0 %6366
    %6368 = vset.pattern.permute.xlu0 0
    %6369 = vperm.xlu0 %6368, %v5559
    %v6370 = vpop.permute.xlu0 %6369
    %6371 = vset.pattern.permute.xlu0 0
    %6372 = vperm.xlu0 %6371, %v5561
    %v6373 = vpop.permute.xlu0 %6372
    %6374 = vset.pattern.permute.xlu0 0
    %6375 = vperm.xlu0 %6374, %v5563
    %v6376 = vpop.permute.xlu0 %6375
    %6377 = vset.pattern.permute.xlu0 0
    %6378 = vperm.xlu0 %6377, %v5565
    %v6379 = vpop.permute.xlu0 %6378
    %6380 = vset.pattern.permute.xlu0 0
    %6381 = vperm.xlu0 %6380, %v5567
    %v6382 = vpop.permute.xlu0 %6381
    %6383 = vset.pattern.permute.xlu0 0
    %6384 = vperm.xlu0 %6383, %v5569
    %v6385 = vpop.permute.xlu0 %6384
    %6386 = vset.pattern.permute.xlu0 0
    %6387 = vperm.xlu0 %6386, %v5571
    %v6388 = vpop.permute.xlu0 %6387
    %6389 = vset.pattern.permute.xlu0 0
    %6390 = vperm.xlu0 %6389, %v5573
    %v6391 = vpop.permute.xlu0 %6390
    %6392 = vset.pattern.permute.xlu0 0
    %6393 = vperm.xlu0 %6392, %v5575
    %v6394 = vpop.permute.xlu0 %6393
    %6395 = vset.pattern.permute.xlu0 0
    %6396 = vperm.xlu0 %6395, %v5577
    %v6397 = vpop.permute.xlu0 %6396
    %6398 = vset.pattern.permute.xlu0 0
    %6399 = vperm.xlu0 %6398, %v5579
    %v6400 = vpop.permute.xlu0 %6399
    %6401 = vset.pattern.permute.xlu0 0
    %6402 = vperm.xlu0 %6401, %v5581
    %v6403 = vpop.permute.xlu0 %6402
    %6404 = vset.pattern.permute.xlu0 0
    %6405 = vperm.xlu0 %6404, %v5583
    %v6406 = vpop.permute.xlu0 %6405
    %6407 = vset.pattern.permute.xlu0 0
    %6408 = vperm.xlu0 %6407, %v5585
    %v6409 = vpop.permute.xlu0 %6408
    %6410 = vset.pattern.permute.xlu0 0
    %6411 = vperm.xlu0 %6410, %v5587
    %v6412 = vpop.permute.xlu0 %6411
    %6413 = vset.pattern.permute.xlu0 0
    %6414 = vperm.xlu0 %6413, %v5589
    %v6415 = vpop.permute.xlu0 %6414
    %6416 = vset.pattern.permute.xlu0 0
    %6417 = vperm.xlu0 %6416, %v5591
    %v6418 = vpop.permute.xlu0 %6417
    %6419 = vset.pattern.permute.xlu0 0
    %6420 = vperm.xlu0 %6419, %v5593
    %v6421 = vpop.permute.xlu0 %6420
    %6422 = vset.pattern.permute.xlu0 0
    %6423 = vperm.xlu0 %6422, %v5595
    %v6424 = vpop.permute.xlu0 %6423
    %6425 = vset.pattern.permute.xlu0 0
    %6426 = vperm.xlu0 %6425, %v5597
    %v6427 = vpop.permute.xlu0 %6426
    %6428 = vset.pattern.permute.xlu0 0
    %6429 = vperm.xlu0 %6428, %v5599
    %v6430 = vpop.permute.xlu0 %6429
    %6431 = vset.pattern.permute.xlu0 0
    %6432 = vperm.xlu0 %6431, %v5601
    %v6433 = vpop.permute.xlu0 %6432
    %6434 = vset.pattern.permute.xlu0 0
    %6435 = vperm.xlu0 %6434, %v5603
    %v6436 = vpop.permute.xlu0 %6435
    %6437 = vset.pattern.permute.xlu0 0
    %6438 = vperm.xlu0 %6437, %v5605
    %v6439 = vpop.permute.xlu0 %6438
    %6440 = vset.pattern.permute.xlu0 0
    %6441 = vperm.xlu0 %6440, %v5607
    %v6442 = vpop.permute.xlu0 %6441
    %6443 = vset.pattern.permute.xlu0 0
    %6444 = vperm.xlu0 %6443, %v5609
    %v6445 = vpop.permute.xlu0 %6444
    %6446 = vset.pattern.permute.xlu0 0
    %6447 = vperm.xlu0 %6446, %v5611
    %v6448 = vpop.permute.xlu0 %6447
    %6449 = vset.pattern.permute.xlu0 0
    %6450 = vperm.xlu0 %6449, %v5613
    %v6451 = vpop.permute.xlu0 %6450
    %6452 = vset.pattern.permute.xlu0 0
    %6453 = vperm.xlu0 %6452, %v5615
    %v6454 = vpop.permute.xlu0 %6453
    %6455 = vset.pattern.permute.xlu0 0
    %6456 = vperm.xlu0 %6455, %v5617
    %v6457 = vpop.permute.xlu0 %6456
    %6458 = vset.pattern.permute.xlu0 0
    %6459 = vperm.xlu0 %6458, %v5619
    %v6460 = vpop.permute.xlu0 %6459
    %6461 = vset.pattern.permute.xlu0 0
    %6462 = vperm.xlu0 %6461, %v5621
    %v6463 = vpop.permute.xlu0 %6462
    %6464 = vset.pattern.permute.xlu0 0
    %6465 = vperm.xlu0 %6464, %v5623
    %v6466 = vpop.permute.xlu0 %6465
    %6467 = vset.pattern.permute.xlu0 0
    %6468 = vperm.xlu0 %6467, %v5625
    %v6469 = vpop.permute.xlu0 %6468
    %6470 = vset.pattern.permute.xlu0 0
    %6471 = vperm.xlu0 %6470, %v5627
    %v6472 = vpop.permute.xlu0 %6471
    %6473 = vset.pattern.permute.xlu0 0
    %6474 = vperm.xlu0 %6473, %v5629
    %v6475 = vpop.permute.xlu0 %6474
    %6476 = vset.pattern.permute.xlu0 0
    %6477 = vperm.xlu0 %6476, %v5631
    %v6478 = vpop.permute.xlu0 %6477
    %6479 = vset.pattern.permute.xlu0 0
    %6480 = vperm.xlu0 %6479, %v5633
    %v6481 = vpop.permute.xlu0 %6480
    %6482 = vset.pattern.permute.xlu0 0
    %6483 = vperm.xlu0 %6482, %v5635
    %v6484 = vpop.permute.xlu0 %6483
    %6485 = vset.pattern.permute.xlu0 0
    %6486 = vperm.xlu0 %6485, %v5637
    %v6487 = vpop.permute.xlu0 %6486
    %6488 = vset.pattern.permute.xlu0 0
    %6489 = vperm.xlu0 %6488, %v5639
    %v6490 = vpop.permute.xlu0 %6489
    %6491 = vset.pattern.permute.xlu0 0
    %6492 = vperm.xlu0 %6491, %v5641
    %v6493 = vpop.permute.xlu0 %6492
    %6494 = vset.pattern.permute.xlu0 0
    %6495 = vperm.xlu0 %6494, %v5643
    %v6496 = vpop.permute.xlu0 %6495
    %6497 = vset.pattern.permute.xlu0 0
    %6498 = vperm.xlu0 %6497, %v5645
    %v6499 = vpop.permute.xlu0 %6498
    %6500 = vset.pattern.permute.xlu0 0
    %6501 = vperm.xlu0 %6500, %v5647
    %v6502 = vpop.permute.xlu0 %6501
    %6503 = vset.pattern.permute.xlu0 0
    %6504 = vperm.xlu0 %6503, %v5649
    %v6505 = vpop.permute.xlu0 %6504
    %6506 = vset.pattern.permute.xlu0 0
    %6507 = vperm.xlu0 %6506, %v5651
    %v6508 = vpop.permute.xlu0 %6507
    %6509 = vset.pattern.permute.xlu0 0
    %6510 = vperm.xlu0 %6509, %v5653
    %v6511 = vpop.permute.xlu0 %6510
    %6512 = vset.pattern.permute.xlu0 0
    %6513 = vperm.xlu0 %6512, %v5655
    %v6514 = vpop.permute.xlu0 %6513
    %6515 = vset.pattern.permute.xlu0 0
    %6516 = vperm.xlu0 %6515, %v5657
    %v6517 = vpop.permute.xlu0 %6516
    %6518 = vset.pattern.permute.xlu0 0
    %6519 = vperm.xlu0 %6518, %v5659
    %v6520 = vpop.permute.xlu0 %6519
    %6521 = vset.pattern.permute.xlu0 0
    %6522 = vperm.xlu0 %6521, %v5661
    %v6523 = vpop.permute.xlu0 %6522
    %6524 = vset.pattern.permute.xlu0 0
    %6525 = vperm.xlu0 %6524, %v5663
    %v6526 = vpop.permute.xlu0 %6525
    %6527 = vset.pattern.permute.xlu0 0
    %6528 = vperm.xlu0 %6527, %v5665
    %v6529 = vpop.permute.xlu0 %6528
    %6530 = vset.pattern.permute.xlu0 0
    %6531 = vperm.xlu0 %6530, %v5667
    %v6532 = vpop.permute.xlu0 %6531
    %6533 = vset.pattern.permute.xlu0 0
    %6534 = vperm.xlu0 %6533, %v5669
    %v6535 = vpop.permute.xlu0 %6534
    %6536 = vset.pattern.permute.xlu0 0
    %6537 = vperm.xlu0 %6536, %v5671
    %v6538 = vpop.permute.xlu0 %6537
    %6539 = vset.pattern.permute.xlu0 0
    %6540 = vperm.xlu0 %6539, %v5673
    %v6541 = vpop.permute.xlu0 %6540
    %6542 = vset.pattern.permute.xlu0 0
    %6543 = vperm.xlu0 %6542, %v5675
    %v6544 = vpop.permute.xlu0 %6543
    %6545 = vset.pattern.permute.xlu0 0
    %6546 = vperm.xlu0 %6545, %v5677
    %v6547 = vpop.permute.xlu0 %6546
    %6548 = vset.pattern.permute.xlu0 0
    %6549 = vperm.xlu0 %6548, %v5679
    %v6550 = vpop.permute.xlu0 %6549
    %6551 = vset.pattern.permute.xlu0 0
    %6552 = vperm.xlu0 %6551, %v5681
    %v6553 = vpop.permute.xlu0 %6552
    %6554 = vset.pattern.permute.xlu0 0
    %6555 = vperm.xlu0 %6554, %v5683
    %v6556 = vpop.permute.xlu0 %6555
    %6557 = vset.pattern.permute.xlu0 0
    %6558 = vperm.xlu0 %6557, %v5685
    %v6559 = vpop.permute.xlu0 %6558
    %6560 = vset.pattern.permute.xlu0 0
    %6561 = vperm.xlu0 %6560, %v5687
    %v6562 = vpop.permute.xlu0 %6561
    %6563 = vset.pattern.permute.xlu0 0
    %6564 = vperm.xlu0 %6563, %v5689
    %v6565 = vpop.permute.xlu0 %6564
    %6566 = vset.pattern.permute.xlu0 0
    %6567 = vperm.xlu0 %6566, %v5691
    %v6568 = vpop.permute.xlu0 %6567
    %6569 = vset.pattern.permute.xlu0 0
    %6570 = vperm.xlu0 %6569, %v5693
    %v6571 = vpop.permute.xlu0 %6570
    %6572 = vset.pattern.permute.xlu0 0
    %6573 = vperm.xlu0 %6572, %v5695
    %v6574 = vpop.permute.xlu0 %6573
    %6575 = vset.pattern.permute.xlu0 0
    %6576 = vperm.xlu0 %6575, %v5697
    %v6577 = vpop.permute.xlu0 %6576
    %6578 = vset.pattern.permute.xlu0 0
    %6579 = vperm.xlu0 %6578, %v5699
    %v6580 = vpop.permute.xlu0 %6579
    %6581 = vset.pattern.permute.xlu0 0
    %6582 = vperm.xlu0 %6581, %v5701
    %v6583 = vpop.permute.xlu0 %6582
    %6584 = vset.pattern.permute.xlu0 0
    %6585 = vperm.xlu0 %6584, %v5703
    %v6586 = vpop.permute.xlu0 %6585
    %6587 = vset.pattern.permute.xlu0 0
    %6588 = vperm.xlu0 %6587, %v5705
    %v6589 = vpop.permute.xlu0 %6588
    %6590 = vset.pattern.permute.xlu0 0
    %6591 = vperm.xlu0 %6590, %v5707
    %v6592 = vpop.permute.xlu0 %6591
    %6593 = vset.pattern.permute.xlu0 0
    %6594 = vperm.xlu0 %6593, %v5709
    %v6595 = vpop.permute.xlu0 %6594
    %6596 = vset.pattern.permute.xlu0 0
    %6597 = vperm.xlu0 %6596, %v5711
    %v6598 = vpop.permute.xlu0 %6597
    %6599 = vset.pattern.permute.xlu0 0
    %6600 = vperm.xlu0 %6599, %v5713
    %v6601 = vpop.permute.xlu0 %6600
    %6602 = vset.pattern.permute.xlu0 0
    %6603 = vperm.xlu0 %6602, %v5715
    %v6604 = vpop.permute.xlu0 %6603
    %6605 = vset.pattern.permute.xlu0 0
    %6606 = vperm.xlu0 %6605, %v5717
    %v6607 = vpop.permute.xlu0 %6606
    %6608 = vset.pattern.permute.xlu0 0
    %6609 = vperm.xlu0 %6608, %v5719
    %v6610 = vpop.permute.xlu0 %6609
    %6611 = vset.pattern.permute.xlu0 0
    %6612 = vperm.xlu0 %6611, %v5721
    %v6613 = vpop.permute.xlu0 %6612
    %6614 = vset.pattern.permute.xlu0 0
    %6615 = vperm.xlu0 %6614, %v5723
    %v6616 = vpop.permute.xlu0 %6615
    %6617 = vset.pattern.permute.xlu0 0
    %6618 = vperm.xlu0 %6617, %v5725
    %v6619 = vpop.permute.xlu0 %6618
    %6620 = vset.pattern.permute.xlu0 0
    %6621 = vperm.xlu0 %6620, %v5727
    %v6622 = vpop.permute.xlu0 %6621
    %6623 = vset.pattern.permute.xlu0 0
    %6624 = vperm.xlu0 %6623, %v5729
    %v6625 = vpop.permute.xlu0 %6624
    %6626 = vset.pattern.permute.xlu0 0
    %6627 = vperm.xlu0 %6626, %v5731
    %v6628 = vpop.permute.xlu0 %6627
    %6629 = vset.pattern.permute.xlu0 0
    %6630 = vperm.xlu0 %6629, %v5733
    %v6631 = vpop.permute.xlu0 %6630
    %6632 = vset.pattern.permute.xlu0 0
    %6633 = vperm.xlu0 %6632, %v5735
    %v6634 = vpop.permute.xlu0 %6633
    %6635 = vset.pattern.permute.xlu0 0
    %6636 = vperm.xlu0 %6635, %v5737
    %v6637 = vpop.permute.xlu0 %6636
    %6638 = vset.pattern.permute.xlu0 0
    %6639 = vperm.xlu0 %6638, %v5739
    %v6640 = vpop.permute.xlu0 %6639
    %6641 = vset.pattern.permute.xlu0 0
    %6642 = vperm.xlu0 %6641, %v5741
    %v6643 = vpop.permute.xlu0 %6642
    %6644 = vset.pattern.permute.xlu0 0
    %6645 = vperm.xlu0 %6644, %v5743
    %v6646 = vpop.permute.xlu0 %6645
    %6647 = vset.pattern.permute.xlu0 0
    %6648 = vperm.xlu0 %6647, %v5745
    %v6649 = vpop.permute.xlu0 %6648
    %6650 = vset.pattern.permute.xlu0 0
    %6651 = vperm.xlu0 %6650, %v5747
    %v6652 = vpop.permute.xlu0 %6651
    %6653 = vset.pattern.permute.xlu0 0
    %6654 = vperm.xlu0 %6653, %v5749
    %v6655 = vpop.permute.xlu0 %6654
    %6656 = vset.pattern.permute.xlu0 0
    %6657 = vperm.xlu0 %6656, %v5751
    %v6658 = vpop.permute.xlu0 %6657
    %6659 = vset.pattern.permute.xlu0 0
    %6660 = vperm.xlu0 %6659, %v5753
    %v6661 = vpop.permute.xlu0 %6660
    %6662 = vset.pattern.permute.xlu0 0
    %6663 = vperm.xlu0 %6662, %v5755
    %v6664 = vpop.permute.xlu0 %6663
    %6665 = vset.pattern.permute.xlu0 0
    %6666 = vperm.xlu0 %6665, %v5757
    %v6667 = vpop.permute.xlu0 %6666
    %6668 = vset.pattern.permute.xlu0 0
    %6669 = vperm.xlu0 %6668, %v5759
    %v6670 = vpop.permute.xlu0 %6669
    %6671 = vset.pattern.permute.xlu0 0
    %6672 = vperm.xlu0 %6671, %v5761
    %v6673 = vpop.permute.xlu0 %6672
    %6674 = vset.pattern.permute.xlu0 0
    %6675 = vperm.xlu0 %6674, %v5763
    %v6676 = vpop.permute.xlu0 %6675
    %6677 = vset.pattern.permute.xlu0 0
    %6678 = vperm.xlu0 %6677, %v5765
    %v6679 = vpop.permute.xlu0 %6678
    %6680 = vset.pattern.permute.xlu0 0
    %6681 = vperm.xlu0 %6680, %v5767
    %v6682 = vpop.permute.xlu0 %6681
    %6683 = vset.pattern.permute.xlu0 0
    %6684 = vperm.xlu0 %6683, %v5769
    %v6685 = vpop.permute.xlu0 %6684
    %6686 = vset.pattern.permute.xlu0 0
    %6687 = vperm.xlu0 %6686, %v5771
    %v6688 = vpop.permute.xlu0 %6687
    %6689 = vset.pattern.permute.xlu0 0
    %6690 = vperm.xlu0 %6689, %v5773
    %v6691 = vpop.permute.xlu0 %6690
    %6692 = vset.pattern.permute.xlu0 0
    %6693 = vperm.xlu0 %6692, %v5775
    %v6694 = vpop.permute.xlu0 %6693
    %6695 = vset.pattern.permute.xlu0 0
    %6696 = vperm.xlu0 %6695, %v5777
    %v6697 = vpop.permute.xlu0 %6696
    %6698 = vset.pattern.permute.xlu0 0
    %6699 = vperm.xlu0 %6698, %v5779
    %v6700 = vpop.permute.xlu0 %6699
    %6701 = vset.pattern.permute.xlu0 0
    %6702 = vperm.xlu0 %6701, %v5781
    %v6703 = vpop.permute.xlu0 %6702
    %6704 = vset.pattern.permute.xlu0 0
    %6705 = vperm.xlu0 %6704, %v5783
    %v6706 = vpop.permute.xlu0 %6705
    %6707 = vset.pattern.permute.xlu0 0
    %6708 = vperm.xlu0 %6707, %v5785
    %v6709 = vpop.permute.xlu0 %6708
    %6710 = vset.pattern.permute.xlu0 0
    %6711 = vperm.xlu0 %6710, %v5787
    %v6712 = vpop.permute.xlu0 %6711
    %6713 = vset.pattern.permute.xlu0 0
    %6714 = vperm.xlu0 %6713, %v5789
    %v6715 = vpop.permute.xlu0 %6714
    %6716 = vset.pattern.permute.xlu0 0
    %6717 = vperm.xlu0 %6716, %v5791
    %v6718 = vpop.permute.xlu0 %6717
    %6719 = vset.pattern.permute.xlu0 0
    %6720 = vperm.xlu0 %6719, %v5793
    %v6721 = vpop.permute.xlu0 %6720
    %6722 = vset.pattern.permute.xlu0 0
    %6723 = vperm.xlu0 %6722, %v5795
    %v6724 = vpop.permute.xlu0 %6723
    %6725 = vset.pattern.permute.xlu0 0
    %6726 = vperm.xlu0 %6725, %v5797
    %v6727 = vpop.permute.xlu0 %6726
    %6728 = vset.pattern.permute.xlu0 0
    %6729 = vperm.xlu0 %6728, %v5799
    %v6730 = vpop.permute.xlu0 %6729
    %6731 = vset.pattern.permute.xlu0 0
    %6732 = vperm.xlu0 %6731, %v5801
    %v6733 = vpop.permute.xlu0 %6732
    %6734 = vset.pattern.permute.xlu0 0
    %6735 = vperm.xlu0 %6734, %v5803
    %v6736 = vpop.permute.xlu0 %6735
    %6737 = vset.pattern.permute.xlu0 0
    %6738 = vperm.xlu0 %6737, %v5805
    %v6739 = vpop.permute.xlu0 %6738
    %6740 = vset.pattern.permute.xlu0 0
    %6741 = vperm.xlu0 %6740, %v5807
    %v6742 = vpop.permute.xlu0 %6741
    %6743 = vset.pattern.permute.xlu0 0
    %6744 = vperm.xlu0 %6743, %v5809
    %v6745 = vpop.permute.xlu0 %6744
    %6746 = vset.pattern.permute.xlu0 0
    %6747 = vperm.xlu0 %6746, %v5811
    %v6748 = vpop.permute.xlu0 %6747
    %6749 = vset.pattern.permute.xlu0 0
    %6750 = vperm.xlu0 %6749, %v5813
    %v6751 = vpop.permute.xlu0 %6750
    %6752 = vset.pattern.permute.xlu0 0
    %6753 = vperm.xlu0 %6752, %v5815
    %v6754 = vpop.permute.xlu0 %6753
    %6755 = vset.pattern.permute.xlu0 0
    %6756 = vperm.xlu0 %6755, %v5817
    %v6757 = vpop.permute.xlu0 %6756
    %6758 = vset.pattern.permute.xlu0 0
    %6759 = vperm.xlu0 %6758, %v5819
    %v6760 = vpop.permute.xlu0 %6759
    %6761 = vset.pattern.permute.xlu0 0
    %6762 = vperm.xlu0 %6761, %v5821
    %v6763 = vpop.permute.xlu0 %6762
    %6764 = vset.pattern.permute.xlu0 0
    %6765 = vperm.xlu0 %6764, %v5823
    %v6766 = vpop.permute.xlu0 %6765
    %6767 = vset.pattern.permute.xlu0 0
    %6768 = vperm.xlu0 %6767, %v5825
    %v6769 = vpop.permute.xlu0 %6768
    %6770 = vset.pattern.permute.xlu0 0
    %6771 = vperm.xlu0 %6770, %v5827
    %v6772 = vpop.permute.xlu0 %6771
    %6773 = vset.pattern.permute.xlu0 0
    %6774 = vperm.xlu0 %6773, %v5829
    %v6775 = vpop.permute.xlu0 %6774
    %6776 = vset.pattern.permute.xlu0 0
    %6777 = vperm.xlu0 %6776, %v5831
    %v6778 = vpop.permute.xlu0 %6777
    %6779 = vset.pattern.permute.xlu0 0
    %6780 = vperm.xlu0 %6779, %v5833
    %v6781 = vpop.permute.xlu0 %6780
    %6782 = vset.pattern.permute.xlu0 0
    %6783 = vperm.xlu0 %6782, %v5835
    %v6784 = vpop.permute.xlu0 %6783
    %6785 = vset.pattern.permute.xlu0 0
    %6786 = vperm.xlu0 %6785, %v5837
    %v6787 = vpop.permute.xlu0 %6786
    %6788 = vset.pattern.permute.xlu0 0
    %6789 = vperm.xlu0 %6788, %v5839
    %v6790 = vpop.permute.xlu0 %6789
    %6791 = vset.pattern.permute.xlu0 0
    %6792 = vperm.xlu0 %6791, %v5841
    %v6793 = vpop.permute.xlu0 %6792
    %6794 = vset.pattern.permute.xlu0 0
    %6795 = vperm.xlu0 %6794, %v5843
    %v6796 = vpop.permute.xlu0 %6795
    %6797 = vset.pattern.permute.xlu0 0
    %6798 = vperm.xlu0 %6797, %v5845
    %v6799 = vpop.permute.xlu0 %6798
    %6800 = vset.pattern.permute.xlu0 0
    %6801 = vperm.xlu0 %6800, %v5847
    %v6802 = vpop.permute.xlu0 %6801
    %6803 = vset.pattern.permute.xlu0 0
    %6804 = vperm.xlu0 %6803, %v5849
    %v6805 = vpop.permute.xlu0 %6804
    %6806 = vset.pattern.permute.xlu0 0
    %6807 = vperm.xlu0 %6806, %v5851
    %v6808 = vpop.permute.xlu0 %6807
    %6809 = vset.pattern.permute.xlu0 0
    %6810 = vperm.xlu0 %6809, %v5853
    %v6811 = vpop.permute.xlu0 %6810
    %6812 = vset.pattern.permute.xlu0 0
    %6813 = vperm.xlu0 %6812, %v5855
    %v6814 = vpop.permute.xlu0 %6813
    %6815 = vset.pattern.permute.xlu0 0
    %6816 = vperm.xlu0 %6815, %v5857
    %v6817 = vpop.permute.xlu0 %6816
    %6818 = vset.pattern.permute.xlu0 0
    %6819 = vperm.xlu0 %6818, %v5859
    %v6820 = vpop.permute.xlu0 %6819
    %6821 = vset.pattern.permute.xlu0 0
    %6822 = vperm.xlu0 %6821, %v5861
    %v6823 = vpop.permute.xlu0 %6822
    %6824 = vset.pattern.permute.xlu0 0
    %6825 = vperm.xlu0 %6824, %v5863
    %v6826 = vpop.permute.xlu0 %6825
    %6827 = vset.pattern.permute.xlu0 0
    %6828 = vperm.xlu0 %6827, %v5865
    %v6829 = vpop.permute.xlu0 %6828
    %6830 = vset.pattern.permute.xlu0 0
    %6831 = vperm.xlu0 %6830, %v5867
    %v6832 = vpop.permute.xlu0 %6831
    %6833 = vset.pattern.permute.xlu0 0
    %6834 = vperm.xlu0 %6833, %v5869
    %v6835 = vpop.permute.xlu0 %6834
    %6836 = vset.pattern.permute.xlu0 0
    %6837 = vperm.xlu0 %6836, %v5871
    %v6838 = vpop.permute.xlu0 %6837
    %6839 = vset.pattern.permute.xlu0 0
    %6840 = vperm.xlu0 %6839, %v5873
    %v6841 = vpop.permute.xlu0 %6840
    %6842 = vset.pattern.permute.xlu0 0
    %6843 = vperm.xlu0 %6842, %v5875
    %v6844 = vpop.permute.xlu0 %6843
    %6845 = vset.pattern.permute.xlu0 0
    %6846 = vperm.xlu0 %6845, %v5877
    %v6847 = vpop.permute.xlu0 %6846
    %6848 = vset.pattern.permute.xlu0 0
    %6849 = vperm.xlu0 %6848, %v5879
    %v6850 = vpop.permute.xlu0 %6849
    %6851 = vset.pattern.permute.xlu0 0
    %6852 = vperm.xlu0 %6851, %v5881
    %v6853 = vpop.permute.xlu0 %6852
    %6854 = vset.pattern.permute.xlu0 0
    %6855 = vperm.xlu0 %6854, %v5883
    %v6856 = vpop.permute.xlu0 %6855
    %6857 = vset.pattern.permute.xlu0 0
    %6858 = vperm.xlu0 %6857, %v5885
    %v6859 = vpop.permute.xlu0 %6858
    %6860 = vset.pattern.permute.xlu0 0
    %6861 = vperm.xlu0 %6860, %v5887
    %v6862 = vpop.permute.xlu0 %6861
    %6863 = vset.pattern.permute.xlu0 0
    %6864 = vperm.xlu0 %6863, %v5889
    %v6865 = vpop.permute.xlu0 %6864
    %6866 = vset.pattern.permute.xlu0 0
    %6867 = vperm.xlu0 %6866, %v5891
    %v6868 = vpop.permute.xlu0 %6867
    %6869 = vset.pattern.permute.xlu0 0
    %6870 = vperm.xlu0 %6869, %v5893
    %v6871 = vpop.permute.xlu0 %6870
    %6872 = vset.pattern.permute.xlu0 0
    %6873 = vperm.xlu0 %6872, %v5895
    %v6874 = vpop.permute.xlu0 %6873
    %6875 = vset.pattern.permute.xlu0 0
    %6876 = vperm.xlu0 %6875, %v5897
    %v6877 = vpop.permute.xlu0 %6876
    %6878 = vset.pattern.permute.xlu0 0
    %6879 = vperm.xlu0 %6878, %v5899
    %v6880 = vpop.permute.xlu0 %6879
    %6881 = vset.pattern.permute.xlu0 0
    %6882 = vperm.xlu0 %6881, %v5901
    %v6883 = vpop.permute.xlu0 %6882
    %6884 = vset.pattern.permute.xlu0 0
    %6885 = vperm.xlu0 %6884, %v5903
    %v6886 = vpop.permute.xlu0 %6885
    %6887 = vset.pattern.permute.xlu0 0
    %6888 = vperm.xlu0 %6887, %v5905
    %v6889 = vpop.permute.xlu0 %6888
    %6890 = vset.pattern.permute.xlu0 0
    %6891 = vperm.xlu0 %6890, %v5907
    %v6892 = vpop.permute.xlu0 %6891
    %6893 = vset.pattern.permute.xlu0 0
    %6894 = vperm.xlu0 %6893, %v5909
    %v6895 = vpop.permute.xlu0 %6894
    %6896 = vset.pattern.permute.xlu0 0
    %6897 = vperm.xlu0 %6896, %v5911
    %v6898 = vpop.permute.xlu0 %6897
    %6899 = vset.pattern.permute.xlu0 0
    %6900 = vperm.xlu0 %6899, %v5913
    %v6901 = vpop.permute.xlu0 %6900
    %6902 = vset.pattern.permute.xlu0 0
    %6903 = vperm.xlu0 %6902, %v5915
    %v6904 = vpop.permute.xlu0 %6903
    %6905 = vset.pattern.permute.xlu0 0
    %6906 = vperm.xlu0 %6905, %v5917
    %v6907 = vpop.permute.xlu0 %6906
    %6908 = vset.pattern.permute.xlu0 0
    %6909 = vperm.xlu0 %6908, %v5919
    %v6910 = vpop.permute.xlu0 %6909
    %6911 = vset.pattern.permute.xlu0 0
    %6912 = vperm.xlu0 %6911, %v5921
    %v6913 = vpop.permute.xlu0 %6912
    %6914 = vset.pattern.permute.xlu0 0
    %6915 = vperm.xlu0 %6914, %v5923
    %v6916 = vpop.permute.xlu0 %6915
    %6917 = vset.pattern.permute.xlu0 0
    %6918 = vperm.xlu0 %6917, %v5925
    %v6919 = vpop.permute.xlu0 %6918
    %6920 = vset.pattern.permute.xlu0 0
    %6921 = vperm.xlu0 %6920, %v5927
    %v6922 = vpop.permute.xlu0 %6921
    %6923 = vset.pattern.permute.xlu0 0
    %6924 = vperm.xlu0 %6923, %v5929
    %v6925 = vpop.permute.xlu0 %6924
    %6926 = vset.pattern.permute.xlu0 0
    %6927 = vperm.xlu0 %6926, %v5931
    %v6928 = vpop.permute.xlu0 %6927
    %6929 = vset.pattern.permute.xlu0 0
    %6930 = vperm.xlu0 %6929, %v5933
    %v6931 = vpop.permute.xlu0 %6930
    %6932 = vset.pattern.permute.xlu0 0
    %6933 = vperm.xlu0 %6932, %v5935
    %v6934 = vpop.permute.xlu0 %6933
    %6935 = vset.pattern.permute.xlu0 0
    %6936 = vperm.xlu0 %6935, %v5937
    %v6937 = vpop.permute.xlu0 %6936
    %6938 = vset.pattern.permute.xlu0 0
    %6939 = vperm.xlu0 %6938, %v5939
    %v6940 = vpop.permute.xlu0 %6939
    %6941 = vset.pattern.permute.xlu0 0
    %6942 = vperm.xlu0 %6941, %v5941
    %v6943 = vpop.permute.xlu0 %6942
    %6944 = vset.pattern.permute.xlu0 0
    %6945 = vperm.xlu0 %6944, %v5943
    %v6946 = vpop.permute.xlu0 %6945
    %6947 = vset.pattern.permute.xlu0 0
    %6948 = vperm.xlu0 %6947, %v5945
    %v6949 = vpop.permute.xlu0 %6948
    %6950 = vset.pattern.permute.xlu0 0
    %6951 = vperm.xlu0 %6950, %v5947
    %v6952 = vpop.permute.xlu0 %6951
    %6953 = vset.pattern.permute.xlu0 0
    %6954 = vperm.xlu0 %6953, %v5949
    %v6955 = vpop.permute.xlu0 %6954
    %6956 = vset.pattern.permute.xlu0 0
    %6957 = vperm.xlu0 %6956, %v5951
    %v6958 = vpop.permute.xlu0 %6957
    %6959 = vset.pattern.permute.xlu0 0
    %6960 = vperm.xlu0 %6959, %v5953
    %v6961 = vpop.permute.xlu0 %6960
    %6962 = vset.pattern.permute.xlu0 0
    %6963 = vperm.xlu0 %6962, %v5955
    %v6964 = vpop.permute.xlu0 %6963
    %6965 = vset.pattern.permute.xlu0 0
    %6966 = vperm.xlu0 %6965, %v5957
    %v6967 = vpop.permute.xlu0 %6966
    %6968 = vset.pattern.permute.xlu0 0
    %6969 = vperm.xlu0 %6968, %v5959
    %v6970 = vpop.permute.xlu0 %6969
    %6971 = vset.pattern.permute.xlu0 0
    %6972 = vperm.xlu0 %6971, %v5961
    %v6973 = vpop.permute.xlu0 %6972
    %6974 = vset.pattern.permute.xlu0 0
    %6975 = vperm.xlu0 %6974, %v5963
    %v6976 = vpop.permute.xlu0 %6975
    %6977 = vset.pattern.permute.xlu0 0
    %6978 = vperm.xlu0 %6977, %v5965
    %v6979 = vpop.permute.xlu0 %6978
    %6980 = vset.pattern.permute.xlu0 0
    %6981 = vperm.xlu0 %6980, %v5967
    %v6982 = vpop.permute.xlu0 %6981
    %6983 = vset.pattern.permute.xlu0 0
    %6984 = vperm.xlu0 %6983, %v5969
    %v6985 = vpop.permute.xlu0 %6984
    %6986 = vset.pattern.permute.xlu0 0
    %6987 = vperm.xlu0 %6986, %v5971
    %v6988 = vpop.permute.xlu0 %6987
    %6989 = vset.pattern.permute.xlu0 0
    %6990 = vperm.xlu0 %6989, %v5973
    %v6991 = vpop.permute.xlu0 %6990
    %6992 = vset.pattern.permute.xlu0 0
    %6993 = vperm.xlu0 %6992, %v5975
    %v6994 = vpop.permute.xlu0 %6993
    %6995 = vset.pattern.permute.xlu0 0
    %6996 = vperm.xlu0 %6995, %v5977
    %v6997 = vpop.permute.xlu0 %6996
    %6998 = vset.pattern.permute.xlu0 0
    %6999 = vperm.xlu0 %6998, %v5979
    %v7000 = vpop.permute.xlu0 %6999
    %7001 = vset.pattern.permute.xlu0 0
    %7002 = vperm.xlu0 %7001, %v5981
    %v7003 = vpop.permute.xlu0 %7002
    %7004 = vset.pattern.permute.xlu0 0
    %7005 = vperm.xlu0 %7004, %v5983
    %v7006 = vpop.permute.xlu0 %7005
    %7007 = vset.pattern.permute.xlu0 0
    %7008 = vperm.xlu0 %7007, %v5985
    %v7009 = vpop.permute.xlu0 %7008
    %v7010 = vperm.slane %v6244, %v4630
    %v7011 = vperm.slane %v6247, %v4632
    %v7012 = vsel %vm4634, %v7011, %v7010
    %v7013 = vperm.slane %v6250, %v4636
    %v7014 = vsel %vm4638, %v7013, %v7012
    %v7015 = vperm.slane %v6253, %v4640
    %v7016 = vsel %vm4642, %v7015, %v7014
    %v7017 = vperm.slane %v6256, %v4644
    %v7018 = vsel %vm4646, %v7017, %v7016
    %v7019 = vperm.slane %v6259, %v4648
    %v7020 = vsel %vm4650, %v7019, %v7018
    %v7021 = vperm.slane %v6262, %v4652
    %v7022 = vsel %vm4654, %v7021, %v7020
    %v7023 = vperm.slane %v6265, %v4656
    %v7024 = vsel %vm4658, %v7023, %v7022
    %v7025 = vperm.slane %v6268, %v4660
    %v7026 = vsel %vm4662, %v7025, %v7024
    %v7027 = vperm.slane %v6271, %v4664
    %v7028 = vsel %vm4666, %v7027, %v7026
    %v7029 = vperm.slane %v6274, %v4668
    %v7030 = vsel %vm4670, %v7029, %v7028
    %v7031 = vperm.slane %v6277, %v4672
    %v7032 = vsel %vm4674, %v7031, %v7030
    %v7033 = vperm.slane %v6280, %v4676
    %v7034 = vsel %vm4678, %v7033, %v7032
    %v7035 = vperm.slane %v6283, %v4680
    %v7036 = vsel %vm4682, %v7035, %v7034
    %v7037 = vperm.slane %v6286, %v4684
    %v7038 = vsel %vm4686, %v7037, %v7036
    %v7039 = vperm.slane %v6289, %v4688
    %v7040 = vsel %vm4690, %v7039, %v7038
    %v7041 = vperm.slane %v6292, %v4630
    %v7042 = vperm.slane %v6295, %v4632
    %v7043 = vsel %vm4634, %v7042, %v7041
    %v7044 = vperm.slane %v6298, %v4636
    %v7045 = vsel %vm4638, %v7044, %v7043
    %v7046 = vperm.slane %v6301, %v4640
    %v7047 = vsel %vm4642, %v7046, %v7045
    %v7048 = vperm.slane %v6304, %v4644
    %v7049 = vsel %vm4646, %v7048, %v7047
    %v7050 = vperm.slane %v6307, %v4648
    %v7051 = vsel %vm4650, %v7050, %v7049
    %v7052 = vperm.slane %v6310, %v4652
    %v7053 = vsel %vm4654, %v7052, %v7051
    %v7054 = vperm.slane %v6313, %v4656
    %v7055 = vsel %vm4658, %v7054, %v7053
    %v7056 = vperm.slane %v6316, %v4660
    %v7057 = vsel %vm4662, %v7056, %v7055
    %v7058 = vperm.slane %v6319, %v4664
    %v7059 = vsel %vm4666, %v7058, %v7057
    %v7060 = vperm.slane %v6322, %v4668
    %v7061 = vsel %vm4670, %v7060, %v7059
    %v7062 = vperm.slane %v6325, %v4672
    %v7063 = vsel %vm4674, %v7062, %v7061
    %v7064 = vperm.slane %v6328, %v4676
    %v7065 = vsel %vm4678, %v7064, %v7063
    %v7066 = vperm.slane %v6331, %v4680
    %v7067 = vsel %vm4682, %v7066, %v7065
    %v7068 = vperm.slane %v6334, %v4684
    %v7069 = vsel %vm4686, %v7068, %v7067
    %v7070 = vperm.slane %v6337, %v4688
    %v7071 = vsel %vm4690, %v7070, %v7069
    %v7072 = vperm.slane %v6340, %v4630
    %v7073 = vperm.slane %v6343, %v4632
    %v7074 = vsel %vm4634, %v7073, %v7072
    %v7075 = vperm.slane %v6346, %v4636
    %v7076 = vsel %vm4638, %v7075, %v7074
    %v7077 = vperm.slane %v6349, %v4640
    %v7078 = vsel %vm4642, %v7077, %v7076
    %v7079 = vperm.slane %v6352, %v4644
    %v7080 = vsel %vm4646, %v7079, %v7078
    %v7081 = vperm.slane %v6355, %v4648
    %v7082 = vsel %vm4650, %v7081, %v7080
    %v7083 = vperm.slane %v6358, %v4652
    %v7084 = vsel %vm4654, %v7083, %v7082
    %v7085 = vperm.slane %v6361, %v4656
    %v7086 = vsel %vm4658, %v7085, %v7084
    %v7087 = vperm.slane %v6364, %v4660
    %v7088 = vsel %vm4662, %v7087, %v7086
    %v7089 = vperm.slane %v6367, %v4664
    %v7090 = vsel %vm4666, %v7089, %v7088
    %v7091 = vperm.slane %v6370, %v4668
    %v7092 = vsel %vm4670, %v7091, %v7090
    %v7093 = vperm.slane %v6373, %v4672
    %v7094 = vsel %vm4674, %v7093, %v7092
    %v7095 = vperm.slane %v6376, %v4676
    %v7096 = vsel %vm4678, %v7095, %v7094
    %v7097 = vperm.slane %v6379, %v4680
    %v7098 = vsel %vm4682, %v7097, %v7096
    %v7099 = vperm.slane %v6382, %v4684
    %v7100 = vsel %vm4686, %v7099, %v7098
    %v7101 = vperm.slane %v6385, %v4688
    %v7102 = vsel %vm4690, %v7101, %v7100
    %v7103 = vperm.slane %v6388, %v4630
    %v7104 = vperm.slane %v6391, %v4632
    %v7105 = vsel %vm4634, %v7104, %v7103
    %v7106 = vperm.slane %v6394, %v4636
    %v7107 = vsel %vm4638, %v7106, %v7105
    %v7108 = vperm.slane %v6397, %v4640
    %v7109 = vsel %vm4642, %v7108, %v7107
    %v7110 = vperm.slane %v6400, %v4644
    %v7111 = vsel %vm4646, %v7110, %v7109
    %v7112 = vperm.slane %v6403, %v4648
    %v7113 = vsel %vm4650, %v7112, %v7111
    %v7114 = vperm.slane %v6406, %v4652
    %v7115 = vsel %vm4654, %v7114, %v7113
    %v7116 = vperm.slane %v6409, %v4656
    %v7117 = vsel %vm4658, %v7116, %v7115
    %v7118 = vperm.slane %v6412, %v4660
    %v7119 = vsel %vm4662, %v7118, %v7117
    %v7120 = vperm.slane %v6415, %v4664
    %v7121 = vsel %vm4666, %v7120, %v7119
    %v7122 = vperm.slane %v6418, %v4668
    %v7123 = vsel %vm4670, %v7122, %v7121
    %v7124 = vperm.slane %v6421, %v4672
    %v7125 = vsel %vm4674, %v7124, %v7123
    %v7126 = vperm.slane %v6424, %v4676
    %v7127 = vsel %vm4678, %v7126, %v7125
    %v7128 = vperm.slane %v6427, %v4680
    %v7129 = vsel %vm4682, %v7128, %v7127
    %v7130 = vperm.slane %v6430, %v4684
    %v7131 = vsel %vm4686, %v7130, %v7129
    %v7132 = vperm.slane %v6433, %v4688
    %v7133 = vsel %vm4690, %v7132, %v7131
    %v7134 = vperm.slane %v6436, %v4630
    %v7135 = vperm.slane %v6439, %v4632
    %v7136 = vsel %vm4634, %v7135, %v7134
    %v7137 = vperm.slane %v6442, %v4636
    %v7138 = vsel %vm4638, %v7137, %v7136
    %v7139 = vperm.slane %v6445, %v4640
    %v7140 = vsel %vm4642, %v7139, %v7138
    %v7141 = vperm.slane %v6448, %v4644
    %v7142 = vsel %vm4646, %v7141, %v7140
    %v7143 = vperm.slane %v6451, %v4648
    %v7144 = vsel %vm4650, %v7143, %v7142
    %v7145 = vperm.slane %v6454, %v4652
    %v7146 = vsel %vm4654, %v7145, %v7144
    %v7147 = vperm.slane %v6457, %v4656
    %v7148 = vsel %vm4658, %v7147, %v7146
    %v7149 = vperm.slane %v6460, %v4660
    %v7150 = vsel %vm4662, %v7149, %v7148
    %v7151 = vperm.slane %v6463, %v4664
    %v7152 = vsel %vm4666, %v7151, %v7150
    %v7153 = vperm.slane %v6466, %v4668
    %v7154 = vsel %vm4670, %v7153, %v7152
    %v7155 = vperm.slane %v6469, %v4672
    %v7156 = vsel %vm4674, %v7155, %v7154
    %v7157 = vperm.slane %v6472, %v4676
    %v7158 = vsel %vm4678, %v7157, %v7156
    %v7159 = vperm.slane %v6475, %v4680
    %v7160 = vsel %vm4682, %v7159, %v7158
    %v7161 = vperm.slane %v6478, %v4684
    %v7162 = vsel %vm4686, %v7161, %v7160
    %v7163 = vperm.slane %v6481, %v4688
    %v7164 = vsel %vm4690, %v7163, %v7162
    %v7165 = vperm.slane %v6484, %v4630
    %v7166 = vperm.slane %v6487, %v4632
    %v7167 = vsel %vm4634, %v7166, %v7165
    %v7168 = vperm.slane %v6490, %v4636
    %v7169 = vsel %vm4638, %v7168, %v7167
    %v7170 = vperm.slane %v6493, %v4640
    %v7171 = vsel %vm4642, %v7170, %v7169
    %v7172 = vperm.slane %v6496, %v4644
    %v7173 = vsel %vm4646, %v7172, %v7171
    %v7174 = vperm.slane %v6499, %v4648
    %v7175 = vsel %vm4650, %v7174, %v7173
    %v7176 = vperm.slane %v6502, %v4652
    %v7177 = vsel %vm4654, %v7176, %v7175
    %v7178 = vperm.slane %v6505, %v4656
    %v7179 = vsel %vm4658, %v7178, %v7177
    %v7180 = vperm.slane %v6508, %v4660
    %v7181 = vsel %vm4662, %v7180, %v7179
    %v7182 = vperm.slane %v6511, %v4664
    %v7183 = vsel %vm4666, %v7182, %v7181
    %v7184 = vperm.slane %v6514, %v4668
    %v7185 = vsel %vm4670, %v7184, %v7183
    %v7186 = vperm.slane %v6517, %v4672
    %v7187 = vsel %vm4674, %v7186, %v7185
    %v7188 = vperm.slane %v6520, %v4676
    %v7189 = vsel %vm4678, %v7188, %v7187
    %v7190 = vperm.slane %v6523, %v4680
    %v7191 = vsel %vm4682, %v7190, %v7189
    %v7192 = vperm.slane %v6526, %v4684
    %v7193 = vsel %vm4686, %v7192, %v7191
    %v7194 = vperm.slane %v6529, %v4688
    %v7195 = vsel %vm4690, %v7194, %v7193
    %v7196 = vperm.slane %v6532, %v4630
    %v7197 = vperm.slane %v6535, %v4632
    %v7198 = vsel %vm4634, %v7197, %v7196
    %v7199 = vperm.slane %v6538, %v4636
    %v7200 = vsel %vm4638, %v7199, %v7198
    %v7201 = vperm.slane %v6541, %v4640
    %v7202 = vsel %vm4642, %v7201, %v7200
    %v7203 = vperm.slane %v6544, %v4644
    %v7204 = vsel %vm4646, %v7203, %v7202
    %v7205 = vperm.slane %v6547, %v4648
    %v7206 = vsel %vm4650, %v7205, %v7204
    %v7207 = vperm.slane %v6550, %v4652
    %v7208 = vsel %vm4654, %v7207, %v7206
    %v7209 = vperm.slane %v6553, %v4656
    %v7210 = vsel %vm4658, %v7209, %v7208
    %v7211 = vperm.slane %v6556, %v4660
    %v7212 = vsel %vm4662, %v7211, %v7210
    %v7213 = vperm.slane %v6559, %v4664
    %v7214 = vsel %vm4666, %v7213, %v7212
    %v7215 = vperm.slane %v6562, %v4668
    %v7216 = vsel %vm4670, %v7215, %v7214
    %v7217 = vperm.slane %v6565, %v4672
    %v7218 = vsel %vm4674, %v7217, %v7216
    %v7219 = vperm.slane %v6568, %v4676
    %v7220 = vsel %vm4678, %v7219, %v7218
    %v7221 = vperm.slane %v6571, %v4680
    %v7222 = vsel %vm4682, %v7221, %v7220
    %v7223 = vperm.slane %v6574, %v4684
    %v7224 = vsel %vm4686, %v7223, %v7222
    %v7225 = vperm.slane %v6577, %v4688
    %v7226 = vsel %vm4690, %v7225, %v7224
    %v7227 = vperm.slane %v6580, %v4630
    %v7228 = vperm.slane %v6583, %v4632
    %v7229 = vsel %vm4634, %v7228, %v7227
    %v7230 = vperm.slane %v6586, %v4636
    %v7231 = vsel %vm4638, %v7230, %v7229
    %v7232 = vperm.slane %v6589, %v4640
    %v7233 = vsel %vm4642, %v7232, %v7231
    %v7234 = vperm.slane %v6592, %v4644
    %v7235 = vsel %vm4646, %v7234, %v7233
    %v7236 = vperm.slane %v6595, %v4648
    %v7237 = vsel %vm4650, %v7236, %v7235
    %v7238 = vperm.slane %v6598, %v4652
    %v7239 = vsel %vm4654, %v7238, %v7237
    %v7240 = vperm.slane %v6601, %v4656
    %v7241 = vsel %vm4658, %v7240, %v7239
    %v7242 = vperm.slane %v6604, %v4660
    %v7243 = vsel %vm4662, %v7242, %v7241
    %v7244 = vperm.slane %v6607, %v4664
    %v7245 = vsel %vm4666, %v7244, %v7243
    %v7246 = vperm.slane %v6610, %v4668
    %v7247 = vsel %vm4670, %v7246, %v7245
    %v7248 = vperm.slane %v6613, %v4672
    %v7249 = vsel %vm4674, %v7248, %v7247
    %v7250 = vperm.slane %v6616, %v4676
    %v7251 = vsel %vm4678, %v7250, %v7249
    %v7252 = vperm.slane %v6619, %v4680
    %v7253 = vsel %vm4682, %v7252, %v7251
    %v7254 = vperm.slane %v6622, %v4684
    %v7255 = vsel %vm4686, %v7254, %v7253
    %v7256 = vperm.slane %v6625, %v4688
    %v7257 = vsel %vm4690, %v7256, %v7255
    %v7258 = vperm.slane %v6628, %v4630
    %v7259 = vperm.slane %v6631, %v4632
    %v7260 = vsel %vm4634, %v7259, %v7258
    %v7261 = vperm.slane %v6634, %v4636
    %v7262 = vsel %vm4638, %v7261, %v7260
    %v7263 = vperm.slane %v6637, %v4640
    %v7264 = vsel %vm4642, %v7263, %v7262
    %v7265 = vperm.slane %v6640, %v4644
    %v7266 = vsel %vm4646, %v7265, %v7264
    %v7267 = vperm.slane %v6643, %v4648
    %v7268 = vsel %vm4650, %v7267, %v7266
    %v7269 = vperm.slane %v6646, %v4652
    %v7270 = vsel %vm4654, %v7269, %v7268
    %v7271 = vperm.slane %v6649, %v4656
    %v7272 = vsel %vm4658, %v7271, %v7270
    %v7273 = vperm.slane %v6652, %v4660
    %v7274 = vsel %vm4662, %v7273, %v7272
    %v7275 = vperm.slane %v6655, %v4664
    %v7276 = vsel %vm4666, %v7275, %v7274
    %v7277 = vperm.slane %v6658, %v4668
    %v7278 = vsel %vm4670, %v7277, %v7276
    %v7279 = vperm.slane %v6661, %v4672
    %v7280 = vsel %vm4674, %v7279, %v7278
    %v7281 = vperm.slane %v6664, %v4676
    %v7282 = vsel %vm4678, %v7281, %v7280
    %v7283 = vperm.slane %v6667, %v4680
    %v7284 = vsel %vm4682, %v7283, %v7282
    %v7285 = vperm.slane %v6670, %v4684
    %v7286 = vsel %vm4686, %v7285, %v7284
    %v7287 = vperm.slane %v6673, %v4688
    %v7288 = vsel %vm4690, %v7287, %v7286
    %v7289 = vperm.slane %v6676, %v4630
    %v7290 = vperm.slane %v6679, %v4632
    %v7291 = vsel %vm4634, %v7290, %v7289
    %v7292 = vperm.slane %v6682, %v4636
    %v7293 = vsel %vm4638, %v7292, %v7291
    %v7294 = vperm.slane %v6685, %v4640
    %v7295 = vsel %vm4642, %v7294, %v7293
    %v7296 = vperm.slane %v6688, %v4644
    %v7297 = vsel %vm4646, %v7296, %v7295
    %v7298 = vperm.slane %v6691, %v4648
    %v7299 = vsel %vm4650, %v7298, %v7297
    %v7300 = vperm.slane %v6694, %v4652
    %v7301 = vsel %vm4654, %v7300, %v7299
    %v7302 = vperm.slane %v6697, %v4656
    %v7303 = vsel %vm4658, %v7302, %v7301
    %v7304 = vperm.slane %v6700, %v4660
    %v7305 = vsel %vm4662, %v7304, %v7303
    %v7306 = vperm.slane %v6703, %v4664
    %v7307 = vsel %vm4666, %v7306, %v7305
    %v7308 = vperm.slane %v6706, %v4668
    %v7309 = vsel %vm4670, %v7308, %v7307
    %v7310 = vperm.slane %v6709, %v4672
    %v7311 = vsel %vm4674, %v7310, %v7309
    %v7312 = vperm.slane %v6712, %v4676
    %v7313 = vsel %vm4678, %v7312, %v7311
    %v7314 = vperm.slane %v6715, %v4680
    %v7315 = vsel %vm4682, %v7314, %v7313
    %v7316 = vperm.slane %v6718, %v4684
    %v7317 = vsel %vm4686, %v7316, %v7315
    %v7318 = vperm.slane %v6721, %v4688
    %v7319 = vsel %vm4690, %v7318, %v7317
    %v7320 = vperm.slane %v6724, %v4630
    %v7321 = vperm.slane %v6727, %v4632
    %v7322 = vsel %vm4634, %v7321, %v7320
    %v7323 = vperm.slane %v6730, %v4636
    %v7324 = vsel %vm4638, %v7323, %v7322
    %v7325 = vperm.slane %v6733, %v4640
    %v7326 = vsel %vm4642, %v7325, %v7324
    %v7327 = vperm.slane %v6736, %v4644
    %v7328 = vsel %vm4646, %v7327, %v7326
    %v7329 = vperm.slane %v6739, %v4648
    %v7330 = vsel %vm4650, %v7329, %v7328
    %v7331 = vperm.slane %v6742, %v4652
    %v7332 = vsel %vm4654, %v7331, %v7330
    %v7333 = vperm.slane %v6745, %v4656
    %v7334 = vsel %vm4658, %v7333, %v7332
    %v7335 = vperm.slane %v6748, %v4660
    %v7336 = vsel %vm4662, %v7335, %v7334
    %v7337 = vperm.slane %v6751, %v4664
    %v7338 = vsel %vm4666, %v7337, %v7336
    %v7339 = vperm.slane %v6754, %v4668
    %v7340 = vsel %vm4670, %v7339, %v7338
    %v7341 = vperm.slane %v6757, %v4672
    %v7342 = vsel %vm4674, %v7341, %v7340
    %v7343 = vperm.slane %v6760, %v4676
    %v7344 = vsel %vm4678, %v7343, %v7342
    %v7345 = vperm.slane %v6763, %v4680
    %v7346 = vsel %vm4682, %v7345, %v7344
    %v7347 = vperm.slane %v6766, %v4684
    %v7348 = vsel %vm4686, %v7347, %v7346
    %v7349 = vperm.slane %v6769, %v4688
    %v7350 = vsel %vm4690, %v7349, %v7348
    %v7351 = vperm.slane %v6772, %v4630
    %v7352 = vperm.slane %v6775, %v4632
    %v7353 = vsel %vm4634, %v7352, %v7351
    %v7354 = vperm.slane %v6778, %v4636
    %v7355 = vsel %vm4638, %v7354, %v7353
    %v7356 = vperm.slane %v6781, %v4640
    %v7357 = vsel %vm4642, %v7356, %v7355
    %v7358 = vperm.slane %v6784, %v4644
    %v7359 = vsel %vm4646, %v7358, %v7357
    %v7360 = vperm.slane %v6787, %v4648
    %v7361 = vsel %vm4650, %v7360, %v7359
    %v7362 = vperm.slane %v6790, %v4652
    %v7363 = vsel %vm4654, %v7362, %v7361
    %v7364 = vperm.slane %v6793, %v4656
    %v7365 = vsel %vm4658, %v7364, %v7363
    %v7366 = vperm.slane %v6796, %v4660
    %v7367 = vsel %vm4662, %v7366, %v7365
    %v7368 = vperm.slane %v6799, %v4664
    %v7369 = vsel %vm4666, %v7368, %v7367
    %v7370 = vperm.slane %v6802, %v4668
    %v7371 = vsel %vm4670, %v7370, %v7369
    %v7372 = vperm.slane %v6805, %v4672
    %v7373 = vsel %vm4674, %v7372, %v7371
    %v7374 = vperm.slane %v6808, %v4676
    %v7375 = vsel %vm4678, %v7374, %v7373
    %v7376 = vperm.slane %v6811, %v4680
    %v7377 = vsel %vm4682, %v7376, %v7375
    %v7378 = vperm.slane %v6814, %v4684
    %v7379 = vsel %vm4686, %v7378, %v7377
    %v7380 = vperm.slane %v6817, %v4688
    %v7381 = vsel %vm4690, %v7380, %v7379
    %v7382 = vperm.slane %v6820, %v4630
    %v7383 = vperm.slane %v6823, %v4632
    %v7384 = vsel %vm4634, %v7383, %v7382
    %v7385 = vperm.slane %v6826, %v4636
    %v7386 = vsel %vm4638, %v7385, %v7384
    %v7387 = vperm.slane %v6829, %v4640
    %v7388 = vsel %vm4642, %v7387, %v7386
    %v7389 = vperm.slane %v6832, %v4644
    %v7390 = vsel %vm4646, %v7389, %v7388
    %v7391 = vperm.slane %v6835, %v4648
    %v7392 = vsel %vm4650, %v7391, %v7390
    %v7393 = vperm.slane %v6838, %v4652
    %v7394 = vsel %vm4654, %v7393, %v7392
    %v7395 = vperm.slane %v6841, %v4656
    %v7396 = vsel %vm4658, %v7395, %v7394
    %v7397 = vperm.slane %v6844, %v4660
    %v7398 = vsel %vm4662, %v7397, %v7396
    %v7399 = vperm.slane %v6847, %v4664
    %v7400 = vsel %vm4666, %v7399, %v7398
    %v7401 = vperm.slane %v6850, %v4668
    %v7402 = vsel %vm4670, %v7401, %v7400
    %v7403 = vperm.slane %v6853, %v4672
    %v7404 = vsel %vm4674, %v7403, %v7402
    %v7405 = vperm.slane %v6856, %v4676
    %v7406 = vsel %vm4678, %v7405, %v7404
    %v7407 = vperm.slane %v6859, %v4680
    %v7408 = vsel %vm4682, %v7407, %v7406
    %v7409 = vperm.slane %v6862, %v4684
    %v7410 = vsel %vm4686, %v7409, %v7408
    %v7411 = vperm.slane %v6865, %v4688
    %v7412 = vsel %vm4690, %v7411, %v7410
    %v7413 = vperm.slane %v6868, %v4630
    %v7414 = vperm.slane %v6871, %v4632
    %v7415 = vsel %vm4634, %v7414, %v7413
    %v7416 = vperm.slane %v6874, %v4636
    %v7417 = vsel %vm4638, %v7416, %v7415
    %v7418 = vperm.slane %v6877, %v4640
    %v7419 = vsel %vm4642, %v7418, %v7417
    %v7420 = vperm.slane %v6880, %v4644
    %v7421 = vsel %vm4646, %v7420, %v7419
    %v7422 = vperm.slane %v6883, %v4648
    %v7423 = vsel %vm4650, %v7422, %v7421
    %v7424 = vperm.slane %v6886, %v4652
    %v7425 = vsel %vm4654, %v7424, %v7423
    %v7426 = vperm.slane %v6889, %v4656
    %v7427 = vsel %vm4658, %v7426, %v7425
    %v7428 = vperm.slane %v6892, %v4660
    %v7429 = vsel %vm4662, %v7428, %v7427
    %v7430 = vperm.slane %v6895, %v4664
    %v7431 = vsel %vm4666, %v7430, %v7429
    %v7432 = vperm.slane %v6898, %v4668
    %v7433 = vsel %vm4670, %v7432, %v7431
    %v7434 = vperm.slane %v6901, %v4672
    %v7435 = vsel %vm4674, %v7434, %v7433
    %v7436 = vperm.slane %v6904, %v4676
    %v7437 = vsel %vm4678, %v7436, %v7435
    %v7438 = vperm.slane %v6907, %v4680
    %v7439 = vsel %vm4682, %v7438, %v7437
    %v7440 = vperm.slane %v6910, %v4684
    %v7441 = vsel %vm4686, %v7440, %v7439
    %v7442 = vperm.slane %v6913, %v4688
    %v7443 = vsel %vm4690, %v7442, %v7441
    %v7444 = vperm.slane %v6916, %v4630
    %v7445 = vperm.slane %v6919, %v4632
    %v7446 = vsel %vm4634, %v7445, %v7444
    %v7447 = vperm.slane %v6922, %v4636
    %v7448 = vsel %vm4638, %v7447, %v7446
    %v7449 = vperm.slane %v6925, %v4640
    %v7450 = vsel %vm4642, %v7449, %v7448
    %v7451 = vperm.slane %v6928, %v4644
    %v7452 = vsel %vm4646, %v7451, %v7450
    %v7453 = vperm.slane %v6931, %v4648
    %v7454 = vsel %vm4650, %v7453, %v7452
    %v7455 = vperm.slane %v6934, %v4652
    %v7456 = vsel %vm4654, %v7455, %v7454
    %v7457 = vperm.slane %v6937, %v4656
    %v7458 = vsel %vm4658, %v7457, %v7456
    %v7459 = vperm.slane %v6940, %v4660
    %v7460 = vsel %vm4662, %v7459, %v7458
    %v7461 = vperm.slane %v6943, %v4664
    %v7462 = vsel %vm4666, %v7461, %v7460
    %v7463 = vperm.slane %v6946, %v4668
    %v7464 = vsel %vm4670, %v7463, %v7462
    %v7465 = vperm.slane %v6949, %v4672
    %v7466 = vsel %vm4674, %v7465, %v7464
    %v7467 = vperm.slane %v6952, %v4676
    %v7468 = vsel %vm4678, %v7467, %v7466
    %v7469 = vperm.slane %v6955, %v4680
    %v7470 = vsel %vm4682, %v7469, %v7468
    %v7471 = vperm.slane %v6958, %v4684
    %v7472 = vsel %vm4686, %v7471, %v7470
    %v7473 = vperm.slane %v6961, %v4688
    %v7474 = vsel %vm4690, %v7473, %v7472
    %v7475 = vperm.slane %v6964, %v4630
    %v7476 = vperm.slane %v6967, %v4632
    %v7477 = vsel %vm4634, %v7476, %v7475
    %v7478 = vperm.slane %v6970, %v4636
    %v7479 = vsel %vm4638, %v7478, %v7477
    %v7480 = vperm.slane %v6973, %v4640
    %v7481 = vsel %vm4642, %v7480, %v7479
    %v7482 = vperm.slane %v6976, %v4644
    %v7483 = vsel %vm4646, %v7482, %v7481
    %v7484 = vperm.slane %v6979, %v4648
    %v7485 = vsel %vm4650, %v7484, %v7483
    %v7486 = vperm.slane %v6982, %v4652
    %v7487 = vsel %vm4654, %v7486, %v7485
    %v7488 = vperm.slane %v6985, %v4656
    %v7489 = vsel %vm4658, %v7488, %v7487
    %v7490 = vperm.slane %v6988, %v4660
    %v7491 = vsel %vm4662, %v7490, %v7489
    %v7492 = vperm.slane %v6991, %v4664
    %v7493 = vsel %vm4666, %v7492, %v7491
    %v7494 = vperm.slane %v6994, %v4668
    %v7495 = vsel %vm4670, %v7494, %v7493
    %v7496 = vperm.slane %v6997, %v4672
    %v7497 = vsel %vm4674, %v7496, %v7495
    %v7498 = vperm.slane %v7000, %v4676
    %v7499 = vsel %vm4678, %v7498, %v7497
    %v7500 = vperm.slane %v7003, %v4680
    %v7501 = vsel %vm4682, %v7500, %v7499
    %v7502 = vperm.slane %v7006, %v4684
    %v7503 = vsel %vm4686, %v7502, %v7501
    %v7504 = vperm.slane %v7009, %v4688
    %v7505 = vsel %vm4690, %v7504, %v7503
    %v7506 = vsel %vm5157, %v7071, %v7040
    %v7507 = vsel %vm5159, %v7102, %v7506
    %v7508 = vsel %vm5161, %v7133, %v7507
    %v7509 = vsel %vm5163, %v7164, %v7508
    %v7510 = vsel %vm5165, %v7195, %v7509
    %v7511 = vsel %vm5167, %v7226, %v7510
    %v7512 = vsel %vm5169, %v7257, %v7511
    %v7513 = vsel %vm5157, %v7319, %v7288
    %v7514 = vsel %vm5159, %v7350, %v7513
    %v7515 = vsel %vm5161, %v7381, %v7514
    %v7516 = vsel %vm5163, %v7412, %v7515
    %v7517 = vsel %vm5165, %v7443, %v7516
    %v7518 = vsel %vm5167, %v7474, %v7517
    %v7519 = vsel %vm5169, %v7505, %v7518
    %7522 = vadd.xlane.f32.xlu0 %v7512
    %v7523 = vpop.xlane.xlu0 %7522
    %7524 = vadd.xlane.f32.xlu0 %v7519
    %v7525 = vpop.xlane.xlu0 %7524
    %v7526 = vrcp.pop %v7523
    %v7527 = vrcp.pop %v7525
    %v7530 = vperm.slane %v7526, 0
    %v7531 = vperm.slane %v7526, 1
    %v7532 = vperm.slane %v7526, 2
    %v7533 = vperm.slane %v7526, 3
    %v7534 = vperm.slane %v7526, 4
    %v7535 = vperm.slane %v7526, 5
    %v7536 = vperm.slane %v7526, 6
    %v7537 = vperm.slane %v7526, 7
    %v7538 = vperm.slane %v7527, 0
    %v7539 = vperm.slane %v7527, 1
    %v7540 = vperm.slane %v7527, 2
    %v7541 = vperm.slane %v7527, 3
    %v7542 = vperm.slane %v7527, 4
    %v7543 = vperm.slane %v7527, 5
    %v7544 = vperm.slane %v7527, 6
    %v7545 = vperm.slane %v7527, 7
    %v7562 = vmul.f32 %v5475, %v7530
    %v7563 = vmul.f32 %v5477, %v7530
    %v7564 = vmul.f32 %v5479, %v7530
    %v7565 = vmul.f32 %v5481, %v7530
    %v7566 = vmul.f32 %v5483, %v7530
    %v7567 = vmul.f32 %v5485, %v7530
    %v7568 = vmul.f32 %v5487, %v7530
    %v7569 = vmul.f32 %v5489, %v7530
    %v7570 = vmul.f32 %v5491, %v7530
    %v7571 = vmul.f32 %v5493, %v7530
    %v7572 = vmul.f32 %v5495, %v7530
    %v7573 = vmul.f32 %v5497, %v7530
    %v7574 = vmul.f32 %v5499, %v7530
    %v7575 = vmul.f32 %v5501, %v7530
    %v7576 = vmul.f32 %v5503, %v7530
    %v7577 = vmul.f32 %v5505, %v7530
    %v7578 = vmul.f32 %v5507, %v7531
    %v7579 = vmul.f32 %v5509, %v7531
    %v7580 = vmul.f32 %v5511, %v7531
    %v7581 = vmul.f32 %v5513, %v7531
    %v7582 = vmul.f32 %v5515, %v7531
    %v7583 = vmul.f32 %v5517, %v7531
    %v7584 = vmul.f32 %v5519, %v7531
    %v7585 = vmul.f32 %v5521, %v7531
    %v7586 = vmul.f32 %v5523, %v7531
    %v7587 = vmul.f32 %v5525, %v7531
    %v7588 = vmul.f32 %v5527, %v7531
    %v7589 = vmul.f32 %v5529, %v7531
    %v7590 = vmul.f32 %v5531, %v7531
    %v7591 = vmul.f32 %v5533, %v7531
    %v7592 = vmul.f32 %v5535, %v7531
    %v7593 = vmul.f32 %v5537, %v7531
    %v7594 = vmul.f32 %v5539, %v7532
    %v7595 = vmul.f32 %v5541, %v7532
    %v7596 = vmul.f32 %v5543, %v7532
    %v7597 = vmul.f32 %v5545, %v7532
    %v7598 = vmul.f32 %v5547, %v7532
    %v7599 = vmul.f32 %v5549, %v7532
    %v7600 = vmul.f32 %v5551, %v7532
    %v7601 = vmul.f32 %v5553, %v7532
    %v7602 = vmul.f32 %v5555, %v7532
    %v7603 = vmul.f32 %v5557, %v7532
    %v7604 = vmul.f32 %v5559, %v7532
    %v7605 = vmul.f32 %v5561, %v7532
    %v7606 = vmul.f32 %v5563, %v7532
    %v7607 = vmul.f32 %v5565, %v7532
    %v7608 = vmul.f32 %v5567, %v7532
    %v7609 = vmul.f32 %v5569, %v7532
    %v7610 = vmul.f32 %v5571, %v7533
    %v7611 = vmul.f32 %v5573, %v7533
    %v7612 = vmul.f32 %v5575, %v7533
    %v7613 = vmul.f32 %v5577, %v7533
    %v7614 = vmul.f32 %v5579, %v7533
    %v7615 = vmul.f32 %v5581, %v7533
    %v7616 = vmul.f32 %v5583, %v7533
    %v7617 = vmul.f32 %v5585, %v7533
    %v7618 = vmul.f32 %v5587, %v7533
    %v7619 = vmul.f32 %v5589, %v7533
    %v7620 = vmul.f32 %v5591, %v7533
    %v7621 = vmul.f32 %v5593, %v7533
    %v7622 = vmul.f32 %v5595, %v7533
    %v7623 = vmul.f32 %v5597, %v7533
    %v7624 = vmul.f32 %v5599, %v7533
    %v7625 = vmul.f32 %v5601, %v7533
    %v7626 = vmul.f32 %v5603, %v7534
    %v7627 = vmul.f32 %v5605, %v7534
    %v7628 = vmul.f32 %v5607, %v7534
    %v7629 = vmul.f32 %v5609, %v7534
    %v7630 = vmul.f32 %v5611, %v7534
    %v7631 = vmul.f32 %v5613, %v7534
    %v7632 = vmul.f32 %v5615, %v7534
    %v7633 = vmul.f32 %v5617, %v7534
    %v7634 = vmul.f32 %v5619, %v7534
    %v7635 = vmul.f32 %v5621, %v7534
    %v7636 = vmul.f32 %v5623, %v7534
    %v7637 = vmul.f32 %v5625, %v7534
    %v7638 = vmul.f32 %v5627, %v7534
    %v7639 = vmul.f32 %v5629, %v7534
    %v7640 = vmul.f32 %v5631, %v7534
    %v7641 = vmul.f32 %v5633, %v7534
    %v7642 = vmul.f32 %v5635, %v7535
    %v7643 = vmul.f32 %v5637, %v7535
    %v7644 = vmul.f32 %v5639, %v7535
    %v7645 = vmul.f32 %v5641, %v7535
    %v7646 = vmul.f32 %v5643, %v7535
    %v7647 = vmul.f32 %v5645, %v7535
    %v7648 = vmul.f32 %v5647, %v7535
    %v7649 = vmul.f32 %v5649, %v7535
    %v7650 = vmul.f32 %v5651, %v7535
    %v7651 = vmul.f32 %v5653, %v7535
    %v7652 = vmul.f32 %v5655, %v7535
    %v7653 = vmul.f32 %v5657, %v7535
    %v7654 = vmul.f32 %v5659, %v7535
    %v7655 = vmul.f32 %v5661, %v7535
    %v7656 = vmul.f32 %v5663, %v7535
    %v7657 = vmul.f32 %v5665, %v7535
    %v7658 = vmul.f32 %v5667, %v7536
    %v7659 = vmul.f32 %v5669, %v7536
    %v7660 = vmul.f32 %v5671, %v7536
    %v7661 = vmul.f32 %v5673, %v7536
    %v7662 = vmul.f32 %v5675, %v7536
    %v7663 = vmul.f32 %v5677, %v7536
    %v7664 = vmul.f32 %v5679, %v7536
    %v7665 = vmul.f32 %v5681, %v7536
    %v7666 = vmul.f32 %v5683, %v7536
    %v7667 = vmul.f32 %v5685, %v7536
    %v7668 = vmul.f32 %v5687, %v7536
    %v7669 = vmul.f32 %v5689, %v7536
    %v7670 = vmul.f32 %v5691, %v7536
    %v7671 = vmul.f32 %v5693, %v7536
    %v7672 = vmul.f32 %v5695, %v7536
    %v7673 = vmul.f32 %v5697, %v7536
    %v7674 = vmul.f32 %v5699, %v7537
    %v7675 = vmul.f32 %v5701, %v7537
    %v7676 = vmul.f32 %v5703, %v7537
    %v7677 = vmul.f32 %v5705, %v7537
    %v7678 = vmul.f32 %v5707, %v7537
    %v7679 = vmul.f32 %v5709, %v7537
    %v7680 = vmul.f32 %v5711, %v7537
    %v7681 = vmul.f32 %v5713, %v7537
    %v7682 = vmul.f32 %v5715, %v7537
    %v7683 = vmul.f32 %v5717, %v7537
    %v7684 = vmul.f32 %v5719, %v7537
    %v7685 = vmul.f32 %v5721, %v7537
    %v7686 = vmul.f32 %v5723, %v7537
    %v7687 = vmul.f32 %v5725, %v7537
    %v7688 = vmul.f32 %v5727, %v7537
    %v7689 = vmul.f32 %v5729, %v7537
    %v7690 = vmul.f32 %v5731, %v7538
    %v7691 = vmul.f32 %v5733, %v7538
    %v7692 = vmul.f32 %v5735, %v7538
    %v7693 = vmul.f32 %v5737, %v7538
    %v7694 = vmul.f32 %v5739, %v7538
    %v7695 = vmul.f32 %v5741, %v7538
    %v7696 = vmul.f32 %v5743, %v7538
    %v7697 = vmul.f32 %v5745, %v7538
    %v7698 = vmul.f32 %v5747, %v7538
    %v7699 = vmul.f32 %v5749, %v7538
    %v7700 = vmul.f32 %v5751, %v7538
    %v7701 = vmul.f32 %v5753, %v7538
    %v7702 = vmul.f32 %v5755, %v7538
    %v7703 = vmul.f32 %v5757, %v7538
    %v7704 = vmul.f32 %v5759, %v7538
    %v7705 = vmul.f32 %v5761, %v7538
    %v7706 = vmul.f32 %v5763, %v7539
    %v7707 = vmul.f32 %v5765, %v7539
    %v7708 = vmul.f32 %v5767, %v7539
    %v7709 = vmul.f32 %v5769, %v7539
    %v7710 = vmul.f32 %v5771, %v7539
    %v7711 = vmul.f32 %v5773, %v7539
    %v7712 = vmul.f32 %v5775, %v7539
    %v7713 = vmul.f32 %v5777, %v7539
    %v7714 = vmul.f32 %v5779, %v7539
    %v7715 = vmul.f32 %v5781, %v7539
    %v7716 = vmul.f32 %v5783, %v7539
    %v7717 = vmul.f32 %v5785, %v7539
    %v7718 = vmul.f32 %v5787, %v7539
    %v7719 = vmul.f32 %v5789, %v7539
    %v7720 = vmul.f32 %v5791, %v7539
    %v7721 = vmul.f32 %v5793, %v7539
    %v7722 = vmul.f32 %v5795, %v7540
    %v7723 = vmul.f32 %v5797, %v7540
    %v7724 = vmul.f32 %v5799, %v7540
    %v7725 = vmul.f32 %v5801, %v7540
    %v7726 = vmul.f32 %v5803, %v7540
    %v7727 = vmul.f32 %v5805, %v7540
    %v7728 = vmul.f32 %v5807, %v7540
    %v7729 = vmul.f32 %v5809, %v7540
    %v7730 = vmul.f32 %v5811, %v7540
    %v7731 = vmul.f32 %v5813, %v7540
    %v7732 = vmul.f32 %v5815, %v7540
    %v7733 = vmul.f32 %v5817, %v7540
    %v7734 = vmul.f32 %v5819, %v7540
    %v7735 = vmul.f32 %v5821, %v7540
    %v7736 = vmul.f32 %v5823, %v7540
    %v7737 = vmul.f32 %v5825, %v7540
    %v7738 = vmul.f32 %v5827, %v7541
    %v7739 = vmul.f32 %v5829, %v7541
    %v7740 = vmul.f32 %v5831, %v7541
    %v7741 = vmul.f32 %v5833, %v7541
    %v7742 = vmul.f32 %v5835, %v7541
    %v7743 = vmul.f32 %v5837, %v7541
    %v7744 = vmul.f32 %v5839, %v7541
    %v7745 = vmul.f32 %v5841, %v7541
    %v7746 = vmul.f32 %v5843, %v7541
    %v7747 = vmul.f32 %v5845, %v7541
    %v7748 = vmul.f32 %v5847, %v7541
    %v7749 = vmul.f32 %v5849, %v7541
    %v7750 = vmul.f32 %v5851, %v7541
    %v7751 = vmul.f32 %v5853, %v7541
    %v7752 = vmul.f32 %v5855, %v7541
    %v7753 = vmul.f32 %v5857, %v7541
    %v7754 = vmul.f32 %v5859, %v7542
    %v7755 = vmul.f32 %v5861, %v7542
    %v7756 = vmul.f32 %v5863, %v7542
    %v7757 = vmul.f32 %v5865, %v7542
    %v7758 = vmul.f32 %v5867, %v7542
    %v7759 = vmul.f32 %v5869, %v7542
    %v7760 = vmul.f32 %v5871, %v7542
    %v7761 = vmul.f32 %v5873, %v7542
    %v7762 = vmul.f32 %v5875, %v7542
    %v7763 = vmul.f32 %v5877, %v7542
    %v7764 = vmul.f32 %v5879, %v7542
    %v7765 = vmul.f32 %v5881, %v7542
    %v7766 = vmul.f32 %v5883, %v7542
    %v7767 = vmul.f32 %v5885, %v7542
    %v7768 = vmul.f32 %v5887, %v7542
    %v7769 = vmul.f32 %v5889, %v7542
    %v7770 = vmul.f32 %v5891, %v7543
    %v7771 = vmul.f32 %v5893, %v7543
    %v7772 = vmul.f32 %v5895, %v7543
    %v7773 = vmul.f32 %v5897, %v7543
    %v7774 = vmul.f32 %v5899, %v7543
    %v7775 = vmul.f32 %v5901, %v7543
    %v7776 = vmul.f32 %v5903, %v7543
    %v7777 = vmul.f32 %v5905, %v7543
    %v7778 = vmul.f32 %v5907, %v7543
    %v7779 = vmul.f32 %v5909, %v7543
    %v7780 = vmul.f32 %v5911, %v7543
    %v7781 = vmul.f32 %v5913, %v7543
    %v7782 = vmul.f32 %v5915, %v7543
    %v7783 = vmul.f32 %v5917, %v7543
    %v7784 = vmul.f32 %v5919, %v7543
    %v7785 = vmul.f32 %v5921, %v7543
    %v7786 = vmul.f32 %v5923, %v7544
    %v7787 = vmul.f32 %v5925, %v7544
    %v7788 = vmul.f32 %v5927, %v7544
    %v7789 = vmul.f32 %v5929, %v7544
    %v7790 = vmul.f32 %v5931, %v7544
    %v7791 = vmul.f32 %v5933, %v7544
    %v7792 = vmul.f32 %v5935, %v7544
    %v7793 = vmul.f32 %v5937, %v7544
    %v7794 = vmul.f32 %v5939, %v7544
    %v7795 = vmul.f32 %v5941, %v7544
    %v7796 = vmul.f32 %v5943, %v7544
    %v7797 = vmul.f32 %v5945, %v7544
    %v7798 = vmul.f32 %v5947, %v7544
    %v7799 = vmul.f32 %v5949, %v7544
    %v7800 = vmul.f32 %v5951, %v7544
    %v7801 = vmul.f32 %v5953, %v7544
    %v7802 = vmul.f32 %v5955, %v7545
    %v7803 = vmul.f32 %v5957, %v7545
    %v7804 = vmul.f32 %v5959, %v7545
    %v7805 = vmul.f32 %v5961, %v7545
    %v7806 = vmul.f32 %v5963, %v7545
    %v7807 = vmul.f32 %v5965, %v7545
    %v7808 = vmul.f32 %v5967, %v7545
    %v7809 = vmul.f32 %v5969, %v7545
    %v7810 = vmul.f32 %v5971, %v7545
    %v7811 = vmul.f32 %v5973, %v7545
    %v7812 = vmul.f32 %v5975, %v7545
    %v7813 = vmul.f32 %v5977, %v7545
    %v7814 = vmul.f32 %v5979, %v7545
    %v7815 = vmul.f32 %v5981, %v7545
    %v7816 = vmul.f32 %v5983, %v7545
    %v7817 = vmul.f32 %v5985, %v7545
    %8074 = vset.pattern.permute.xlu0 0
    %8075 = vperm.xlu0 %8074, %v7562
    %v8076 = vpop.permute.xlu0 %8075
    %8077 = vset.pattern.permute.xlu0 0
    %8078 = vperm.xlu0 %8077, %v7563
    %v8079 = vpop.permute.xlu0 %8078
    %8080 = vset.pattern.permute.xlu0 0
    %8081 = vperm.xlu0 %8080, %v7564
    %v8082 = vpop.permute.xlu0 %8081
    %8083 = vset.pattern.permute.xlu0 0
    %8084 = vperm.xlu0 %8083, %v7565
    %v8085 = vpop.permute.xlu0 %8084
    %8086 = vset.pattern.permute.xlu0 0
    %8087 = vperm.xlu0 %8086, %v7566
    %v8088 = vpop.permute.xlu0 %8087
    %8089 = vset.pattern.permute.xlu0 0
    %8090 = vperm.xlu0 %8089, %v7567
    %v8091 = vpop.permute.xlu0 %8090
    %8092 = vset.pattern.permute.xlu0 0
    %8093 = vperm.xlu0 %8092, %v7568
    %v8094 = vpop.permute.xlu0 %8093
    %8095 = vset.pattern.permute.xlu0 0
    %8096 = vperm.xlu0 %8095, %v7569
    %v8097 = vpop.permute.xlu0 %8096
    %8098 = vset.pattern.permute.xlu0 0
    %8099 = vperm.xlu0 %8098, %v7570
    %v8100 = vpop.permute.xlu0 %8099
    %8101 = vset.pattern.permute.xlu0 0
    %8102 = vperm.xlu0 %8101, %v7571
    %v8103 = vpop.permute.xlu0 %8102
    %8104 = vset.pattern.permute.xlu0 0
    %8105 = vperm.xlu0 %8104, %v7572
    %v8106 = vpop.permute.xlu0 %8105
    %8107 = vset.pattern.permute.xlu0 0
    %8108 = vperm.xlu0 %8107, %v7573
    %v8109 = vpop.permute.xlu0 %8108
    %8110 = vset.pattern.permute.xlu0 0
    %8111 = vperm.xlu0 %8110, %v7574
    %v8112 = vpop.permute.xlu0 %8111
    %8113 = vset.pattern.permute.xlu0 0
    %8114 = vperm.xlu0 %8113, %v7575
    %v8115 = vpop.permute.xlu0 %8114
    %8116 = vset.pattern.permute.xlu0 0
    %8117 = vperm.xlu0 %8116, %v7576
    %v8118 = vpop.permute.xlu0 %8117
    %8119 = vset.pattern.permute.xlu0 0
    %8120 = vperm.xlu0 %8119, %v7577
    %v8121 = vpop.permute.xlu0 %8120
    %8122 = vset.pattern.permute.xlu0 0
    %8123 = vperm.xlu0 %8122, %v7578
    %v8124 = vpop.permute.xlu0 %8123
    %8125 = vset.pattern.permute.xlu0 0
    %8126 = vperm.xlu0 %8125, %v7579
    %v8127 = vpop.permute.xlu0 %8126
    %8128 = vset.pattern.permute.xlu0 0
    %8129 = vperm.xlu0 %8128, %v7580
    %v8130 = vpop.permute.xlu0 %8129
    %8131 = vset.pattern.permute.xlu0 0
    %8132 = vperm.xlu0 %8131, %v7581
    %v8133 = vpop.permute.xlu0 %8132
    %8134 = vset.pattern.permute.xlu0 0
    %8135 = vperm.xlu0 %8134, %v7582
    %v8136 = vpop.permute.xlu0 %8135
    %8137 = vset.pattern.permute.xlu0 0
    %8138 = vperm.xlu0 %8137, %v7583
    %v8139 = vpop.permute.xlu0 %8138
    %8140 = vset.pattern.permute.xlu0 0
    %8141 = vperm.xlu0 %8140, %v7584
    %v8142 = vpop.permute.xlu0 %8141
    %8143 = vset.pattern.permute.xlu0 0
    %8144 = vperm.xlu0 %8143, %v7585
    %v8145 = vpop.permute.xlu0 %8144
    %8146 = vset.pattern.permute.xlu0 0
    %8147 = vperm.xlu0 %8146, %v7586
    %v8148 = vpop.permute.xlu0 %8147
    %8149 = vset.pattern.permute.xlu0 0
    %8150 = vperm.xlu0 %8149, %v7587
    %v8151 = vpop.permute.xlu0 %8150
    %8152 = vset.pattern.permute.xlu0 0
    %8153 = vperm.xlu0 %8152, %v7588
    %v8154 = vpop.permute.xlu0 %8153
    %8155 = vset.pattern.permute.xlu0 0
    %8156 = vperm.xlu0 %8155, %v7589
    %v8157 = vpop.permute.xlu0 %8156
    %8158 = vset.pattern.permute.xlu0 0
    %8159 = vperm.xlu0 %8158, %v7590
    %v8160 = vpop.permute.xlu0 %8159
    %8161 = vset.pattern.permute.xlu0 0
    %8162 = vperm.xlu0 %8161, %v7591
    %v8163 = vpop.permute.xlu0 %8162
    %8164 = vset.pattern.permute.xlu0 0
    %8165 = vperm.xlu0 %8164, %v7592
    %v8166 = vpop.permute.xlu0 %8165
    %8167 = vset.pattern.permute.xlu0 0
    %8168 = vperm.xlu0 %8167, %v7593
    %v8169 = vpop.permute.xlu0 %8168
    %8170 = vset.pattern.permute.xlu0 0
    %8171 = vperm.xlu0 %8170, %v7594
    %v8172 = vpop.permute.xlu0 %8171
    %8173 = vset.pattern.permute.xlu0 0
    %8174 = vperm.xlu0 %8173, %v7595
    %v8175 = vpop.permute.xlu0 %8174
    %8176 = vset.pattern.permute.xlu0 0
    %8177 = vperm.xlu0 %8176, %v7596
    %v8178 = vpop.permute.xlu0 %8177
    %8179 = vset.pattern.permute.xlu0 0
    %8180 = vperm.xlu0 %8179, %v7597
    %v8181 = vpop.permute.xlu0 %8180
    %8182 = vset.pattern.permute.xlu0 0
    %8183 = vperm.xlu0 %8182, %v7598
    %v8184 = vpop.permute.xlu0 %8183
    %8185 = vset.pattern.permute.xlu0 0
    %8186 = vperm.xlu0 %8185, %v7599
    %v8187 = vpop.permute.xlu0 %8186
    %8188 = vset.pattern.permute.xlu0 0
    %8189 = vperm.xlu0 %8188, %v7600
    %v8190 = vpop.permute.xlu0 %8189
    %8191 = vset.pattern.permute.xlu0 0
    %8192 = vperm.xlu0 %8191, %v7601
    %v8193 = vpop.permute.xlu0 %8192
    %8194 = vset.pattern.permute.xlu0 0
    %8195 = vperm.xlu0 %8194, %v7602
    %v8196 = vpop.permute.xlu0 %8195
    %8197 = vset.pattern.permute.xlu0 0
    %8198 = vperm.xlu0 %8197, %v7603
    %v8199 = vpop.permute.xlu0 %8198
    %8200 = vset.pattern.permute.xlu0 0
    %8201 = vperm.xlu0 %8200, %v7604
    %v8202 = vpop.permute.xlu0 %8201
    %8203 = vset.pattern.permute.xlu0 0
    %8204 = vperm.xlu0 %8203, %v7605
    %v8205 = vpop.permute.xlu0 %8204
    %8206 = vset.pattern.permute.xlu0 0
    %8207 = vperm.xlu0 %8206, %v7606
    %v8208 = vpop.permute.xlu0 %8207
    %8209 = vset.pattern.permute.xlu0 0
    %8210 = vperm.xlu0 %8209, %v7607
    %v8211 = vpop.permute.xlu0 %8210
    %8212 = vset.pattern.permute.xlu0 0
    %8213 = vperm.xlu0 %8212, %v7608
    %v8214 = vpop.permute.xlu0 %8213
    %8215 = vset.pattern.permute.xlu0 0
    %8216 = vperm.xlu0 %8215, %v7609
    %v8217 = vpop.permute.xlu0 %8216
    %8218 = vset.pattern.permute.xlu0 0
    %8219 = vperm.xlu0 %8218, %v7610
    %v8220 = vpop.permute.xlu0 %8219
    %8221 = vset.pattern.permute.xlu0 0
    %8222 = vperm.xlu0 %8221, %v7611
    %v8223 = vpop.permute.xlu0 %8222
    %8224 = vset.pattern.permute.xlu0 0
    %8225 = vperm.xlu0 %8224, %v7612
    %v8226 = vpop.permute.xlu0 %8225
    %8227 = vset.pattern.permute.xlu0 0
    %8228 = vperm.xlu0 %8227, %v7613
    %v8229 = vpop.permute.xlu0 %8228
    %8230 = vset.pattern.permute.xlu0 0
    %8231 = vperm.xlu0 %8230, %v7614
    %v8232 = vpop.permute.xlu0 %8231
    %8233 = vset.pattern.permute.xlu0 0
    %8234 = vperm.xlu0 %8233, %v7615
    %v8235 = vpop.permute.xlu0 %8234
    %8236 = vset.pattern.permute.xlu0 0
    %8237 = vperm.xlu0 %8236, %v7616
    %v8238 = vpop.permute.xlu0 %8237
    %8239 = vset.pattern.permute.xlu0 0
    %8240 = vperm.xlu0 %8239, %v7617
    %v8241 = vpop.permute.xlu0 %8240
    %8242 = vset.pattern.permute.xlu0 0
    %8243 = vperm.xlu0 %8242, %v7618
    %v8244 = vpop.permute.xlu0 %8243
    %8245 = vset.pattern.permute.xlu0 0
    %8246 = vperm.xlu0 %8245, %v7619
    %v8247 = vpop.permute.xlu0 %8246
    %8248 = vset.pattern.permute.xlu0 0
    %8249 = vperm.xlu0 %8248, %v7620
    %v8250 = vpop.permute.xlu0 %8249
    %8251 = vset.pattern.permute.xlu0 0
    %8252 = vperm.xlu0 %8251, %v7621
    %v8253 = vpop.permute.xlu0 %8252
    %8254 = vset.pattern.permute.xlu0 0
    %8255 = vperm.xlu0 %8254, %v7622
    %v8256 = vpop.permute.xlu0 %8255
    %8257 = vset.pattern.permute.xlu0 0
    %8258 = vperm.xlu0 %8257, %v7623
    %v8259 = vpop.permute.xlu0 %8258
    %8260 = vset.pattern.permute.xlu0 0
    %8261 = vperm.xlu0 %8260, %v7624
    %v8262 = vpop.permute.xlu0 %8261
    %8263 = vset.pattern.permute.xlu0 0
    %8264 = vperm.xlu0 %8263, %v7625
    %v8265 = vpop.permute.xlu0 %8264
    %8266 = vset.pattern.permute.xlu0 0
    %8267 = vperm.xlu0 %8266, %v7626
    %v8268 = vpop.permute.xlu0 %8267
    %8269 = vset.pattern.permute.xlu0 0
    %8270 = vperm.xlu0 %8269, %v7627
    %v8271 = vpop.permute.xlu0 %8270
    %8272 = vset.pattern.permute.xlu0 0
    %8273 = vperm.xlu0 %8272, %v7628
    %v8274 = vpop.permute.xlu0 %8273
    %8275 = vset.pattern.permute.xlu0 0
    %8276 = vperm.xlu0 %8275, %v7629
    %v8277 = vpop.permute.xlu0 %8276
    %8278 = vset.pattern.permute.xlu0 0
    %8279 = vperm.xlu0 %8278, %v7630
    %v8280 = vpop.permute.xlu0 %8279
    %8281 = vset.pattern.permute.xlu0 0
    %8282 = vperm.xlu0 %8281, %v7631
    %v8283 = vpop.permute.xlu0 %8282
    %8284 = vset.pattern.permute.xlu0 0
    %8285 = vperm.xlu0 %8284, %v7632
    %v8286 = vpop.permute.xlu0 %8285
    %8287 = vset.pattern.permute.xlu0 0
    %8288 = vperm.xlu0 %8287, %v7633
    %v8289 = vpop.permute.xlu0 %8288
    %8290 = vset.pattern.permute.xlu0 0
    %8291 = vperm.xlu0 %8290, %v7634
    %v8292 = vpop.permute.xlu0 %8291
    %8293 = vset.pattern.permute.xlu0 0
    %8294 = vperm.xlu0 %8293, %v7635
    %v8295 = vpop.permute.xlu0 %8294
    %8296 = vset.pattern.permute.xlu0 0
    %8297 = vperm.xlu0 %8296, %v7636
    %v8298 = vpop.permute.xlu0 %8297
    %8299 = vset.pattern.permute.xlu0 0
    %8300 = vperm.xlu0 %8299, %v7637
    %v8301 = vpop.permute.xlu0 %8300
    %8302 = vset.pattern.permute.xlu0 0
    %8303 = vperm.xlu0 %8302, %v7638
    %v8304 = vpop.permute.xlu0 %8303
    %8305 = vset.pattern.permute.xlu0 0
    %8306 = vperm.xlu0 %8305, %v7639
    %v8307 = vpop.permute.xlu0 %8306
    %8308 = vset.pattern.permute.xlu0 0
    %8309 = vperm.xlu0 %8308, %v7640
    %v8310 = vpop.permute.xlu0 %8309
    %8311 = vset.pattern.permute.xlu0 0
    %8312 = vperm.xlu0 %8311, %v7641
    %v8313 = vpop.permute.xlu0 %8312
    %8314 = vset.pattern.permute.xlu0 0
    %8315 = vperm.xlu0 %8314, %v7642
    %v8316 = vpop.permute.xlu0 %8315
    %8317 = vset.pattern.permute.xlu0 0
    %8318 = vperm.xlu0 %8317, %v7643
    %v8319 = vpop.permute.xlu0 %8318
    %8320 = vset.pattern.permute.xlu0 0
    %8321 = vperm.xlu0 %8320, %v7644
    %v8322 = vpop.permute.xlu0 %8321
    %8323 = vset.pattern.permute.xlu0 0
    %8324 = vperm.xlu0 %8323, %v7645
    %v8325 = vpop.permute.xlu0 %8324
    %8326 = vset.pattern.permute.xlu0 0
    %8327 = vperm.xlu0 %8326, %v7646
    %v8328 = vpop.permute.xlu0 %8327
    %8329 = vset.pattern.permute.xlu0 0
    %8330 = vperm.xlu0 %8329, %v7647
    %v8331 = vpop.permute.xlu0 %8330
    %8332 = vset.pattern.permute.xlu0 0
    %8333 = vperm.xlu0 %8332, %v7648
    %v8334 = vpop.permute.xlu0 %8333
    %8335 = vset.pattern.permute.xlu0 0
    %8336 = vperm.xlu0 %8335, %v7649
    %v8337 = vpop.permute.xlu0 %8336
    %8338 = vset.pattern.permute.xlu0 0
    %8339 = vperm.xlu0 %8338, %v7650
    %v8340 = vpop.permute.xlu0 %8339
    %8341 = vset.pattern.permute.xlu0 0
    %8342 = vperm.xlu0 %8341, %v7651
    %v8343 = vpop.permute.xlu0 %8342
    %8344 = vset.pattern.permute.xlu0 0
    %8345 = vperm.xlu0 %8344, %v7652
    %v8346 = vpop.permute.xlu0 %8345
    %8347 = vset.pattern.permute.xlu0 0
    %8348 = vperm.xlu0 %8347, %v7653
    %v8349 = vpop.permute.xlu0 %8348
    %8350 = vset.pattern.permute.xlu0 0
    %8351 = vperm.xlu0 %8350, %v7654
    %v8352 = vpop.permute.xlu0 %8351
    %8353 = vset.pattern.permute.xlu0 0
    %8354 = vperm.xlu0 %8353, %v7655
    %v8355 = vpop.permute.xlu0 %8354
    %8356 = vset.pattern.permute.xlu0 0
    %8357 = vperm.xlu0 %8356, %v7656
    %v8358 = vpop.permute.xlu0 %8357
    %8359 = vset.pattern.permute.xlu0 0
    %8360 = vperm.xlu0 %8359, %v7657
    %v8361 = vpop.permute.xlu0 %8360
    %8362 = vset.pattern.permute.xlu0 0
    %8363 = vperm.xlu0 %8362, %v7658
    %v8364 = vpop.permute.xlu0 %8363
    %8365 = vset.pattern.permute.xlu0 0
    %8366 = vperm.xlu0 %8365, %v7659
    %v8367 = vpop.permute.xlu0 %8366
    %8368 = vset.pattern.permute.xlu0 0
    %8369 = vperm.xlu0 %8368, %v7660
    %v8370 = vpop.permute.xlu0 %8369
    %8371 = vset.pattern.permute.xlu0 0
    %8372 = vperm.xlu0 %8371, %v7661
    %v8373 = vpop.permute.xlu0 %8372
    %8374 = vset.pattern.permute.xlu0 0
    %8375 = vperm.xlu0 %8374, %v7662
    %v8376 = vpop.permute.xlu0 %8375
    %8377 = vset.pattern.permute.xlu0 0
    %8378 = vperm.xlu0 %8377, %v7663
    %v8379 = vpop.permute.xlu0 %8378
    %8380 = vset.pattern.permute.xlu0 0
    %8381 = vperm.xlu0 %8380, %v7664
    %v8382 = vpop.permute.xlu0 %8381
    %8383 = vset.pattern.permute.xlu0 0
    %8384 = vperm.xlu0 %8383, %v7665
    %v8385 = vpop.permute.xlu0 %8384
    %8386 = vset.pattern.permute.xlu0 0
    %8387 = vperm.xlu0 %8386, %v7666
    %v8388 = vpop.permute.xlu0 %8387
    %8389 = vset.pattern.permute.xlu0 0
    %8390 = vperm.xlu0 %8389, %v7667
    %v8391 = vpop.permute.xlu0 %8390
    %8392 = vset.pattern.permute.xlu0 0
    %8393 = vperm.xlu0 %8392, %v7668
    %v8394 = vpop.permute.xlu0 %8393
    %8395 = vset.pattern.permute.xlu0 0
    %8396 = vperm.xlu0 %8395, %v7669
    %v8397 = vpop.permute.xlu0 %8396
    %8398 = vset.pattern.permute.xlu0 0
    %8399 = vperm.xlu0 %8398, %v7670
    %v8400 = vpop.permute.xlu0 %8399
    %8401 = vset.pattern.permute.xlu0 0
    %8402 = vperm.xlu0 %8401, %v7671
    %v8403 = vpop.permute.xlu0 %8402
    %8404 = vset.pattern.permute.xlu0 0
    %8405 = vperm.xlu0 %8404, %v7672
    %v8406 = vpop.permute.xlu0 %8405
    %8407 = vset.pattern.permute.xlu0 0
    %8408 = vperm.xlu0 %8407, %v7673
    %v8409 = vpop.permute.xlu0 %8408
    %8410 = vset.pattern.permute.xlu0 0
    %8411 = vperm.xlu0 %8410, %v7674
    %v8412 = vpop.permute.xlu0 %8411
    %8413 = vset.pattern.permute.xlu0 0
    %8414 = vperm.xlu0 %8413, %v7675
    %v8415 = vpop.permute.xlu0 %8414
    %8416 = vset.pattern.permute.xlu0 0
    %8417 = vperm.xlu0 %8416, %v7676
    %v8418 = vpop.permute.xlu0 %8417
    %8419 = vset.pattern.permute.xlu0 0
    %8420 = vperm.xlu0 %8419, %v7677
    %v8421 = vpop.permute.xlu0 %8420
    %8422 = vset.pattern.permute.xlu0 0
    %8423 = vperm.xlu0 %8422, %v7678
    %v8424 = vpop.permute.xlu0 %8423
    %8425 = vset.pattern.permute.xlu0 0
    %8426 = vperm.xlu0 %8425, %v7679
    %v8427 = vpop.permute.xlu0 %8426
    %8428 = vset.pattern.permute.xlu0 0
    %8429 = vperm.xlu0 %8428, %v7680
    %v8430 = vpop.permute.xlu0 %8429
    %8431 = vset.pattern.permute.xlu0 0
    %8432 = vperm.xlu0 %8431, %v7681
    %v8433 = vpop.permute.xlu0 %8432
    %8434 = vset.pattern.permute.xlu0 0
    %8435 = vperm.xlu0 %8434, %v7682
    %v8436 = vpop.permute.xlu0 %8435
    %8437 = vset.pattern.permute.xlu0 0
    %8438 = vperm.xlu0 %8437, %v7683
    %v8439 = vpop.permute.xlu0 %8438
    %8440 = vset.pattern.permute.xlu0 0
    %8441 = vperm.xlu0 %8440, %v7684
    %v8442 = vpop.permute.xlu0 %8441
    %8443 = vset.pattern.permute.xlu0 0
    %8444 = vperm.xlu0 %8443, %v7685
    %v8445 = vpop.permute.xlu0 %8444
    %8446 = vset.pattern.permute.xlu0 0
    %8447 = vperm.xlu0 %8446, %v7686
    %v8448 = vpop.permute.xlu0 %8447
    %8449 = vset.pattern.permute.xlu0 0
    %8450 = vperm.xlu0 %8449, %v7687
    %v8451 = vpop.permute.xlu0 %8450
    %8452 = vset.pattern.permute.xlu0 0
    %8453 = vperm.xlu0 %8452, %v7688
    %v8454 = vpop.permute.xlu0 %8453
    %8455 = vset.pattern.permute.xlu0 0
    %8456 = vperm.xlu0 %8455, %v7689
    %v8457 = vpop.permute.xlu0 %8456
    %8458 = vset.pattern.permute.xlu0 0
    %8459 = vperm.xlu0 %8458, %v7690
    %v8460 = vpop.permute.xlu0 %8459
    %8461 = vset.pattern.permute.xlu0 0
    %8462 = vperm.xlu0 %8461, %v7691
    %v8463 = vpop.permute.xlu0 %8462
    %8464 = vset.pattern.permute.xlu0 0
    %8465 = vperm.xlu0 %8464, %v7692
    %v8466 = vpop.permute.xlu0 %8465
    %8467 = vset.pattern.permute.xlu0 0
    %8468 = vperm.xlu0 %8467, %v7693
    %v8469 = vpop.permute.xlu0 %8468
    %8470 = vset.pattern.permute.xlu0 0
    %8471 = vperm.xlu0 %8470, %v7694
    %v8472 = vpop.permute.xlu0 %8471
    %8473 = vset.pattern.permute.xlu0 0
    %8474 = vperm.xlu0 %8473, %v7695
    %v8475 = vpop.permute.xlu0 %8474
    %8476 = vset.pattern.permute.xlu0 0
    %8477 = vperm.xlu0 %8476, %v7696
    %v8478 = vpop.permute.xlu0 %8477
    %8479 = vset.pattern.permute.xlu0 0
    %8480 = vperm.xlu0 %8479, %v7697
    %v8481 = vpop.permute.xlu0 %8480
    %8482 = vset.pattern.permute.xlu0 0
    %8483 = vperm.xlu0 %8482, %v7698
    %v8484 = vpop.permute.xlu0 %8483
    %8485 = vset.pattern.permute.xlu0 0
    %8486 = vperm.xlu0 %8485, %v7699
    %v8487 = vpop.permute.xlu0 %8486
    %8488 = vset.pattern.permute.xlu0 0
    %8489 = vperm.xlu0 %8488, %v7700
    %v8490 = vpop.permute.xlu0 %8489
    %8491 = vset.pattern.permute.xlu0 0
    %8492 = vperm.xlu0 %8491, %v7701
    %v8493 = vpop.permute.xlu0 %8492
    %8494 = vset.pattern.permute.xlu0 0
    %8495 = vperm.xlu0 %8494, %v7702
    %v8496 = vpop.permute.xlu0 %8495
    %8497 = vset.pattern.permute.xlu0 0
    %8498 = vperm.xlu0 %8497, %v7703
    %v8499 = vpop.permute.xlu0 %8498
    %8500 = vset.pattern.permute.xlu0 0
    %8501 = vperm.xlu0 %8500, %v7704
    %v8502 = vpop.permute.xlu0 %8501
    %8503 = vset.pattern.permute.xlu0 0
    %8504 = vperm.xlu0 %8503, %v7705
    %v8505 = vpop.permute.xlu0 %8504
    %8506 = vset.pattern.permute.xlu0 0
    %8507 = vperm.xlu0 %8506, %v7706
    %v8508 = vpop.permute.xlu0 %8507
    %8509 = vset.pattern.permute.xlu0 0
    %8510 = vperm.xlu0 %8509, %v7707
    %v8511 = vpop.permute.xlu0 %8510
    %8512 = vset.pattern.permute.xlu0 0
    %8513 = vperm.xlu0 %8512, %v7708
    %v8514 = vpop.permute.xlu0 %8513
    %8515 = vset.pattern.permute.xlu0 0
    %8516 = vperm.xlu0 %8515, %v7709
    %v8517 = vpop.permute.xlu0 %8516
    %8518 = vset.pattern.permute.xlu0 0
    %8519 = vperm.xlu0 %8518, %v7710
    %v8520 = vpop.permute.xlu0 %8519
    %8521 = vset.pattern.permute.xlu0 0
    %8522 = vperm.xlu0 %8521, %v7711
    %v8523 = vpop.permute.xlu0 %8522
    %8524 = vset.pattern.permute.xlu0 0
    %8525 = vperm.xlu0 %8524, %v7712
    %v8526 = vpop.permute.xlu0 %8525
    %8527 = vset.pattern.permute.xlu0 0
    %8528 = vperm.xlu0 %8527, %v7713
    %v8529 = vpop.permute.xlu0 %8528
    %8530 = vset.pattern.permute.xlu0 0
    %8531 = vperm.xlu0 %8530, %v7714
    %v8532 = vpop.permute.xlu0 %8531
    %8533 = vset.pattern.permute.xlu0 0
    %8534 = vperm.xlu0 %8533, %v7715
    %v8535 = vpop.permute.xlu0 %8534
    %8536 = vset.pattern.permute.xlu0 0
    %8537 = vperm.xlu0 %8536, %v7716
    %v8538 = vpop.permute.xlu0 %8537
    %8539 = vset.pattern.permute.xlu0 0
    %8540 = vperm.xlu0 %8539, %v7717
    %v8541 = vpop.permute.xlu0 %8540
    %8542 = vset.pattern.permute.xlu0 0
    %8543 = vperm.xlu0 %8542, %v7718
    %v8544 = vpop.permute.xlu0 %8543
    %8545 = vset.pattern.permute.xlu0 0
    %8546 = vperm.xlu0 %8545, %v7719
    %v8547 = vpop.permute.xlu0 %8546
    %8548 = vset.pattern.permute.xlu0 0
    %8549 = vperm.xlu0 %8548, %v7720
    %v8550 = vpop.permute.xlu0 %8549
    %8551 = vset.pattern.permute.xlu0 0
    %8552 = vperm.xlu0 %8551, %v7721
    %v8553 = vpop.permute.xlu0 %8552
    %8554 = vset.pattern.permute.xlu0 0
    %8555 = vperm.xlu0 %8554, %v7722
    %v8556 = vpop.permute.xlu0 %8555
    %8557 = vset.pattern.permute.xlu0 0
    %8558 = vperm.xlu0 %8557, %v7723
    %v8559 = vpop.permute.xlu0 %8558
    %8560 = vset.pattern.permute.xlu0 0
    %8561 = vperm.xlu0 %8560, %v7724
    %v8562 = vpop.permute.xlu0 %8561
    %8563 = vset.pattern.permute.xlu0 0
    %8564 = vperm.xlu0 %8563, %v7725
    %v8565 = vpop.permute.xlu0 %8564
    %8566 = vset.pattern.permute.xlu0 0
    %8567 = vperm.xlu0 %8566, %v7726
    %v8568 = vpop.permute.xlu0 %8567
    %8569 = vset.pattern.permute.xlu0 0
    %8570 = vperm.xlu0 %8569, %v7727
    %v8571 = vpop.permute.xlu0 %8570
    %8572 = vset.pattern.permute.xlu0 0
    %8573 = vperm.xlu0 %8572, %v7728
    %v8574 = vpop.permute.xlu0 %8573
    %8575 = vset.pattern.permute.xlu0 0
    %8576 = vperm.xlu0 %8575, %v7729
    %v8577 = vpop.permute.xlu0 %8576
    %8578 = vset.pattern.permute.xlu0 0
    %8579 = vperm.xlu0 %8578, %v7730
    %v8580 = vpop.permute.xlu0 %8579
    %8581 = vset.pattern.permute.xlu0 0
    %8582 = vperm.xlu0 %8581, %v7731
    %v8583 = vpop.permute.xlu0 %8582
    %8584 = vset.pattern.permute.xlu0 0
    %8585 = vperm.xlu0 %8584, %v7732
    %v8586 = vpop.permute.xlu0 %8585
    %8587 = vset.pattern.permute.xlu0 0
    %8588 = vperm.xlu0 %8587, %v7733
    %v8589 = vpop.permute.xlu0 %8588
    %8590 = vset.pattern.permute.xlu0 0
    %8591 = vperm.xlu0 %8590, %v7734
    %v8592 = vpop.permute.xlu0 %8591
    %8593 = vset.pattern.permute.xlu0 0
    %8594 = vperm.xlu0 %8593, %v7735
    %v8595 = vpop.permute.xlu0 %8594
    %8596 = vset.pattern.permute.xlu0 0
    %8597 = vperm.xlu0 %8596, %v7736
    %v8598 = vpop.permute.xlu0 %8597
    %8599 = vset.pattern.permute.xlu0 0
    %8600 = vperm.xlu0 %8599, %v7737
    %v8601 = vpop.permute.xlu0 %8600
    %8602 = vset.pattern.permute.xlu0 0
    %8603 = vperm.xlu0 %8602, %v7738
    %v8604 = vpop.permute.xlu0 %8603
    %8605 = vset.pattern.permute.xlu0 0
    %8606 = vperm.xlu0 %8605, %v7739
    %v8607 = vpop.permute.xlu0 %8606
    %8608 = vset.pattern.permute.xlu0 0
    %8609 = vperm.xlu0 %8608, %v7740
    %v8610 = vpop.permute.xlu0 %8609
    %8611 = vset.pattern.permute.xlu0 0
    %8612 = vperm.xlu0 %8611, %v7741
    %v8613 = vpop.permute.xlu0 %8612
    %8614 = vset.pattern.permute.xlu0 0
    %8615 = vperm.xlu0 %8614, %v7742
    %v8616 = vpop.permute.xlu0 %8615
    %8617 = vset.pattern.permute.xlu0 0
    %8618 = vperm.xlu0 %8617, %v7743
    %v8619 = vpop.permute.xlu0 %8618
    %8620 = vset.pattern.permute.xlu0 0
    %8621 = vperm.xlu0 %8620, %v7744
    %v8622 = vpop.permute.xlu0 %8621
    %8623 = vset.pattern.permute.xlu0 0
    %8624 = vperm.xlu0 %8623, %v7745
    %v8625 = vpop.permute.xlu0 %8624
    %8626 = vset.pattern.permute.xlu0 0
    %8627 = vperm.xlu0 %8626, %v7746
    %v8628 = vpop.permute.xlu0 %8627
    %8629 = vset.pattern.permute.xlu0 0
    %8630 = vperm.xlu0 %8629, %v7747
    %v8631 = vpop.permute.xlu0 %8630
    %8632 = vset.pattern.permute.xlu0 0
    %8633 = vperm.xlu0 %8632, %v7748
    %v8634 = vpop.permute.xlu0 %8633
    %8635 = vset.pattern.permute.xlu0 0
    %8636 = vperm.xlu0 %8635, %v7749
    %v8637 = vpop.permute.xlu0 %8636
    %8638 = vset.pattern.permute.xlu0 0
    %8639 = vperm.xlu0 %8638, %v7750
    %v8640 = vpop.permute.xlu0 %8639
    %8641 = vset.pattern.permute.xlu0 0
    %8642 = vperm.xlu0 %8641, %v7751
    %v8643 = vpop.permute.xlu0 %8642
    %8644 = vset.pattern.permute.xlu0 0
    %8645 = vperm.xlu0 %8644, %v7752
    %v8646 = vpop.permute.xlu0 %8645
    %8647 = vset.pattern.permute.xlu0 0
    %8648 = vperm.xlu0 %8647, %v7753
    %v8649 = vpop.permute.xlu0 %8648
    %8650 = vset.pattern.permute.xlu0 0
    %8651 = vperm.xlu0 %8650, %v7754
    %v8652 = vpop.permute.xlu0 %8651
    %8653 = vset.pattern.permute.xlu0 0
    %8654 = vperm.xlu0 %8653, %v7755
    %v8655 = vpop.permute.xlu0 %8654
    %8656 = vset.pattern.permute.xlu0 0
    %8657 = vperm.xlu0 %8656, %v7756
    %v8658 = vpop.permute.xlu0 %8657
    %8659 = vset.pattern.permute.xlu0 0
    %8660 = vperm.xlu0 %8659, %v7757
    %v8661 = vpop.permute.xlu0 %8660
    %8662 = vset.pattern.permute.xlu0 0
    %8663 = vperm.xlu0 %8662, %v7758
    %v8664 = vpop.permute.xlu0 %8663
    %8665 = vset.pattern.permute.xlu0 0
    %8666 = vperm.xlu0 %8665, %v7759
    %v8667 = vpop.permute.xlu0 %8666
    %8668 = vset.pattern.permute.xlu0 0
    %8669 = vperm.xlu0 %8668, %v7760
    %v8670 = vpop.permute.xlu0 %8669
    %8671 = vset.pattern.permute.xlu0 0
    %8672 = vperm.xlu0 %8671, %v7761
    %v8673 = vpop.permute.xlu0 %8672
    %8674 = vset.pattern.permute.xlu0 0
    %8675 = vperm.xlu0 %8674, %v7762
    %v8676 = vpop.permute.xlu0 %8675
    %8677 = vset.pattern.permute.xlu0 0
    %8678 = vperm.xlu0 %8677, %v7763
    %v8679 = vpop.permute.xlu0 %8678
    %8680 = vset.pattern.permute.xlu0 0
    %8681 = vperm.xlu0 %8680, %v7764
    %v8682 = vpop.permute.xlu0 %8681
    %8683 = vset.pattern.permute.xlu0 0
    %8684 = vperm.xlu0 %8683, %v7765
    %v8685 = vpop.permute.xlu0 %8684
    %8686 = vset.pattern.permute.xlu0 0
    %8687 = vperm.xlu0 %8686, %v7766
    %v8688 = vpop.permute.xlu0 %8687
    %8689 = vset.pattern.permute.xlu0 0
    %8690 = vperm.xlu0 %8689, %v7767
    %v8691 = vpop.permute.xlu0 %8690
    %8692 = vset.pattern.permute.xlu0 0
    %8693 = vperm.xlu0 %8692, %v7768
    %v8694 = vpop.permute.xlu0 %8693
    %8695 = vset.pattern.permute.xlu0 0
    %8696 = vperm.xlu0 %8695, %v7769
    %v8697 = vpop.permute.xlu0 %8696
    %8698 = vset.pattern.permute.xlu0 0
    %8699 = vperm.xlu0 %8698, %v7770
    %v8700 = vpop.permute.xlu0 %8699
    %8701 = vset.pattern.permute.xlu0 0
    %8702 = vperm.xlu0 %8701, %v7771
    %v8703 = vpop.permute.xlu0 %8702
    %8704 = vset.pattern.permute.xlu0 0
    %8705 = vperm.xlu0 %8704, %v7772
    %v8706 = vpop.permute.xlu0 %8705
    %8707 = vset.pattern.permute.xlu0 0
    %8708 = vperm.xlu0 %8707, %v7773
    %v8709 = vpop.permute.xlu0 %8708
    %8710 = vset.pattern.permute.xlu0 0
    %8711 = vperm.xlu0 %8710, %v7774
    %v8712 = vpop.permute.xlu0 %8711
    %8713 = vset.pattern.permute.xlu0 0
    %8714 = vperm.xlu0 %8713, %v7775
    %v8715 = vpop.permute.xlu0 %8714
    %8716 = vset.pattern.permute.xlu0 0
    %8717 = vperm.xlu0 %8716, %v7776
    %v8718 = vpop.permute.xlu0 %8717
    %8719 = vset.pattern.permute.xlu0 0
    %8720 = vperm.xlu0 %8719, %v7777
    %v8721 = vpop.permute.xlu0 %8720
    %8722 = vset.pattern.permute.xlu0 0
    %8723 = vperm.xlu0 %8722, %v7778
    %v8724 = vpop.permute.xlu0 %8723
    %8725 = vset.pattern.permute.xlu0 0
    %8726 = vperm.xlu0 %8725, %v7779
    %v8727 = vpop.permute.xlu0 %8726
    %8728 = vset.pattern.permute.xlu0 0
    %8729 = vperm.xlu0 %8728, %v7780
    %v8730 = vpop.permute.xlu0 %8729
    %8731 = vset.pattern.permute.xlu0 0
    %8732 = vperm.xlu0 %8731, %v7781
    %v8733 = vpop.permute.xlu0 %8732
    %8734 = vset.pattern.permute.xlu0 0
    %8735 = vperm.xlu0 %8734, %v7782
    %v8736 = vpop.permute.xlu0 %8735
    %8737 = vset.pattern.permute.xlu0 0
    %8738 = vperm.xlu0 %8737, %v7783
    %v8739 = vpop.permute.xlu0 %8738
    %8740 = vset.pattern.permute.xlu0 0
    %8741 = vperm.xlu0 %8740, %v7784
    %v8742 = vpop.permute.xlu0 %8741
    %8743 = vset.pattern.permute.xlu0 0
    %8744 = vperm.xlu0 %8743, %v7785
    %v8745 = vpop.permute.xlu0 %8744
    %8746 = vset.pattern.permute.xlu0 0
    %8747 = vperm.xlu0 %8746, %v7786
    %v8748 = vpop.permute.xlu0 %8747
    %8749 = vset.pattern.permute.xlu0 0
    %8750 = vperm.xlu0 %8749, %v7787
    %v8751 = vpop.permute.xlu0 %8750
    %8752 = vset.pattern.permute.xlu0 0
    %8753 = vperm.xlu0 %8752, %v7788
    %v8754 = vpop.permute.xlu0 %8753
    %8755 = vset.pattern.permute.xlu0 0
    %8756 = vperm.xlu0 %8755, %v7789
    %v8757 = vpop.permute.xlu0 %8756
    %8758 = vset.pattern.permute.xlu0 0
    %8759 = vperm.xlu0 %8758, %v7790
    %v8760 = vpop.permute.xlu0 %8759
    %8761 = vset.pattern.permute.xlu0 0
    %8762 = vperm.xlu0 %8761, %v7791
    %v8763 = vpop.permute.xlu0 %8762
    %8764 = vset.pattern.permute.xlu0 0
    %8765 = vperm.xlu0 %8764, %v7792
    %v8766 = vpop.permute.xlu0 %8765
    %8767 = vset.pattern.permute.xlu0 0
    %8768 = vperm.xlu0 %8767, %v7793
    %v8769 = vpop.permute.xlu0 %8768
    %8770 = vset.pattern.permute.xlu0 0
    %8771 = vperm.xlu0 %8770, %v7794
    %v8772 = vpop.permute.xlu0 %8771
    %8773 = vset.pattern.permute.xlu0 0
    %8774 = vperm.xlu0 %8773, %v7795
    %v8775 = vpop.permute.xlu0 %8774
    %8776 = vset.pattern.permute.xlu0 0
    %8777 = vperm.xlu0 %8776, %v7796
    %v8778 = vpop.permute.xlu0 %8777
    %8779 = vset.pattern.permute.xlu0 0
    %8780 = vperm.xlu0 %8779, %v7797
    %v8781 = vpop.permute.xlu0 %8780
    %8782 = vset.pattern.permute.xlu0 0
    %8783 = vperm.xlu0 %8782, %v7798
    %v8784 = vpop.permute.xlu0 %8783
    %8785 = vset.pattern.permute.xlu0 0
    %8786 = vperm.xlu0 %8785, %v7799
    %v8787 = vpop.permute.xlu0 %8786
    %8788 = vset.pattern.permute.xlu0 0
    %8789 = vperm.xlu0 %8788, %v7800
    %v8790 = vpop.permute.xlu0 %8789
    %8791 = vset.pattern.permute.xlu0 0
    %8792 = vperm.xlu0 %8791, %v7801
    %v8793 = vpop.permute.xlu0 %8792
    %8794 = vset.pattern.permute.xlu0 0
    %8795 = vperm.xlu0 %8794, %v7802
    %v8796 = vpop.permute.xlu0 %8795
    %8797 = vset.pattern.permute.xlu0 0
    %8798 = vperm.xlu0 %8797, %v7803
    %v8799 = vpop.permute.xlu0 %8798
    %8800 = vset.pattern.permute.xlu0 0
    %8801 = vperm.xlu0 %8800, %v7804
    %v8802 = vpop.permute.xlu0 %8801
    %8803 = vset.pattern.permute.xlu0 0
    %8804 = vperm.xlu0 %8803, %v7805
    %v8805 = vpop.permute.xlu0 %8804
    %8806 = vset.pattern.permute.xlu0 0
    %8807 = vperm.xlu0 %8806, %v7806
    %v8808 = vpop.permute.xlu0 %8807
    %8809 = vset.pattern.permute.xlu0 0
    %8810 = vperm.xlu0 %8809, %v7807
    %v8811 = vpop.permute.xlu0 %8810
    %8812 = vset.pattern.permute.xlu0 0
    %8813 = vperm.xlu0 %8812, %v7808
    %v8814 = vpop.permute.xlu0 %8813
    %8815 = vset.pattern.permute.xlu0 0
    %8816 = vperm.xlu0 %8815, %v7809
    %v8817 = vpop.permute.xlu0 %8816
    %8818 = vset.pattern.permute.xlu0 0
    %8819 = vperm.xlu0 %8818, %v7810
    %v8820 = vpop.permute.xlu0 %8819
    %8821 = vset.pattern.permute.xlu0 0
    %8822 = vperm.xlu0 %8821, %v7811
    %v8823 = vpop.permute.xlu0 %8822
    %8824 = vset.pattern.permute.xlu0 0
    %8825 = vperm.xlu0 %8824, %v7812
    %v8826 = vpop.permute.xlu0 %8825
    %8827 = vset.pattern.permute.xlu0 0
    %8828 = vperm.xlu0 %8827, %v7813
    %v8829 = vpop.permute.xlu0 %8828
    %8830 = vset.pattern.permute.xlu0 0
    %8831 = vperm.xlu0 %8830, %v7814
    %v8832 = vpop.permute.xlu0 %8831
    %8833 = vset.pattern.permute.xlu0 0
    %8834 = vperm.xlu0 %8833, %v7815
    %v8835 = vpop.permute.xlu0 %8834
    %8836 = vset.pattern.permute.xlu0 0
    %8837 = vperm.xlu0 %8836, %v7816
    %v8838 = vpop.permute.xlu0 %8837
    %8839 = vset.pattern.permute.xlu0 0
    %8840 = vperm.xlu0 %8839, %v7817
    %v8841 = vpop.permute.xlu0 %8840
    %v8842 = vperm.slane %v8076, %v4630
    %v8843 = vperm.slane %v8079, %v4632
    %v8844 = vsel %vm4634, %v8843, %v8842
    %v8845 = vperm.slane %v8082, %v4636
    %v8846 = vsel %vm4638, %v8845, %v8844
    %v8847 = vperm.slane %v8085, %v4640
    %v8848 = vsel %vm4642, %v8847, %v8846
    %v8849 = vperm.slane %v8088, %v4644
    %v8850 = vsel %vm4646, %v8849, %v8848
    %v8851 = vperm.slane %v8091, %v4648
    %v8852 = vsel %vm4650, %v8851, %v8850
    %v8853 = vperm.slane %v8094, %v4652
    %v8854 = vsel %vm4654, %v8853, %v8852
    %v8855 = vperm.slane %v8097, %v4656
    %v8856 = vsel %vm4658, %v8855, %v8854
    %v8857 = vperm.slane %v8100, %v4660
    %v8858 = vsel %vm4662, %v8857, %v8856
    %v8859 = vperm.slane %v8103, %v4664
    %v8860 = vsel %vm4666, %v8859, %v8858
    %v8861 = vperm.slane %v8106, %v4668
    %v8862 = vsel %vm4670, %v8861, %v8860
    %v8863 = vperm.slane %v8109, %v4672
    %v8864 = vsel %vm4674, %v8863, %v8862
    %v8865 = vperm.slane %v8112, %v4676
    %v8866 = vsel %vm4678, %v8865, %v8864
    %v8867 = vperm.slane %v8115, %v4680
    %v8868 = vsel %vm4682, %v8867, %v8866
    %v8869 = vperm.slane %v8118, %v4684
    %v8870 = vsel %vm4686, %v8869, %v8868
    %v8871 = vperm.slane %v8121, %v4688
    %v8872 = vsel %vm4690, %v8871, %v8870
    %v8873 = vperm.slane %v8124, %v4630
    %v8874 = vperm.slane %v8127, %v4632
    %v8875 = vsel %vm4634, %v8874, %v8873
    %v8876 = vperm.slane %v8130, %v4636
    %v8877 = vsel %vm4638, %v8876, %v8875
    %v8878 = vperm.slane %v8133, %v4640
    %v8879 = vsel %vm4642, %v8878, %v8877
    %v8880 = vperm.slane %v8136, %v4644
    %v8881 = vsel %vm4646, %v8880, %v8879
    %v8882 = vperm.slane %v8139, %v4648
    %v8883 = vsel %vm4650, %v8882, %v8881
    %v8884 = vperm.slane %v8142, %v4652
    %v8885 = vsel %vm4654, %v8884, %v8883
    %v8886 = vperm.slane %v8145, %v4656
    %v8887 = vsel %vm4658, %v8886, %v8885
    %v8888 = vperm.slane %v8148, %v4660
    %v8889 = vsel %vm4662, %v8888, %v8887
    %v8890 = vperm.slane %v8151, %v4664
    %v8891 = vsel %vm4666, %v8890, %v8889
    %v8892 = vperm.slane %v8154, %v4668
    %v8893 = vsel %vm4670, %v8892, %v8891
    %v8894 = vperm.slane %v8157, %v4672
    %v8895 = vsel %vm4674, %v8894, %v8893
    %v8896 = vperm.slane %v8160, %v4676
    %v8897 = vsel %vm4678, %v8896, %v8895
    %v8898 = vperm.slane %v8163, %v4680
    %v8899 = vsel %vm4682, %v8898, %v8897
    %v8900 = vperm.slane %v8166, %v4684
    %v8901 = vsel %vm4686, %v8900, %v8899
    %v8902 = vperm.slane %v8169, %v4688
    %v8903 = vsel %vm4690, %v8902, %v8901
    %v8904 = vperm.slane %v8172, %v4630
    %v8905 = vperm.slane %v8175, %v4632
    %v8906 = vsel %vm4634, %v8905, %v8904
    %v8907 = vperm.slane %v8178, %v4636
    %v8908 = vsel %vm4638, %v8907, %v8906
    %v8909 = vperm.slane %v8181, %v4640
    %v8910 = vsel %vm4642, %v8909, %v8908
    %v8911 = vperm.slane %v8184, %v4644
    %v8912 = vsel %vm4646, %v8911, %v8910
    %v8913 = vperm.slane %v8187, %v4648
    %v8914 = vsel %vm4650, %v8913, %v8912
    %v8915 = vperm.slane %v8190, %v4652
    %v8916 = vsel %vm4654, %v8915, %v8914
    %v8917 = vperm.slane %v8193, %v4656
    %v8918 = vsel %vm4658, %v8917, %v8916
    %v8919 = vperm.slane %v8196, %v4660
    %v8920 = vsel %vm4662, %v8919, %v8918
    %v8921 = vperm.slane %v8199, %v4664
    %v8922 = vsel %vm4666, %v8921, %v8920
    %v8923 = vperm.slane %v8202, %v4668
    %v8924 = vsel %vm4670, %v8923, %v8922
    %v8925 = vperm.slane %v8205, %v4672
    %v8926 = vsel %vm4674, %v8925, %v8924
    %v8927 = vperm.slane %v8208, %v4676
    %v8928 = vsel %vm4678, %v8927, %v8926
    %v8929 = vperm.slane %v8211, %v4680
    %v8930 = vsel %vm4682, %v8929, %v8928
    %v8931 = vperm.slane %v8214, %v4684
    %v8932 = vsel %vm4686, %v8931, %v8930
    %v8933 = vperm.slane %v8217, %v4688
    %v8934 = vsel %vm4690, %v8933, %v8932
    %v8935 = vperm.slane %v8220, %v4630
    %v8936 = vperm.slane %v8223, %v4632
    %v8937 = vsel %vm4634, %v8936, %v8935
    %v8938 = vperm.slane %v8226, %v4636
    %v8939 = vsel %vm4638, %v8938, %v8937
    %v8940 = vperm.slane %v8229, %v4640
    %v8941 = vsel %vm4642, %v8940, %v8939
    %v8942 = vperm.slane %v8232, %v4644
    %v8943 = vsel %vm4646, %v8942, %v8941
    %v8944 = vperm.slane %v8235, %v4648
    %v8945 = vsel %vm4650, %v8944, %v8943
    %v8946 = vperm.slane %v8238, %v4652
    %v8947 = vsel %vm4654, %v8946, %v8945
    %v8948 = vperm.slane %v8241, %v4656
    %v8949 = vsel %vm4658, %v8948, %v8947
    %v8950 = vperm.slane %v8244, %v4660
    %v8951 = vsel %vm4662, %v8950, %v8949
    %v8952 = vperm.slane %v8247, %v4664
    %v8953 = vsel %vm4666, %v8952, %v8951
    %v8954 = vperm.slane %v8250, %v4668
    %v8955 = vsel %vm4670, %v8954, %v8953
    %v8956 = vperm.slane %v8253, %v4672
    %v8957 = vsel %vm4674, %v8956, %v8955
    %v8958 = vperm.slane %v8256, %v4676
    %v8959 = vsel %vm4678, %v8958, %v8957
    %v8960 = vperm.slane %v8259, %v4680
    %v8961 = vsel %vm4682, %v8960, %v8959
    %v8962 = vperm.slane %v8262, %v4684
    %v8963 = vsel %vm4686, %v8962, %v8961
    %v8964 = vperm.slane %v8265, %v4688
    %v8965 = vsel %vm4690, %v8964, %v8963
    %v8966 = vperm.slane %v8268, %v4630
    %v8967 = vperm.slane %v8271, %v4632
    %v8968 = vsel %vm4634, %v8967, %v8966
    %v8969 = vperm.slane %v8274, %v4636
    %v8970 = vsel %vm4638, %v8969, %v8968
    %v8971 = vperm.slane %v8277, %v4640
    %v8972 = vsel %vm4642, %v8971, %v8970
    %v8973 = vperm.slane %v8280, %v4644
    %v8974 = vsel %vm4646, %v8973, %v8972
    %v8975 = vperm.slane %v8283, %v4648
    %v8976 = vsel %vm4650, %v8975, %v8974
    %v8977 = vperm.slane %v8286, %v4652
    %v8978 = vsel %vm4654, %v8977, %v8976
    %v8979 = vperm.slane %v8289, %v4656
    %v8980 = vsel %vm4658, %v8979, %v8978
    %v8981 = vperm.slane %v8292, %v4660
    %v8982 = vsel %vm4662, %v8981, %v8980
    %v8983 = vperm.slane %v8295, %v4664
    %v8984 = vsel %vm4666, %v8983, %v8982
    %v8985 = vperm.slane %v8298, %v4668
    %v8986 = vsel %vm4670, %v8985, %v8984
    %v8987 = vperm.slane %v8301, %v4672
    %v8988 = vsel %vm4674, %v8987, %v8986
    %v8989 = vperm.slane %v8304, %v4676
    %v8990 = vsel %vm4678, %v8989, %v8988
    %v8991 = vperm.slane %v8307, %v4680
    %v8992 = vsel %vm4682, %v8991, %v8990
    %v8993 = vperm.slane %v8310, %v4684
    %v8994 = vsel %vm4686, %v8993, %v8992
    %v8995 = vperm.slane %v8313, %v4688
    %v8996 = vsel %vm4690, %v8995, %v8994
    %v8997 = vperm.slane %v8316, %v4630
    %v8998 = vperm.slane %v8319, %v4632
    %v8999 = vsel %vm4634, %v8998, %v8997
    %v9000 = vperm.slane %v8322, %v4636
    %v9001 = vsel %vm4638, %v9000, %v8999
    %v9002 = vperm.slane %v8325, %v4640
    %v9003 = vsel %vm4642, %v9002, %v9001
    %v9004 = vperm.slane %v8328, %v4644
    %v9005 = vsel %vm4646, %v9004, %v9003
    %v9006 = vperm.slane %v8331, %v4648
    %v9007 = vsel %vm4650, %v9006, %v9005
    %v9008 = vperm.slane %v8334, %v4652
    %v9009 = vsel %vm4654, %v9008, %v9007
    %v9010 = vperm.slane %v8337, %v4656
    %v9011 = vsel %vm4658, %v9010, %v9009
    %v9012 = vperm.slane %v8340, %v4660
    %v9013 = vsel %vm4662, %v9012, %v9011
    %v9014 = vperm.slane %v8343, %v4664
    %v9015 = vsel %vm4666, %v9014, %v9013
    %v9016 = vperm.slane %v8346, %v4668
    %v9017 = vsel %vm4670, %v9016, %v9015
    %v9018 = vperm.slane %v8349, %v4672
    %v9019 = vsel %vm4674, %v9018, %v9017
    %v9020 = vperm.slane %v8352, %v4676
    %v9021 = vsel %vm4678, %v9020, %v9019
    %v9022 = vperm.slane %v8355, %v4680
    %v9023 = vsel %vm4682, %v9022, %v9021
    %v9024 = vperm.slane %v8358, %v4684
    %v9025 = vsel %vm4686, %v9024, %v9023
    %v9026 = vperm.slane %v8361, %v4688
    %v9027 = vsel %vm4690, %v9026, %v9025
    %v9028 = vperm.slane %v8364, %v4630
    %v9029 = vperm.slane %v8367, %v4632
    %v9030 = vsel %vm4634, %v9029, %v9028
    %v9031 = vperm.slane %v8370, %v4636
    %v9032 = vsel %vm4638, %v9031, %v9030
    %v9033 = vperm.slane %v8373, %v4640
    %v9034 = vsel %vm4642, %v9033, %v9032
    %v9035 = vperm.slane %v8376, %v4644
    %v9036 = vsel %vm4646, %v9035, %v9034
    %v9037 = vperm.slane %v8379, %v4648
    %v9038 = vsel %vm4650, %v9037, %v9036
    %v9039 = vperm.slane %v8382, %v4652
    %v9040 = vsel %vm4654, %v9039, %v9038
    %v9041 = vperm.slane %v8385, %v4656
    %v9042 = vsel %vm4658, %v9041, %v9040
    %v9043 = vperm.slane %v8388, %v4660
    %v9044 = vsel %vm4662, %v9043, %v9042
    %v9045 = vperm.slane %v8391, %v4664
    %v9046 = vsel %vm4666, %v9045, %v9044
    %v9047 = vperm.slane %v8394, %v4668
    %v9048 = vsel %vm4670, %v9047, %v9046
    %v9049 = vperm.slane %v8397, %v4672
    %v9050 = vsel %vm4674, %v9049, %v9048
    %v9051 = vperm.slane %v8400, %v4676
    %v9052 = vsel %vm4678, %v9051, %v9050
    %v9053 = vperm.slane %v8403, %v4680
    %v9054 = vsel %vm4682, %v9053, %v9052
    %v9055 = vperm.slane %v8406, %v4684
    %v9056 = vsel %vm4686, %v9055, %v9054
    %v9057 = vperm.slane %v8409, %v4688
    %v9058 = vsel %vm4690, %v9057, %v9056
    %v9059 = vperm.slane %v8412, %v4630
    %v9060 = vperm.slane %v8415, %v4632
    %v9061 = vsel %vm4634, %v9060, %v9059
    %v9062 = vperm.slane %v8418, %v4636
    %v9063 = vsel %vm4638, %v9062, %v9061
    %v9064 = vperm.slane %v8421, %v4640
    %v9065 = vsel %vm4642, %v9064, %v9063
    %v9066 = vperm.slane %v8424, %v4644
    %v9067 = vsel %vm4646, %v9066, %v9065
    %v9068 = vperm.slane %v8427, %v4648
    %v9069 = vsel %vm4650, %v9068, %v9067
    %v9070 = vperm.slane %v8430, %v4652
    %v9071 = vsel %vm4654, %v9070, %v9069
    %v9072 = vperm.slane %v8433, %v4656
    %v9073 = vsel %vm4658, %v9072, %v9071
    %v9074 = vperm.slane %v8436, %v4660
    %v9075 = vsel %vm4662, %v9074, %v9073
    %v9076 = vperm.slane %v8439, %v4664
    %v9077 = vsel %vm4666, %v9076, %v9075
    %v9078 = vperm.slane %v8442, %v4668
    %v9079 = vsel %vm4670, %v9078, %v9077
    %v9080 = vperm.slane %v8445, %v4672
    %v9081 = vsel %vm4674, %v9080, %v9079
    %v9082 = vperm.slane %v8448, %v4676
    %v9083 = vsel %vm4678, %v9082, %v9081
    %v9084 = vperm.slane %v8451, %v4680
    %v9085 = vsel %vm4682, %v9084, %v9083
    %v9086 = vperm.slane %v8454, %v4684
    %v9087 = vsel %vm4686, %v9086, %v9085
    %v9088 = vperm.slane %v8457, %v4688
    %v9089 = vsel %vm4690, %v9088, %v9087
    %v9090 = vperm.slane %v8460, %v4630
    %v9091 = vperm.slane %v8463, %v4632
    %v9092 = vsel %vm4634, %v9091, %v9090
    %v9093 = vperm.slane %v8466, %v4636
    %v9094 = vsel %vm4638, %v9093, %v9092
    %v9095 = vperm.slane %v8469, %v4640
    %v9096 = vsel %vm4642, %v9095, %v9094
    %v9097 = vperm.slane %v8472, %v4644
    %v9098 = vsel %vm4646, %v9097, %v9096
    %v9099 = vperm.slane %v8475, %v4648
    %v9100 = vsel %vm4650, %v9099, %v9098
    %v9101 = vperm.slane %v8478, %v4652
    %v9102 = vsel %vm4654, %v9101, %v9100
    %v9103 = vperm.slane %v8481, %v4656
    %v9104 = vsel %vm4658, %v9103, %v9102
    %v9105 = vperm.slane %v8484, %v4660
    %v9106 = vsel %vm4662, %v9105, %v9104
    %v9107 = vperm.slane %v8487, %v4664
    %v9108 = vsel %vm4666, %v9107, %v9106
    %v9109 = vperm.slane %v8490, %v4668
    %v9110 = vsel %vm4670, %v9109, %v9108
    %v9111 = vperm.slane %v8493, %v4672
    %v9112 = vsel %vm4674, %v9111, %v9110
    %v9113 = vperm.slane %v8496, %v4676
    %v9114 = vsel %vm4678, %v9113, %v9112
    %v9115 = vperm.slane %v8499, %v4680
    %v9116 = vsel %vm4682, %v9115, %v9114
    %v9117 = vperm.slane %v8502, %v4684
    %v9118 = vsel %vm4686, %v9117, %v9116
    %v9119 = vperm.slane %v8505, %v4688
    %v9120 = vsel %vm4690, %v9119, %v9118
    %v9121 = vperm.slane %v8508, %v4630
    %v9122 = vperm.slane %v8511, %v4632
    %v9123 = vsel %vm4634, %v9122, %v9121
    %v9124 = vperm.slane %v8514, %v4636
    %v9125 = vsel %vm4638, %v9124, %v9123
    %v9126 = vperm.slane %v8517, %v4640
    %v9127 = vsel %vm4642, %v9126, %v9125
    %v9128 = vperm.slane %v8520, %v4644
    %v9129 = vsel %vm4646, %v9128, %v9127
    %v9130 = vperm.slane %v8523, %v4648
    %v9131 = vsel %vm4650, %v9130, %v9129
    %v9132 = vperm.slane %v8526, %v4652
    %v9133 = vsel %vm4654, %v9132, %v9131
    %v9134 = vperm.slane %v8529, %v4656
    %v9135 = vsel %vm4658, %v9134, %v9133
    %v9136 = vperm.slane %v8532, %v4660
    %v9137 = vsel %vm4662, %v9136, %v9135
    %v9138 = vperm.slane %v8535, %v4664
    %v9139 = vsel %vm4666, %v9138, %v9137
    %v9140 = vperm.slane %v8538, %v4668
    %v9141 = vsel %vm4670, %v9140, %v9139
    %v9142 = vperm.slane %v8541, %v4672
    %v9143 = vsel %vm4674, %v9142, %v9141
    %v9144 = vperm.slane %v8544, %v4676
    %v9145 = vsel %vm4678, %v9144, %v9143
    %v9146 = vperm.slane %v8547, %v4680
    %v9147 = vsel %vm4682, %v9146, %v9145
    %v9148 = vperm.slane %v8550, %v4684
    %v9149 = vsel %vm4686, %v9148, %v9147
    %v9150 = vperm.slane %v8553, %v4688
    %v9151 = vsel %vm4690, %v9150, %v9149
    %v9152 = vperm.slane %v8556, %v4630
    %v9153 = vperm.slane %v8559, %v4632
    %v9154 = vsel %vm4634, %v9153, %v9152
    %v9155 = vperm.slane %v8562, %v4636
    %v9156 = vsel %vm4638, %v9155, %v9154
    %v9157 = vperm.slane %v8565, %v4640
    %v9158 = vsel %vm4642, %v9157, %v9156
    %v9159 = vperm.slane %v8568, %v4644
    %v9160 = vsel %vm4646, %v9159, %v9158
    %v9161 = vperm.slane %v8571, %v4648
    %v9162 = vsel %vm4650, %v9161, %v9160
    %v9163 = vperm.slane %v8574, %v4652
    %v9164 = vsel %vm4654, %v9163, %v9162
    %v9165 = vperm.slane %v8577, %v4656
    %v9166 = vsel %vm4658, %v9165, %v9164
    %v9167 = vperm.slane %v8580, %v4660
    %v9168 = vsel %vm4662, %v9167, %v9166
    %v9169 = vperm.slane %v8583, %v4664
    %v9170 = vsel %vm4666, %v9169, %v9168
    %v9171 = vperm.slane %v8586, %v4668
    %v9172 = vsel %vm4670, %v9171, %v9170
    %v9173 = vperm.slane %v8589, %v4672
    %v9174 = vsel %vm4674, %v9173, %v9172
    %v9175 = vperm.slane %v8592, %v4676
    %v9176 = vsel %vm4678, %v9175, %v9174
    %v9177 = vperm.slane %v8595, %v4680
    %v9178 = vsel %vm4682, %v9177, %v9176
    %v9179 = vperm.slane %v8598, %v4684
    %v9180 = vsel %vm4686, %v9179, %v9178
    %v9181 = vperm.slane %v8601, %v4688
    %v9182 = vsel %vm4690, %v9181, %v9180
    %v9183 = vperm.slane %v8604, %v4630
    %v9184 = vperm.slane %v8607, %v4632
    %v9185 = vsel %vm4634, %v9184, %v9183
    %v9186 = vperm.slane %v8610, %v4636
    %v9187 = vsel %vm4638, %v9186, %v9185
    %v9188 = vperm.slane %v8613, %v4640
    %v9189 = vsel %vm4642, %v9188, %v9187
    %v9190 = vperm.slane %v8616, %v4644
    %v9191 = vsel %vm4646, %v9190, %v9189
    %v9192 = vperm.slane %v8619, %v4648
    %v9193 = vsel %vm4650, %v9192, %v9191
    %v9194 = vperm.slane %v8622, %v4652
    %v9195 = vsel %vm4654, %v9194, %v9193
    %v9196 = vperm.slane %v8625, %v4656
    %v9197 = vsel %vm4658, %v9196, %v9195
    %v9198 = vperm.slane %v8628, %v4660
    %v9199 = vsel %vm4662, %v9198, %v9197
    %v9200 = vperm.slane %v8631, %v4664
    %v9201 = vsel %vm4666, %v9200, %v9199
    %v9202 = vperm.slane %v8634, %v4668
    %v9203 = vsel %vm4670, %v9202, %v9201
    %v9204 = vperm.slane %v8637, %v4672
    %v9205 = vsel %vm4674, %v9204, %v9203
    %v9206 = vperm.slane %v8640, %v4676
    %v9207 = vsel %vm4678, %v9206, %v9205
    %v9208 = vperm.slane %v8643, %v4680
    %v9209 = vsel %vm4682, %v9208, %v9207
    %v9210 = vperm.slane %v8646, %v4684
    %v9211 = vsel %vm4686, %v9210, %v9209
    %v9212 = vperm.slane %v8649, %v4688
    %v9213 = vsel %vm4690, %v9212, %v9211
    %v9214 = vperm.slane %v8652, %v4630
    %v9215 = vperm.slane %v8655, %v4632
    %v9216 = vsel %vm4634, %v9215, %v9214
    %v9217 = vperm.slane %v8658, %v4636
    %v9218 = vsel %vm4638, %v9217, %v9216
    %v9219 = vperm.slane %v8661, %v4640
    %v9220 = vsel %vm4642, %v9219, %v9218
    %v9221 = vperm.slane %v8664, %v4644
    %v9222 = vsel %vm4646, %v9221, %v9220
    %v9223 = vperm.slane %v8667, %v4648
    %v9224 = vsel %vm4650, %v9223, %v9222
    %v9225 = vperm.slane %v8670, %v4652
    %v9226 = vsel %vm4654, %v9225, %v9224
    %v9227 = vperm.slane %v8673, %v4656
    %v9228 = vsel %vm4658, %v9227, %v9226
    %v9229 = vperm.slane %v8676, %v4660
    %v9230 = vsel %vm4662, %v9229, %v9228
    %v9231 = vperm.slane %v8679, %v4664
    %v9232 = vsel %vm4666, %v9231, %v9230
    %v9233 = vperm.slane %v8682, %v4668
    %v9234 = vsel %vm4670, %v9233, %v9232
    %v9235 = vperm.slane %v8685, %v4672
    %v9236 = vsel %vm4674, %v9235, %v9234
    %v9237 = vperm.slane %v8688, %v4676
    %v9238 = vsel %vm4678, %v9237, %v9236
    %v9239 = vperm.slane %v8691, %v4680
    %v9240 = vsel %vm4682, %v9239, %v9238
    %v9241 = vperm.slane %v8694, %v4684
    %v9242 = vsel %vm4686, %v9241, %v9240
    %v9243 = vperm.slane %v8697, %v4688
    %v9244 = vsel %vm4690, %v9243, %v9242
    %v9245 = vperm.slane %v8700, %v4630
    %v9246 = vperm.slane %v8703, %v4632
    %v9247 = vsel %vm4634, %v9246, %v9245
    %v9248 = vperm.slane %v8706, %v4636
    %v9249 = vsel %vm4638, %v9248, %v9247
    %v9250 = vperm.slane %v8709, %v4640
    %v9251 = vsel %vm4642, %v9250, %v9249
    %v9252 = vperm.slane %v8712, %v4644
    %v9253 = vsel %vm4646, %v9252, %v9251
    %v9254 = vperm.slane %v8715, %v4648
    %v9255 = vsel %vm4650, %v9254, %v9253
    %v9256 = vperm.slane %v8718, %v4652
    %v9257 = vsel %vm4654, %v9256, %v9255
    %v9258 = vperm.slane %v8721, %v4656
    %v9259 = vsel %vm4658, %v9258, %v9257
    %v9260 = vperm.slane %v8724, %v4660
    %v9261 = vsel %vm4662, %v9260, %v9259
    %v9262 = vperm.slane %v8727, %v4664
    %v9263 = vsel %vm4666, %v9262, %v9261
    %v9264 = vperm.slane %v8730, %v4668
    %v9265 = vsel %vm4670, %v9264, %v9263
    %v9266 = vperm.slane %v8733, %v4672
    %v9267 = vsel %vm4674, %v9266, %v9265
    %v9268 = vperm.slane %v8736, %v4676
    %v9269 = vsel %vm4678, %v9268, %v9267
    %v9270 = vperm.slane %v8739, %v4680
    %v9271 = vsel %vm4682, %v9270, %v9269
    %v9272 = vperm.slane %v8742, %v4684
    %v9273 = vsel %vm4686, %v9272, %v9271
    %v9274 = vperm.slane %v8745, %v4688
    %v9275 = vsel %vm4690, %v9274, %v9273
    %v9276 = vperm.slane %v8748, %v4630
    %v9277 = vperm.slane %v8751, %v4632
    %v9278 = vsel %vm4634, %v9277, %v9276
    %v9279 = vperm.slane %v8754, %v4636
    %v9280 = vsel %vm4638, %v9279, %v9278
    %v9281 = vperm.slane %v8757, %v4640
    %v9282 = vsel %vm4642, %v9281, %v9280
    %v9283 = vperm.slane %v8760, %v4644
    %v9284 = vsel %vm4646, %v9283, %v9282
    %v9285 = vperm.slane %v8763, %v4648
    %v9286 = vsel %vm4650, %v9285, %v9284
    %v9287 = vperm.slane %v8766, %v4652
    %v9288 = vsel %vm4654, %v9287, %v9286
    %v9289 = vperm.slane %v8769, %v4656
    %v9290 = vsel %vm4658, %v9289, %v9288
    %v9291 = vperm.slane %v8772, %v4660
    %v9292 = vsel %vm4662, %v9291, %v9290
    %v9293 = vperm.slane %v8775, %v4664
    %v9294 = vsel %vm4666, %v9293, %v9292
    %v9295 = vperm.slane %v8778, %v4668
    %v9296 = vsel %vm4670, %v9295, %v9294
    %v9297 = vperm.slane %v8781, %v4672
    %v9298 = vsel %vm4674, %v9297, %v9296
    %v9299 = vperm.slane %v8784, %v4676
    %v9300 = vsel %vm4678, %v9299, %v9298
    %v9301 = vperm.slane %v8787, %v4680
    %v9302 = vsel %vm4682, %v9301, %v9300
    %v9303 = vperm.slane %v8790, %v4684
    %v9304 = vsel %vm4686, %v9303, %v9302
    %v9305 = vperm.slane %v8793, %v4688
    %v9306 = vsel %vm4690, %v9305, %v9304
    %v9307 = vperm.slane %v8796, %v4630
    %v9308 = vperm.slane %v8799, %v4632
    %v9309 = vsel %vm4634, %v9308, %v9307
    %v9310 = vperm.slane %v8802, %v4636
    %v9311 = vsel %vm4638, %v9310, %v9309
    %v9312 = vperm.slane %v8805, %v4640
    %v9313 = vsel %vm4642, %v9312, %v9311
    %v9314 = vperm.slane %v8808, %v4644
    %v9315 = vsel %vm4646, %v9314, %v9313
    %v9316 = vperm.slane %v8811, %v4648
    %v9317 = vsel %vm4650, %v9316, %v9315
    %v9318 = vperm.slane %v8814, %v4652
    %v9319 = vsel %vm4654, %v9318, %v9317
    %v9320 = vperm.slane %v8817, %v4656
    %v9321 = vsel %vm4658, %v9320, %v9319
    %v9322 = vperm.slane %v8820, %v4660
    %v9323 = vsel %vm4662, %v9322, %v9321
    %v9324 = vperm.slane %v8823, %v4664
    %v9325 = vsel %vm4666, %v9324, %v9323
    %v9326 = vperm.slane %v8826, %v4668
    %v9327 = vsel %vm4670, %v9326, %v9325
    %v9328 = vperm.slane %v8829, %v4672
    %v9329 = vsel %vm4674, %v9328, %v9327
    %v9330 = vperm.slane %v8832, %v4676
    %v9331 = vsel %vm4678, %v9330, %v9329
    %v9332 = vperm.slane %v8835, %v4680
    %v9333 = vsel %vm4682, %v9332, %v9331
    %v9334 = vperm.slane %v8838, %v4684
    %v9335 = vsel %vm4686, %v9334, %v9333
    %v9336 = vperm.slane %v8841, %v4688
    %v9337 = vsel %vm4690, %v9336, %v9335
    %v9338 = vsel %vm5157, %v8903, %v8872
    %v9339 = vsel %vm5159, %v8934, %v9338
    %v9340 = vsel %vm5161, %v8965, %v9339
    %v9341 = vsel %vm5163, %v8996, %v9340
    %v9342 = vsel %vm5165, %v9027, %v9341
    %v9343 = vsel %vm5167, %v9058, %v9342
    %v9344 = vsel %vm5169, %v9089, %v9343
    %v9345 = vsel %vm5157, %v9151, %v9120
    %v9346 = vsel %vm5159, %v9182, %v9345
    %v9347 = vsel %vm5161, %v9213, %v9346
    %v9348 = vsel %vm5163, %v9244, %v9347
    %v9349 = vsel %vm5165, %v9275, %v9348
    %v9350 = vsel %vm5167, %v9306, %v9349
    %v9351 = vsel %vm5169, %v9337, %v9350
    %9354 = vst [vmem:[#allocation14] sm:$0xff] %v9344
    %9355 = vst [vmem:[#allocation14 + $0x8] sm:$0xff] %v9351
    %v9612 = vmul.f32 %v8076, %v483
    %v9613 = vmul.f32 %v8079, %v484
    %v9614 = vmul.f32 %v8082, %v485
    %v9615 = vmul.f32 %v8085, %v486
    %v9616 = vmul.f32 %v8088, %v487
    %v9617 = vmul.f32 %v8091, %v488
    %v9618 = vmul.f32 %v8094, %v489
    %v9619 = vmul.f32 %v8097, %v490
    %v9620 = vmul.f32 %v8100, %v491
    %v9621 = vmul.f32 %v8103, %v492
    %v9622 = vmul.f32 %v8106, %v493
    %v9623 = vmul.f32 %v8109, %v494
    %v9624 = vmul.f32 %v8112, %v495
    %v9625 = vmul.f32 %v8115, %v496
    %v9626 = vmul.f32 %v8118, %v497
    %v9627 = vmul.f32 %v8121, %v498
    %v9628 = vmul.f32 %v8124, %v499
    %v9629 = vmul.f32 %v8127, %v500
    %v9630 = vmul.f32 %v8130, %v501
    %v9631 = vmul.f32 %v8133, %v502
    %v9632 = vmul.f32 %v8136, %v503
    %v9633 = vmul.f32 %v8139, %v504
    %v9634 = vmul.f32 %v8142, %v505
    %v9635 = vmul.f32 %v8145, %v506
    %v9636 = vmul.f32 %v8148, %v507
    %v9637 = vmul.f32 %v8151, %v508
    %v9638 = vmul.f32 %v8154, %v509
    %v9639 = vmul.f32 %v8157, %v510
    %v9640 = vmul.f32 %v8160, %v511
    %v9641 = vmul.f32 %v8163, %v512
    %v9642 = vmul.f32 %v8166, %v513
    %v9643 = vmul.f32 %v8169, %v514
    %v9644 = vmul.f32 %v8172, %v515
    %v9645 = vmul.f32 %v8175, %v516
    %v9646 = vmul.f32 %v8178, %v517
    %v9647 = vmul.f32 %v8181, %v518
    %v9648 = vmul.f32 %v8184, %v519
    %v9649 = vmul.f32 %v8187, %v520
    %v9650 = vmul.f32 %v8190, %v521
    %v9651 = vmul.f32 %v8193, %v522
    %v9652 = vmul.f32 %v8196, %v523
    %v9653 = vmul.f32 %v8199, %v524
    %v9654 = vmul.f32 %v8202, %v525
    %v9655 = vmul.f32 %v8205, %v526
    %v9656 = vmul.f32 %v8208, %v527
    %v9657 = vmul.f32 %v8211, %v528
    %v9658 = vmul.f32 %v8214, %v529
    %v9659 = vmul.f32 %v8217, %v530
    %v9660 = vmul.f32 %v8220, %v531
    %v9661 = vmul.f32 %v8223, %v532
    %v9662 = vmul.f32 %v8226, %v533
    %v9663 = vmul.f32 %v8229, %v534
    %v9664 = vmul.f32 %v8232, %v535
    %v9665 = vmul.f32 %v8235, %v536
    %v9666 = vmul.f32 %v8238, %v537
    %v9667 = vmul.f32 %v8241, %v538
    %v9668 = vmul.f32 %v8244, %v539
    %v9669 = vmul.f32 %v8247, %v540
    %v9670 = vmul.f32 %v8250, %v541
    %v9671 = vmul.f32 %v8253, %v542
    %v9672 = vmul.f32 %v8256, %v543
    %v9673 = vmul.f32 %v8259, %v544
    %v9674 = vmul.f32 %v8262, %v545
    %v9675 = vmul.f32 %v8265, %v546
    %v9676 = vmul.f32 %v8268, %v547
    %v9677 = vmul.f32 %v8271, %v548
    %v9678 = vmul.f32 %v8274, %v549
    %v9679 = vmul.f32 %v8277, %v550
    %v9680 = vmul.f32 %v8280, %v551
    %v9681 = vmul.f32 %v8283, %v552
    %v9682 = vmul.f32 %v8286, %v553
    %v9683 = vmul.f32 %v8289, %v554
    %v9684 = vmul.f32 %v8292, %v555
    %v9685 = vmul.f32 %v8295, %v556
    %v9686 = vmul.f32 %v8298, %v557
    %v9687 = vmul.f32 %v8301, %v558
    %v9688 = vmul.f32 %v8304, %v559
    %v9689 = vmul.f32 %v8307, %v560
    %v9690 = vmul.f32 %v8310, %v561
    %v9691 = vmul.f32 %v8313, %v562
    %v9692 = vmul.f32 %v8316, %v563
    %v9693 = vmul.f32 %v8319, %v564
    %v9694 = vmul.f32 %v8322, %v565
    %v9695 = vmul.f32 %v8325, %v566
    %v9696 = vmul.f32 %v8328, %v567
    %v9697 = vmul.f32 %v8331, %v568
    %v9698 = vmul.f32 %v8334, %v569
    %v9699 = vmul.f32 %v8337, %v570
    %v9700 = vmul.f32 %v8340, %v571
    %v9701 = vmul.f32 %v8343, %v572
    %v9702 = vmul.f32 %v8346, %v573
    %v9703 = vmul.f32 %v8349, %v574
    %v9704 = vmul.f32 %v8352, %v575
    %v9705 = vmul.f32 %v8355, %v576
    %v9706 = vmul.f32 %v8358, %v577
    %v9707 = vmul.f32 %v8361, %v578
    %v9708 = vmul.f32 %v8364, %v579
    %v9709 = vmul.f32 %v8367, %v580
    %v9710 = vmul.f32 %v8370, %v581
    %v9711 = vmul.f32 %v8373, %v582
    %v9712 = vmul.f32 %v8376, %v583
    %v9713 = vmul.f32 %v8379, %v584
    %v9714 = vmul.f32 %v8382, %v585
    %v9715 = vmul.f32 %v8385, %v586
    %v9716 = vmul.f32 %v8388, %v587
    %v9717 = vmul.f32 %v8391, %v588
    %v9718 = vmul.f32 %v8394, %v589
    %v9719 = vmul.f32 %v8397, %v590
    %v9720 = vmul.f32 %v8400, %v591
    %v9721 = vmul.f32 %v8403, %v592
    %v9722 = vmul.f32 %v8406, %v593
    %v9723 = vmul.f32 %v8409, %v594
    %v9724 = vmul.f32 %v8412, %v595
    %v9725 = vmul.f32 %v8415, %v596
    %v9726 = vmul.f32 %v8418, %v597
    %v9727 = vmul.f32 %v8421, %v598
    %v9728 = vmul.f32 %v8424, %v599
    %v9729 = vmul.f32 %v8427, %v600
    %v9730 = vmul.f32 %v8430, %v601
    %v9731 = vmul.f32 %v8433, %v602
    %v9732 = vmul.f32 %v8436, %v603
    %v9733 = vmul.f32 %v8439, %v604
    %v9734 = vmul.f32 %v8442, %v605
    %v9735 = vmul.f32 %v8445, %v606
    %v9736 = vmul.f32 %v8448, %v607
    %v9737 = vmul.f32 %v8451, %v608
    %v9738 = vmul.f32 %v8454, %v609
    %v9739 = vmul.f32 %v8457, %v610
    %v9740 = vmul.f32 %v8460, %v611
    %v9741 = vmul.f32 %v8463, %v612
    %v9742 = vmul.f32 %v8466, %v613
    %v9743 = vmul.f32 %v8469, %v614
    %v9744 = vmul.f32 %v8472, %v615
    %v9745 = vmul.f32 %v8475, %v616
    %v9746 = vmul.f32 %v8478, %v617
    %v9747 = vmul.f32 %v8481, %v618
    %v9748 = vmul.f32 %v8484, %v619
    %v9749 = vmul.f32 %v8487, %v620
    %v9750 = vmul.f32 %v8490, %v621
    %v9751 = vmul.f32 %v8493, %v622
    %v9752 = vmul.f32 %v8496, %v623
    %v9753 = vmul.f32 %v8499, %v624
    %v9754 = vmul.f32 %v8502, %v625
    %v9755 = vmul.f32 %v8505, %v626
    %v9756 = vmul.f32 %v8508, %v627
    %v9757 = vmul.f32 %v8511, %v628
    %v9758 = vmul.f32 %v8514, %v629
    %v9759 = vmul.f32 %v8517, %v630
    %v9760 = vmul.f32 %v8520, %v631
    %v9761 = vmul.f32 %v8523, %v632
    %v9762 = vmul.f32 %v8526, %v633
    %v9763 = vmul.f32 %v8529, %v634
    %v9764 = vmul.f32 %v8532, %v635
    %v9765 = vmul.f32 %v8535, %v636
    %v9766 = vmul.f32 %v8538, %v637
    %v9767 = vmul.f32 %v8541, %v638
    %v9768 = vmul.f32 %v8544, %v639
    %v9769 = vmul.f32 %v8547, %v640
    %v9770 = vmul.f32 %v8550, %v641
    %v9771 = vmul.f32 %v8553, %v642
    %v9772 = vmul.f32 %v8556, %v643
    %v9773 = vmul.f32 %v8559, %v644
    %v9774 = vmul.f32 %v8562, %v645
    %v9775 = vmul.f32 %v8565, %v646
    %v9776 = vmul.f32 %v8568, %v647
    %v9777 = vmul.f32 %v8571, %v648
    %v9778 = vmul.f32 %v8574, %v649
    %v9779 = vmul.f32 %v8577, %v650
    %v9780 = vmul.f32 %v8580, %v651
    %v9781 = vmul.f32 %v8583, %v652
    %v9782 = vmul.f32 %v8586, %v653
    %v9783 = vmul.f32 %v8589, %v654
    %v9784 = vmul.f32 %v8592, %v655
    %v9785 = vmul.f32 %v8595, %v656
    %v9786 = vmul.f32 %v8598, %v657
    %v9787 = vmul.f32 %v8601, %v658
    %v9788 = vmul.f32 %v8604, %v659
    %v9789 = vmul.f32 %v8607, %v660
    %v9790 = vmul.f32 %v8610, %v661
    %v9791 = vmul.f32 %v8613, %v662
    %v9792 = vmul.f32 %v8616, %v663
    %v9793 = vmul.f32 %v8619, %v664
    %v9794 = vmul.f32 %v8622, %v665
    %v9795 = vmul.f32 %v8625, %v666
    %v9796 = vmul.f32 %v8628, %v667
    %v9797 = vmul.f32 %v8631, %v668
    %v9798 = vmul.f32 %v8634, %v669
    %v9799 = vmul.f32 %v8637, %v670
    %v9800 = vmul.f32 %v8640, %v671
    %v9801 = vmul.f32 %v8643, %v672
    %v9802 = vmul.f32 %v8646, %v673
    %v9803 = vmul.f32 %v8649, %v674
    %v9804 = vmul.f32 %v8652, %v675
    %v9805 = vmul.f32 %v8655, %v676
    %v9806 = vmul.f32 %v8658, %v677
    %v9807 = vmul.f32 %v8661, %v678
    %v9808 = vmul.f32 %v8664, %v679
    %v9809 = vmul.f32 %v8667, %v680
    %v9810 = vmul.f32 %v8670, %v681
    %v9811 = vmul.f32 %v8673, %v682
    %v9812 = vmul.f32 %v8676, %v683
    %v9813 = vmul.f32 %v8679, %v684
    %v9814 = vmul.f32 %v8682, %v685
    %v9815 = vmul.f32 %v8685, %v686
    %v9816 = vmul.f32 %v8688, %v687
    %v9817 = vmul.f32 %v8691, %v688
    %v9818 = vmul.f32 %v8694, %v689
    %v9819 = vmul.f32 %v8697, %v690
    %v9820 = vmul.f32 %v8700, %v691
    %v9821 = vmul.f32 %v8703, %v692
    %v9822 = vmul.f32 %v8706, %v693
    %v9823 = vmul.f32 %v8709, %v694
    %v9824 = vmul.f32 %v8712, %v695
    %v9825 = vmul.f32 %v8715, %v696
    %v9826 = vmul.f32 %v8718, %v697
    %v9827 = vmul.f32 %v8721, %v698
    %v9828 = vmul.f32 %v8724, %v699
    %v9829 = vmul.f32 %v8727, %v700
    %v9830 = vmul.f32 %v8730, %v701
    %v9831 = vmul.f32 %v8733, %v702
    %v9832 = vmul.f32 %v8736, %v703
    %v9833 = vmul.f32 %v8739, %v704
    %v9834 = vmul.f32 %v8742, %v705
    %v9835 = vmul.f32 %v8745, %v706
    %v9836 = vmul.f32 %v8748, %v707
    %v9837 = vmul.f32 %v8751, %v708
    %v9838 = vmul.f32 %v8754, %v709
    %v9839 = vmul.f32 %v8757, %v710
    %v9840 = vmul.f32 %v8760, %v711
    %v9841 = vmul.f32 %v8763, %v712
    %v9842 = vmul.f32 %v8766, %v713
    %v9843 = vmul.f32 %v8769, %v714
    %v9844 = vmul.f32 %v8772, %v715
    %v9845 = vmul.f32 %v8775, %v716
    %v9846 = vmul.f32 %v8778, %v717
    %v9847 = vmul.f32 %v8781, %v718
    %v9848 = vmul.f32 %v8784, %v719
    %v9849 = vmul.f32 %v8787, %v720
    %v9850 = vmul.f32 %v8790, %v721
    %v9851 = vmul.f32 %v8793, %v722
    %v9852 = vmul.f32 %v8796, %v723
    %v9853 = vmul.f32 %v8799, %v724
    %v9854 = vmul.f32 %v8802, %v725
    %v9855 = vmul.f32 %v8805, %v726
    %v9856 = vmul.f32 %v8808, %v727
    %v9857 = vmul.f32 %v8811, %v728
    %v9858 = vmul.f32 %v8814, %v729
    %v9859 = vmul.f32 %v8817, %v730
    %v9860 = vmul.f32 %v8820, %v731
    %v9861 = vmul.f32 %v8823, %v732
    %v9862 = vmul.f32 %v8826, %v733
    %v9863 = vmul.f32 %v8829, %v734
    %v9864 = vmul.f32 %v8832, %v735
    %v9865 = vmul.f32 %v8835, %v736
    %v9866 = vmul.f32 %v8838, %v737
    %v9867 = vmul.f32 %v8841, %v738
    %v9868 = vadd.f32 %v9612, %v9613
    %v9869 = vadd.f32 %v9868, %v9614
    %v9870 = vadd.f32 %v9869, %v9615
    %v9871 = vadd.f32 %v9870, %v9616
    %v9872 = vadd.f32 %v9871, %v9617
    %v9873 = vadd.f32 %v9872, %v9618
    %v9874 = vadd.f32 %v9873, %v9619
    %v9875 = vadd.f32 %v9874, %v9620
    %v9876 = vadd.f32 %v9875, %v9621
    %v9877 = vadd.f32 %v9876, %v9622
    %v9878 = vadd.f32 %v9877, %v9623
    %v9879 = vadd.f32 %v9878, %v9624
    %v9880 = vadd.f32 %v9879, %v9625
    %v9881 = vadd.f32 %v9880, %v9626
    %v9882 = vadd.f32 %v9881, %v9627
    %v9883 = vrot.slane %v9882, 4
    %v9884 = vadd.f32 %v9882, %v9883
    %v9885 = vrot.slane %v9884, 2
    %v9886 = vadd.f32 %v9884, %v9885
    %v9887 = vrot.slane %v9886, 1
    %v9888 = vadd.f32 %v9886, %v9887
    %v9889 = vadd.f32 %v9628, %v9629
    %v9890 = vadd.f32 %v9889, %v9630
    %v9891 = vadd.f32 %v9890, %v9631
    %v9892 = vadd.f32 %v9891, %v9632
    %v9893 = vadd.f32 %v9892, %v9633
    %v9894 = vadd.f32 %v9893, %v9634
    %v9895 = vadd.f32 %v9894, %v9635
    %v9896 = vadd.f32 %v9895, %v9636
    %v9897 = vadd.f32 %v9896, %v9637
    %v9898 = vadd.f32 %v9897, %v9638
    %v9899 = vadd.f32 %v9898, %v9639
    %v9900 = vadd.f32 %v9899, %v9640
    %v9901 = vadd.f32 %v9900, %v9641
    %v9902 = vadd.f32 %v9901, %v9642
    %v9903 = vadd.f32 %v9902, %v9643
    %v9904 = vrot.slane %v9903, 4
    %v9905 = vadd.f32 %v9903, %v9904
    %v9906 = vrot.slane %v9905, 2
    %v9907 = vadd.f32 %v9905, %v9906
    %v9908 = vrot.slane %v9907, 1
    %v9909 = vadd.f32 %v9907, %v9908
    %v9910 = vadd.f32 %v9644, %v9645
    %v9911 = vadd.f32 %v9910, %v9646
    %v9912 = vadd.f32 %v9911, %v9647
    %v9913 = vadd.f32 %v9912, %v9648
    %v9914 = vadd.f32 %v9913, %v9649
    %v9915 = vadd.f32 %v9914, %v9650
    %v9916 = vadd.f32 %v9915, %v9651
    %v9917 = vadd.f32 %v9916, %v9652
    %v9918 = vadd.f32 %v9917, %v9653
    %v9919 = vadd.f32 %v9918, %v9654
    %v9920 = vadd.f32 %v9919, %v9655
    %v9921 = vadd.f32 %v9920, %v9656
    %v9922 = vadd.f32 %v9921, %v9657
    %v9923 = vadd.f32 %v9922, %v9658
    %v9924 = vadd.f32 %v9923, %v9659
    %v9925 = vrot.slane %v9924, 4
    %v9926 = vadd.f32 %v9924, %v9925
    %v9927 = vrot.slane %v9926, 2
    %v9928 = vadd.f32 %v9926, %v9927
    %v9929 = vrot.slane %v9928, 1
    %v9930 = vadd.f32 %v9928, %v9929
    %v9931 = vadd.f32 %v9660, %v9661
    %v9932 = vadd.f32 %v9931, %v9662
    %v9933 = vadd.f32 %v9932, %v9663
    %v9934 = vadd.f32 %v9933, %v9664
    %v9935 = vadd.f32 %v9934, %v9665
    %v9936 = vadd.f32 %v9935, %v9666
    %v9937 = vadd.f32 %v9936, %v9667
    %v9938 = vadd.f32 %v9937, %v9668
    %v9939 = vadd.f32 %v9938, %v9669
    %v9940 = vadd.f32 %v9939, %v9670
    %v9941 = vadd.f32 %v9940, %v9671
    %v9942 = vadd.f32 %v9941, %v9672
    %v9943 = vadd.f32 %v9942, %v9673
    %v9944 = vadd.f32 %v9943, %v9674
    %v9945 = vadd.f32 %v9944, %v9675
    %v9946 = vrot.slane %v9945, 4
    %v9947 = vadd.f32 %v9945, %v9946
    %v9948 = vrot.slane %v9947, 2
    %v9949 = vadd.f32 %v9947, %v9948
    %v9950 = vrot.slane %v9949, 1
    %v9951 = vadd.f32 %v9949, %v9950
    %v9952 = vadd.f32 %v9676, %v9677
    %v9953 = vadd.f32 %v9952, %v9678
    %v9954 = vadd.f32 %v9953, %v9679
    %v9955 = vadd.f32 %v9954, %v9680
    %v9956 = vadd.f32 %v9955, %v9681
    %v9957 = vadd.f32 %v9956, %v9682
    %v9958 = vadd.f32 %v9957, %v9683
    %v9959 = vadd.f32 %v9958, %v9684
    %v9960 = vadd.f32 %v9959, %v9685
    %v9961 = vadd.f32 %v9960, %v9686
    %v9962 = vadd.f32 %v9961, %v9687
    %v9963 = vadd.f32 %v9962, %v9688
    %v9964 = vadd.f32 %v9963, %v9689
    %v9965 = vadd.f32 %v9964, %v9690
    %v9966 = vadd.f32 %v9965, %v9691
    %v9967 = vrot.slane %v9966, 4
    %v9968 = vadd.f32 %v9966, %v9967
    %v9969 = vrot.slane %v9968, 2
    %v9970 = vadd.f32 %v9968, %v9969
    %v9971 = vrot.slane %v9970, 1
    %v9972 = vadd.f32 %v9970, %v9971
    %v9973 = vadd.f32 %v9692, %v9693
    %v9974 = vadd.f32 %v9973, %v9694
    %v9975 = vadd.f32 %v9974, %v9695
    %v9976 = vadd.f32 %v9975, %v9696
    %v9977 = vadd.f32 %v9976, %v9697
    %v9978 = vadd.f32 %v9977, %v9698
    %v9979 = vadd.f32 %v9978, %v9699
    %v9980 = vadd.f32 %v9979, %v9700
    %v9981 = vadd.f32 %v9980, %v9701
    %v9982 = vadd.f32 %v9981, %v9702
    %v9983 = vadd.f32 %v9982, %v9703
    %v9984 = vadd.f32 %v9983, %v9704
    %v9985 = vadd.f32 %v9984, %v9705
    %v9986 = vadd.f32 %v9985, %v9706
    %v9987 = vadd.f32 %v9986, %v9707
    %v9988 = vrot.slane %v9987, 4
    %v9989 = vadd.f32 %v9987, %v9988
    %v9990 = vrot.slane %v9989, 2
    %v9991 = vadd.f32 %v9989, %v9990
    %v9992 = vrot.slane %v9991, 1
    %v9993 = vadd.f32 %v9991, %v9992
    %v9994 = vadd.f32 %v9708, %v9709
    %v9995 = vadd.f32 %v9994, %v9710
    %v9996 = vadd.f32 %v9995, %v9711
    %v9997 = vadd.f32 %v9996, %v9712
    %v9998 = vadd.f32 %v9997, %v9713
    %v9999 = vadd.f32 %v9998, %v9714
    %v10000 = vadd.f32 %v9999, %v9715
    %v10001 = vadd.f32 %v10000, %v9716
    %v10002 = vadd.f32 %v10001, %v9717
    %v10003 = vadd.f32 %v10002, %v9718
    %v10004 = vadd.f32 %v10003, %v9719
    %v10005 = vadd.f32 %v10004, %v9720
    %v10006 = vadd.f32 %v10005, %v9721
    %v10007 = vadd.f32 %v10006, %v9722
    %v10008 = vadd.f32 %v10007, %v9723
    %v10009 = vrot.slane %v10008, 4
    %v10010 = vadd.f32 %v10008, %v10009
    %v10011 = vrot.slane %v10010, 2
    %v10012 = vadd.f32 %v10010, %v10011
    %v10013 = vrot.slane %v10012, 1
    %v10014 = vadd.f32 %v10012, %v10013
    %v10015 = vadd.f32 %v9724, %v9725
    %v10016 = vadd.f32 %v10015, %v9726
    %v10017 = vadd.f32 %v10016, %v9727
    %v10018 = vadd.f32 %v10017, %v9728
    %v10019 = vadd.f32 %v10018, %v9729
    %v10020 = vadd.f32 %v10019, %v9730
    %v10021 = vadd.f32 %v10020, %v9731
    %v10022 = vadd.f32 %v10021, %v9732
    %v10023 = vadd.f32 %v10022, %v9733
    %v10024 = vadd.f32 %v10023, %v9734
    %v10025 = vadd.f32 %v10024, %v9735
    %v10026 = vadd.f32 %v10025, %v9736
    %v10027 = vadd.f32 %v10026, %v9737
    %v10028 = vadd.f32 %v10027, %v9738
    %v10029 = vadd.f32 %v10028, %v9739
    %v10030 = vrot.slane %v10029, 4
    %v10031 = vadd.f32 %v10029, %v10030
    %v10032 = vrot.slane %v10031, 2
    %v10033 = vadd.f32 %v10031, %v10032
    %v10034 = vrot.slane %v10033, 1
    %v10035 = vadd.f32 %v10033, %v10034
    %v10036 = vadd.f32 %v9740, %v9741
    %v10037 = vadd.f32 %v10036, %v9742
    %v10038 = vadd.f32 %v10037, %v9743
    %v10039 = vadd.f32 %v10038, %v9744
    %v10040 = vadd.f32 %v10039, %v9745
    %v10041 = vadd.f32 %v10040, %v9746
    %v10042 = vadd.f32 %v10041, %v9747
    %v10043 = vadd.f32 %v10042, %v9748
    %v10044 = vadd.f32 %v10043, %v9749
    %v10045 = vadd.f32 %v10044, %v9750
    %v10046 = vadd.f32 %v10045, %v9751
    %v10047 = vadd.f32 %v10046, %v9752
    %v10048 = vadd.f32 %v10047, %v9753
    %v10049 = vadd.f32 %v10048, %v9754
    %v10050 = vadd.f32 %v10049, %v9755
    %v10051 = vrot.slane %v10050, 4
    %v10052 = vadd.f32 %v10050, %v10051
    %v10053 = vrot.slane %v10052, 2
    %v10054 = vadd.f32 %v10052, %v10053
    %v10055 = vrot.slane %v10054, 1
    %v10056 = vadd.f32 %v10054, %v10055
    %v10057 = vadd.f32 %v9756, %v9757
    %v10058 = vadd.f32 %v10057, %v9758
    %v10059 = vadd.f32 %v10058, %v9759
    %v10060 = vadd.f32 %v10059, %v9760
    %v10061 = vadd.f32 %v10060, %v9761
    %v10062 = vadd.f32 %v10061, %v9762
    %v10063 = vadd.f32 %v10062, %v9763
    %v10064 = vadd.f32 %v10063, %v9764
    %v10065 = vadd.f32 %v10064, %v9765
    %v10066 = vadd.f32 %v10065, %v9766
    %v10067 = vadd.f32 %v10066, %v9767
    %v10068 = vadd.f32 %v10067, %v9768
    %v10069 = vadd.f32 %v10068, %v9769
    %v10070 = vadd.f32 %v10069, %v9770
    %v10071 = vadd.f32 %v10070, %v9771
    %v10072 = vrot.slane %v10071, 4
    %v10073 = vadd.f32 %v10071, %v10072
    %v10074 = vrot.slane %v10073, 2
    %v10075 = vadd.f32 %v10073, %v10074
    %v10076 = vrot.slane %v10075, 1
    %v10077 = vadd.f32 %v10075, %v10076
    %v10078 = vadd.f32 %v9772, %v9773
    %v10079 = vadd.f32 %v10078, %v9774
    %v10080 = vadd.f32 %v10079, %v9775
    %v10081 = vadd.f32 %v10080, %v9776
    %v10082 = vadd.f32 %v10081, %v9777
    %v10083 = vadd.f32 %v10082, %v9778
    %v10084 = vadd.f32 %v10083, %v9779
    %v10085 = vadd.f32 %v10084, %v9780
    %v10086 = vadd.f32 %v10085, %v9781
    %v10087 = vadd.f32 %v10086, %v9782
    %v10088 = vadd.f32 %v10087, %v9783
    %v10089 = vadd.f32 %v10088, %v9784
    %v10090 = vadd.f32 %v10089, %v9785
    %v10091 = vadd.f32 %v10090, %v9786
    %v10092 = vadd.f32 %v10091, %v9787
    %v10093 = vrot.slane %v10092, 4
    %v10094 = vadd.f32 %v10092, %v10093
    %v10095 = vrot.slane %v10094, 2
    %v10096 = vadd.f32 %v10094, %v10095
    %v10097 = vrot.slane %v10096, 1
    %v10098 = vadd.f32 %v10096, %v10097
    %v10099 = vadd.f32 %v9788, %v9789
    %v10100 = vadd.f32 %v10099, %v9790
    %v10101 = vadd.f32 %v10100, %v9791
    %v10102 = vadd.f32 %v10101, %v9792
    %v10103 = vadd.f32 %v10102, %v9793
    %v10104 = vadd.f32 %v10103, %v9794
    %v10105 = vadd.f32 %v10104, %v9795
    %v10106 = vadd.f32 %v10105, %v9796
    %v10107 = vadd.f32 %v10106, %v9797
    %v10108 = vadd.f32 %v10107, %v9798
    %v10109 = vadd.f32 %v10108, %v9799
    %v10110 = vadd.f32 %v10109, %v9800
    %v10111 = vadd.f32 %v10110, %v9801
    %v10112 = vadd.f32 %v10111, %v9802
    %v10113 = vadd.f32 %v10112, %v9803
    %v10114 = vrot.slane %v10113, 4
    %v10115 = vadd.f32 %v10113, %v10114
    %v10116 = vrot.slane %v10115, 2
    %v10117 = vadd.f32 %v10115, %v10116
    %v10118 = vrot.slane %v10117, 1
    %v10119 = vadd.f32 %v10117, %v10118
    %v10120 = vadd.f32 %v9804, %v9805
    %v10121 = vadd.f32 %v10120, %v9806
    %v10122 = vadd.f32 %v10121, %v9807
    %v10123 = vadd.f32 %v10122, %v9808
    %v10124 = vadd.f32 %v10123, %v9809
    %v10125 = vadd.f32 %v10124, %v9810
    %v10126 = vadd.f32 %v10125, %v9811
    %v10127 = vadd.f32 %v10126, %v9812
    %v10128 = vadd.f32 %v10127, %v9813
    %v10129 = vadd.f32 %v10128, %v9814
    %v10130 = vadd.f32 %v10129, %v9815
    %v10131 = vadd.f32 %v10130, %v9816
    %v10132 = vadd.f32 %v10131, %v9817
    %v10133 = vadd.f32 %v10132, %v9818
    %v10134 = vadd.f32 %v10133, %v9819
    %v10135 = vrot.slane %v10134, 4
    %v10136 = vadd.f32 %v10134, %v10135
    %v10137 = vrot.slane %v10136, 2
    %v10138 = vadd.f32 %v10136, %v10137
    %v10139 = vrot.slane %v10138, 1
    %v10140 = vadd.f32 %v10138, %v10139
    %v10141 = vadd.f32 %v9820, %v9821
    %v10142 = vadd.f32 %v10141, %v9822
    %v10143 = vadd.f32 %v10142, %v9823
    %v10144 = vadd.f32 %v10143, %v9824
    %v10145 = vadd.f32 %v10144, %v9825
    %v10146 = vadd.f32 %v10145, %v9826
    %v10147 = vadd.f32 %v10146, %v9827
    %v10148 = vadd.f32 %v10147, %v9828
    %v10149 = vadd.f32 %v10148, %v9829
    %v10150 = vadd.f32 %v10149, %v9830
    %v10151 = vadd.f32 %v10150, %v9831
    %v10152 = vadd.f32 %v10151, %v9832
    %v10153 = vadd.f32 %v10152, %v9833
    %v10154 = vadd.f32 %v10153, %v9834
    %v10155 = vadd.f32 %v10154, %v9835
    %v10156 = vrot.slane %v10155, 4
    %v10157 = vadd.f32 %v10155, %v10156
    %v10158 = vrot.slane %v10157, 2
    %v10159 = vadd.f32 %v10157, %v10158
    %v10160 = vrot.slane %v10159, 1
    %v10161 = vadd.f32 %v10159, %v10160
    %v10162 = vadd.f32 %v9836, %v9837
    %v10163 = vadd.f32 %v10162, %v9838
    %v10164 = vadd.f32 %v10163, %v9839
    %v10165 = vadd.f32 %v10164, %v9840
    %v10166 = vadd.f32 %v10165, %v9841
    %v10167 = vadd.f32 %v10166, %v9842
    %v10168 = vadd.f32 %v10167, %v9843
    %v10169 = vadd.f32 %v10168, %v9844
    %v10170 = vadd.f32 %v10169, %v9845
    %v10171 = vadd.f32 %v10170, %v9846
    %v10172 = vadd.f32 %v10171, %v9847
    %v10173 = vadd.f32 %v10172, %v9848
    %v10174 = vadd.f32 %v10173, %v9849
    %v10175 = vadd.f32 %v10174, %v9850
    %v10176 = vadd.f32 %v10175, %v9851
    %v10177 = vrot.slane %v10176, 4
    %v10178 = vadd.f32 %v10176, %v10177
    %v10179 = vrot.slane %v10178, 2
    %v10180 = vadd.f32 %v10178, %v10179
    %v10181 = vrot.slane %v10180, 1
    %v10182 = vadd.f32 %v10180, %v10181
    %v10183 = vadd.f32 %v9852, %v9853
    %v10184 = vadd.f32 %v10183, %v9854
    %v10185 = vadd.f32 %v10184, %v9855
    %v10186 = vadd.f32 %v10185, %v9856
    %v10187 = vadd.f32 %v10186, %v9857
    %v10188 = vadd.f32 %v10187, %v9858
    %v10189 = vadd.f32 %v10188, %v9859
    %v10190 = vadd.f32 %v10189, %v9860
    %v10191 = vadd.f32 %v10190, %v9861
    %v10192 = vadd.f32 %v10191, %v9862
    %v10193 = vadd.f32 %v10192, %v9863
    %v10194 = vadd.f32 %v10193, %v9864
    %v10195 = vadd.f32 %v10194, %v9865
    %v10196 = vadd.f32 %v10195, %v9866
    %v10197 = vadd.f32 %v10196, %v9867
    %v10198 = vrot.slane %v10197, 4
    %v10199 = vadd.f32 %v10197, %v10198
    %v10200 = vrot.slane %v10199, 2
    %v10201 = vadd.f32 %v10199, %v10200
    %v10202 = vrot.slane %v10201, 1
    %v10203 = vadd.f32 %v10201, %v10202
    %v10204 = vpack.c.bf16 %v9888, %v9888
    %v10205 = vpack.c.bf16 %v9909, %v9909
    %v10206 = vpack.c.bf16 %v9930, %v9930
    %v10207 = vpack.c.bf16 %v9951, %v9951
    %v10208 = vpack.c.bf16 %v9972, %v9972
    %v10209 = vpack.c.bf16 %v9993, %v9993
    %v10210 = vpack.c.bf16 %v10014, %v10014
    %v10211 = vpack.c.bf16 %v10035, %v10035
    %v10212 = vpack.c.bf16 %v10056, %v10056
    %v10213 = vpack.c.bf16 %v10077, %v10077
    %v10214 = vpack.c.bf16 %v10098, %v10098
    %v10215 = vpack.c.bf16 %v10119, %v10119
    %v10216 = vpack.c.bf16 %v10140, %v10140
    %v10217 = vpack.c.bf16 %v10161, %v10161
    %v10218 = vpack.c.bf16 %v10182, %v10182
    %v10219 = vpack.c.bf16 %v10203, %v10203
    %v10220 = vld [vmem:[#allocation10] sm:$0xf]
    %v10221 = vld [vmem:[#allocation10 + $0x4] sm:$0xf]
    %v10222 = vld [vmem:[#allocation10 + $0x8] sm:$0xf]
    %v10223 = vld [vmem:[#allocation10 + $0xc] sm:$0xf]
    %v10224 = vld [vmem:[#allocation10 + $0x10] sm:$0xf]
    %v10225 = vld [vmem:[#allocation10 + $0x14] sm:$0xf]
    %v10226 = vld [vmem:[#allocation10 + $0x18] sm:$0xf]
    %v10227 = vld [vmem:[#allocation10 + $0x1c] sm:$0xf]
    %v10228 = vld [vmem:[#allocation10 + $0x20] sm:$0xf]
    %v10229 = vld [vmem:[#allocation10 + $0x24] sm:$0xf]
    %v10230 = vld [vmem:[#allocation10 + $0x28] sm:$0xf]
    %v10231 = vld [vmem:[#allocation10 + $0x2c] sm:$0xf]
    %v10232 = vld [vmem:[#allocation10 + $0x30] sm:$0xf]
    %v10233 = vld [vmem:[#allocation10 + $0x34] sm:$0xf]
    %v10234 = vld [vmem:[#allocation10 + $0x38] sm:$0xf]
    %v10235 = vld [vmem:[#allocation10 + $0x3c] sm:$0xf]
    %v10236 = vld [vmem:[#allocation11] sm:$0xf]
    %v10237 = vld [vmem:[#allocation11 + $0x4] sm:$0xf]
    %v10238 = vld [vmem:[#allocation11 + $0x8] sm:$0xf]
    %v10239 = vld [vmem:[#allocation11 + $0xc] sm:$0xf]
    %v10240 = vld [vmem:[#allocation11 + $0x10] sm:$0xf]
    %v10241 = vld [vmem:[#allocation11 + $0x14] sm:$0xf]
    %v10242 = vld [vmem:[#allocation11 + $0x18] sm:$0xf]
    %v10243 = vld [vmem:[#allocation11 + $0x1c] sm:$0xf]
    %v10244 = vld [vmem:[#allocation11 + $0x20] sm:$0xf]
    %v10245 = vld [vmem:[#allocation11 + $0x24] sm:$0xf]
    %v10246 = vld [vmem:[#allocation11 + $0x28] sm:$0xf]
    %v10247 = vld [vmem:[#allocation11 + $0x2c] sm:$0xf]
    %v10248 = vld [vmem:[#allocation11 + $0x30] sm:$0xf]
    %v10249 = vld [vmem:[#allocation11 + $0x34] sm:$0xf]
    %v10250 = vld [vmem:[#allocation11 + $0x38] sm:$0xf]
    %v10251 = vld [vmem:[#allocation11 + $0x3c] sm:$0xf]
    %v10268 = vunpack.c.l.b16 %v10236
    %v10269 = vunpack.c.l.b16 %v10237
    %v10270 = vunpack.c.l.b16 %v10238
    %v10271 = vunpack.c.l.b16 %v10239
    %v10272 = vunpack.c.l.b16 %v10240
    %v10273 = vunpack.c.l.b16 %v10241
    %v10274 = vunpack.c.l.b16 %v10242
    %v10275 = vunpack.c.l.b16 %v10243
    %v10276 = vunpack.c.l.b16 %v10244
    %v10277 = vunpack.c.l.b16 %v10245
    %v10278 = vunpack.c.l.b16 %v10246
    %v10279 = vunpack.c.l.b16 %v10247
    %v10280 = vunpack.c.l.b16 %v10248
    %v10281 = vunpack.c.l.b16 %v10249
    %v10282 = vunpack.c.l.b16 %v10250
    %v10283 = vunpack.c.l.b16 %v10251
    %v10284 = vpack.c.b16 %v10269, %v10268
    %v10285 = vpack.c.b16 %v10271, %v10270
    %v10286 = vpack.c.b16 %v10273, %v10272
    %v10287 = vpack.c.b16 %v10275, %v10274
    %v10288 = vpack.c.b16 %v10277, %v10276
    %v10289 = vpack.c.b16 %v10279, %v10278
    %v10290 = vpack.c.b16 %v10281, %v10280
    %v10291 = vpack.c.b16 %v10283, %v10282
    %10300 = vmatpush.bf16.msra.mxu0 %v10291
    %10301 = vmatpush.bf16.msra.mxu0 %v10290
    %10302 = vmatpush.bf16.msra.mxu0 %v10289
    %10303 = vmatpush.bf16.msra.mxu0 %v10288
    %10304 = vmatpush.bf16.msra.mxu0 %v10287
    %10305 = vmatpush.bf16.msra.mxu0 %v10286
    %10306 = vmatpush.bf16.msra.mxu0 %v10285
    %10307 = vmatpush.bf16.msra.mxu0 %v10284
    %10308 = vmatmul.bf16.gmra.mxu0 %v403
    %v10309 = vpop.f32.mrf.mxu0
    %v10310 = vadd.f32 0.0, %v10309
    %v10311 = vpop.f32.mrf.mxu0
    %v10312 = vadd.f32 0.0, %v10311
    %10313 = vdwg.mxu0
    %v10330 = vunpack.c.l.b16 %v10204
    %v10331 = vunpack.c.l.b16 %v10205
    %v10332 = vunpack.c.l.b16 %v10206
    %v10333 = vunpack.c.l.b16 %v10207
    %v10334 = vunpack.c.l.b16 %v10208
    %v10335 = vunpack.c.l.b16 %v10209
    %v10336 = vunpack.c.l.b16 %v10210
    %v10337 = vunpack.c.l.b16 %v10211
    %v10338 = vunpack.c.l.b16 %v10212
    %v10339 = vunpack.c.l.b16 %v10213
    %v10340 = vunpack.c.l.b16 %v10214
    %v10341 = vunpack.c.l.b16 %v10215
    %v10342 = vunpack.c.l.b16 %v10216
    %v10343 = vunpack.c.l.b16 %v10217
    %v10344 = vunpack.c.l.b16 %v10218
    %v10345 = vunpack.c.l.b16 %v10219
    %v10346 = vsel %vm5157, %v10331, %v10330
    %v10347 = vsel %vm5159, %v10332, %v10346
    %v10348 = vsel %vm5161, %v10333, %v10347
    %v10349 = vsel %vm5163, %v10334, %v10348
    %v10350 = vsel %vm5165, %v10335, %v10349
    %v10351 = vsel %vm5167, %v10336, %v10350
    %v10352 = vsel %vm5169, %v10337, %v10351
    %v10353 = vsel %vm5157, %v10339, %v10338
    %v10354 = vsel %vm5159, %v10340, %v10353
    %v10355 = vsel %vm5161, %v10341, %v10354
    %v10356 = vsel %vm5163, %v10342, %v10355
    %v10357 = vsel %vm5165, %v10343, %v10356
    %v10358 = vsel %vm5167, %v10344, %v10357
    %v10359 = vsel %vm5169, %v10345, %v10358
    %v10360 = vpack.c.b16 %v10359, %v10352
    %v10378 = vunpack.c.l.b16 %v10220
    %v10379 = vunpack.c.l.b16 %v10221
    %v10380 = vunpack.c.l.b16 %v10222
    %v10381 = vunpack.c.l.b16 %v10223
    %v10382 = vunpack.c.l.b16 %v10224
    %v10383 = vunpack.c.l.b16 %v10225
    %v10384 = vunpack.c.l.b16 %v10226
    %v10385 = vunpack.c.l.b16 %v10227
    %v10386 = vunpack.c.l.b16 %v10228
    %v10387 = vunpack.c.l.b16 %v10229
    %v10388 = vunpack.c.l.b16 %v10230
    %v10389 = vunpack.c.l.b16 %v10231
    %v10390 = vunpack.c.l.b16 %v10232
    %v10391 = vunpack.c.l.b16 %v10233
    %v10392 = vunpack.c.l.b16 %v10234
    %v10393 = vunpack.c.l.b16 %v10235
    %v10394 = vpack.c.b16 %v10379, %v10378
    %v10395 = vpack.c.b16 %v10381, %v10380
    %v10396 = vpack.c.b16 %v10383, %v10382
    %v10397 = vpack.c.b16 %v10385, %v10384
    %v10398 = vpack.c.b16 %v10387, %v10386
    %v10399 = vpack.c.b16 %v10389, %v10388
    %v10400 = vpack.c.b16 %v10391, %v10390
    %v10401 = vpack.c.b16 %v10393, %v10392
    %10410 = vmatpush.bf16.msra.mxu0 %v10401
    %10411 = vmatpush.bf16.msra.mxu0 %v10400
    %10412 = vmatpush.bf16.msra.mxu0 %v10399
    %10413 = vmatpush.bf16.msra.mxu0 %v10398
    %10414 = vmatpush.bf16.msra.mxu0 %v10397
    %10415 = vmatpush.bf16.msra.mxu0 %v10396
    %10416 = vmatpush.bf16.msra.mxu0 %v10395
    %10417 = vmatpush.bf16.msra.mxu0 %v10394
    %10418 = vmatmul.bf16.gmra.mxu0 %v10360
    %v10419 = vpop.f32.mrf.mxu0
    %v10420 = vadd.f32 %v10310, %v10419
    %v10421 = vpop.f32.mrf.mxu0
    %v10422 = vadd.f32 %v10312, %v10421
    %10423 = vdwg.mxu0
    %v10424 = vtanh.pop %v10420
    %v10425 = vtanh.pop %v10422
    %10426 = vst [vmem:[#allocation13] sm:$0xff] %v10424
    %10427 = vst [vmem:[#allocation13 + $0x8] sm:$0xff] %v10425
    // Predicated region
    $region50: #{tpu_custom_call.1} parent=1 // pred_check
      _
    $region51: #{tpu_custom_call.1} parent=1 // pred_check_branch
      %10429 = sbr.rel (0) target = $region53
    $region52: #{tpu_custom_call.1} parent=1 // pred_region
      %10431 = vsyncadd [#allocation4], 0
      %s10432 = sshll.u32 [#allocation13], 4
      %s10433 = int_to_ptr.vmem [resolvable:$true] %s10432
      %s10434 = sshll.u32 %s6, 4
      %s10435 = int_to_ptr.hbm [resolvable:$true] %s10434
      %10440 = dma.vmem_to_hbm [thread:$0]  %s10433, 256, %s10435, [#allocation4], 128, 128, 8
    $region53: #{tpu_custom_call.1} parent=1 // pred_fallthru
      _
    // Predicated region
    $region54: #{tpu_custom_call.1} parent=1 // pred_check
      _
    $region55: #{tpu_custom_call.1} parent=1 // pred_check_branch
      %10442 = sbr.rel (0) target = $region57
    $region56: #{tpu_custom_call.1} parent=1 // pred_region
      %10444 = vsyncadd [#allocation15], 0
      %s10445 = sshll.u32 [#allocation14], 4
      %s10446 = int_to_ptr.vmem [resolvable:$true] %s10445
      %s10447 = sshll.u32 %s7, 4
      %s10448 = int_to_ptr.hbm [resolvable:$true] %s10447
      %10453 = dma.vmem_to_hbm [thread:$0]  %s10446, 256, %s10448, [#allocation15], 128, 128, 8
    $region57: #{tpu_custom_call.1} parent=1 // pred_fallthru
      _
    // Predicated region
    $region58: #{tpu_custom_call.1} parent=1 // pred_check
      _
    $region59: #{tpu_custom_call.1} parent=1 // pred_check_branch
      %10455 = sbr.rel (0) target = $region61
    $region60: #{tpu_custom_call.1} parent=1 // pred_region
      %10457 = dma.done [#allocation4], 256
    $region61: #{tpu_custom_call.1} parent=1 // pred_fallthru
      _
    // Predicated region
    $region62: #{tpu_custom_call.1} parent=1 // pred_check
      _
    $region63: #{tpu_custom_call.1} parent=1 // pred_check_branch
      %10459 = sbr.rel (0) target = $region65
    $region64: #{tpu_custom_call.1} parent=1 // pred_region
      %10461 = dma.done [#allocation15], 256
    $region65: #{tpu_custom_call.1} parent=1 // pred_fallthru
      _
    %10462 = vsyncpa [#allocation3], 1
    %10463 = vsyncpa [#allocation6], 1
    %10464 = vsyncpa [#allocation9], 1
    %10465 = vsyncpa [#allocation12], 1
    %10466 = vsyncpa [#allocation4], 1
    %10467 = vsyncpa [#allocation15], 1

</llo_original>
